<compile_context>
chip_gen: v6e
topology: v6e:2x2x1
jax: 0.10.0
libtpu: 0.0.40
codegen_flags: <defaults>
</compile_context>

<pallas_src>
import numpy as np
import jax
import jax.numpy as jnp
from jax import lax
from jax.experimental import pallas as pl
from jax.experimental.pallas import tpu as pltpu


def _shift_rows(v, k):
    """result[r] = v[r + k]; rows wrapped from the top only land in dead rows."""
    if k == 0:
        return v
    return jnp.concatenate([v[k:], v[:k]], axis=0)


def lenet_kernel(x_ref, w1_ref, b1_ref, w2_ref, b2_ref, sel_ref,
                 wf1_ref, bf1_ref, wf2_ref, bf2_ref, wf3_ref, bf3_ref, out_ref):
    f32 = jnp.float32
    x2 = x_ref[...]                     # (NB*32, 32): NB samples x 32 rows, W=32 on lanes
    rows = x2.shape[0]
    nb = out_ref.shape[0]

    # ---- conv1 (MXU): 5 row-tap matmuls, width taps folded into Toeplitz weights ----
    acc1 = jnp.zeros((rows, 168), f32)                       # lane = w*6 + co
    for ki in range(5):
        acc1 = acc1 + jnp.dot(_shift_rows(x2, ki), w1_ref[ki],
                              preferred_element_type=f32)
    c1 = jnp.maximum(acc1 + b1_ref[...], 0.0)

    # ---- maxpool1 (whole-tensor): rows via shift+max, cols via lane-shift+max ----
    hp1 = jnp.maximum(c1, _shift_rows(c1, 1))                # valid at even rows
    p1 = jnp.maximum(hp1[:, :162], hp1[:, 6:])               # valid at even-w lane groups

    # ---- conv2 (MXU): width taps, channel contraction and W-decompaction folded into W2T ----
    acc2 = jnp.zeros((rows, 160), f32)                       # lane = wo*16 + co
    for ki in range(5):
        acc2 = acc2 + jnp.dot(_shift_rows(p1, 2 * ki), w2_ref[ki],
                              preferred_element_type=f32)
    c2 = jnp.maximum(acc2 + b2_ref[...], 0.0)                # valid at rows 32n+2*ho

    # ---- maxpool2 (whole-tensor) ----
    hp2 = jnp.maximum(c2, _shift_rows(c2, 2))
    p2 = jnp.maximum(hp2[:, :144], hp2[:, 16:])              # valid rows 32n+4t, lanes (2j)*16+c

    # ---- fc1: row gather via 0/1 selection matmul; CHW flatten folded into Wf1 (padded to 128) ----
    y = jnp.zeros((nb, 128), f32)
    for t in range(5):
        rows_t = jnp.dot(sel_ref[t], p2, preferred_element_type=f32)       # (NB, 144)
        y = y + jnp.dot(rows_t, wf1_ref[t], preferred_element_type=f32)
    y = y + bf1_ref[...]

    # ---- fc2 / fc3 (spec module has no ReLU on fc layers) ----
    y = jnp.dot(y, wf2_ref[...], preferred_element_type=f32) + bf2_ref[...]
    y = jnp.dot(y, wf3_ref[...], preferred_element_type=f32) + bf3_ref[...]
    out_ref[...] = y


def _pack_params(params, nb):
    (c1w, c1b, c2w, c2b, f1w, f1b, f2w, f2b, f3w, f3b) = params

    # conv1 width-Toeplitz: W1T[ki, wi, w*6+co] = c1w[co, 0, ki, wi-w]
    p1 = np.zeros((5, 32, 28), np.float32)
    for kj in range(5):
        p1[kj, np.arange(28) + kj, np.arange(28)] = 1.0
    w1t = jnp.einsum('jvw,okj->kvwo', jnp.asarray(p1), c1w[:, 0, :, :]).reshape(5, 32, 168)
    b1t = jnp.tile(c1b, 28).reshape(1, 168)

    # conv2: W2T[ki, (2*(wo+kj))*6+ci, wo*16+co] = c2w[co, ci, ki, kj]  (zeros elsewhere)
    p2 = np.zeros((5, 27, 10), np.float32)
    for kj in range(5):
        for wo in range(10):
            p2[kj, 2 * (wo + kj), wo] = 1.0
    w2t = jnp.einsum('jru,ockj->krcuo', jnp.asarray(p2), c2w).reshape(5, 162, 160)
    b2t = jnp.tile(c2b, 10).reshape(1, 160)

    # fc1: Wf1[t, (2j)*16+c, k] = f1w[k, c*25 + t*5 + j], padded 120 -> 128 output lanes
    p3 = np.zeros((5, 9), np.float32)
    for j in range(5):
        p3[j, 2 * j] = 1.0
    f1r = f1w.reshape(120, 16, 5, 5)
    wf1 = jnp.einsum('jr,kctj->trck', jnp.asarray(p3), f1r).reshape(5, 144, 120)
    wf1 = jnp.pad(wf1, ((0, 0), (0, 0), (0, 8)))
    bf1 = jnp.pad(f1b, (0, 8)).reshape(1, 128)

    # fc2 / fc3 padded to MXU-friendly (128, 128) tiles
    wf2 = jnp.pad(f2w.T, ((0, 8), (0, 44)))
    bf2 = jnp.pad(f2b, (0, 44)).reshape(1, 128)
    wf3 = jnp.pad(f3w.T, ((0, 44), (0, 118)))
    bf3 = jnp.pad(f3b, (0, 118)).reshape(1, 128)

    # row-selection matrix: sel[t, n, 32n + 4t] = 1
    sel = np.zeros((5, nb, nb * 32), np.float32)
    for t in range(5):
        sel[t, np.arange(nb), 32 * np.arange(nb) + 4 * t] = 1.0

    return (w1t, b1t, w2t, b2t, jnp.asarray(sel), wf1, bf1, wf2, bf2, wf3, bf3)


def _rep(shape):
    nd = len(shape)
    return pl.BlockSpec(shape, lambda b, nd=nd: (0,) * nd)


def lenet_forward(x_nchw, params, block_n=8):
    n = x_nchw.shape[0]
    nb = block_n
    n_pad = ((n + nb - 1) // nb) * nb

    # glue: NCHW (C=1) -> one lane-dense (N*32, 32) row slab, zero-pad batch to a block multiple
    x2 = x_nchw.astype(jnp.float32).reshape(n * 32, 32)
    if n_pad != n:
        x2 = jnp.pad(x2, ((0, (n_pad - n) * 32), (0, 0)))

    (w1t, b1t, w2t, b2t, sel, wf1, bf1, wf2, bf2, wf3, bf3) = _pack_params(params, nb)

    out = pl.pallas_call(
        lenet_kernel,
        out_shape=jax.ShapeDtypeStruct((n_pad, 128), jnp.float32),
        grid=(n_pad // nb,),
        in_specs=[
            pl.BlockSpec((nb * 32, 32), lambda b: (b, 0)),   # x rows for this batch block
            _rep((5, 32, 168)), _rep((1, 168)),              # conv1 Toeplitz + bias
            _rep((5, 162, 160)), _rep((1, 160)),             # conv2 Toeplitz + bias
            _rep((5, nb, nb * 32)),                          # row-selection matrices
            _rep((5, 144, 128)), _rep((1, 128)),             # fc1 (folded flatten) + bias
            _rep((128, 128)), _rep((1, 128)),                # fc2 + bias
            _rep((128, 128)), _rep((1, 128)),                # fc3 + bias
        ],
        out_specs=pl.BlockSpec((nb, 128), lambda b: (b, 0)),
        compiler_params=pltpu.CompilerParams(dimension_semantics=("parallel",)),
    )(x2, w1t, b1t, w2t, b2t, sel, wf1, bf1, wf2, bf2, wf3, bf3)

    return out[:n, :10]


# Pure-JAX reference (mirrors the PyTorch module exactly) for a correctness check.
def reference_forward(x, params):
    (c1w, c1b, c2w, c2b, f1w, f1b, f2w, f2b, f3w, f3b) = params
    dn = ("NCHW", "OIHW", "NCHW")
    y = lax.conv_general_dilated(x, c1w, (1, 1), "VALID", dimension_numbers=dn,
                                 precision=lax.Precision.HIGHEST)
    y = jnp.maximum(y + c1b[None, :, None, None], 0.0)
    y = lax.reduce_window(y, -jnp.inf, lax.max, (1, 1, 2, 2), (1, 1, 2, 2), "VALID")
    y = lax.conv_general_dilated(y, c2w, (1, 1), "VALID", dimension_numbers=dn,
                                 precision=lax.Precision.HIGHEST)
    y = jnp.maximum(y + c2b[None, :, None, None], 0.0)
    y = lax.reduce_window(y, -jnp.inf, lax.max, (1, 1, 2, 2), (1, 1, 2, 2), "VALID")
    y = y.reshape(y.shape[0], -1)                                   # (N, 400), CHW order
    y = jnp.dot(y, f1w.T, precision=lax.Precision.HIGHEST) + f1b    # no relu (as in the module)
    y = jnp.dot(y, f2w.T, precision=lax.Precision.HIGHEST) + f2b
    y = jnp.dot(y, f3w.T, precision=lax.Precision.HIGHEST) + f3b
    return y


if __name__ == "__main__":
    key = jax.random.PRNGKey(0)
    ks = jax.random.split(key, 11)
    params = (
        0.1 * jax.random.normal(ks[0], (6, 1, 5, 5), jnp.float32),    # conv1.weight
        0.1 * jax.random.normal(ks[1], (6,), jnp.float32),            # conv1.bias
        0.1 * jax.random.normal(ks[2], (16, 6, 5, 5), jnp.float32),   # conv2.weight
        0.1 * jax.random.normal(ks[3], (16,), jnp.float32),           # conv2.bias
        0.1 * jax.random.normal(ks[4], (120, 400), jnp.float32),      # fc1.weight
        0.1 * jax.random.normal(ks[5], (120,), jnp.float32),          # fc1.bias
        0.1 * jax.random.normal(ks[6], (84, 120), jnp.float32),       # fc2.weight
        0.1 * jax.random.normal(ks[7], (84,), jnp.float32),           # fc2.bias
        0.1 * jax.random.normal(ks[8], (10, 84), jnp.float32),        # fc3.weight
        0.1 * jax.random.normal(ks[9], (10,), jnp.float32),           # fc3.bias
    )
    # Input in PyTorch NCHW convention: (batch=2, channels=1, 32, 32)
    x = jax.random.normal(ks[10], (2, 1, 32, 32), jnp.float32)

    out = jax.block_until_ready(lenet_forward(x, params))
    ref = jax.block_until_ready(reference_forward(x, params))

    assert out.shape == (2, 10), out.shape
    if not np.allclose(np.asarray(out), np.asarray(ref), atol=1e-2, rtol=1e-2):
        raise AssertionError("Pallas kernel output does not match plain-JAX reference")
    print("KERNEL_OK")
</pallas_src>

<mosaic_0001>
module attributes {stable_mosaic.version = 11 : i64} {
  func.func @lenet_kernel(%arg0: i32, %arg1: memref<256x32xf32, #tpu.memory_space<vmem>>, %arg2: memref<5x32x168xf32, #tpu.memory_space<vmem>>, %arg3: memref<1x168xf32, #tpu.memory_space<vmem>>, %arg4: memref<5x162x160xf32, #tpu.memory_space<vmem>>, %arg5: memref<1x160xf32, #tpu.memory_space<vmem>>, %arg6: memref<5x8x256xf32, #tpu.memory_space<vmem>>, %arg7: memref<5x144x128xf32, #tpu.memory_space<vmem>>, %arg8: memref<1x128xf32, #tpu.memory_space<vmem>>, %arg9: memref<128x128xf32, #tpu.memory_space<vmem>>, %arg10: memref<1x128xf32, #tpu.memory_space<vmem>>, %arg11: memref<128x128xf32, #tpu.memory_space<vmem>>, %arg12: memref<1x128xf32, #tpu.memory_space<vmem>>, %arg13: memref<8x128xf32, #tpu.memory_space<vmem>>) attributes {dimension_semantics = [#tpu.dimension_semantics<parallel>], iteration_bounds = array<i64: 1>, scalar_prefetch = 0 : i64, scratch_operands = 0 : i64, tpu.core_type = #tpu.core_type<tc>, window_params = [{transform_indices = @transform_0, window_bounds = array<i64: 256, 32>}, {pipeline_mode = #tpu.pipeline_mode<synchronous>, transform_indices = @transform_1, window_bounds = array<i64: 5, 32, 168>}, {pipeline_mode = #tpu.pipeline_mode<synchronous>, transform_indices = @transform_2, window_bounds = array<i64: 1, 168>}, {pipeline_mode = #tpu.pipeline_mode<synchronous>, transform_indices = @transform_3, window_bounds = array<i64: 5, 162, 160>}, {pipeline_mode = #tpu.pipeline_mode<synchronous>, transform_indices = @transform_4, window_bounds = array<i64: 1, 160>}, {pipeline_mode = #tpu.pipeline_mode<synchronous>, transform_indices = @transform_5, window_bounds = array<i64: 5, 8, 256>}, {pipeline_mode = #tpu.pipeline_mode<synchronous>, transform_indices = @transform_6, window_bounds = array<i64: 5, 144, 128>}, {pipeline_mode = #tpu.pipeline_mode<synchronous>, transform_indices = @transform_7, window_bounds = array<i64: 1, 128>}, {pipeline_mode = #tpu.pipeline_mode<synchronous>, transform_indices = @transform_8, window_bounds = array<i64: 128, 128>}, {pipeline_mode = #tpu.pipeline_mode<synchronous>, transform_indices = @transform_9, window_bounds = array<i64: 1, 128>}, {pipeline_mode = #tpu.pipeline_mode<synchronous>, transform_indices = @transform_10, window_bounds = array<i64: 128, 128>}, {pipeline_mode = #tpu.pipeline_mode<synchronous>, transform_indices = @transform_11, window_bounds = array<i64: 1, 128>}, {transform_indices = @transform_12, window_bounds = array<i64: 8, 128>}]} {
    %c0 = arith.constant 0 : index
    %c0_0 = arith.constant 0 : index
    %0 = vector.load %arg1[%c0, %c0_0] : memref<256x32xf32, #tpu.memory_space<vmem>>, vector<256x32xf32>
    %cst = arith.constant 0.000000e+00 : f32
    %1 = vector.broadcast %cst : f32 to vector<256x168xf32>
    %c0_1 = arith.constant 0 : index
    %c0_2 = arith.constant 0 : index
    %c0_3 = arith.constant 0 : index
    %2 = vector.load %arg2[%c0_1, %c0_2, %c0_3] : memref<5x32x168xf32, #tpu.memory_space<vmem>>, vector<1x32x168xf32>
    %3 = vector.shape_cast %2 : vector<1x32x168xf32> to vector<32x168xf32>
    %cst_4 = arith.constant dense<0.000000e+00> : vector<256x168xf32>
    %4 = tpu.matmul %0, %3, %cst_4 {dimension_numbers = #tpu.dot_dimension_numbers<[1], [0], [0], [1], [0, 0, 1, 1], [], []>} : vector<256x32xf32>, vector<32x168xf32>, vector<256x168xf32> -> vector<256x168xf32>
    %5 = arith.addf %1, %4 : vector<256x168xf32>
    %6 = vector.extract_strided_slice %0 {offsets = [1, 0], sizes = [255, 32], strides = [1, 1]} : vector<256x32xf32> to vector<255x32xf32>
    %7 = vector.extract_strided_slice %0 {offsets = [0, 0], sizes = [1, 32], strides = [1, 1]} : vector<256x32xf32> to vector<1x32xf32>
    %8 = tpu.concatenate %6, %7 in 0 : vector<255x32xf32>, vector<1x32xf32> -> vector<256x32xf32>
    %c1 = arith.constant 1 : index
    %c0_5 = arith.constant 0 : index
    %c0_6 = arith.constant 0 : index
    %9 = vector.load %arg2[%c1, %c0_5, %c0_6] : memref<5x32x168xf32, #tpu.memory_space<vmem>>, vector<1x32x168xf32>
    %10 = vector.shape_cast %9 : vector<1x32x168xf32> to vector<32x168xf32>
    %cst_7 = arith.constant dense<0.000000e+00> : vector<256x168xf32>
    %11 = tpu.matmul %8, %10, %cst_7 {dimension_numbers = #tpu.dot_dimension_numbers<[1], [0], [0], [1], [0, 0, 1, 1], [], []>} : vector<256x32xf32>, vector<32x168xf32>, vector<256x168xf32> -> vector<256x168xf32>
    %12 = arith.addf %5, %11 : vector<256x168xf32>
    %13 = vector.extract_strided_slice %0 {offsets = [2, 0], sizes = [254, 32], strides = [1, 1]} : vector<256x32xf32> to vector<254x32xf32>
    %14 = vector.extract_strided_slice %0 {offsets = [0, 0], sizes = [2, 32], strides = [1, 1]} : vector<256x32xf32> to vector<2x32xf32>
    %15 = tpu.concatenate %13, %14 in 0 : vector<254x32xf32>, vector<2x32xf32> -> vector<256x32xf32>
    %c2 = arith.constant 2 : index
    %c0_8 = arith.constant 0 : index
    %c0_9 = arith.constant 0 : index
    %16 = vector.load %arg2[%c2, %c0_8, %c0_9] : memref<5x32x168xf32, #tpu.memory_space<vmem>>, vector<1x32x168xf32>
    %17 = vector.shape_cast %16 : vector<1x32x168xf32> to vector<32x168xf32>
    %cst_10 = arith.constant dense<0.000000e+00> : vector<256x168xf32>
    %18 = tpu.matmul %15, %17, %cst_10 {dimension_numbers = #tpu.dot_dimension_numbers<[1], [0], [0], [1], [0, 0, 1, 1], [], []>} : vector<256x32xf32>, vector<32x168xf32>, vector<256x168xf32> -> vector<256x168xf32>
    %19 = arith.addf %12, %18 : vector<256x168xf32>
    %20 = vector.extract_strided_slice %0 {offsets = [3, 0], sizes = [253, 32], strides = [1, 1]} : vector<256x32xf32> to vector<253x32xf32>
    %21 = vector.extract_strided_slice %0 {offsets = [0, 0], sizes = [3, 32], strides = [1, 1]} : vector<256x32xf32> to vector<3x32xf32>
    %22 = tpu.concatenate %20, %21 in 0 : vector<253x32xf32>, vector<3x32xf32> -> vector<256x32xf32>
    %c3 = arith.constant 3 : index
    %c0_11 = arith.constant 0 : index
    %c0_12 = arith.constant 0 : index
    %23 = vector.load %arg2[%c3, %c0_11, %c0_12] : memref<5x32x168xf32, #tpu.memory_space<vmem>>, vector<1x32x168xf32>
    %24 = vector.shape_cast %23 : vector<1x32x168xf32> to vector<32x168xf32>
    %cst_13 = arith.constant dense<0.000000e+00> : vector<256x168xf32>
    %25 = tpu.matmul %22, %24, %cst_13 {dimension_numbers = #tpu.dot_dimension_numbers<[1], [0], [0], [1], [0, 0, 1, 1], [], []>} : vector<256x32xf32>, vector<32x168xf32>, vector<256x168xf32> -> vector<256x168xf32>
    %26 = arith.addf %19, %25 : vector<256x168xf32>
    %27 = vector.extract_strided_slice %0 {offsets = [4, 0], sizes = [252, 32], strides = [1, 1]} : vector<256x32xf32> to vector<252x32xf32>
    %28 = vector.extract_strided_slice %0 {offsets = [0, 0], sizes = [4, 32], strides = [1, 1]} : vector<256x32xf32> to vector<4x32xf32>
    %29 = tpu.concatenate %27, %28 in 0 : vector<252x32xf32>, vector<4x32xf32> -> vector<256x32xf32>
    %c4 = arith.constant 4 : index
    %c0_14 = arith.constant 0 : index
    %c0_15 = arith.constant 0 : index
    %30 = vector.load %arg2[%c4, %c0_14, %c0_15] : memref<5x32x168xf32, #tpu.memory_space<vmem>>, vector<1x32x168xf32>
    %31 = vector.shape_cast %30 : vector<1x32x168xf32> to vector<32x168xf32>
    %cst_16 = arith.constant dense<0.000000e+00> : vector<256x168xf32>
    %32 = tpu.matmul %29, %31, %cst_16 {dimension_numbers = #tpu.dot_dimension_numbers<[1], [0], [0], [1], [0, 0, 1, 1], [], []>} : vector<256x32xf32>, vector<32x168xf32>, vector<256x168xf32> -> vector<256x168xf32>
    %33 = arith.addf %26, %32 : vector<256x168xf32>
    %c0_17 = arith.constant 0 : index
    %c0_18 = arith.constant 0 : index
    %34 = vector.load %arg3[%c0_17, %c0_18] : memref<1x168xf32, #tpu.memory_space<vmem>>, vector<1x168xf32>
    %35 = vector.broadcast %34 : vector<1x168xf32> to vector<256x168xf32>
    %36 = arith.addf %33, %35 : vector<256x168xf32>
    %cst_19 = arith.constant 0.000000e+00 : f32
    %37 = vector.broadcast %cst_19 : f32 to vector<256x168xf32>
    %38 = arith.maximumf %36, %37 : vector<256x168xf32>
    %39 = vector.extract_strided_slice %38 {offsets = [1, 0], sizes = [255, 168], strides = [1, 1]} : vector<256x168xf32> to vector<255x168xf32>
    %40 = vector.extract_strided_slice %38 {offsets = [0, 0], sizes = [1, 168], strides = [1, 1]} : vector<256x168xf32> to vector<1x168xf32>
    %41 = tpu.concatenate %39, %40 in 0 : vector<255x168xf32>, vector<1x168xf32> -> vector<256x168xf32>
    %42 = arith.maximumf %38, %41 : vector<256x168xf32>
    %43 = vector.extract_strided_slice %42 {offsets = [0, 0], sizes = [256, 162], strides = [1, 1]} : vector<256x168xf32> to vector<256x162xf32>
    %44 = vector.extract_strided_slice %42 {offsets = [0, 6], sizes = [256, 162], strides = [1, 1]} : vector<256x168xf32> to vector<256x162xf32>
    %45 = arith.maximumf %43, %44 : vector<256x162xf32>
    %cst_20 = arith.constant 0.000000e+00 : f32
    %46 = vector.broadcast %cst_20 : f32 to vector<256x160xf32>
    %c0_21 = arith.constant 0 : index
    %c0_22 = arith.constant 0 : index
    %c0_23 = arith.constant 0 : index
    %47 = vector.load %arg4[%c0_21, %c0_22, %c0_23] : memref<5x162x160xf32, #tpu.memory_space<vmem>>, vector<1x162x160xf32>
    %48 = vector.shape_cast %47 : vector<1x162x160xf32> to vector<162x160xf32>
    %cst_24 = arith.constant dense<0.000000e+00> : vector<256x160xf32>
    %49 = tpu.matmul %45, %48, %cst_24 {dimension_numbers = #tpu.dot_dimension_numbers<[1], [0], [0], [1], [0, 0, 1, 1], [], []>} : vector<256x162xf32>, vector<162x160xf32>, vector<256x160xf32> -> vector<256x160xf32>
    %50 = arith.addf %46, %49 : vector<256x160xf32>
    %51 = vector.extract_strided_slice %45 {offsets = [2, 0], sizes = [254, 162], strides = [1, 1]} : vector<256x162xf32> to vector<254x162xf32>
    %52 = vector.extract_strided_slice %45 {offsets = [0, 0], sizes = [2, 162], strides = [1, 1]} : vector<256x162xf32> to vector<2x162xf32>
    %53 = tpu.concatenate %51, %52 in 0 : vector<254x162xf32>, vector<2x162xf32> -> vector<256x162xf32>
    %c1_25 = arith.constant 1 : index
    %c0_26 = arith.constant 0 : index
    %c0_27 = arith.constant 0 : index
    %54 = vector.load %arg4[%c1_25, %c0_26, %c0_27] : memref<5x162x160xf32, #tpu.memory_space<vmem>>, vector<1x162x160xf32>
    %55 = vector.shape_cast %54 : vector<1x162x160xf32> to vector<162x160xf32>
    %cst_28 = arith.constant dense<0.000000e+00> : vector<256x160xf32>
    %56 = tpu.matmul %53, %55, %cst_28 {dimension_numbers = #tpu.dot_dimension_numbers<[1], [0], [0], [1], [0, 0, 1, 1], [], []>} : vector<256x162xf32>, vector<162x160xf32>, vector<256x160xf32> -> vector<256x160xf32>
    %57 = arith.addf %50, %56 : vector<256x160xf32>
    %58 = vector.extract_strided_slice %45 {offsets = [4, 0], sizes = [252, 162], strides = [1, 1]} : vector<256x162xf32> to vector<252x162xf32>
    %59 = vector.extract_strided_slice %45 {offsets = [0, 0], sizes = [4, 162], strides = [1, 1]} : vector<256x162xf32> to vector<4x162xf32>
    %60 = tpu.concatenate %58, %59 in 0 : vector<252x162xf32>, vector<4x162xf32> -> vector<256x162xf32>
    %c2_29 = arith.constant 2 : index
    %c0_30 = arith.constant 0 : index
    %c0_31 = arith.constant 0 : index
    %61 = vector.load %arg4[%c2_29, %c0_30, %c0_31] : memref<5x162x160xf32, #tpu.memory_space<vmem>>, vector<1x162x160xf32>
    %62 = vector.shape_cast %61 : vector<1x162x160xf32> to vector<162x160xf32>
    %cst_32 = arith.constant dense<0.000000e+00> : vector<256x160xf32>
    %63 = tpu.matmul %60, %62, %cst_32 {dimension_numbers = #tpu.dot_dimension_numbers<[1], [0], [0], [1], [0, 0, 1, 1], [], []>} : vector<256x162xf32>, vector<162x160xf32>, vector<256x160xf32> -> vector<256x160xf32>
    %64 = arith.addf %57, %63 : vector<256x160xf32>
    %65 = vector.extract_strided_slice %45 {offsets = [6, 0], sizes = [250, 162], strides = [1, 1]} : vector<256x162xf32> to vector<250x162xf32>
    %66 = vector.extract_strided_slice %45 {offsets = [0, 0], sizes = [6, 162], strides = [1, 1]} : vector<256x162xf32> to vector<6x162xf32>
    %67 = tpu.concatenate %65, %66 in 0 : vector<250x162xf32>, vector<6x162xf32> -> vector<256x162xf32>
    %c3_33 = arith.constant 3 : index
    %c0_34 = arith.constant 0 : index
    %c0_35 = arith.constant 0 : index
    %68 = vector.load %arg4[%c3_33, %c0_34, %c0_35] : memref<5x162x160xf32, #tpu.memory_space<vmem>>, vector<1x162x160xf32>
    %69 = vector.shape_cast %68 : vector<1x162x160xf32> to vector<162x160xf32>
    %cst_36 = arith.constant dense<0.000000e+00> : vector<256x160xf32>
    %70 = tpu.matmul %67, %69, %cst_36 {dimension_numbers = #tpu.dot_dimension_numbers<[1], [0], [0], [1], [0, 0, 1, 1], [], []>} : vector<256x162xf32>, vector<162x160xf32>, vector<256x160xf32> -> vector<256x160xf32>
    %71 = arith.addf %64, %70 : vector<256x160xf32>
    %72 = vector.extract_strided_slice %45 {offsets = [8, 0], sizes = [248, 162], strides = [1, 1]} : vector<256x162xf32> to vector<248x162xf32>
    %73 = vector.extract_strided_slice %45 {offsets = [0, 0], sizes = [8, 162], strides = [1, 1]} : vector<256x162xf32> to vector<8x162xf32>
    %74 = tpu.concatenate %72, %73 in 0 : vector<248x162xf32>, vector<8x162xf32> -> vector<256x162xf32>
    %c4_37 = arith.constant 4 : index
    %c0_38 = arith.constant 0 : index
    %c0_39 = arith.constant 0 : index
    %75 = vector.load %arg4[%c4_37, %c0_38, %c0_39] : memref<5x162x160xf32, #tpu.memory_space<vmem>>, vector<1x162x160xf32>
    %76 = vector.shape_cast %75 : vector<1x162x160xf32> to vector<162x160xf32>
    %cst_40 = arith.constant dense<0.000000e+00> : vector<256x160xf32>
    %77 = tpu.matmul %74, %76, %cst_40 {dimension_numbers = #tpu.dot_dimension_numbers<[1], [0], [0], [1], [0, 0, 1, 1], [], []>} : vector<256x162xf32>, vector<162x160xf32>, vector<256x160xf32> -> vector<256x160xf32>
    %78 = arith.addf %71, %77 : vector<256x160xf32>
    %c0_41 = arith.constant 0 : index
    %c0_42 = arith.constant 0 : index
    %79 = vector.load %arg5[%c0_41, %c0_42] : memref<1x160xf32, #tpu.memory_space<vmem>>, vector<1x160xf32>
    %80 = vector.broadcast %79 : vector<1x160xf32> to vector<256x160xf32>
    %81 = arith.addf %78, %80 : vector<256x160xf32>
    %cst_43 = arith.constant 0.000000e+00 : f32
    %82 = vector.broadcast %cst_43 : f32 to vector<256x160xf32>
    %83 = arith.maximumf %81, %82 : vector<256x160xf32>
    %84 = vector.extract_strided_slice %83 {offsets = [2, 0], sizes = [254, 160], strides = [1, 1]} : vector<256x160xf32> to vector<254x160xf32>
    %85 = vector.extract_strided_slice %83 {offsets = [0, 0], sizes = [2, 160], strides = [1, 1]} : vector<256x160xf32> to vector<2x160xf32>
    %86 = tpu.concatenate %84, %85 in 0 : vector<254x160xf32>, vector<2x160xf32> -> vector<256x160xf32>
    %87 = arith.maximumf %83, %86 : vector<256x160xf32>
    %88 = vector.extract_strided_slice %87 {offsets = [0, 0], sizes = [256, 144], strides = [1, 1]} : vector<256x160xf32> to vector<256x144xf32>
    %89 = vector.extract_strided_slice %87 {offsets = [0, 16], sizes = [256, 144], strides = [1, 1]} : vector<256x160xf32> to vector<256x144xf32>
    %90 = arith.maximumf %88, %89 : vector<256x144xf32>
    %cst_44 = arith.constant 0.000000e+00 : f32
    %91 = vector.broadcast %cst_44 : f32 to vector<8x128xf32>
    %c0_45 = arith.constant 0 : index
    %c0_46 = arith.constant 0 : index
    %c0_47 = arith.constant 0 : index
    %92 = vector.load %arg6[%c0_45, %c0_46, %c0_47] : memref<5x8x256xf32, #tpu.memory_space<vmem>>, vector<1x8x256xf32>
    %93 = vector.shape_cast %92 : vector<1x8x256xf32> to vector<8x256xf32>
    %cst_48 = arith.constant dense<0.000000e+00> : vector<8x144xf32>
    %94 = tpu.matmul %93, %90, %cst_48 {dimension_numbers = #tpu.dot_dimension_numbers<[1], [0], [0], [1], [0, 0, 1, 1], [], []>} : vector<8x256xf32>, vector<256x144xf32>, vector<8x144xf32> -> vector<8x144xf32>
    %c0_49 = arith.constant 0 : index
    %c0_50 = arith.constant 0 : index
    %c0_51 = arith.constant 0 : index
    %95 = vector.load %arg7[%c0_49, %c0_50, %c0_51] : memref<5x144x128xf32, #tpu.memory_space<vmem>>, vector<1x144x128xf32>
    %96 = vector.shape_cast %95 : vector<1x144x128xf32> to vector<144x128xf32>
    %cst_52 = arith.constant dense<0.000000e+00> : vector<8x128xf32>
    %97 = tpu.matmul %94, %96, %cst_52 {dimension_numbers = #tpu.dot_dimension_numbers<[1], [0], [0], [1], [0, 0, 1, 1], [], []>} : vector<8x144xf32>, vector<144x128xf32>, vector<8x128xf32> -> vector<8x128xf32>
    %98 = arith.addf %91, %97 : vector<8x128xf32>
    %c1_53 = arith.constant 1 : index
    %c0_54 = arith.constant 0 : index
    %c0_55 = arith.constant 0 : index
    %99 = vector.load %arg6[%c1_53, %c0_54, %c0_55] : memref<5x8x256xf32, #tpu.memory_space<vmem>>, vector<1x8x256xf32>
    %100 = vector.shape_cast %99 : vector<1x8x256xf32> to vector<8x256xf32>
    %cst_56 = arith.constant dense<0.000000e+00> : vector<8x144xf32>
    %101 = tpu.matmul %100, %90, %cst_56 {dimension_numbers = #tpu.dot_dimension_numbers<[1], [0], [0], [1], [0, 0, 1, 1], [], []>} : vector<8x256xf32>, vector<256x144xf32>, vector<8x144xf32> -> vector<8x144xf32>
    %c1_57 = arith.constant 1 : index
    %c0_58 = arith.constant 0 : index
    %c0_59 = arith.constant 0 : index
    %102 = vector.load %arg7[%c1_57, %c0_58, %c0_59] : memref<5x144x128xf32, #tpu.memory_space<vmem>>, vector<1x144x128xf32>
    %103 = vector.shape_cast %102 : vector<1x144x128xf32> to vector<144x128xf32>
    %cst_60 = arith.constant dense<0.000000e+00> : vector<8x128xf32>
    %104 = tpu.matmul %101, %103, %cst_60 {dimension_numbers = #tpu.dot_dimension_numbers<[1], [0], [0], [1], [0, 0, 1, 1], [], []>} : vector<8x144xf32>, vector<144x128xf32>, vector<8x128xf32> -> vector<8x128xf32>
    %105 = arith.addf %98, %104 : vector<8x128xf32>
    %c2_61 = arith.constant 2 : index
    %c0_62 = arith.constant 0 : index
    %c0_63 = arith.constant 0 : index
    %106 = vector.load %arg6[%c2_61, %c0_62, %c0_63] : memref<5x8x256xf32, #tpu.memory_space<vmem>>, vector<1x8x256xf32>
    %107 = vector.shape_cast %106 : vector<1x8x256xf32> to vector<8x256xf32>
    %cst_64 = arith.constant dense<0.000000e+00> : vector<8x144xf32>
    %108 = tpu.matmul %107, %90, %cst_64 {dimension_numbers = #tpu.dot_dimension_numbers<[1], [0], [0], [1], [0, 0, 1, 1], [], []>} : vector<8x256xf32>, vector<256x144xf32>, vector<8x144xf32> -> vector<8x144xf32>
    %c2_65 = arith.constant 2 : index
    %c0_66 = arith.constant 0 : index
    %c0_67 = arith.constant 0 : index
    %109 = vector.load %arg7[%c2_65, %c0_66, %c0_67] : memref<5x144x128xf32, #tpu.memory_space<vmem>>, vector<1x144x128xf32>
    %110 = vector.shape_cast %109 : vector<1x144x128xf32> to vector<144x128xf32>
    %cst_68 = arith.constant dense<0.000000e+00> : vector<8x128xf32>
    %111 = tpu.matmul %108, %110, %cst_68 {dimension_numbers = #tpu.dot_dimension_numbers<[1], [0], [0], [1], [0, 0, 1, 1], [], []>} : vector<8x144xf32>, vector<144x128xf32>, vector<8x128xf32> -> vector<8x128xf32>
    %112 = arith.addf %105, %111 : vector<8x128xf32>
    %c3_69 = arith.constant 3 : index
    %c0_70 = arith.constant 0 : index
    %c0_71 = arith.constant 0 : index
    %113 = vector.load %arg6[%c3_69, %c0_70, %c0_71] : memref<5x8x256xf32, #tpu.memory_space<vmem>>, vector<1x8x256xf32>
    %114 = vector.shape_cast %113 : vector<1x8x256xf32> to vector<8x256xf32>
    %cst_72 = arith.constant dense<0.000000e+00> : vector<8x144xf32>
    %115 = tpu.matmul %114, %90, %cst_72 {dimension_numbers = #tpu.dot_dimension_numbers<[1], [0], [0], [1], [0, 0, 1, 1], [], []>} : vector<8x256xf32>, vector<256x144xf32>, vector<8x144xf32> -> vector<8x144xf32>
    %c3_73 = arith.constant 3 : index
    %c0_74 = arith.constant 0 : index
    %c0_75 = arith.constant 0 : index
    %116 = vector.load %arg7[%c3_73, %c0_74, %c0_75] : memref<5x144x128xf32, #tpu.memory_space<vmem>>, vector<1x144x128xf32>
    %117 = vector.shape_cast %116 : vector<1x144x128xf32> to vector<144x128xf32>
    %cst_76 = arith.constant dense<0.000000e+00> : vector<8x128xf32>
    %118 = tpu.matmul %115, %117, %cst_76 {dimension_numbers = #tpu.dot_dimension_numbers<[1], [0], [0], [1], [0, 0, 1, 1], [], []>} : vector<8x144xf32>, vector<144x128xf32>, vector<8x128xf32> -> vector<8x128xf32>
    %119 = arith.addf %112, %118 : vector<8x128xf32>
    %c4_77 = arith.constant 4 : index
    %c0_78 = arith.constant 0 : index
    %c0_79 = arith.constant 0 : index
    %120 = vector.load %arg6[%c4_77, %c0_78, %c0_79] : memref<5x8x256xf32, #tpu.memory_space<vmem>>, vector<1x8x256xf32>
    %121 = vector.shape_cast %120 : vector<1x8x256xf32> to vector<8x256xf32>
    %cst_80 = arith.constant dense<0.000000e+00> : vector<8x144xf32>
    %122 = tpu.matmul %121, %90, %cst_80 {dimension_numbers = #tpu.dot_dimension_numbers<[1], [0], [0], [1], [0, 0, 1, 1], [], []>} : vector<8x256xf32>, vector<256x144xf32>, vector<8x144xf32> -> vector<8x144xf32>
    %c4_81 = arith.constant 4 : index
    %c0_82 = arith.constant 0 : index
    %c0_83 = arith.constant 0 : index
    %123 = vector.load %arg7[%c4_81, %c0_82, %c0_83] : memref<5x144x128xf32, #tpu.memory_space<vmem>>, vector<1x144x128xf32>
    %124 = vector.shape_cast %123 : vector<1x144x128xf32> to vector<144x128xf32>
    %cst_84 = arith.constant dense<0.000000e+00> : vector<8x128xf32>
    %125 = tpu.matmul %122, %124, %cst_84 {dimension_numbers = #tpu.dot_dimension_numbers<[1], [0], [0], [1], [0, 0, 1, 1], [], []>} : vector<8x144xf32>, vector<144x128xf32>, vector<8x128xf32> -> vector<8x128xf32>
    %126 = arith.addf %119, %125 : vector<8x128xf32>
    %c0_85 = arith.constant 0 : index
    %c0_86 = arith.constant 0 : index
    %127 = vector.load %arg8[%c0_85, %c0_86] : memref<1x128xf32, #tpu.memory_space<vmem>>, vector<1x128xf32>
    %128 = vector.broadcast %127 : vector<1x128xf32> to vector<8x128xf32>
    %129 = arith.addf %126, %128 : vector<8x128xf32>
    %c0_87 = arith.constant 0 : index
    %c0_88 = arith.constant 0 : index
    %130 = vector.load %arg9[%c0_87, %c0_88] : memref<128x128xf32, #tpu.memory_space<vmem>>, vector<128x128xf32>
    %cst_89 = arith.constant dense<0.000000e+00> : vector<8x128xf32>
    %131 = tpu.matmul %129, %130, %cst_89 {dimension_numbers = #tpu.dot_dimension_numbers<[1], [0], [0], [1], [0, 0, 1, 1], [], []>} : vector<8x128xf32>, vector<128x128xf32>, vector<8x128xf32> -> vector<8x128xf32>
    %c0_90 = arith.constant 0 : index
    %c0_91 = arith.constant 0 : index
    %132 = vector.load %arg10[%c0_90, %c0_91] : memref<1x128xf32, #tpu.memory_space<vmem>>, vector<1x128xf32>
    %133 = vector.broadcast %132 : vector<1x128xf32> to vector<8x128xf32>
    %134 = arith.addf %131, %133 : vector<8x128xf32>
    %c0_92 = arith.constant 0 : index
    %c0_93 = arith.constant 0 : index
    %135 = vector.load %arg11[%c0_92, %c0_93] : memref<128x128xf32, #tpu.memory_space<vmem>>, vector<128x128xf32>
    %cst_94 = arith.constant dense<0.000000e+00> : vector<8x128xf32>
    %136 = tpu.matmul %134, %135, %cst_94 {dimension_numbers = #tpu.dot_dimension_numbers<[1], [0], [0], [1], [0, 0, 1, 1], [], []>} : vector<8x128xf32>, vector<128x128xf32>, vector<8x128xf32> -> vector<8x128xf32>
    %c0_95 = arith.constant 0 : index
    %c0_96 = arith.constant 0 : index
    %137 = vector.load %arg12[%c0_95, %c0_96] : memref<1x128xf32, #tpu.memory_space<vmem>>, vector<1x128xf32>
    %138 = vector.broadcast %137 : vector<1x128xf32> to vector<8x128xf32>
    %139 = arith.addf %136, %138 : vector<8x128xf32>
    %c0_97 = arith.constant 0 : index
    %c0_98 = arith.constant 0 : index
    %140 = vector.load %arg13[%c0_97, %c0_98] : memref<8x128xf32, #tpu.memory_space<vmem>>, vector<8x128xf32>
    tpu.vector_store %arg13[%c0_97, %c0_98], %139 {strides = array<i32>} : memref<8x128xf32, #tpu.memory_space<vmem>>, vector<8x128xf32>,
    return
  }
  func.func @transform_0(%arg0: i32) -> (i32, i32) {
    %c0_i32 = arith.constant 0 : i32
    %c0_i32_0 = arith.constant 0 : i32
    return %arg0, %c0_i32 : i32, i32
  }
  func.func @transform_1(%arg0: i32) -> (i32, i32, i32) {
    %c0_i32 = arith.constant 0 : i32
    %c0_i32_0 = arith.constant 0 : i32
    %c0_i32_1 = arith.constant 0 : i32
    %c0_i32_2 = arith.constant 0 : i32
    return %c0_i32, %c0_i32_0, %c0_i32_1 : i32, i32, i32
  }
  func.func @transform_2(%arg0: i32) -> (i32, i32) {
    %c0_i32 = arith.constant 0 : i32
    %c0_i32_0 = arith.constant 0 : i32
    %c0_i32_1 = arith.constant 0 : i32
    return %c0_i32, %c0_i32_0 : i32, i32
  }
  func.func @transform_3(%arg0: i32) -> (i32, i32, i32) {
    %c0_i32 = arith.constant 0 : i32
    %c0_i32_0 = arith.constant 0 : i32
    %c0_i32_1 = arith.constant 0 : i32
    %c0_i32_2 = arith.constant 0 : i32
    return %c0_i32, %c0_i32_0, %c0_i32_1 : i32, i32, i32
  }
  func.func @transform_4(%arg0: i32) -> (i32, i32) {
    %c0_i32 = arith.constant 0 : i32
    %c0_i32_0 = arith.constant 0 : i32
    %c0_i32_1 = arith.constant 0 : i32
    return %c0_i32, %c0_i32_0 : i32, i32
  }
  func.func @transform_5(%arg0: i32) -> (i32, i32, i32) {
    %c0_i32 = arith.constant 0 : i32
    %c0_i32_0 = arith.constant 0 : i32
    %c0_i32_1 = arith.constant 0 : i32
    %c0_i32_2 = arith.constant 0 : i32
    return %c0_i32, %c0_i32_0, %c0_i32_1 : i32, i32, i32
  }
  func.func @transform_6(%arg0: i32) -> (i32, i32, i32) {
    %c0_i32 = arith.constant 0 : i32
    %c0_i32_0 = arith.constant 0 : i32
    %c0_i32_1 = arith.constant 0 : i32
    %c0_i32_2 = arith.constant 0 : i32
    return %c0_i32, %c0_i32_0, %c0_i32_1 : i32, i32, i32
  }
  func.func @transform_7(%arg0: i32) -> (i32, i32) {
    %c0_i32 = arith.constant 0 : i32
    %c0_i32_0 = arith.constant 0 : i32
    %c0_i32_1 = arith.constant 0 : i32
    return %c0_i32, %c0_i32_0 : i32, i32
  }
  func.func @transform_8(%arg0: i32) -> (i32, i32) {
    %c0_i32 = arith.constant 0 : i32
    %c0_i32_0 = arith.constant 0 : i32
    %c0_i32_1 = arith.constant 0 : i32
    return %c0_i32, %c0_i32_0 : i32, i32
  }
  func.func @transform_9(%arg0: i32) -> (i32, i32) {
    %c0_i32 = arith.constant 0 : i32
    %c0_i32_0 = arith.constant 0 : i32
    %c0_i32_1 = arith.constant 0 : i32
    return %c0_i32, %c0_i32_0 : i32, i32
  }
  func.func @transform_10(%arg0: i32) -> (i32, i32) {
    %c0_i32 = arith.constant 0 : i32
    %c0_i32_0 = arith.constant 0 : i32
    %c0_i32_1 = arith.constant 0 : i32
    return %c0_i32, %c0_i32_0 : i32, i32
  }
  func.func @transform_11(%arg0: i32) -> (i32, i32) {
    %c0_i32 = arith.constant 0 : i32
    %c0_i32_0 = arith.constant 0 : i32
    %c0_i32_1 = arith.constant 0 : i32
    return %c0_i32, %c0_i32_0 : i32, i32
  }
  func.func @transform_12(%arg0: i32) -> (i32, i32) {
    %c0_i32 = arith.constant 0 : i32
    %c0_i32_0 = arith.constant 0 : i32
    return %arg0, %c0_i32 : i32, i32
  }
}

</mosaic_0001>

<llo_original>
// kernel: tpu_custom_call.1
$region0: #{tpu_custom_call.1}
  #allocation0 [shape = 'u32[]', space=smem, size = 0x4, offset = 0x4, fixed_abs, tag = 'smem constant byte address 0x4 - core index']
  #allocation1 [shape = 'u32[144,128]{1,0:T(1,128)}', space=vmem, size = 0x12000, scoped, tag = 'internal scratch']
  %s0 = inlined_call_operand.vmem [shape: f32[256,32], index: 0, kind: input, shape index: {}]
  %s1 = inlined_call_operand.vmem [shape: f32[5,32,168], index: 1, kind: input, shape index: {}]
  %s2 = inlined_call_operand.vmem [shape: f32[1,168], index: 2, kind: input, shape index: {}]
  %s3 = inlined_call_operand.vmem [shape: f32[5,162,160], index: 3, kind: input, shape index: {}]
  %s4 = inlined_call_operand.vmem [shape: f32[1,160], index: 4, kind: input, shape index: {}]
  %s5 = inlined_call_operand.vmem [shape: f32[5,8,256], index: 5, kind: input, shape index: {}]
  %s6 = inlined_call_operand.vmem [shape: f32[5,144,128], index: 6, kind: input, shape index: {}]
  %s7 = inlined_call_operand.vmem [shape: f32[1,128], index: 7, kind: input, shape index: {}]
  %s8 = inlined_call_operand.vmem [shape: f32[128,128], index: 8, kind: input, shape index: {}]
  %s9 = inlined_call_operand.vmem [shape: f32[1,128], index: 9, kind: input, shape index: {}]
  %s10 = inlined_call_operand.vmem [shape: f32[128,128], index: 10, kind: input, shape index: {}]
  %s11 = inlined_call_operand.vmem [shape: f32[1,128], index: 11, kind: input, shape index: {}]
  %s12 = inlined_call_operand.hbm [shape: f32[8,128], index: 12, kind: output, shape index: {}]
  %s13 = sld [smem:[#allocation0]]
  $region58: #{tpu_custom_call.1} parent=0
    _
  %s15 = ssub.s32 1, %s13
  %s16 = scalar_select 0, %s15, %s13
  $region1: #{tpu_custom_call.1} parent=0
    #allocation2 [shape = 'u8[4096]{0}', space=vmem, size = 0x1000, scoped, tag = 'output window, operand 0, single buffered']
    #allocation3 [shape = 's32[1]{0}', space=sflag, size = 0x4, scoped, tag = 'scoped memory for tpu_custom_call.1']
    %17 = vsyncpa [#allocation3], 0
    // Predicated region
    $region2: #{tpu_custom_call.1} parent=1 // pred_check
      _
    $region3: #{tpu_custom_call.1} parent=1 // pred_check_branch
      %19 = sbr.rel (0) target = $region5
    $region4: #{tpu_custom_call.1} parent=1 // pred_region
      _
    $region5: #{tpu_custom_call.1} parent=1 // pred_fallthru
      _
    // Predicated region
    $region6: #{tpu_custom_call.1} parent=1 // pred_check
      _
    $region7: #{tpu_custom_call.1} parent=1 // pred_check_branch
      %21 = sbr.rel (0) target = $region9
    $region8: #{tpu_custom_call.1} parent=1 // pred_region
      _
    $region9: #{tpu_custom_call.1} parent=1 // pred_fallthru
      _
    // Predicated region
    $region10: #{tpu_custom_call.1} parent=1 // pred_check
      _
    $region11: #{tpu_custom_call.1} parent=1 // pred_check_branch
      %23 = sbr.rel (0) target = $region13
    $region12: #{tpu_custom_call.1} parent=1 // pred_region
      _
    $region13: #{tpu_custom_call.1} parent=1 // pred_fallthru
      _
    // Predicated region
    $region14: #{tpu_custom_call.1} parent=1 // pred_check
      _
    $region15: #{tpu_custom_call.1} parent=1 // pred_check_branch
      %25 = sbr.rel (0) target = $region17
    $region16: #{tpu_custom_call.1} parent=1 // pred_region
      _
    $region17: #{tpu_custom_call.1} parent=1 // pred_fallthru
      _
    // Predicated region
    $region18: #{tpu_custom_call.1} parent=1 // pred_check
      _
    $region19: #{tpu_custom_call.1} parent=1 // pred_check_branch
      %27 = sbr.rel (0) target = $region21
    $region20: #{tpu_custom_call.1} parent=1 // pred_region
      _
    $region21: #{tpu_custom_call.1} parent=1 // pred_fallthru
      _
    // Predicated region
    $region22: #{tpu_custom_call.1} parent=1 // pred_check
      _
    $region23: #{tpu_custom_call.1} parent=1 // pred_check_branch
      %29 = sbr.rel (0) target = $region25
    $region24: #{tpu_custom_call.1} parent=1 // pred_region
      _
    $region25: #{tpu_custom_call.1} parent=1 // pred_fallthru
      _
    // Predicated region
    $region26: #{tpu_custom_call.1} parent=1 // pred_check
      _
    $region27: #{tpu_custom_call.1} parent=1 // pred_check_branch
      %31 = sbr.rel (0) target = $region29
    $region28: #{tpu_custom_call.1} parent=1 // pred_region
      _
    $region29: #{tpu_custom_call.1} parent=1 // pred_fallthru
      _
    // Predicated region
    $region30: #{tpu_custom_call.1} parent=1 // pred_check
      _
    $region31: #{tpu_custom_call.1} parent=1 // pred_check_branch
      %33 = sbr.rel (0) target = $region33
    $region32: #{tpu_custom_call.1} parent=1 // pred_region
      _
    $region33: #{tpu_custom_call.1} parent=1 // pred_fallthru
      _
    // Predicated region
    $region34: #{tpu_custom_call.1} parent=1 // pred_check
      _
    $region35: #{tpu_custom_call.1} parent=1 // pred_check_branch
      %35 = sbr.rel (0) target = $region37
    $region36: #{tpu_custom_call.1} parent=1 // pred_region
      _
    $region37: #{tpu_custom_call.1} parent=1 // pred_fallthru
      _
    // Predicated region
    $region38: #{tpu_custom_call.1} parent=1 // pred_check
      _
    $region39: #{tpu_custom_call.1} parent=1 // pred_check_branch
      %37 = sbr.rel (0) target = $region41
    $region40: #{tpu_custom_call.1} parent=1 // pred_region
      _
    $region41: #{tpu_custom_call.1} parent=1 // pred_fallthru
      _
    // Predicated region
    $region42: #{tpu_custom_call.1} parent=1 // pred_check
      _
    $region43: #{tpu_custom_call.1} parent=1 // pred_check_branch
      %39 = sbr.rel (0) target = $region45
    $region44: #{tpu_custom_call.1} parent=1 // pred_region
      _
    $region45: #{tpu_custom_call.1} parent=1 // pred_fallthru
      _
    // Predicated region
    $region46: #{tpu_custom_call.1} parent=1 // pred_check
      _
    $region47: #{tpu_custom_call.1} parent=1 // pred_check_branch
      %41 = sbr.rel (0) target = $region49
    $region48: #{tpu_custom_call.1} parent=1 // pred_region
      _
    $region49: #{tpu_custom_call.1} parent=1 // pred_fallthru
      _
    %v42 = vld [vmem:[%s0] sm:$0xff]
    %v43 = vld [vmem:[%s0 + $0x8] sm:$0xff]
    %v44 = vld [vmem:[%s0 + $0x10] sm:$0xff]
    %v45 = vld [vmem:[%s0 + $0x18] sm:$0xff]
    %v46 = vld [vmem:[%s0 + $0x20] sm:$0xff]
    %v47 = vld [vmem:[%s0 + $0x28] sm:$0xff]
    %v48 = vld [vmem:[%s0 + $0x30] sm:$0xff]
    %v49 = vld [vmem:[%s0 + $0x38] sm:$0xff]
    %v50 = vld [vmem:[%s0 + $0x40] sm:$0xff]
    %v51 = vld [vmem:[%s0 + $0x48] sm:$0xff]
    %v52 = vld [vmem:[%s0 + $0x50] sm:$0xff]
    %v53 = vld [vmem:[%s0 + $0x58] sm:$0xff]
    %v54 = vld [vmem:[%s0 + $0x60] sm:$0xff]
    %v55 = vld [vmem:[%s0 + $0x68] sm:$0xff]
    %v56 = vld [vmem:[%s0 + $0x70] sm:$0xff]
    %v57 = vld [vmem:[%s0 + $0x78] sm:$0xff]
    %v58 = vld [vmem:[%s0 + $0x80] sm:$0xff]
    %v59 = vld [vmem:[%s0 + $0x88] sm:$0xff]
    %v60 = vld [vmem:[%s0 + $0x90] sm:$0xff]
    %v61 = vld [vmem:[%s0 + $0x98] sm:$0xff]
    %v62 = vld [vmem:[%s0 + $0xa0] sm:$0xff]
    %v63 = vld [vmem:[%s0 + $0xa8] sm:$0xff]
    %v64 = vld [vmem:[%s0 + $0xb0] sm:$0xff]
    %v65 = vld [vmem:[%s0 + $0xb8] sm:$0xff]
    %v66 = vld [vmem:[%s0 + $0xc0] sm:$0xff]
    %v67 = vld [vmem:[%s0 + $0xc8] sm:$0xff]
    %v68 = vld [vmem:[%s0 + $0xd0] sm:$0xff]
    %v69 = vld [vmem:[%s0 + $0xd8] sm:$0xff]
    %v70 = vld [vmem:[%s0 + $0xe0] sm:$0xff]
    %v71 = vld [vmem:[%s0 + $0xe8] sm:$0xff]
    %v72 = vld [vmem:[%s0 + $0xf0] sm:$0xff]
    %v73 = vld [vmem:[%s0 + $0xf8] sm:$0xff]
    %v74 = vld [vmem:[%s1] sm:$0xff]
    %v75 = vld [vmem:[%s1 + $0x8] sm:$0xff]
    %v76 = vld [vmem:[%s1 + $0x10] sm:$0xff]
    %v77 = vld [vmem:[%s1 + $0x18] sm:$0xff]
    %v78 = vld [vmem:[%s1 + $0x20] sm:$0xff]
    %v79 = vld [vmem:[%s1 + $0x28] sm:$0xff]
    %v80 = vld [vmem:[%s1 + $0x30] sm:$0xff]
    %v81 = vld [vmem:[%s1 + $0x38] sm:$0xff]
    %vm114 = vcmask 1046528
    %v115 = vrot.slane %v42, 1
    %v116 = vrot.slane %v43, 1
    %v117 = vsel %vm114, %v115, %v116
    %v118 = vrot.slane %v44, 1
    %v119 = vsel %vm114, %v116, %v118
    %v120 = vrot.slane %v45, 1
    %v121 = vsel %vm114, %v118, %v120
    %v122 = vrot.slane %v46, 1
    %v123 = vsel %vm114, %v120, %v122
    %v124 = vrot.slane %v47, 1
    %v125 = vsel %vm114, %v122, %v124
    %v126 = vrot.slane %v48, 1
    %v127 = vsel %vm114, %v124, %v126
    %v128 = vrot.slane %v49, 1
    %v129 = vsel %vm114, %v126, %v128
    %v130 = vrot.slane %v50, 1
    %v131 = vsel %vm114, %v128, %v130
    %v132 = vrot.slane %v51, 1
    %v133 = vsel %vm114, %v130, %v132
    %v134 = vrot.slane %v52, 1
    %v135 = vsel %vm114, %v132, %v134
    %v136 = vrot.slane %v53, 1
    %v137 = vsel %vm114, %v134, %v136
    %v138 = vrot.slane %v54, 1
    %v139 = vsel %vm114, %v136, %v138
    %v140 = vrot.slane %v55, 1
    %v141 = vsel %vm114, %v138, %v140
    %v142 = vrot.slane %v56, 1
    %v143 = vsel %vm114, %v140, %v142
    %v144 = vrot.slane %v57, 1
    %v145 = vsel %vm114, %v142, %v144
    %v146 = vrot.slane %v58, 1
    %v147 = vsel %vm114, %v144, %v146
    %v148 = vrot.slane %v59, 1
    %v149 = vsel %vm114, %v146, %v148
    %v150 = vrot.slane %v60, 1
    %v151 = vsel %vm114, %v148, %v150
    %v152 = vrot.slane %v61, 1
    %v153 = vsel %vm114, %v150, %v152
    %v154 = vrot.slane %v62, 1
    %v155 = vsel %vm114, %v152, %v154
    %v156 = vrot.slane %v63, 1
    %v157 = vsel %vm114, %v154, %v156
    %v158 = vrot.slane %v64, 1
    %v159 = vsel %vm114, %v156, %v158
    %v160 = vrot.slane %v65, 1
    %v161 = vsel %vm114, %v158, %v160
    %v162 = vrot.slane %v66, 1
    %v163 = vsel %vm114, %v160, %v162
    %v164 = vrot.slane %v67, 1
    %v165 = vsel %vm114, %v162, %v164
    %v166 = vrot.slane %v68, 1
    %v167 = vsel %vm114, %v164, %v166
    %v168 = vrot.slane %v69, 1
    %v169 = vsel %vm114, %v166, %v168
    %v170 = vrot.slane %v70, 1
    %v171 = vsel %vm114, %v168, %v170
    %v172 = vrot.slane %v71, 1
    %v173 = vsel %vm114, %v170, %v172
    %v174 = vrot.slane %v72, 1
    %v175 = vsel %vm114, %v172, %v174
    %v176 = vrot.slane %v73, 1
    %v177 = vsel %vm114, %v174, %v176
    %v180 = vsel %vm114, %v176, %v115
    %s181 = scalar_lea.vmem %s1, 64
    %v182 = vld [vmem:[%s181] sm:$0xff]
    %v183 = vld [vmem:[%s181 + $0x8] sm:$0xff]
    %v184 = vld [vmem:[%s181 + $0x10] sm:$0xff]
    %v185 = vld [vmem:[%s181 + $0x18] sm:$0xff]
    %v186 = vld [vmem:[%s181 + $0x20] sm:$0xff]
    %v187 = vld [vmem:[%s181 + $0x28] sm:$0xff]
    %v188 = vld [vmem:[%s181 + $0x30] sm:$0xff]
    %v189 = vld [vmem:[%s181 + $0x38] sm:$0xff]
    %vm190 = vcmask 261120
    %v191 = vsel %vm190, %v117, 0
    %v193 = vsel %vm190, %v119, 0
    %v195 = vsel %vm190, %v121, 0
    %v197 = vsel %vm190, %v123, 0
    %v199 = vsel %vm190, %v125, 0
    %v201 = vsel %vm190, %v127, 0
    %v203 = vsel %vm190, %v129, 0
    %v205 = vsel %vm190, %v131, 0
    %v207 = vsel %vm190, %v133, 0
    %v209 = vsel %vm190, %v135, 0
    %v211 = vsel %vm190, %v137, 0
    %v213 = vsel %vm190, %v139, 0
    %v215 = vsel %vm190, %v141, 0
    %v217 = vsel %vm190, %v143, 0
    %v219 = vsel %vm190, %v145, 0
    %v221 = vsel %vm190, %v147, 0
    %v223 = vsel %vm190, %v149, 0
    %v225 = vsel %vm190, %v151, 0
    %v227 = vsel %vm190, %v153, 0
    %v229 = vsel %vm190, %v155, 0
    %v231 = vsel %vm190, %v157, 0
    %v233 = vsel %vm190, %v159, 0
    %v235 = vsel %vm190, %v161, 0
    %v237 = vsel %vm190, %v163, 0
    %v239 = vsel %vm190, %v165, 0
    %v241 = vsel %vm190, %v167, 0
    %v243 = vsel %vm190, %v169, 0
    %v245 = vsel %vm190, %v171, 0
    %v247 = vsel %vm190, %v173, 0
    %v249 = vsel %vm190, %v175, 0
    %v251 = vsel %vm190, %v177, 0
    %v254 = vsel %vm190, %v180, 0
    %256 = vmatprep.subr.mxu0 0.0
    %257 = vmatpush1.msra.mxu0 0.0
    %258 = vmatprep.subr.mxu0 0.0
    %259 = vmatpush1.msra.mxu0 0.0
    %260 = vmatprep.subr.mxu0 0.0
    %261 = vmatpush1.msra.mxu0 0.0
    %262 = vmatprep.subr.mxu0 0.0
    %263 = vmatpush1.msra.mxu0 0.0
    %264 = vmatprep.subr.mxu0 0.0
    %265 = vmatpush1.msra.mxu0 0.0
    %266 = vmatprep.subr.mxu0 0.0
    %267 = vmatpush1.msra.mxu0 0.0
    %268 = vmatprep.subr.mxu0 0.0
    %269 = vmatpush1.msra.mxu0 0.0
    %270 = vmatprep.subr.mxu0 0.0
    %271 = vmatpush1.msra.mxu0 0.0
    %272 = vmatprep.subr.mxu0 0.0
    %273 = vmatpush1.msra.mxu0 0.0
    %274 = vmatprep.subr.mxu0 0.0
    %275 = vmatpush1.msra.mxu0 0.0
    %276 = vmatprep.subr.mxu0 0.0
    %277 = vmatpush1.msra.mxu0 0.0
    %278 = vmatprep.subr.mxu0 0.0
    %279 = vmatpush1.msra.mxu0 0.0
    %280 = vmatprep.subr.mxu0 %v189
    %281 = vmatpush1.msra.mxu0 %v188
    %282 = vmatprep.subr.mxu0 %v187
    %283 = vmatpush1.msra.mxu0 %v186
    %284 = vmatprep.subr.mxu0 %v185
    %285 = vmatpush1.msra.mxu0 %v184
    %286 = vmatprep.subr.mxu0 %v183
    %287 = vmatpush1.msra.mxu0 %v182
    %288 = vmatprep.subr.mxu0 0.0
    %289 = vmatpush2.msra.mxu0 0.0
    %290 = vmatprep.subr.mxu0 0.0
    %291 = vmatpush2.msra.mxu0 0.0
    %292 = vmatprep.subr.mxu0 0.0
    %293 = vmatpush2.msra.mxu0 0.0
    %294 = vmatprep.subr.mxu0 0.0
    %295 = vmatpush2.msra.mxu0 0.0
    %296 = vmatprep.subr.mxu0 0.0
    %297 = vmatpush2.msra.mxu0 0.0
    %298 = vmatprep.subr.mxu0 0.0
    %299 = vmatpush2.msra.mxu0 0.0
    %300 = vmatprep.subr.mxu0 0.0
    %301 = vmatpush2.msra.mxu0 0.0
    %302 = vmatprep.subr.mxu0 0.0
    %303 = vmatpush2.msra.mxu0 0.0
    %304 = vmatprep.subr.mxu0 0.0
    %305 = vmatpush2.msra.mxu0 0.0
    %306 = vmatprep.subr.mxu0 0.0
    %307 = vmatpush2.msra.mxu0 0.0
    %308 = vmatprep.subr.mxu0 0.0
    %309 = vmatpush2.msra.mxu0 0.0
    %310 = vmatprep.subr.mxu0 0.0
    %311 = vmatpush2.msra.mxu0 0.0
    %312 = vmatprep.subr.mxu0 0.0
    %313 = vmatpush2.msra.mxu0 0.0
    %314 = vmatprep.subr.mxu0 0.0
    %315 = vmatpush2.msra.mxu0 0.0
    %316 = vmatprep.subr.mxu0 0.0
    %317 = vmatpush2.msra.mxu0 0.0
    %318 = vmatprep.subr.mxu0 0.0
    %319 = vmatpush2.msra.mxu0 0.0
    %320 = vmatprep.mubr.f32.mxu0 0.0
    %321 = vmatmul.mubr.f32.gmra.mxu0 %v191
    %v322 = vpop.f32.mrf.mxu0
    %v323 = vadd.f32 0.0, %v322
    %v324 = vpop.f32.mrf.mxu0
    %v325 = vadd.f32 0.0, %v324
    %326 = vmatprep.mubr.f32.mxu0 0.0
    %327 = vmatmul.mubr.f32.gmra.mxu0 %v193
    %v328 = vpop.f32.mrf.mxu0
    %v329 = vadd.f32 0.0, %v328
    %v330 = vpop.f32.mrf.mxu0
    %v331 = vadd.f32 0.0, %v330
    %332 = vmatprep.mubr.f32.mxu0 0.0
    %333 = vmatmul.mubr.f32.gmra.mxu0 %v195
    %v334 = vpop.f32.mrf.mxu0
    %v335 = vadd.f32 0.0, %v334
    %v336 = vpop.f32.mrf.mxu0
    %v337 = vadd.f32 0.0, %v336
    %338 = vmatprep.mubr.f32.mxu0 0.0
    %339 = vmatmul.mubr.f32.gmra.mxu0 %v197
    %v340 = vpop.f32.mrf.mxu0
    %v341 = vadd.f32 0.0, %v340
    %v342 = vpop.f32.mrf.mxu0
    %v343 = vadd.f32 0.0, %v342
    %344 = vmatprep.mubr.f32.mxu0 0.0
    %345 = vmatmul.mubr.f32.gmra.mxu0 %v199
    %v346 = vpop.f32.mrf.mxu0
    %v347 = vadd.f32 0.0, %v346
    %v348 = vpop.f32.mrf.mxu0
    %v349 = vadd.f32 0.0, %v348
    %350 = vmatprep.mubr.f32.mxu0 0.0
    %351 = vmatmul.mubr.f32.gmra.mxu0 %v201
    %v352 = vpop.f32.mrf.mxu0
    %v353 = vadd.f32 0.0, %v352
    %v354 = vpop.f32.mrf.mxu0
    %v355 = vadd.f32 0.0, %v354
    %356 = vmatprep.mubr.f32.mxu0 0.0
    %357 = vmatmul.mubr.f32.gmra.mxu0 %v203
    %v358 = vpop.f32.mrf.mxu0
    %v359 = vadd.f32 0.0, %v358
    %v360 = vpop.f32.mrf.mxu0
    %v361 = vadd.f32 0.0, %v360
    %362 = vmatprep.mubr.f32.mxu0 0.0
    %363 = vmatmul.mubr.f32.gmra.mxu0 %v205
    %v364 = vpop.f32.mrf.mxu0
    %v365 = vadd.f32 0.0, %v364
    %v366 = vpop.f32.mrf.mxu0
    %v367 = vadd.f32 0.0, %v366
    %368 = vmatprep.mubr.f32.mxu0 0.0
    %369 = vmatmul.mubr.f32.gmra.mxu0 %v207
    %v370 = vpop.f32.mrf.mxu0
    %v371 = vadd.f32 0.0, %v370
    %v372 = vpop.f32.mrf.mxu0
    %v373 = vadd.f32 0.0, %v372
    %374 = vmatprep.mubr.f32.mxu0 0.0
    %375 = vmatmul.mubr.f32.gmra.mxu0 %v209
    %v376 = vpop.f32.mrf.mxu0
    %v377 = vadd.f32 0.0, %v376
    %v378 = vpop.f32.mrf.mxu0
    %v379 = vadd.f32 0.0, %v378
    %380 = vmatprep.mubr.f32.mxu0 0.0
    %381 = vmatmul.mubr.f32.gmra.mxu0 %v211
    %v382 = vpop.f32.mrf.mxu0
    %v383 = vadd.f32 0.0, %v382
    %v384 = vpop.f32.mrf.mxu0
    %v385 = vadd.f32 0.0, %v384
    %386 = vmatprep.mubr.f32.mxu0 0.0
    %387 = vmatmul.mubr.f32.gmra.mxu0 %v213
    %v388 = vpop.f32.mrf.mxu0
    %v389 = vadd.f32 0.0, %v388
    %v390 = vpop.f32.mrf.mxu0
    %v391 = vadd.f32 0.0, %v390
    %392 = vmatprep.mubr.f32.mxu0 0.0
    %393 = vmatmul.mubr.f32.gmra.mxu0 %v215
    %v394 = vpop.f32.mrf.mxu0
    %v395 = vadd.f32 0.0, %v394
    %v396 = vpop.f32.mrf.mxu0
    %v397 = vadd.f32 0.0, %v396
    %398 = vmatprep.mubr.f32.mxu0 0.0
    %399 = vmatmul.mubr.f32.gmra.mxu0 %v217
    %v400 = vpop.f32.mrf.mxu0
    %v401 = vadd.f32 0.0, %v400
    %v402 = vpop.f32.mrf.mxu0
    %v403 = vadd.f32 0.0, %v402
    %404 = vmatprep.mubr.f32.mxu0 0.0
    %405 = vmatmul.mubr.f32.gmra.mxu0 %v219
    %v406 = vpop.f32.mrf.mxu0
    %v407 = vadd.f32 0.0, %v406
    %v408 = vpop.f32.mrf.mxu0
    %v409 = vadd.f32 0.0, %v408
    %410 = vmatprep.mubr.f32.mxu0 0.0
    %411 = vmatmul.mubr.f32.gmra.mxu0 %v221
    %v412 = vpop.f32.mrf.mxu0
    %v413 = vadd.f32 0.0, %v412
    %v414 = vpop.f32.mrf.mxu0
    %v415 = vadd.f32 0.0, %v414
    %416 = vmatprep.mubr.f32.mxu0 0.0
    %417 = vmatmul.mubr.f32.gmra.mxu0 %v223
    %v418 = vpop.f32.mrf.mxu0
    %v419 = vadd.f32 0.0, %v418
    %v420 = vpop.f32.mrf.mxu0
    %v421 = vadd.f32 0.0, %v420
    %422 = vmatprep.mubr.f32.mxu0 0.0
    %423 = vmatmul.mubr.f32.gmra.mxu0 %v225
    %v424 = vpop.f32.mrf.mxu0
    %v425 = vadd.f32 0.0, %v424
    %v426 = vpop.f32.mrf.mxu0
    %v427 = vadd.f32 0.0, %v426
    %428 = vmatprep.mubr.f32.mxu0 0.0
    %429 = vmatmul.mubr.f32.gmra.mxu0 %v227
    %v430 = vpop.f32.mrf.mxu0
    %v431 = vadd.f32 0.0, %v430
    %v432 = vpop.f32.mrf.mxu0
    %v433 = vadd.f32 0.0, %v432
    %434 = vmatprep.mubr.f32.mxu0 0.0
    %435 = vmatmul.mubr.f32.gmra.mxu0 %v229
    %v436 = vpop.f32.mrf.mxu0
    %v437 = vadd.f32 0.0, %v436
    %v438 = vpop.f32.mrf.mxu0
    %v439 = vadd.f32 0.0, %v438
    %440 = vmatprep.mubr.f32.mxu0 0.0
    %441 = vmatmul.mubr.f32.gmra.mxu0 %v231
    %v442 = vpop.f32.mrf.mxu0
    %v443 = vadd.f32 0.0, %v442
    %v444 = vpop.f32.mrf.mxu0
    %v445 = vadd.f32 0.0, %v444
    %446 = vmatprep.mubr.f32.mxu0 0.0
    %447 = vmatmul.mubr.f32.gmra.mxu0 %v233
    %v448 = vpop.f32.mrf.mxu0
    %v449 = vadd.f32 0.0, %v448
    %v450 = vpop.f32.mrf.mxu0
    %v451 = vadd.f32 0.0, %v450
    %452 = vmatprep.mubr.f32.mxu0 0.0
    %453 = vmatmul.mubr.f32.gmra.mxu0 %v235
    %v454 = vpop.f32.mrf.mxu0
    %v455 = vadd.f32 0.0, %v454
    %v456 = vpop.f32.mrf.mxu0
    %v457 = vadd.f32 0.0, %v456
    %458 = vmatprep.mubr.f32.mxu0 0.0
    %459 = vmatmul.mubr.f32.gmra.mxu0 %v237
    %v460 = vpop.f32.mrf.mxu0
    %v461 = vadd.f32 0.0, %v460
    %v462 = vpop.f32.mrf.mxu0
    %v463 = vadd.f32 0.0, %v462
    %464 = vmatprep.mubr.f32.mxu0 0.0
    %465 = vmatmul.mubr.f32.gmra.mxu0 %v239
    %v466 = vpop.f32.mrf.mxu0
    %v467 = vadd.f32 0.0, %v466
    %v468 = vpop.f32.mrf.mxu0
    %v469 = vadd.f32 0.0, %v468
    %470 = vmatprep.mubr.f32.mxu0 0.0
    %471 = vmatmul.mubr.f32.gmra.mxu0 %v241
    %v472 = vpop.f32.mrf.mxu0
    %v473 = vadd.f32 0.0, %v472
    %v474 = vpop.f32.mrf.mxu0
    %v475 = vadd.f32 0.0, %v474
    %476 = vmatprep.mubr.f32.mxu0 0.0
    %477 = vmatmul.mubr.f32.gmra.mxu0 %v243
    %v478 = vpop.f32.mrf.mxu0
    %v479 = vadd.f32 0.0, %v478
    %v480 = vpop.f32.mrf.mxu0
    %v481 = vadd.f32 0.0, %v480
    %482 = vmatprep.mubr.f32.mxu0 0.0
    %483 = vmatmul.mubr.f32.gmra.mxu0 %v245
    %v484 = vpop.f32.mrf.mxu0
    %v485 = vadd.f32 0.0, %v484
    %v486 = vpop.f32.mrf.mxu0
    %v487 = vadd.f32 0.0, %v486
    %488 = vmatprep.mubr.f32.mxu0 0.0
    %489 = vmatmul.mubr.f32.gmra.mxu0 %v247
    %v490 = vpop.f32.mrf.mxu0
    %v491 = vadd.f32 0.0, %v490
    %v492 = vpop.f32.mrf.mxu0
    %v493 = vadd.f32 0.0, %v492
    %494 = vmatprep.mubr.f32.mxu0 0.0
    %495 = vmatmul.mubr.f32.gmra.mxu0 %v249
    %v496 = vpop.f32.mrf.mxu0
    %v497 = vadd.f32 0.0, %v496
    %v498 = vpop.f32.mrf.mxu0
    %v499 = vadd.f32 0.0, %v498
    %500 = vmatprep.mubr.f32.mxu0 0.0
    %501 = vmatmul.mubr.f32.gmra.mxu0 %v251
    %v502 = vpop.f32.mrf.mxu0
    %v503 = vadd.f32 0.0, %v502
    %v504 = vpop.f32.mrf.mxu0
    %v505 = vadd.f32 0.0, %v504
    %506 = vmatprep.mubr.f32.mxu0 0.0
    %507 = vmatmul.mubr.f32.gmra.mxu0 %v254
    %v508 = vpop.f32.mrf.mxu0
    %v509 = vadd.f32 0.0, %v508
    %v510 = vpop.f32.mrf.mxu0
    %v511 = vadd.f32 0.0, %v510
    %512 = vdwg.mxu0
    %v513 = vsel %vm190, %v42, 0
    %v515 = vsel %vm190, %v43, 0
    %v517 = vsel %vm190, %v44, 0
    %v519 = vsel %vm190, %v45, 0
    %v521 = vsel %vm190, %v46, 0
    %v523 = vsel %vm190, %v47, 0
    %v525 = vsel %vm190, %v48, 0
    %v527 = vsel %vm190, %v49, 0
    %v529 = vsel %vm190, %v50, 0
    %v531 = vsel %vm190, %v51, 0
    %v533 = vsel %vm190, %v52, 0
    %v535 = vsel %vm190, %v53, 0
    %v537 = vsel %vm190, %v54, 0
    %v539 = vsel %vm190, %v55, 0
    %v541 = vsel %vm190, %v56, 0
    %v543 = vsel %vm190, %v57, 0
    %v545 = vsel %vm190, %v58, 0
    %v547 = vsel %vm190, %v59, 0
    %v549 = vsel %vm190, %v60, 0
    %v551 = vsel %vm190, %v61, 0
    %v553 = vsel %vm190, %v62, 0
    %v555 = vsel %vm190, %v63, 0
    %v557 = vsel %vm190, %v64, 0
    %v559 = vsel %vm190, %v65, 0
    %v561 = vsel %vm190, %v66, 0
    %v563 = vsel %vm190, %v67, 0
    %v565 = vsel %vm190, %v68, 0
    %v567 = vsel %vm190, %v69, 0
    %v569 = vsel %vm190, %v70, 0
    %v571 = vsel %vm190, %v71, 0
    %v573 = vsel %vm190, %v72, 0
    %v575 = vsel %vm190, %v73, 0
    %577 = vmatprep.subr.mxu0 0.0
    %578 = vmatpush1.msra.mxu0 0.0
    %579 = vmatprep.subr.mxu0 0.0
    %580 = vmatpush1.msra.mxu0 0.0
    %581 = vmatprep.subr.mxu0 0.0
    %582 = vmatpush1.msra.mxu0 0.0
    %583 = vmatprep.subr.mxu0 0.0
    %584 = vmatpush1.msra.mxu0 0.0
    %585 = vmatprep.subr.mxu0 0.0
    %586 = vmatpush1.msra.mxu0 0.0
    %587 = vmatprep.subr.mxu0 0.0
    %588 = vmatpush1.msra.mxu0 0.0
    %589 = vmatprep.subr.mxu0 0.0
    %590 = vmatpush1.msra.mxu0 0.0
    %591 = vmatprep.subr.mxu0 0.0
    %592 = vmatpush1.msra.mxu0 0.0
    %593 = vmatprep.subr.mxu0 0.0
    %594 = vmatpush1.msra.mxu0 0.0
    %595 = vmatprep.subr.mxu0 0.0
    %596 = vmatpush1.msra.mxu0 0.0
    %597 = vmatprep.subr.mxu0 0.0
    %598 = vmatpush1.msra.mxu0 0.0
    %599 = vmatprep.subr.mxu0 0.0
    %600 = vmatpush1.msra.mxu0 0.0
    %601 = vmatprep.subr.mxu0 %v81
    %602 = vmatpush1.msra.mxu0 %v80
    %603 = vmatprep.subr.mxu0 %v79
    %604 = vmatpush1.msra.mxu0 %v78
    %605 = vmatprep.subr.mxu0 %v77
    %606 = vmatpush1.msra.mxu0 %v76
    %607 = vmatprep.subr.mxu0 %v75
    %608 = vmatpush1.msra.mxu0 %v74
    %609 = vmatprep.subr.mxu0 0.0
    %610 = vmatpush2.msra.mxu0 0.0
    %611 = vmatprep.subr.mxu0 0.0
    %612 = vmatpush2.msra.mxu0 0.0
    %613 = vmatprep.subr.mxu0 0.0
    %614 = vmatpush2.msra.mxu0 0.0
    %615 = vmatprep.subr.mxu0 0.0
    %616 = vmatpush2.msra.mxu0 0.0
    %617 = vmatprep.subr.mxu0 0.0
    %618 = vmatpush2.msra.mxu0 0.0
    %619 = vmatprep.subr.mxu0 0.0
    %620 = vmatpush2.msra.mxu0 0.0
    %621 = vmatprep.subr.mxu0 0.0
    %622 = vmatpush2.msra.mxu0 0.0
    %623 = vmatprep.subr.mxu0 0.0
    %624 = vmatpush2.msra.mxu0 0.0
    %625 = vmatprep.subr.mxu0 0.0
    %626 = vmatpush2.msra.mxu0 0.0
    %627 = vmatprep.subr.mxu0 0.0
    %628 = vmatpush2.msra.mxu0 0.0
    %629 = vmatprep.subr.mxu0 0.0
    %630 = vmatpush2.msra.mxu0 0.0
    %631 = vmatprep.subr.mxu0 0.0
    %632 = vmatpush2.msra.mxu0 0.0
    %633 = vmatprep.subr.mxu0 0.0
    %634 = vmatpush2.msra.mxu0 0.0
    %635 = vmatprep.subr.mxu0 0.0
    %636 = vmatpush2.msra.mxu0 0.0
    %637 = vmatprep.subr.mxu0 0.0
    %638 = vmatpush2.msra.mxu0 0.0
    %639 = vmatprep.subr.mxu0 0.0
    %640 = vmatpush2.msra.mxu0 0.0
    %641 = vmatprep.mubr.f32.mxu0 0.0
    %642 = vmatmul.mubr.f32.gmra.mxu0 %v513
    %v643 = vpop.f32.mrf.mxu0
    %v644 = vadd.f32 %v323, %v643
    %v645 = vpop.f32.mrf.mxu0
    %v646 = vadd.f32 %v325, %v645
    %647 = vmatprep.mubr.f32.mxu0 0.0
    %648 = vmatmul.mubr.f32.gmra.mxu0 %v515
    %v649 = vpop.f32.mrf.mxu0
    %v650 = vadd.f32 %v329, %v649
    %v651 = vpop.f32.mrf.mxu0
    %v652 = vadd.f32 %v331, %v651
    %653 = vmatprep.mubr.f32.mxu0 0.0
    %654 = vmatmul.mubr.f32.gmra.mxu0 %v517
    %v655 = vpop.f32.mrf.mxu0
    %v656 = vadd.f32 %v335, %v655
    %v657 = vpop.f32.mrf.mxu0
    %v658 = vadd.f32 %v337, %v657
    %659 = vmatprep.mubr.f32.mxu0 0.0
    %660 = vmatmul.mubr.f32.gmra.mxu0 %v519
    %v661 = vpop.f32.mrf.mxu0
    %v662 = vadd.f32 %v341, %v661
    %v663 = vpop.f32.mrf.mxu0
    %v664 = vadd.f32 %v343, %v663
    %665 = vmatprep.mubr.f32.mxu0 0.0
    %666 = vmatmul.mubr.f32.gmra.mxu0 %v521
    %v667 = vpop.f32.mrf.mxu0
    %v668 = vadd.f32 %v347, %v667
    %v669 = vpop.f32.mrf.mxu0
    %v670 = vadd.f32 %v349, %v669
    %671 = vmatprep.mubr.f32.mxu0 0.0
    %672 = vmatmul.mubr.f32.gmra.mxu0 %v523
    %v673 = vpop.f32.mrf.mxu0
    %v674 = vadd.f32 %v353, %v673
    %v675 = vpop.f32.mrf.mxu0
    %v676 = vadd.f32 %v355, %v675
    %677 = vmatprep.mubr.f32.mxu0 0.0
    %678 = vmatmul.mubr.f32.gmra.mxu0 %v525
    %v679 = vpop.f32.mrf.mxu0
    %v680 = vadd.f32 %v359, %v679
    %v681 = vpop.f32.mrf.mxu0
    %v682 = vadd.f32 %v361, %v681
    %683 = vmatprep.mubr.f32.mxu0 0.0
    %684 = vmatmul.mubr.f32.gmra.mxu0 %v527
    %v685 = vpop.f32.mrf.mxu0
    %v686 = vadd.f32 %v365, %v685
    %v687 = vpop.f32.mrf.mxu0
    %v688 = vadd.f32 %v367, %v687
    %689 = vmatprep.mubr.f32.mxu0 0.0
    %690 = vmatmul.mubr.f32.gmra.mxu0 %v529
    %v691 = vpop.f32.mrf.mxu0
    %v692 = vadd.f32 %v371, %v691
    %v693 = vpop.f32.mrf.mxu0
    %v694 = vadd.f32 %v373, %v693
    %695 = vmatprep.mubr.f32.mxu0 0.0
    %696 = vmatmul.mubr.f32.gmra.mxu0 %v531
    %v697 = vpop.f32.mrf.mxu0
    %v698 = vadd.f32 %v377, %v697
    %v699 = vpop.f32.mrf.mxu0
    %v700 = vadd.f32 %v379, %v699
    %701 = vmatprep.mubr.f32.mxu0 0.0
    %702 = vmatmul.mubr.f32.gmra.mxu0 %v533
    %v703 = vpop.f32.mrf.mxu0
    %v704 = vadd.f32 %v383, %v703
    %v705 = vpop.f32.mrf.mxu0
    %v706 = vadd.f32 %v385, %v705
    %707 = vmatprep.mubr.f32.mxu0 0.0
    %708 = vmatmul.mubr.f32.gmra.mxu0 %v535
    %v709 = vpop.f32.mrf.mxu0
    %v710 = vadd.f32 %v389, %v709
    %v711 = vpop.f32.mrf.mxu0
    %v712 = vadd.f32 %v391, %v711
    %713 = vmatprep.mubr.f32.mxu0 0.0
    %714 = vmatmul.mubr.f32.gmra.mxu0 %v537
    %v715 = vpop.f32.mrf.mxu0
    %v716 = vadd.f32 %v395, %v715
    %v717 = vpop.f32.mrf.mxu0
    %v718 = vadd.f32 %v397, %v717
    %719 = vmatprep.mubr.f32.mxu0 0.0
    %720 = vmatmul.mubr.f32.gmra.mxu0 %v539
    %v721 = vpop.f32.mrf.mxu0
    %v722 = vadd.f32 %v401, %v721
    %v723 = vpop.f32.mrf.mxu0
    %v724 = vadd.f32 %v403, %v723
    %725 = vmatprep.mubr.f32.mxu0 0.0
    %726 = vmatmul.mubr.f32.gmra.mxu0 %v541
    %v727 = vpop.f32.mrf.mxu0
    %v728 = vadd.f32 %v407, %v727
    %v729 = vpop.f32.mrf.mxu0
    %v730 = vadd.f32 %v409, %v729
    %731 = vmatprep.mubr.f32.mxu0 0.0
    %732 = vmatmul.mubr.f32.gmra.mxu0 %v543
    %v733 = vpop.f32.mrf.mxu0
    %v734 = vadd.f32 %v413, %v733
    %v735 = vpop.f32.mrf.mxu0
    %v736 = vadd.f32 %v415, %v735
    %737 = vmatprep.mubr.f32.mxu0 0.0
    %738 = vmatmul.mubr.f32.gmra.mxu0 %v545
    %v739 = vpop.f32.mrf.mxu0
    %v740 = vadd.f32 %v419, %v739
    %v741 = vpop.f32.mrf.mxu0
    %v742 = vadd.f32 %v421, %v741
    %743 = vmatprep.mubr.f32.mxu0 0.0
    %744 = vmatmul.mubr.f32.gmra.mxu0 %v547
    %v745 = vpop.f32.mrf.mxu0
    %v746 = vadd.f32 %v425, %v745
    %v747 = vpop.f32.mrf.mxu0
    %v748 = vadd.f32 %v427, %v747
    %749 = vmatprep.mubr.f32.mxu0 0.0
    %750 = vmatmul.mubr.f32.gmra.mxu0 %v549
    %v751 = vpop.f32.mrf.mxu0
    %v752 = vadd.f32 %v431, %v751
    %v753 = vpop.f32.mrf.mxu0
    %v754 = vadd.f32 %v433, %v753
    %755 = vmatprep.mubr.f32.mxu0 0.0
    %756 = vmatmul.mubr.f32.gmra.mxu0 %v551
    %v757 = vpop.f32.mrf.mxu0
    %v758 = vadd.f32 %v437, %v757
    %v759 = vpop.f32.mrf.mxu0
    %v760 = vadd.f32 %v439, %v759
    %761 = vmatprep.mubr.f32.mxu0 0.0
    %762 = vmatmul.mubr.f32.gmra.mxu0 %v553
    %v763 = vpop.f32.mrf.mxu0
    %v764 = vadd.f32 %v443, %v763
    %v765 = vpop.f32.mrf.mxu0
    %v766 = vadd.f32 %v445, %v765
    %767 = vmatprep.mubr.f32.mxu0 0.0
    %768 = vmatmul.mubr.f32.gmra.mxu0 %v555
    %v769 = vpop.f32.mrf.mxu0
    %v770 = vadd.f32 %v449, %v769
    %v771 = vpop.f32.mrf.mxu0
    %v772 = vadd.f32 %v451, %v771
    %773 = vmatprep.mubr.f32.mxu0 0.0
    %774 = vmatmul.mubr.f32.gmra.mxu0 %v557
    %v775 = vpop.f32.mrf.mxu0
    %v776 = vadd.f32 %v455, %v775
    %v777 = vpop.f32.mrf.mxu0
    %v778 = vadd.f32 %v457, %v777
    %779 = vmatprep.mubr.f32.mxu0 0.0
    %780 = vmatmul.mubr.f32.gmra.mxu0 %v559
    %v781 = vpop.f32.mrf.mxu0
    %v782 = vadd.f32 %v461, %v781
    %v783 = vpop.f32.mrf.mxu0
    %v784 = vadd.f32 %v463, %v783
    %785 = vmatprep.mubr.f32.mxu0 0.0
    %786 = vmatmul.mubr.f32.gmra.mxu0 %v561
    %v787 = vpop.f32.mrf.mxu0
    %v788 = vadd.f32 %v467, %v787
    %v789 = vpop.f32.mrf.mxu0
    %v790 = vadd.f32 %v469, %v789
    %791 = vmatprep.mubr.f32.mxu0 0.0
    %792 = vmatmul.mubr.f32.gmra.mxu0 %v563
    %v793 = vpop.f32.mrf.mxu0
    %v794 = vadd.f32 %v473, %v793
    %v795 = vpop.f32.mrf.mxu0
    %v796 = vadd.f32 %v475, %v795
    %797 = vmatprep.mubr.f32.mxu0 0.0
    %798 = vmatmul.mubr.f32.gmra.mxu0 %v565
    %v799 = vpop.f32.mrf.mxu0
    %v800 = vadd.f32 %v479, %v799
    %v801 = vpop.f32.mrf.mxu0
    %v802 = vadd.f32 %v481, %v801
    %803 = vmatprep.mubr.f32.mxu0 0.0
    %804 = vmatmul.mubr.f32.gmra.mxu0 %v567
    %v805 = vpop.f32.mrf.mxu0
    %v806 = vadd.f32 %v485, %v805
    %v807 = vpop.f32.mrf.mxu0
    %v808 = vadd.f32 %v487, %v807
    %809 = vmatprep.mubr.f32.mxu0 0.0
    %810 = vmatmul.mubr.f32.gmra.mxu0 %v569
    %v811 = vpop.f32.mrf.mxu0
    %v812 = vadd.f32 %v491, %v811
    %v813 = vpop.f32.mrf.mxu0
    %v814 = vadd.f32 %v493, %v813
    %815 = vmatprep.mubr.f32.mxu0 0.0
    %816 = vmatmul.mubr.f32.gmra.mxu0 %v571
    %v817 = vpop.f32.mrf.mxu0
    %v818 = vadd.f32 %v497, %v817
    %v819 = vpop.f32.mrf.mxu0
    %v820 = vadd.f32 %v499, %v819
    %821 = vmatprep.mubr.f32.mxu0 0.0
    %822 = vmatmul.mubr.f32.gmra.mxu0 %v573
    %v823 = vpop.f32.mrf.mxu0
    %v824 = vadd.f32 %v503, %v823
    %v825 = vpop.f32.mrf.mxu0
    %v826 = vadd.f32 %v505, %v825
    %827 = vmatprep.mubr.f32.mxu0 0.0
    %828 = vmatmul.mubr.f32.gmra.mxu0 %v575
    %v829 = vpop.f32.mrf.mxu0
    %v830 = vadd.f32 %v509, %v829
    %v831 = vpop.f32.mrf.mxu0
    %v832 = vadd.f32 %v511, %v831
    %833 = vdwg.mxu0
    %vm834 = vcmask 1045504
    %v835 = vrot.slane %v42, 2
    %v836 = vrot.slane %v43, 2
    %v837 = vsel %vm834, %v835, %v836
    %v838 = vrot.slane %v44, 2
    %v839 = vsel %vm834, %v836, %v838
    %v840 = vrot.slane %v45, 2
    %v841 = vsel %vm834, %v838, %v840
    %v842 = vrot.slane %v46, 2
    %v843 = vsel %vm834, %v840, %v842
    %v844 = vrot.slane %v47, 2
    %v845 = vsel %vm834, %v842, %v844
    %v846 = vrot.slane %v48, 2
    %v847 = vsel %vm834, %v844, %v846
    %v848 = vrot.slane %v49, 2
    %v849 = vsel %vm834, %v846, %v848
    %v850 = vrot.slane %v50, 2
    %v851 = vsel %vm834, %v848, %v850
    %v852 = vrot.slane %v51, 2
    %v853 = vsel %vm834, %v850, %v852
    %v854 = vrot.slane %v52, 2
    %v855 = vsel %vm834, %v852, %v854
    %v856 = vrot.slane %v53, 2
    %v857 = vsel %vm834, %v854, %v856
    %v858 = vrot.slane %v54, 2
    %v859 = vsel %vm834, %v856, %v858
    %v860 = vrot.slane %v55, 2
    %v861 = vsel %vm834, %v858, %v860
    %v862 = vrot.slane %v56, 2
    %v863 = vsel %vm834, %v860, %v862
    %v864 = vrot.slane %v57, 2
    %v865 = vsel %vm834, %v862, %v864
    %v866 = vrot.slane %v58, 2
    %v867 = vsel %vm834, %v864, %v866
    %v868 = vrot.slane %v59, 2
    %v869 = vsel %vm834, %v866, %v868
    %v870 = vrot.slane %v60, 2
    %v871 = vsel %vm834, %v868, %v870
    %v872 = vrot.slane %v61, 2
    %v873 = vsel %vm834, %v870, %v872
    %v874 = vrot.slane %v62, 2
    %v875 = vsel %vm834, %v872, %v874
    %v876 = vrot.slane %v63, 2
    %v877 = vsel %vm834, %v874, %v876
    %v878 = vrot.slane %v64, 2
    %v879 = vsel %vm834, %v876, %v878
    %v880 = vrot.slane %v65, 2
    %v881 = vsel %vm834, %v878, %v880
    %v882 = vrot.slane %v66, 2
    %v883 = vsel %vm834, %v880, %v882
    %v884 = vrot.slane %v67, 2
    %v885 = vsel %vm834, %v882, %v884
    %v886 = vrot.slane %v68, 2
    %v887 = vsel %vm834, %v884, %v886
    %v888 = vrot.slane %v69, 2
    %v889 = vsel %vm834, %v886, %v888
    %v890 = vrot.slane %v70, 2
    %v891 = vsel %vm834, %v888, %v890
    %v892 = vrot.slane %v71, 2
    %v893 = vsel %vm834, %v890, %v892
    %v894 = vrot.slane %v72, 2
    %v895 = vsel %vm834, %v892, %v894
    %v896 = vrot.slane %v73, 2
    %v897 = vsel %vm834, %v894, %v896
    %v900 = vsel %vm834, %v896, %v835
    %s901 = scalar_lea.vmem %s1, 128
    %v902 = vld [vmem:[%s901] sm:$0xff]
    %v903 = vld [vmem:[%s901 + $0x8] sm:$0xff]
    %v904 = vld [vmem:[%s901 + $0x10] sm:$0xff]
    %v905 = vld [vmem:[%s901 + $0x18] sm:$0xff]
    %v906 = vld [vmem:[%s901 + $0x20] sm:$0xff]
    %v907 = vld [vmem:[%s901 + $0x28] sm:$0xff]
    %v908 = vld [vmem:[%s901 + $0x30] sm:$0xff]
    %v909 = vld [vmem:[%s901 + $0x38] sm:$0xff]
    %v910 = vsel %vm190, %v837, 0
    %v912 = vsel %vm190, %v839, 0
    %v914 = vsel %vm190, %v841, 0
    %v916 = vsel %vm190, %v843, 0
    %v918 = vsel %vm190, %v845, 0
    %v920 = vsel %vm190, %v847, 0
    %v922 = vsel %vm190, %v849, 0
    %v924 = vsel %vm190, %v851, 0
    %v926 = vsel %vm190, %v853, 0
    %v928 = vsel %vm190, %v855, 0
    %v930 = vsel %vm190, %v857, 0
    %v932 = vsel %vm190, %v859, 0
    %v934 = vsel %vm190, %v861, 0
    %v936 = vsel %vm190, %v863, 0
    %v938 = vsel %vm190, %v865, 0
    %v940 = vsel %vm190, %v867, 0
    %v942 = vsel %vm190, %v869, 0
    %v944 = vsel %vm190, %v871, 0
    %v946 = vsel %vm190, %v873, 0
    %v948 = vsel %vm190, %v875, 0
    %v950 = vsel %vm190, %v877, 0
    %v952 = vsel %vm190, %v879, 0
    %v954 = vsel %vm190, %v881, 0
    %v956 = vsel %vm190, %v883, 0
    %v958 = vsel %vm190, %v885, 0
    %v960 = vsel %vm190, %v887, 0
    %v962 = vsel %vm190, %v889, 0
    %v964 = vsel %vm190, %v891, 0
    %v966 = vsel %vm190, %v893, 0
    %v968 = vsel %vm190, %v895, 0
    %v970 = vsel %vm190, %v897, 0
    %v973 = vsel %vm190, %v900, 0
    %975 = vmatprep.subr.mxu0 0.0
    %976 = vmatpush1.msra.mxu0 0.0
    %977 = vmatprep.subr.mxu0 0.0
    %978 = vmatpush1.msra.mxu0 0.0
    %979 = vmatprep.subr.mxu0 0.0
    %980 = vmatpush1.msra.mxu0 0.0
    %981 = vmatprep.subr.mxu0 0.0
    %982 = vmatpush1.msra.mxu0 0.0
    %983 = vmatprep.subr.mxu0 0.0
    %984 = vmatpush1.msra.mxu0 0.0
    %985 = vmatprep.subr.mxu0 0.0
    %986 = vmatpush1.msra.mxu0 0.0
    %987 = vmatprep.subr.mxu0 0.0
    %988 = vmatpush1.msra.mxu0 0.0
    %989 = vmatprep.subr.mxu0 0.0
    %990 = vmatpush1.msra.mxu0 0.0
    %991 = vmatprep.subr.mxu0 0.0
    %992 = vmatpush1.msra.mxu0 0.0
    %993 = vmatprep.subr.mxu0 0.0
    %994 = vmatpush1.msra.mxu0 0.0
    %995 = vmatprep.subr.mxu0 0.0
    %996 = vmatpush1.msra.mxu0 0.0
    %997 = vmatprep.subr.mxu0 0.0
    %998 = vmatpush1.msra.mxu0 0.0
    %999 = vmatprep.subr.mxu0 %v909
    %1000 = vmatpush1.msra.mxu0 %v908
    %1001 = vmatprep.subr.mxu0 %v907
    %1002 = vmatpush1.msra.mxu0 %v906
    %1003 = vmatprep.subr.mxu0 %v905
    %1004 = vmatpush1.msra.mxu0 %v904
    %1005 = vmatprep.subr.mxu0 %v903
    %1006 = vmatpush1.msra.mxu0 %v902
    %1007 = vmatprep.subr.mxu0 0.0
    %1008 = vmatpush2.msra.mxu0 0.0
    %1009 = vmatprep.subr.mxu0 0.0
    %1010 = vmatpush2.msra.mxu0 0.0
    %1011 = vmatprep.subr.mxu0 0.0
    %1012 = vmatpush2.msra.mxu0 0.0
    %1013 = vmatprep.subr.mxu0 0.0
    %1014 = vmatpush2.msra.mxu0 0.0
    %1015 = vmatprep.subr.mxu0 0.0
    %1016 = vmatpush2.msra.mxu0 0.0
    %1017 = vmatprep.subr.mxu0 0.0
    %1018 = vmatpush2.msra.mxu0 0.0
    %1019 = vmatprep.subr.mxu0 0.0
    %1020 = vmatpush2.msra.mxu0 0.0
    %1021 = vmatprep.subr.mxu0 0.0
    %1022 = vmatpush2.msra.mxu0 0.0
    %1023 = vmatprep.subr.mxu0 0.0
    %1024 = vmatpush2.msra.mxu0 0.0
    %1025 = vmatprep.subr.mxu0 0.0
    %1026 = vmatpush2.msra.mxu0 0.0
    %1027 = vmatprep.subr.mxu0 0.0
    %1028 = vmatpush2.msra.mxu0 0.0
    %1029 = vmatprep.subr.mxu0 0.0
    %1030 = vmatpush2.msra.mxu0 0.0
    %1031 = vmatprep.subr.mxu0 0.0
    %1032 = vmatpush2.msra.mxu0 0.0
    %1033 = vmatprep.subr.mxu0 0.0
    %1034 = vmatpush2.msra.mxu0 0.0
    %1035 = vmatprep.subr.mxu0 0.0
    %1036 = vmatpush2.msra.mxu0 0.0
    %1037 = vmatprep.subr.mxu0 0.0
    %1038 = vmatpush2.msra.mxu0 0.0
    %1039 = vmatprep.mubr.f32.mxu0 0.0
    %1040 = vmatmul.mubr.f32.gmra.mxu0 %v910
    %v1041 = vpop.f32.mrf.mxu0
    %v1042 = vadd.f32 0.0, %v1041
    %v1043 = vpop.f32.mrf.mxu0
    %v1044 = vadd.f32 0.0, %v1043
    %1045 = vmatprep.mubr.f32.mxu0 0.0
    %1046 = vmatmul.mubr.f32.gmra.mxu0 %v912
    %v1047 = vpop.f32.mrf.mxu0
    %v1048 = vadd.f32 0.0, %v1047
    %v1049 = vpop.f32.mrf.mxu0
    %v1050 = vadd.f32 0.0, %v1049
    %1051 = vmatprep.mubr.f32.mxu0 0.0
    %1052 = vmatmul.mubr.f32.gmra.mxu0 %v914
    %v1053 = vpop.f32.mrf.mxu0
    %v1054 = vadd.f32 0.0, %v1053
    %v1055 = vpop.f32.mrf.mxu0
    %v1056 = vadd.f32 0.0, %v1055
    %1057 = vmatprep.mubr.f32.mxu0 0.0
    %1058 = vmatmul.mubr.f32.gmra.mxu0 %v916
    %v1059 = vpop.f32.mrf.mxu0
    %v1060 = vadd.f32 0.0, %v1059
    %v1061 = vpop.f32.mrf.mxu0
    %v1062 = vadd.f32 0.0, %v1061
    %1063 = vmatprep.mubr.f32.mxu0 0.0
    %1064 = vmatmul.mubr.f32.gmra.mxu0 %v918
    %v1065 = vpop.f32.mrf.mxu0
    %v1066 = vadd.f32 0.0, %v1065
    %v1067 = vpop.f32.mrf.mxu0
    %v1068 = vadd.f32 0.0, %v1067
    %1069 = vmatprep.mubr.f32.mxu0 0.0
    %1070 = vmatmul.mubr.f32.gmra.mxu0 %v920
    %v1071 = vpop.f32.mrf.mxu0
    %v1072 = vadd.f32 0.0, %v1071
    %v1073 = vpop.f32.mrf.mxu0
    %v1074 = vadd.f32 0.0, %v1073
    %1075 = vmatprep.mubr.f32.mxu0 0.0
    %1076 = vmatmul.mubr.f32.gmra.mxu0 %v922
    %v1077 = vpop.f32.mrf.mxu0
    %v1078 = vadd.f32 0.0, %v1077
    %v1079 = vpop.f32.mrf.mxu0
    %v1080 = vadd.f32 0.0, %v1079
    %1081 = vmatprep.mubr.f32.mxu0 0.0
    %1082 = vmatmul.mubr.f32.gmra.mxu0 %v924
    %v1083 = vpop.f32.mrf.mxu0
    %v1084 = vadd.f32 0.0, %v1083
    %v1085 = vpop.f32.mrf.mxu0
    %v1086 = vadd.f32 0.0, %v1085
    %1087 = vmatprep.mubr.f32.mxu0 0.0
    %1088 = vmatmul.mubr.f32.gmra.mxu0 %v926
    %v1089 = vpop.f32.mrf.mxu0
    %v1090 = vadd.f32 0.0, %v1089
    %v1091 = vpop.f32.mrf.mxu0
    %v1092 = vadd.f32 0.0, %v1091
    %1093 = vmatprep.mubr.f32.mxu0 0.0
    %1094 = vmatmul.mubr.f32.gmra.mxu0 %v928
    %v1095 = vpop.f32.mrf.mxu0
    %v1096 = vadd.f32 0.0, %v1095
    %v1097 = vpop.f32.mrf.mxu0
    %v1098 = vadd.f32 0.0, %v1097
    %1099 = vmatprep.mubr.f32.mxu0 0.0
    %1100 = vmatmul.mubr.f32.gmra.mxu0 %v930
    %v1101 = vpop.f32.mrf.mxu0
    %v1102 = vadd.f32 0.0, %v1101
    %v1103 = vpop.f32.mrf.mxu0
    %v1104 = vadd.f32 0.0, %v1103
    %1105 = vmatprep.mubr.f32.mxu0 0.0
    %1106 = vmatmul.mubr.f32.gmra.mxu0 %v932
    %v1107 = vpop.f32.mrf.mxu0
    %v1108 = vadd.f32 0.0, %v1107
    %v1109 = vpop.f32.mrf.mxu0
    %v1110 = vadd.f32 0.0, %v1109
    %1111 = vmatprep.mubr.f32.mxu0 0.0
    %1112 = vmatmul.mubr.f32.gmra.mxu0 %v934
    %v1113 = vpop.f32.mrf.mxu0
    %v1114 = vadd.f32 0.0, %v1113
    %v1115 = vpop.f32.mrf.mxu0
    %v1116 = vadd.f32 0.0, %v1115
    %1117 = vmatprep.mubr.f32.mxu0 0.0
    %1118 = vmatmul.mubr.f32.gmra.mxu0 %v936
    %v1119 = vpop.f32.mrf.mxu0
    %v1120 = vadd.f32 0.0, %v1119
    %v1121 = vpop.f32.mrf.mxu0
    %v1122 = vadd.f32 0.0, %v1121
    %1123 = vmatprep.mubr.f32.mxu0 0.0
    %1124 = vmatmul.mubr.f32.gmra.mxu0 %v938
    %v1125 = vpop.f32.mrf.mxu0
    %v1126 = vadd.f32 0.0, %v1125
    %v1127 = vpop.f32.mrf.mxu0
    %v1128 = vadd.f32 0.0, %v1127
    %1129 = vmatprep.mubr.f32.mxu0 0.0
    %1130 = vmatmul.mubr.f32.gmra.mxu0 %v940
    %v1131 = vpop.f32.mrf.mxu0
    %v1132 = vadd.f32 0.0, %v1131
    %v1133 = vpop.f32.mrf.mxu0
    %v1134 = vadd.f32 0.0, %v1133
    %1135 = vmatprep.mubr.f32.mxu0 0.0
    %1136 = vmatmul.mubr.f32.gmra.mxu0 %v942
    %v1137 = vpop.f32.mrf.mxu0
    %v1138 = vadd.f32 0.0, %v1137
    %v1139 = vpop.f32.mrf.mxu0
    %v1140 = vadd.f32 0.0, %v1139
    %1141 = vmatprep.mubr.f32.mxu0 0.0
    %1142 = vmatmul.mubr.f32.gmra.mxu0 %v944
    %v1143 = vpop.f32.mrf.mxu0
    %v1144 = vadd.f32 0.0, %v1143
    %v1145 = vpop.f32.mrf.mxu0
    %v1146 = vadd.f32 0.0, %v1145
    %1147 = vmatprep.mubr.f32.mxu0 0.0
    %1148 = vmatmul.mubr.f32.gmra.mxu0 %v946
    %v1149 = vpop.f32.mrf.mxu0
    %v1150 = vadd.f32 0.0, %v1149
    %v1151 = vpop.f32.mrf.mxu0
    %v1152 = vadd.f32 0.0, %v1151
    %1153 = vmatprep.mubr.f32.mxu0 0.0
    %1154 = vmatmul.mubr.f32.gmra.mxu0 %v948
    %v1155 = vpop.f32.mrf.mxu0
    %v1156 = vadd.f32 0.0, %v1155
    %v1157 = vpop.f32.mrf.mxu0
    %v1158 = vadd.f32 0.0, %v1157
    %1159 = vmatprep.mubr.f32.mxu0 0.0
    %1160 = vmatmul.mubr.f32.gmra.mxu0 %v950
    %v1161 = vpop.f32.mrf.mxu0
    %v1162 = vadd.f32 0.0, %v1161
    %v1163 = vpop.f32.mrf.mxu0
    %v1164 = vadd.f32 0.0, %v1163
    %1165 = vmatprep.mubr.f32.mxu0 0.0
    %1166 = vmatmul.mubr.f32.gmra.mxu0 %v952
    %v1167 = vpop.f32.mrf.mxu0
    %v1168 = vadd.f32 0.0, %v1167
    %v1169 = vpop.f32.mrf.mxu0
    %v1170 = vadd.f32 0.0, %v1169
    %1171 = vmatprep.mubr.f32.mxu0 0.0
    %1172 = vmatmul.mubr.f32.gmra.mxu0 %v954
    %v1173 = vpop.f32.mrf.mxu0
    %v1174 = vadd.f32 0.0, %v1173
    %v1175 = vpop.f32.mrf.mxu0
    %v1176 = vadd.f32 0.0, %v1175
    %1177 = vmatprep.mubr.f32.mxu0 0.0
    %1178 = vmatmul.mubr.f32.gmra.mxu0 %v956
    %v1179 = vpop.f32.mrf.mxu0
    %v1180 = vadd.f32 0.0, %v1179
    %v1181 = vpop.f32.mrf.mxu0
    %v1182 = vadd.f32 0.0, %v1181
    %1183 = vmatprep.mubr.f32.mxu0 0.0
    %1184 = vmatmul.mubr.f32.gmra.mxu0 %v958
    %v1185 = vpop.f32.mrf.mxu0
    %v1186 = vadd.f32 0.0, %v1185
    %v1187 = vpop.f32.mrf.mxu0
    %v1188 = vadd.f32 0.0, %v1187
    %1189 = vmatprep.mubr.f32.mxu0 0.0
    %1190 = vmatmul.mubr.f32.gmra.mxu0 %v960
    %v1191 = vpop.f32.mrf.mxu0
    %v1192 = vadd.f32 0.0, %v1191
    %v1193 = vpop.f32.mrf.mxu0
    %v1194 = vadd.f32 0.0, %v1193
    %1195 = vmatprep.mubr.f32.mxu0 0.0
    %1196 = vmatmul.mubr.f32.gmra.mxu0 %v962
    %v1197 = vpop.f32.mrf.mxu0
    %v1198 = vadd.f32 0.0, %v1197
    %v1199 = vpop.f32.mrf.mxu0
    %v1200 = vadd.f32 0.0, %v1199
    %1201 = vmatprep.mubr.f32.mxu0 0.0
    %1202 = vmatmul.mubr.f32.gmra.mxu0 %v964
    %v1203 = vpop.f32.mrf.mxu0
    %v1204 = vadd.f32 0.0, %v1203
    %v1205 = vpop.f32.mrf.mxu0
    %v1206 = vadd.f32 0.0, %v1205
    %1207 = vmatprep.mubr.f32.mxu0 0.0
    %1208 = vmatmul.mubr.f32.gmra.mxu0 %v966
    %v1209 = vpop.f32.mrf.mxu0
    %v1210 = vadd.f32 0.0, %v1209
    %v1211 = vpop.f32.mrf.mxu0
    %v1212 = vadd.f32 0.0, %v1211
    %1213 = vmatprep.mubr.f32.mxu0 0.0
    %1214 = vmatmul.mubr.f32.gmra.mxu0 %v968
    %v1215 = vpop.f32.mrf.mxu0
    %v1216 = vadd.f32 0.0, %v1215
    %v1217 = vpop.f32.mrf.mxu0
    %v1218 = vadd.f32 0.0, %v1217
    %1219 = vmatprep.mubr.f32.mxu0 0.0
    %1220 = vmatmul.mubr.f32.gmra.mxu0 %v970
    %v1221 = vpop.f32.mrf.mxu0
    %v1222 = vadd.f32 0.0, %v1221
    %v1223 = vpop.f32.mrf.mxu0
    %v1224 = vadd.f32 0.0, %v1223
    %1225 = vmatprep.mubr.f32.mxu0 0.0
    %1226 = vmatmul.mubr.f32.gmra.mxu0 %v973
    %v1227 = vpop.f32.mrf.mxu0
    %v1228 = vadd.f32 0.0, %v1227
    %v1229 = vpop.f32.mrf.mxu0
    %v1230 = vadd.f32 0.0, %v1229
    %1231 = vdwg.mxu0
    %v1232 = vadd.f32 %v644, %v1042
    %v1233 = vadd.f32 %v646, %v1044
    %v1234 = vadd.f32 %v650, %v1048
    %v1235 = vadd.f32 %v652, %v1050
    %v1236 = vadd.f32 %v656, %v1054
    %v1237 = vadd.f32 %v658, %v1056
    %v1238 = vadd.f32 %v662, %v1060
    %v1239 = vadd.f32 %v664, %v1062
    %v1240 = vadd.f32 %v668, %v1066
    %v1241 = vadd.f32 %v670, %v1068
    %v1242 = vadd.f32 %v674, %v1072
    %v1243 = vadd.f32 %v676, %v1074
    %v1244 = vadd.f32 %v680, %v1078
    %v1245 = vadd.f32 %v682, %v1080
    %v1246 = vadd.f32 %v686, %v1084
    %v1247 = vadd.f32 %v688, %v1086
    %v1248 = vadd.f32 %v692, %v1090
    %v1249 = vadd.f32 %v694, %v1092
    %v1250 = vadd.f32 %v698, %v1096
    %v1251 = vadd.f32 %v700, %v1098
    %v1252 = vadd.f32 %v704, %v1102
    %v1253 = vadd.f32 %v706, %v1104
    %v1254 = vadd.f32 %v710, %v1108
    %v1255 = vadd.f32 %v712, %v1110
    %v1256 = vadd.f32 %v716, %v1114
    %v1257 = vadd.f32 %v718, %v1116
    %v1258 = vadd.f32 %v722, %v1120
    %v1259 = vadd.f32 %v724, %v1122
    %v1260 = vadd.f32 %v728, %v1126
    %v1261 = vadd.f32 %v730, %v1128
    %v1262 = vadd.f32 %v734, %v1132
    %v1263 = vadd.f32 %v736, %v1134
    %v1264 = vadd.f32 %v740, %v1138
    %v1265 = vadd.f32 %v742, %v1140
    %v1266 = vadd.f32 %v746, %v1144
    %v1267 = vadd.f32 %v748, %v1146
    %v1268 = vadd.f32 %v752, %v1150
    %v1269 = vadd.f32 %v754, %v1152
    %v1270 = vadd.f32 %v758, %v1156
    %v1271 = vadd.f32 %v760, %v1158
    %v1272 = vadd.f32 %v764, %v1162
    %v1273 = vadd.f32 %v766, %v1164
    %v1274 = vadd.f32 %v770, %v1168
    %v1275 = vadd.f32 %v772, %v1170
    %v1276 = vadd.f32 %v776, %v1174
    %v1277 = vadd.f32 %v778, %v1176
    %v1278 = vadd.f32 %v782, %v1180
    %v1279 = vadd.f32 %v784, %v1182
    %v1280 = vadd.f32 %v788, %v1186
    %v1281 = vadd.f32 %v790, %v1188
    %v1282 = vadd.f32 %v794, %v1192
    %v1283 = vadd.f32 %v796, %v1194
    %v1284 = vadd.f32 %v800, %v1198
    %v1285 = vadd.f32 %v802, %v1200
    %v1286 = vadd.f32 %v806, %v1204
    %v1287 = vadd.f32 %v808, %v1206
    %v1288 = vadd.f32 %v812, %v1210
    %v1289 = vadd.f32 %v814, %v1212
    %v1290 = vadd.f32 %v818, %v1216
    %v1291 = vadd.f32 %v820, %v1218
    %v1292 = vadd.f32 %v824, %v1222
    %v1293 = vadd.f32 %v826, %v1224
    %v1294 = vadd.f32 %v830, %v1228
    %v1295 = vadd.f32 %v832, %v1230
    %vm1296 = vcmask 1044480
    %v1297 = vrot.slane %v42, 3
    %v1298 = vrot.slane %v43, 3
    %v1299 = vsel %vm1296, %v1297, %v1298
    %v1300 = vrot.slane %v44, 3
    %v1301 = vsel %vm1296, %v1298, %v1300
    %v1302 = vrot.slane %v45, 3
    %v1303 = vsel %vm1296, %v1300, %v1302
    %v1304 = vrot.slane %v46, 3
    %v1305 = vsel %vm1296, %v1302, %v1304
    %v1306 = vrot.slane %v47, 3
    %v1307 = vsel %vm1296, %v1304, %v1306
    %v1308 = vrot.slane %v48, 3
    %v1309 = vsel %vm1296, %v1306, %v1308
    %v1310 = vrot.slane %v49, 3
    %v1311 = vsel %vm1296, %v1308, %v1310
    %v1312 = vrot.slane %v50, 3
    %v1313 = vsel %vm1296, %v1310, %v1312
    %v1314 = vrot.slane %v51, 3
    %v1315 = vsel %vm1296, %v1312, %v1314
    %v1316 = vrot.slane %v52, 3
    %v1317 = vsel %vm1296, %v1314, %v1316
    %v1318 = vrot.slane %v53, 3
    %v1319 = vsel %vm1296, %v1316, %v1318
    %v1320 = vrot.slane %v54, 3
    %v1321 = vsel %vm1296, %v1318, %v1320
    %v1322 = vrot.slane %v55, 3
    %v1323 = vsel %vm1296, %v1320, %v1322
    %v1324 = vrot.slane %v56, 3
    %v1325 = vsel %vm1296, %v1322, %v1324
    %v1326 = vrot.slane %v57, 3
    %v1327 = vsel %vm1296, %v1324, %v1326
    %v1328 = vrot.slane %v58, 3
    %v1329 = vsel %vm1296, %v1326, %v1328
    %v1330 = vrot.slane %v59, 3
    %v1331 = vsel %vm1296, %v1328, %v1330
    %v1332 = vrot.slane %v60, 3
    %v1333 = vsel %vm1296, %v1330, %v1332
    %v1334 = vrot.slane %v61, 3
    %v1335 = vsel %vm1296, %v1332, %v1334
    %v1336 = vrot.slane %v62, 3
    %v1337 = vsel %vm1296, %v1334, %v1336
    %v1338 = vrot.slane %v63, 3
    %v1339 = vsel %vm1296, %v1336, %v1338
    %v1340 = vrot.slane %v64, 3
    %v1341 = vsel %vm1296, %v1338, %v1340
    %v1342 = vrot.slane %v65, 3
    %v1343 = vsel %vm1296, %v1340, %v1342
    %v1344 = vrot.slane %v66, 3
    %v1345 = vsel %vm1296, %v1342, %v1344
    %v1346 = vrot.slane %v67, 3
    %v1347 = vsel %vm1296, %v1344, %v1346
    %v1348 = vrot.slane %v68, 3
    %v1349 = vsel %vm1296, %v1346, %v1348
    %v1350 = vrot.slane %v69, 3
    %v1351 = vsel %vm1296, %v1348, %v1350
    %v1352 = vrot.slane %v70, 3
    %v1353 = vsel %vm1296, %v1350, %v1352
    %v1354 = vrot.slane %v71, 3
    %v1355 = vsel %vm1296, %v1352, %v1354
    %v1356 = vrot.slane %v72, 3
    %v1357 = vsel %vm1296, %v1354, %v1356
    %v1358 = vrot.slane %v73, 3
    %v1359 = vsel %vm1296, %v1356, %v1358
    %v1362 = vsel %vm1296, %v1358, %v1297
    %s1363 = scalar_lea.vmem %s1, 192
    %v1364 = vld [vmem:[%s1363] sm:$0xff]
    %v1365 = vld [vmem:[%s1363 + $0x8] sm:$0xff]
    %v1366 = vld [vmem:[%s1363 + $0x10] sm:$0xff]
    %v1367 = vld [vmem:[%s1363 + $0x18] sm:$0xff]
    %v1368 = vld [vmem:[%s1363 + $0x20] sm:$0xff]
    %v1369 = vld [vmem:[%s1363 + $0x28] sm:$0xff]
    %v1370 = vld [vmem:[%s1363 + $0x30] sm:$0xff]
    %v1371 = vld [vmem:[%s1363 + $0x38] sm:$0xff]
    %v1372 = vsel %vm190, %v1299, 0
    %v1374 = vsel %vm190, %v1301, 0
    %v1376 = vsel %vm190, %v1303, 0
    %v1378 = vsel %vm190, %v1305, 0
    %v1380 = vsel %vm190, %v1307, 0
    %v1382 = vsel %vm190, %v1309, 0
    %v1384 = vsel %vm190, %v1311, 0
    %v1386 = vsel %vm190, %v1313, 0
    %v1388 = vsel %vm190, %v1315, 0
    %v1390 = vsel %vm190, %v1317, 0
    %v1392 = vsel %vm190, %v1319, 0
    %v1394 = vsel %vm190, %v1321, 0
    %v1396 = vsel %vm190, %v1323, 0
    %v1398 = vsel %vm190, %v1325, 0
    %v1400 = vsel %vm190, %v1327, 0
    %v1402 = vsel %vm190, %v1329, 0
    %v1404 = vsel %vm190, %v1331, 0
    %v1406 = vsel %vm190, %v1333, 0
    %v1408 = vsel %vm190, %v1335, 0
    %v1410 = vsel %vm190, %v1337, 0
    %v1412 = vsel %vm190, %v1339, 0
    %v1414 = vsel %vm190, %v1341, 0
    %v1416 = vsel %vm190, %v1343, 0
    %v1418 = vsel %vm190, %v1345, 0
    %v1420 = vsel %vm190, %v1347, 0
    %v1422 = vsel %vm190, %v1349, 0
    %v1424 = vsel %vm190, %v1351, 0
    %v1426 = vsel %vm190, %v1353, 0
    %v1428 = vsel %vm190, %v1355, 0
    %v1430 = vsel %vm190, %v1357, 0
    %v1432 = vsel %vm190, %v1359, 0
    %v1435 = vsel %vm190, %v1362, 0
    %1437 = vmatprep.subr.mxu0 0.0
    %1438 = vmatpush1.msra.mxu0 0.0
    %1439 = vmatprep.subr.mxu0 0.0
    %1440 = vmatpush1.msra.mxu0 0.0
    %1441 = vmatprep.subr.mxu0 0.0
    %1442 = vmatpush1.msra.mxu0 0.0
    %1443 = vmatprep.subr.mxu0 0.0
    %1444 = vmatpush1.msra.mxu0 0.0
    %1445 = vmatprep.subr.mxu0 0.0
    %1446 = vmatpush1.msra.mxu0 0.0
    %1447 = vmatprep.subr.mxu0 0.0
    %1448 = vmatpush1.msra.mxu0 0.0
    %1449 = vmatprep.subr.mxu0 0.0
    %1450 = vmatpush1.msra.mxu0 0.0
    %1451 = vmatprep.subr.mxu0 0.0
    %1452 = vmatpush1.msra.mxu0 0.0
    %1453 = vmatprep.subr.mxu0 0.0
    %1454 = vmatpush1.msra.mxu0 0.0
    %1455 = vmatprep.subr.mxu0 0.0
    %1456 = vmatpush1.msra.mxu0 0.0
    %1457 = vmatprep.subr.mxu0 0.0
    %1458 = vmatpush1.msra.mxu0 0.0
    %1459 = vmatprep.subr.mxu0 0.0
    %1460 = vmatpush1.msra.mxu0 0.0
    %1461 = vmatprep.subr.mxu0 %v1371
    %1462 = vmatpush1.msra.mxu0 %v1370
    %1463 = vmatprep.subr.mxu0 %v1369
    %1464 = vmatpush1.msra.mxu0 %v1368
    %1465 = vmatprep.subr.mxu0 %v1367
    %1466 = vmatpush1.msra.mxu0 %v1366
    %1467 = vmatprep.subr.mxu0 %v1365
    %1468 = vmatpush1.msra.mxu0 %v1364
    %1469 = vmatprep.subr.mxu0 0.0
    %1470 = vmatpush2.msra.mxu0 0.0
    %1471 = vmatprep.subr.mxu0 0.0
    %1472 = vmatpush2.msra.mxu0 0.0
    %1473 = vmatprep.subr.mxu0 0.0
    %1474 = vmatpush2.msra.mxu0 0.0
    %1475 = vmatprep.subr.mxu0 0.0
    %1476 = vmatpush2.msra.mxu0 0.0
    %1477 = vmatprep.subr.mxu0 0.0
    %1478 = vmatpush2.msra.mxu0 0.0
    %1479 = vmatprep.subr.mxu0 0.0
    %1480 = vmatpush2.msra.mxu0 0.0
    %1481 = vmatprep.subr.mxu0 0.0
    %1482 = vmatpush2.msra.mxu0 0.0
    %1483 = vmatprep.subr.mxu0 0.0
    %1484 = vmatpush2.msra.mxu0 0.0
    %1485 = vmatprep.subr.mxu0 0.0
    %1486 = vmatpush2.msra.mxu0 0.0
    %1487 = vmatprep.subr.mxu0 0.0
    %1488 = vmatpush2.msra.mxu0 0.0
    %1489 = vmatprep.subr.mxu0 0.0
    %1490 = vmatpush2.msra.mxu0 0.0
    %1491 = vmatprep.subr.mxu0 0.0
    %1492 = vmatpush2.msra.mxu0 0.0
    %1493 = vmatprep.subr.mxu0 0.0
    %1494 = vmatpush2.msra.mxu0 0.0
    %1495 = vmatprep.subr.mxu0 0.0
    %1496 = vmatpush2.msra.mxu0 0.0
    %1497 = vmatprep.subr.mxu0 0.0
    %1498 = vmatpush2.msra.mxu0 0.0
    %1499 = vmatprep.subr.mxu0 0.0
    %1500 = vmatpush2.msra.mxu0 0.0
    %1501 = vmatprep.mubr.f32.mxu0 0.0
    %1502 = vmatmul.mubr.f32.gmra.mxu0 %v1372
    %v1503 = vpop.f32.mrf.mxu0
    %v1504 = vadd.f32 0.0, %v1503
    %v1505 = vpop.f32.mrf.mxu0
    %v1506 = vadd.f32 0.0, %v1505
    %1507 = vmatprep.mubr.f32.mxu0 0.0
    %1508 = vmatmul.mubr.f32.gmra.mxu0 %v1374
    %v1509 = vpop.f32.mrf.mxu0
    %v1510 = vadd.f32 0.0, %v1509
    %v1511 = vpop.f32.mrf.mxu0
    %v1512 = vadd.f32 0.0, %v1511
    %1513 = vmatprep.mubr.f32.mxu0 0.0
    %1514 = vmatmul.mubr.f32.gmra.mxu0 %v1376
    %v1515 = vpop.f32.mrf.mxu0
    %v1516 = vadd.f32 0.0, %v1515
    %v1517 = vpop.f32.mrf.mxu0
    %v1518 = vadd.f32 0.0, %v1517
    %1519 = vmatprep.mubr.f32.mxu0 0.0
    %1520 = vmatmul.mubr.f32.gmra.mxu0 %v1378
    %v1521 = vpop.f32.mrf.mxu0
    %v1522 = vadd.f32 0.0, %v1521
    %v1523 = vpop.f32.mrf.mxu0
    %v1524 = vadd.f32 0.0, %v1523
    %1525 = vmatprep.mubr.f32.mxu0 0.0
    %1526 = vmatmul.mubr.f32.gmra.mxu0 %v1380
    %v1527 = vpop.f32.mrf.mxu0
    %v1528 = vadd.f32 0.0, %v1527
    %v1529 = vpop.f32.mrf.mxu0
    %v1530 = vadd.f32 0.0, %v1529
    %1531 = vmatprep.mubr.f32.mxu0 0.0
    %1532 = vmatmul.mubr.f32.gmra.mxu0 %v1382
    %v1533 = vpop.f32.mrf.mxu0
    %v1534 = vadd.f32 0.0, %v1533
    %v1535 = vpop.f32.mrf.mxu0
    %v1536 = vadd.f32 0.0, %v1535
    %1537 = vmatprep.mubr.f32.mxu0 0.0
    %1538 = vmatmul.mubr.f32.gmra.mxu0 %v1384
    %v1539 = vpop.f32.mrf.mxu0
    %v1540 = vadd.f32 0.0, %v1539
    %v1541 = vpop.f32.mrf.mxu0
    %v1542 = vadd.f32 0.0, %v1541
    %1543 = vmatprep.mubr.f32.mxu0 0.0
    %1544 = vmatmul.mubr.f32.gmra.mxu0 %v1386
    %v1545 = vpop.f32.mrf.mxu0
    %v1546 = vadd.f32 0.0, %v1545
    %v1547 = vpop.f32.mrf.mxu0
    %v1548 = vadd.f32 0.0, %v1547
    %1549 = vmatprep.mubr.f32.mxu0 0.0
    %1550 = vmatmul.mubr.f32.gmra.mxu0 %v1388
    %v1551 = vpop.f32.mrf.mxu0
    %v1552 = vadd.f32 0.0, %v1551
    %v1553 = vpop.f32.mrf.mxu0
    %v1554 = vadd.f32 0.0, %v1553
    %1555 = vmatprep.mubr.f32.mxu0 0.0
    %1556 = vmatmul.mubr.f32.gmra.mxu0 %v1390
    %v1557 = vpop.f32.mrf.mxu0
    %v1558 = vadd.f32 0.0, %v1557
    %v1559 = vpop.f32.mrf.mxu0
    %v1560 = vadd.f32 0.0, %v1559
    %1561 = vmatprep.mubr.f32.mxu0 0.0
    %1562 = vmatmul.mubr.f32.gmra.mxu0 %v1392
    %v1563 = vpop.f32.mrf.mxu0
    %v1564 = vadd.f32 0.0, %v1563
    %v1565 = vpop.f32.mrf.mxu0
    %v1566 = vadd.f32 0.0, %v1565
    %1567 = vmatprep.mubr.f32.mxu0 0.0
    %1568 = vmatmul.mubr.f32.gmra.mxu0 %v1394
    %v1569 = vpop.f32.mrf.mxu0
    %v1570 = vadd.f32 0.0, %v1569
    %v1571 = vpop.f32.mrf.mxu0
    %v1572 = vadd.f32 0.0, %v1571
    %1573 = vmatprep.mubr.f32.mxu0 0.0
    %1574 = vmatmul.mubr.f32.gmra.mxu0 %v1396
    %v1575 = vpop.f32.mrf.mxu0
    %v1576 = vadd.f32 0.0, %v1575
    %v1577 = vpop.f32.mrf.mxu0
    %v1578 = vadd.f32 0.0, %v1577
    %1579 = vmatprep.mubr.f32.mxu0 0.0
    %1580 = vmatmul.mubr.f32.gmra.mxu0 %v1398
    %v1581 = vpop.f32.mrf.mxu0
    %v1582 = vadd.f32 0.0, %v1581
    %v1583 = vpop.f32.mrf.mxu0
    %v1584 = vadd.f32 0.0, %v1583
    %1585 = vmatprep.mubr.f32.mxu0 0.0
    %1586 = vmatmul.mubr.f32.gmra.mxu0 %v1400
    %v1587 = vpop.f32.mrf.mxu0
    %v1588 = vadd.f32 0.0, %v1587
    %v1589 = vpop.f32.mrf.mxu0
    %v1590 = vadd.f32 0.0, %v1589
    %1591 = vmatprep.mubr.f32.mxu0 0.0
    %1592 = vmatmul.mubr.f32.gmra.mxu0 %v1402
    %v1593 = vpop.f32.mrf.mxu0
    %v1594 = vadd.f32 0.0, %v1593
    %v1595 = vpop.f32.mrf.mxu0
    %v1596 = vadd.f32 0.0, %v1595
    %1597 = vmatprep.mubr.f32.mxu0 0.0
    %1598 = vmatmul.mubr.f32.gmra.mxu0 %v1404
    %v1599 = vpop.f32.mrf.mxu0
    %v1600 = vadd.f32 0.0, %v1599
    %v1601 = vpop.f32.mrf.mxu0
    %v1602 = vadd.f32 0.0, %v1601
    %1603 = vmatprep.mubr.f32.mxu0 0.0
    %1604 = vmatmul.mubr.f32.gmra.mxu0 %v1406
    %v1605 = vpop.f32.mrf.mxu0
    %v1606 = vadd.f32 0.0, %v1605
    %v1607 = vpop.f32.mrf.mxu0
    %v1608 = vadd.f32 0.0, %v1607
    %1609 = vmatprep.mubr.f32.mxu0 0.0
    %1610 = vmatmul.mubr.f32.gmra.mxu0 %v1408
    %v1611 = vpop.f32.mrf.mxu0
    %v1612 = vadd.f32 0.0, %v1611
    %v1613 = vpop.f32.mrf.mxu0
    %v1614 = vadd.f32 0.0, %v1613
    %1615 = vmatprep.mubr.f32.mxu0 0.0
    %1616 = vmatmul.mubr.f32.gmra.mxu0 %v1410
    %v1617 = vpop.f32.mrf.mxu0
    %v1618 = vadd.f32 0.0, %v1617
    %v1619 = vpop.f32.mrf.mxu0
    %v1620 = vadd.f32 0.0, %v1619
    %1621 = vmatprep.mubr.f32.mxu0 0.0
    %1622 = vmatmul.mubr.f32.gmra.mxu0 %v1412
    %v1623 = vpop.f32.mrf.mxu0
    %v1624 = vadd.f32 0.0, %v1623
    %v1625 = vpop.f32.mrf.mxu0
    %v1626 = vadd.f32 0.0, %v1625
    %1627 = vmatprep.mubr.f32.mxu0 0.0
    %1628 = vmatmul.mubr.f32.gmra.mxu0 %v1414
    %v1629 = vpop.f32.mrf.mxu0
    %v1630 = vadd.f32 0.0, %v1629
    %v1631 = vpop.f32.mrf.mxu0
    %v1632 = vadd.f32 0.0, %v1631
    %1633 = vmatprep.mubr.f32.mxu0 0.0
    %1634 = vmatmul.mubr.f32.gmra.mxu0 %v1416
    %v1635 = vpop.f32.mrf.mxu0
    %v1636 = vadd.f32 0.0, %v1635
    %v1637 = vpop.f32.mrf.mxu0
    %v1638 = vadd.f32 0.0, %v1637
    %1639 = vmatprep.mubr.f32.mxu0 0.0
    %1640 = vmatmul.mubr.f32.gmra.mxu0 %v1418
    %v1641 = vpop.f32.mrf.mxu0
    %v1642 = vadd.f32 0.0, %v1641
    %v1643 = vpop.f32.mrf.mxu0
    %v1644 = vadd.f32 0.0, %v1643
    %1645 = vmatprep.mubr.f32.mxu0 0.0
    %1646 = vmatmul.mubr.f32.gmra.mxu0 %v1420
    %v1647 = vpop.f32.mrf.mxu0
    %v1648 = vadd.f32 0.0, %v1647
    %v1649 = vpop.f32.mrf.mxu0
    %v1650 = vadd.f32 0.0, %v1649
    %1651 = vmatprep.mubr.f32.mxu0 0.0
    %1652 = vmatmul.mubr.f32.gmra.mxu0 %v1422
    %v1653 = vpop.f32.mrf.mxu0
    %v1654 = vadd.f32 0.0, %v1653
    %v1655 = vpop.f32.mrf.mxu0
    %v1656 = vadd.f32 0.0, %v1655
    %1657 = vmatprep.mubr.f32.mxu0 0.0
    %1658 = vmatmul.mubr.f32.gmra.mxu0 %v1424
    %v1659 = vpop.f32.mrf.mxu0
    %v1660 = vadd.f32 0.0, %v1659
    %v1661 = vpop.f32.mrf.mxu0
    %v1662 = vadd.f32 0.0, %v1661
    %1663 = vmatprep.mubr.f32.mxu0 0.0
    %1664 = vmatmul.mubr.f32.gmra.mxu0 %v1426
    %v1665 = vpop.f32.mrf.mxu0
    %v1666 = vadd.f32 0.0, %v1665
    %v1667 = vpop.f32.mrf.mxu0
    %v1668 = vadd.f32 0.0, %v1667
    %1669 = vmatprep.mubr.f32.mxu0 0.0
    %1670 = vmatmul.mubr.f32.gmra.mxu0 %v1428
    %v1671 = vpop.f32.mrf.mxu0
    %v1672 = vadd.f32 0.0, %v1671
    %v1673 = vpop.f32.mrf.mxu0
    %v1674 = vadd.f32 0.0, %v1673
    %1675 = vmatprep.mubr.f32.mxu0 0.0
    %1676 = vmatmul.mubr.f32.gmra.mxu0 %v1430
    %v1677 = vpop.f32.mrf.mxu0
    %v1678 = vadd.f32 0.0, %v1677
    %v1679 = vpop.f32.mrf.mxu0
    %v1680 = vadd.f32 0.0, %v1679
    %1681 = vmatprep.mubr.f32.mxu0 0.0
    %1682 = vmatmul.mubr.f32.gmra.mxu0 %v1432
    %v1683 = vpop.f32.mrf.mxu0
    %v1684 = vadd.f32 0.0, %v1683
    %v1685 = vpop.f32.mrf.mxu0
    %v1686 = vadd.f32 0.0, %v1685
    %1687 = vmatprep.mubr.f32.mxu0 0.0
    %1688 = vmatmul.mubr.f32.gmra.mxu0 %v1435
    %v1689 = vpop.f32.mrf.mxu0
    %v1690 = vadd.f32 0.0, %v1689
    %v1691 = vpop.f32.mrf.mxu0
    %v1692 = vadd.f32 0.0, %v1691
    %1693 = vdwg.mxu0
    %v1694 = vadd.f32 %v1232, %v1504
    %v1695 = vadd.f32 %v1233, %v1506
    %v1696 = vadd.f32 %v1234, %v1510
    %v1697 = vadd.f32 %v1235, %v1512
    %v1698 = vadd.f32 %v1236, %v1516
    %v1699 = vadd.f32 %v1237, %v1518
    %v1700 = vadd.f32 %v1238, %v1522
    %v1701 = vadd.f32 %v1239, %v1524
    %v1702 = vadd.f32 %v1240, %v1528
    %v1703 = vadd.f32 %v1241, %v1530
    %v1704 = vadd.f32 %v1242, %v1534
    %v1705 = vadd.f32 %v1243, %v1536
    %v1706 = vadd.f32 %v1244, %v1540
    %v1707 = vadd.f32 %v1245, %v1542
    %v1708 = vadd.f32 %v1246, %v1546
    %v1709 = vadd.f32 %v1247, %v1548
    %v1710 = vadd.f32 %v1248, %v1552
    %v1711 = vadd.f32 %v1249, %v1554
    %v1712 = vadd.f32 %v1250, %v1558
    %v1713 = vadd.f32 %v1251, %v1560
    %v1714 = vadd.f32 %v1252, %v1564
    %v1715 = vadd.f32 %v1253, %v1566
    %v1716 = vadd.f32 %v1254, %v1570
    %v1717 = vadd.f32 %v1255, %v1572
    %v1718 = vadd.f32 %v1256, %v1576
    %v1719 = vadd.f32 %v1257, %v1578
    %v1720 = vadd.f32 %v1258, %v1582
    %v1721 = vadd.f32 %v1259, %v1584
    %v1722 = vadd.f32 %v1260, %v1588
    %v1723 = vadd.f32 %v1261, %v1590
    %v1724 = vadd.f32 %v1262, %v1594
    %v1725 = vadd.f32 %v1263, %v1596
    %v1726 = vadd.f32 %v1264, %v1600
    %v1727 = vadd.f32 %v1265, %v1602
    %v1728 = vadd.f32 %v1266, %v1606
    %v1729 = vadd.f32 %v1267, %v1608
    %v1730 = vadd.f32 %v1268, %v1612
    %v1731 = vadd.f32 %v1269, %v1614
    %v1732 = vadd.f32 %v1270, %v1618
    %v1733 = vadd.f32 %v1271, %v1620
    %v1734 = vadd.f32 %v1272, %v1624
    %v1735 = vadd.f32 %v1273, %v1626
    %v1736 = vadd.f32 %v1274, %v1630
    %v1737 = vadd.f32 %v1275, %v1632
    %v1738 = vadd.f32 %v1276, %v1636
    %v1739 = vadd.f32 %v1277, %v1638
    %v1740 = vadd.f32 %v1278, %v1642
    %v1741 = vadd.f32 %v1279, %v1644
    %v1742 = vadd.f32 %v1280, %v1648
    %v1743 = vadd.f32 %v1281, %v1650
    %v1744 = vadd.f32 %v1282, %v1654
    %v1745 = vadd.f32 %v1283, %v1656
    %v1746 = vadd.f32 %v1284, %v1660
    %v1747 = vadd.f32 %v1285, %v1662
    %v1748 = vadd.f32 %v1286, %v1666
    %v1749 = vadd.f32 %v1287, %v1668
    %v1750 = vadd.f32 %v1288, %v1672
    %v1751 = vadd.f32 %v1289, %v1674
    %v1752 = vadd.f32 %v1290, %v1678
    %v1753 = vadd.f32 %v1291, %v1680
    %v1754 = vadd.f32 %v1292, %v1684
    %v1755 = vadd.f32 %v1293, %v1686
    %v1756 = vadd.f32 %v1294, %v1690
    %v1757 = vadd.f32 %v1295, %v1692
    %vm1758 = vcmask 1043456
    %v1759 = vrot.slane %v42, 4
    %v1760 = vrot.slane %v43, 4
    %v1761 = vsel %vm1758, %v1759, %v1760
    %v1762 = vrot.slane %v44, 4
    %v1763 = vsel %vm1758, %v1760, %v1762
    %v1764 = vrot.slane %v45, 4
    %v1765 = vsel %vm1758, %v1762, %v1764
    %v1766 = vrot.slane %v46, 4
    %v1767 = vsel %vm1758, %v1764, %v1766
    %v1768 = vrot.slane %v47, 4
    %v1769 = vsel %vm1758, %v1766, %v1768
    %v1770 = vrot.slane %v48, 4
    %v1771 = vsel %vm1758, %v1768, %v1770
    %v1772 = vrot.slane %v49, 4
    %v1773 = vsel %vm1758, %v1770, %v1772
    %v1774 = vrot.slane %v50, 4
    %v1775 = vsel %vm1758, %v1772, %v1774
    %v1776 = vrot.slane %v51, 4
    %v1777 = vsel %vm1758, %v1774, %v1776
    %v1778 = vrot.slane %v52, 4
    %v1779 = vsel %vm1758, %v1776, %v1778
    %v1780 = vrot.slane %v53, 4
    %v1781 = vsel %vm1758, %v1778, %v1780
    %v1782 = vrot.slane %v54, 4
    %v1783 = vsel %vm1758, %v1780, %v1782
    %v1784 = vrot.slane %v55, 4
    %v1785 = vsel %vm1758, %v1782, %v1784
    %v1786 = vrot.slane %v56, 4
    %v1787 = vsel %vm1758, %v1784, %v1786
    %v1788 = vrot.slane %v57, 4
    %v1789 = vsel %vm1758, %v1786, %v1788
    %v1790 = vrot.slane %v58, 4
    %v1791 = vsel %vm1758, %v1788, %v1790
    %v1792 = vrot.slane %v59, 4
    %v1793 = vsel %vm1758, %v1790, %v1792
    %v1794 = vrot.slane %v60, 4
    %v1795 = vsel %vm1758, %v1792, %v1794
    %v1796 = vrot.slane %v61, 4
    %v1797 = vsel %vm1758, %v1794, %v1796
    %v1798 = vrot.slane %v62, 4
    %v1799 = vsel %vm1758, %v1796, %v1798
    %v1800 = vrot.slane %v63, 4
    %v1801 = vsel %vm1758, %v1798, %v1800
    %v1802 = vrot.slane %v64, 4
    %v1803 = vsel %vm1758, %v1800, %v1802
    %v1804 = vrot.slane %v65, 4
    %v1805 = vsel %vm1758, %v1802, %v1804
    %v1806 = vrot.slane %v66, 4
    %v1807 = vsel %vm1758, %v1804, %v1806
    %v1808 = vrot.slane %v67, 4
    %v1809 = vsel %vm1758, %v1806, %v1808
    %v1810 = vrot.slane %v68, 4
    %v1811 = vsel %vm1758, %v1808, %v1810
    %v1812 = vrot.slane %v69, 4
    %v1813 = vsel %vm1758, %v1810, %v1812
    %v1814 = vrot.slane %v70, 4
    %v1815 = vsel %vm1758, %v1812, %v1814
    %v1816 = vrot.slane %v71, 4
    %v1817 = vsel %vm1758, %v1814, %v1816
    %v1818 = vrot.slane %v72, 4
    %v1819 = vsel %vm1758, %v1816, %v1818
    %v1820 = vrot.slane %v73, 4
    %v1821 = vsel %vm1758, %v1818, %v1820
    %v1824 = vsel %vm1758, %v1820, %v1759
    %s1825 = scalar_lea.vmem %s1, 256
    %v1826 = vld [vmem:[%s1825] sm:$0xff]
    %v1827 = vld [vmem:[%s1825 + $0x8] sm:$0xff]
    %v1828 = vld [vmem:[%s1825 + $0x10] sm:$0xff]
    %v1829 = vld [vmem:[%s1825 + $0x18] sm:$0xff]
    %v1830 = vld [vmem:[%s1825 + $0x20] sm:$0xff]
    %v1831 = vld [vmem:[%s1825 + $0x28] sm:$0xff]
    %v1832 = vld [vmem:[%s1825 + $0x30] sm:$0xff]
    %v1833 = vld [vmem:[%s1825 + $0x38] sm:$0xff]
    %v1834 = vsel %vm190, %v1761, 0
    %v1836 = vsel %vm190, %v1763, 0
    %v1838 = vsel %vm190, %v1765, 0
    %v1840 = vsel %vm190, %v1767, 0
    %v1842 = vsel %vm190, %v1769, 0
    %v1844 = vsel %vm190, %v1771, 0
    %v1846 = vsel %vm190, %v1773, 0
    %v1848 = vsel %vm190, %v1775, 0
    %v1850 = vsel %vm190, %v1777, 0
    %v1852 = vsel %vm190, %v1779, 0
    %v1854 = vsel %vm190, %v1781, 0
    %v1856 = vsel %vm190, %v1783, 0
    %v1858 = vsel %vm190, %v1785, 0
    %v1860 = vsel %vm190, %v1787, 0
    %v1862 = vsel %vm190, %v1789, 0
    %v1864 = vsel %vm190, %v1791, 0
    %v1866 = vsel %vm190, %v1793, 0
    %v1868 = vsel %vm190, %v1795, 0
    %v1870 = vsel %vm190, %v1797, 0
    %v1872 = vsel %vm190, %v1799, 0
    %v1874 = vsel %vm190, %v1801, 0
    %v1876 = vsel %vm190, %v1803, 0
    %v1878 = vsel %vm190, %v1805, 0
    %v1880 = vsel %vm190, %v1807, 0
    %v1882 = vsel %vm190, %v1809, 0
    %v1884 = vsel %vm190, %v1811, 0
    %v1886 = vsel %vm190, %v1813, 0
    %v1888 = vsel %vm190, %v1815, 0
    %v1890 = vsel %vm190, %v1817, 0
    %v1892 = vsel %vm190, %v1819, 0
    %v1894 = vsel %vm190, %v1821, 0
    %v1897 = vsel %vm190, %v1824, 0
    %1899 = vmatprep.subr.mxu0 0.0
    %1900 = vmatpush1.msra.mxu0 0.0
    %1901 = vmatprep.subr.mxu0 0.0
    %1902 = vmatpush1.msra.mxu0 0.0
    %1903 = vmatprep.subr.mxu0 0.0
    %1904 = vmatpush1.msra.mxu0 0.0
    %1905 = vmatprep.subr.mxu0 0.0
    %1906 = vmatpush1.msra.mxu0 0.0
    %1907 = vmatprep.subr.mxu0 0.0
    %1908 = vmatpush1.msra.mxu0 0.0
    %1909 = vmatprep.subr.mxu0 0.0
    %1910 = vmatpush1.msra.mxu0 0.0
    %1911 = vmatprep.subr.mxu0 0.0
    %1912 = vmatpush1.msra.mxu0 0.0
    %1913 = vmatprep.subr.mxu0 0.0
    %1914 = vmatpush1.msra.mxu0 0.0
    %1915 = vmatprep.subr.mxu0 0.0
    %1916 = vmatpush1.msra.mxu0 0.0
    %1917 = vmatprep.subr.mxu0 0.0
    %1918 = vmatpush1.msra.mxu0 0.0
    %1919 = vmatprep.subr.mxu0 0.0
    %1920 = vmatpush1.msra.mxu0 0.0
    %1921 = vmatprep.subr.mxu0 0.0
    %1922 = vmatpush1.msra.mxu0 0.0
    %1923 = vmatprep.subr.mxu0 %v1833
    %1924 = vmatpush1.msra.mxu0 %v1832
    %1925 = vmatprep.subr.mxu0 %v1831
    %1926 = vmatpush1.msra.mxu0 %v1830
    %1927 = vmatprep.subr.mxu0 %v1829
    %1928 = vmatpush1.msra.mxu0 %v1828
    %1929 = vmatprep.subr.mxu0 %v1827
    %1930 = vmatpush1.msra.mxu0 %v1826
    %1931 = vmatprep.subr.mxu0 0.0
    %1932 = vmatpush2.msra.mxu0 0.0
    %1933 = vmatprep.subr.mxu0 0.0
    %1934 = vmatpush2.msra.mxu0 0.0
    %1935 = vmatprep.subr.mxu0 0.0
    %1936 = vmatpush2.msra.mxu0 0.0
    %1937 = vmatprep.subr.mxu0 0.0
    %1938 = vmatpush2.msra.mxu0 0.0
    %1939 = vmatprep.subr.mxu0 0.0
    %1940 = vmatpush2.msra.mxu0 0.0
    %1941 = vmatprep.subr.mxu0 0.0
    %1942 = vmatpush2.msra.mxu0 0.0
    %1943 = vmatprep.subr.mxu0 0.0
    %1944 = vmatpush2.msra.mxu0 0.0
    %1945 = vmatprep.subr.mxu0 0.0
    %1946 = vmatpush2.msra.mxu0 0.0
    %1947 = vmatprep.subr.mxu0 0.0
    %1948 = vmatpush2.msra.mxu0 0.0
    %1949 = vmatprep.subr.mxu0 0.0
    %1950 = vmatpush2.msra.mxu0 0.0
    %1951 = vmatprep.subr.mxu0 0.0
    %1952 = vmatpush2.msra.mxu0 0.0
    %1953 = vmatprep.subr.mxu0 0.0
    %1954 = vmatpush2.msra.mxu0 0.0
    %1955 = vmatprep.subr.mxu0 0.0
    %1956 = vmatpush2.msra.mxu0 0.0
    %1957 = vmatprep.subr.mxu0 0.0
    %1958 = vmatpush2.msra.mxu0 0.0
    %1959 = vmatprep.subr.mxu0 0.0
    %1960 = vmatpush2.msra.mxu0 0.0
    %1961 = vmatprep.subr.mxu0 0.0
    %1962 = vmatpush2.msra.mxu0 0.0
    %1963 = vmatprep.mubr.f32.mxu0 0.0
    %1964 = vmatmul.mubr.f32.gmra.mxu0 %v1834
    %v1965 = vpop.f32.mrf.mxu0
    %v1966 = vadd.f32 0.0, %v1965
    %v1967 = vpop.f32.mrf.mxu0
    %v1968 = vadd.f32 0.0, %v1967
    %1969 = vmatprep.mubr.f32.mxu0 0.0
    %1970 = vmatmul.mubr.f32.gmra.mxu0 %v1836
    %v1971 = vpop.f32.mrf.mxu0
    %v1972 = vadd.f32 0.0, %v1971
    %v1973 = vpop.f32.mrf.mxu0
    %v1974 = vadd.f32 0.0, %v1973
    %1975 = vmatprep.mubr.f32.mxu0 0.0
    %1976 = vmatmul.mubr.f32.gmra.mxu0 %v1838
    %v1977 = vpop.f32.mrf.mxu0
    %v1978 = vadd.f32 0.0, %v1977
    %v1979 = vpop.f32.mrf.mxu0
    %v1980 = vadd.f32 0.0, %v1979
    %1981 = vmatprep.mubr.f32.mxu0 0.0
    %1982 = vmatmul.mubr.f32.gmra.mxu0 %v1840
    %v1983 = vpop.f32.mrf.mxu0
    %v1984 = vadd.f32 0.0, %v1983
    %v1985 = vpop.f32.mrf.mxu0
    %v1986 = vadd.f32 0.0, %v1985
    %1987 = vmatprep.mubr.f32.mxu0 0.0
    %1988 = vmatmul.mubr.f32.gmra.mxu0 %v1842
    %v1989 = vpop.f32.mrf.mxu0
    %v1990 = vadd.f32 0.0, %v1989
    %v1991 = vpop.f32.mrf.mxu0
    %v1992 = vadd.f32 0.0, %v1991
    %1993 = vmatprep.mubr.f32.mxu0 0.0
    %1994 = vmatmul.mubr.f32.gmra.mxu0 %v1844
    %v1995 = vpop.f32.mrf.mxu0
    %v1996 = vadd.f32 0.0, %v1995
    %v1997 = vpop.f32.mrf.mxu0
    %v1998 = vadd.f32 0.0, %v1997
    %1999 = vmatprep.mubr.f32.mxu0 0.0
    %2000 = vmatmul.mubr.f32.gmra.mxu0 %v1846
    %v2001 = vpop.f32.mrf.mxu0
    %v2002 = vadd.f32 0.0, %v2001
    %v2003 = vpop.f32.mrf.mxu0
    %v2004 = vadd.f32 0.0, %v2003
    %2005 = vmatprep.mubr.f32.mxu0 0.0
    %2006 = vmatmul.mubr.f32.gmra.mxu0 %v1848
    %v2007 = vpop.f32.mrf.mxu0
    %v2008 = vadd.f32 0.0, %v2007
    %v2009 = vpop.f32.mrf.mxu0
    %v2010 = vadd.f32 0.0, %v2009
    %2011 = vmatprep.mubr.f32.mxu0 0.0
    %2012 = vmatmul.mubr.f32.gmra.mxu0 %v1850
    %v2013 = vpop.f32.mrf.mxu0
    %v2014 = vadd.f32 0.0, %v2013
    %v2015 = vpop.f32.mrf.mxu0
    %v2016 = vadd.f32 0.0, %v2015
    %2017 = vmatprep.mubr.f32.mxu0 0.0
    %2018 = vmatmul.mubr.f32.gmra.mxu0 %v1852
    %v2019 = vpop.f32.mrf.mxu0
    %v2020 = vadd.f32 0.0, %v2019
    %v2021 = vpop.f32.mrf.mxu0
    %v2022 = vadd.f32 0.0, %v2021
    %2023 = vmatprep.mubr.f32.mxu0 0.0
    %2024 = vmatmul.mubr.f32.gmra.mxu0 %v1854
    %v2025 = vpop.f32.mrf.mxu0
    %v2026 = vadd.f32 0.0, %v2025
    %v2027 = vpop.f32.mrf.mxu0
    %v2028 = vadd.f32 0.0, %v2027
    %2029 = vmatprep.mubr.f32.mxu0 0.0
    %2030 = vmatmul.mubr.f32.gmra.mxu0 %v1856
    %v2031 = vpop.f32.mrf.mxu0
    %v2032 = vadd.f32 0.0, %v2031
    %v2033 = vpop.f32.mrf.mxu0
    %v2034 = vadd.f32 0.0, %v2033
    %2035 = vmatprep.mubr.f32.mxu0 0.0
    %2036 = vmatmul.mubr.f32.gmra.mxu0 %v1858
    %v2037 = vpop.f32.mrf.mxu0
    %v2038 = vadd.f32 0.0, %v2037
    %v2039 = vpop.f32.mrf.mxu0
    %v2040 = vadd.f32 0.0, %v2039
    %2041 = vmatprep.mubr.f32.mxu0 0.0
    %2042 = vmatmul.mubr.f32.gmra.mxu0 %v1860
    %v2043 = vpop.f32.mrf.mxu0
    %v2044 = vadd.f32 0.0, %v2043
    %v2045 = vpop.f32.mrf.mxu0
    %v2046 = vadd.f32 0.0, %v2045
    %2047 = vmatprep.mubr.f32.mxu0 0.0
    %2048 = vmatmul.mubr.f32.gmra.mxu0 %v1862
    %v2049 = vpop.f32.mrf.mxu0
    %v2050 = vadd.f32 0.0, %v2049
    %v2051 = vpop.f32.mrf.mxu0
    %v2052 = vadd.f32 0.0, %v2051
    %2053 = vmatprep.mubr.f32.mxu0 0.0
    %2054 = vmatmul.mubr.f32.gmra.mxu0 %v1864
    %v2055 = vpop.f32.mrf.mxu0
    %v2056 = vadd.f32 0.0, %v2055
    %v2057 = vpop.f32.mrf.mxu0
    %v2058 = vadd.f32 0.0, %v2057
    %2059 = vmatprep.mubr.f32.mxu0 0.0
    %2060 = vmatmul.mubr.f32.gmra.mxu0 %v1866
    %v2061 = vpop.f32.mrf.mxu0
    %v2062 = vadd.f32 0.0, %v2061
    %v2063 = vpop.f32.mrf.mxu0
    %v2064 = vadd.f32 0.0, %v2063
    %2065 = vmatprep.mubr.f32.mxu0 0.0
    %2066 = vmatmul.mubr.f32.gmra.mxu0 %v1868
    %v2067 = vpop.f32.mrf.mxu0
    %v2068 = vadd.f32 0.0, %v2067
    %v2069 = vpop.f32.mrf.mxu0
    %v2070 = vadd.f32 0.0, %v2069
    %2071 = vmatprep.mubr.f32.mxu0 0.0
    %2072 = vmatmul.mubr.f32.gmra.mxu0 %v1870
    %v2073 = vpop.f32.mrf.mxu0
    %v2074 = vadd.f32 0.0, %v2073
    %v2075 = vpop.f32.mrf.mxu0
    %v2076 = vadd.f32 0.0, %v2075
    %2077 = vmatprep.mubr.f32.mxu0 0.0
    %2078 = vmatmul.mubr.f32.gmra.mxu0 %v1872
    %v2079 = vpop.f32.mrf.mxu0
    %v2080 = vadd.f32 0.0, %v2079
    %v2081 = vpop.f32.mrf.mxu0
    %v2082 = vadd.f32 0.0, %v2081
    %2083 = vmatprep.mubr.f32.mxu0 0.0
    %2084 = vmatmul.mubr.f32.gmra.mxu0 %v1874
    %v2085 = vpop.f32.mrf.mxu0
    %v2086 = vadd.f32 0.0, %v2085
    %v2087 = vpop.f32.mrf.mxu0
    %v2088 = vadd.f32 0.0, %v2087
    %2089 = vmatprep.mubr.f32.mxu0 0.0
    %2090 = vmatmul.mubr.f32.gmra.mxu0 %v1876
    %v2091 = vpop.f32.mrf.mxu0
    %v2092 = vadd.f32 0.0, %v2091
    %v2093 = vpop.f32.mrf.mxu0
    %v2094 = vadd.f32 0.0, %v2093
    %2095 = vmatprep.mubr.f32.mxu0 0.0
    %2096 = vmatmul.mubr.f32.gmra.mxu0 %v1878
    %v2097 = vpop.f32.mrf.mxu0
    %v2098 = vadd.f32 0.0, %v2097
    %v2099 = vpop.f32.mrf.mxu0
    %v2100 = vadd.f32 0.0, %v2099
    %2101 = vmatprep.mubr.f32.mxu0 0.0
    %2102 = vmatmul.mubr.f32.gmra.mxu0 %v1880
    %v2103 = vpop.f32.mrf.mxu0
    %v2104 = vadd.f32 0.0, %v2103
    %v2105 = vpop.f32.mrf.mxu0
    %v2106 = vadd.f32 0.0, %v2105
    %2107 = vmatprep.mubr.f32.mxu0 0.0
    %2108 = vmatmul.mubr.f32.gmra.mxu0 %v1882
    %v2109 = vpop.f32.mrf.mxu0
    %v2110 = vadd.f32 0.0, %v2109
    %v2111 = vpop.f32.mrf.mxu0
    %v2112 = vadd.f32 0.0, %v2111
    %2113 = vmatprep.mubr.f32.mxu0 0.0
    %2114 = vmatmul.mubr.f32.gmra.mxu0 %v1884
    %v2115 = vpop.f32.mrf.mxu0
    %v2116 = vadd.f32 0.0, %v2115
    %v2117 = vpop.f32.mrf.mxu0
    %v2118 = vadd.f32 0.0, %v2117
    %2119 = vmatprep.mubr.f32.mxu0 0.0
    %2120 = vmatmul.mubr.f32.gmra.mxu0 %v1886
    %v2121 = vpop.f32.mrf.mxu0
    %v2122 = vadd.f32 0.0, %v2121
    %v2123 = vpop.f32.mrf.mxu0
    %v2124 = vadd.f32 0.0, %v2123
    %2125 = vmatprep.mubr.f32.mxu0 0.0
    %2126 = vmatmul.mubr.f32.gmra.mxu0 %v1888
    %v2127 = vpop.f32.mrf.mxu0
    %v2128 = vadd.f32 0.0, %v2127
    %v2129 = vpop.f32.mrf.mxu0
    %v2130 = vadd.f32 0.0, %v2129
    %2131 = vmatprep.mubr.f32.mxu0 0.0
    %2132 = vmatmul.mubr.f32.gmra.mxu0 %v1890
    %v2133 = vpop.f32.mrf.mxu0
    %v2134 = vadd.f32 0.0, %v2133
    %v2135 = vpop.f32.mrf.mxu0
    %v2136 = vadd.f32 0.0, %v2135
    %2137 = vmatprep.mubr.f32.mxu0 0.0
    %2138 = vmatmul.mubr.f32.gmra.mxu0 %v1892
    %v2139 = vpop.f32.mrf.mxu0
    %v2140 = vadd.f32 0.0, %v2139
    %v2141 = vpop.f32.mrf.mxu0
    %v2142 = vadd.f32 0.0, %v2141
    %2143 = vmatprep.mubr.f32.mxu0 0.0
    %2144 = vmatmul.mubr.f32.gmra.mxu0 %v1894
    %v2145 = vpop.f32.mrf.mxu0
    %v2146 = vadd.f32 0.0, %v2145
    %v2147 = vpop.f32.mrf.mxu0
    %v2148 = vadd.f32 0.0, %v2147
    %2149 = vmatprep.mubr.f32.mxu0 0.0
    %2150 = vmatmul.mubr.f32.gmra.mxu0 %v1897
    %v2151 = vpop.f32.mrf.mxu0
    %v2152 = vadd.f32 0.0, %v2151
    %v2153 = vpop.f32.mrf.mxu0
    %v2154 = vadd.f32 0.0, %v2153
    %2155 = vdwg.mxu0
    %v2156 = vadd.f32 %v1694, %v1966
    %v2157 = vadd.f32 %v1695, %v1968
    %v2158 = vadd.f32 %v1696, %v1972
    %v2159 = vadd.f32 %v1697, %v1974
    %v2160 = vadd.f32 %v1698, %v1978
    %v2161 = vadd.f32 %v1699, %v1980
    %v2162 = vadd.f32 %v1700, %v1984
    %v2163 = vadd.f32 %v1701, %v1986
    %v2164 = vadd.f32 %v1702, %v1990
    %v2165 = vadd.f32 %v1703, %v1992
    %v2166 = vadd.f32 %v1704, %v1996
    %v2167 = vadd.f32 %v1705, %v1998
    %v2168 = vadd.f32 %v1706, %v2002
    %v2169 = vadd.f32 %v1707, %v2004
    %v2170 = vadd.f32 %v1708, %v2008
    %v2171 = vadd.f32 %v1709, %v2010
    %v2172 = vadd.f32 %v1710, %v2014
    %v2173 = vadd.f32 %v1711, %v2016
    %v2174 = vadd.f32 %v1712, %v2020
    %v2175 = vadd.f32 %v1713, %v2022
    %v2176 = vadd.f32 %v1714, %v2026
    %v2177 = vadd.f32 %v1715, %v2028
    %v2178 = vadd.f32 %v1716, %v2032
    %v2179 = vadd.f32 %v1717, %v2034
    %v2180 = vadd.f32 %v1718, %v2038
    %v2181 = vadd.f32 %v1719, %v2040
    %v2182 = vadd.f32 %v1720, %v2044
    %v2183 = vadd.f32 %v1721, %v2046
    %v2184 = vadd.f32 %v1722, %v2050
    %v2185 = vadd.f32 %v1723, %v2052
    %v2186 = vadd.f32 %v1724, %v2056
    %v2187 = vadd.f32 %v1725, %v2058
    %v2188 = vadd.f32 %v1726, %v2062
    %v2189 = vadd.f32 %v1727, %v2064
    %v2190 = vadd.f32 %v1728, %v2068
    %v2191 = vadd.f32 %v1729, %v2070
    %v2192 = vadd.f32 %v1730, %v2074
    %v2193 = vadd.f32 %v1731, %v2076
    %v2194 = vadd.f32 %v1732, %v2080
    %v2195 = vadd.f32 %v1733, %v2082
    %v2196 = vadd.f32 %v1734, %v2086
    %v2197 = vadd.f32 %v1735, %v2088
    %v2198 = vadd.f32 %v1736, %v2092
    %v2199 = vadd.f32 %v1737, %v2094
    %v2200 = vadd.f32 %v1738, %v2098
    %v2201 = vadd.f32 %v1739, %v2100
    %v2202 = vadd.f32 %v1740, %v2104
    %v2203 = vadd.f32 %v1741, %v2106
    %v2204 = vadd.f32 %v1742, %v2110
    %v2205 = vadd.f32 %v1743, %v2112
    %v2206 = vadd.f32 %v1744, %v2116
    %v2207 = vadd.f32 %v1745, %v2118
    %v2208 = vadd.f32 %v1746, %v2122
    %v2209 = vadd.f32 %v1747, %v2124
    %v2210 = vadd.f32 %v1748, %v2128
    %v2211 = vadd.f32 %v1749, %v2130
    %v2212 = vadd.f32 %v1750, %v2134
    %v2213 = vadd.f32 %v1751, %v2136
    %v2214 = vadd.f32 %v1752, %v2140
    %v2215 = vadd.f32 %v1753, %v2142
    %v2216 = vadd.f32 %v1754, %v2146
    %v2217 = vadd.f32 %v1755, %v2148
    %v2218 = vadd.f32 %v1756, %v2152
    %v2219 = vadd.f32 %v1757, %v2154
    %v2220 = vld [vmem:[%s2] sm:$0x3]
    %v2222 = vlaneseq
    %v2223 = vshrl.u32 %v2222, 7
    %v2224 = vsub.s32 0, %v2223
    %v2225 = vrot.slane %v2220, %v2224
    %v2226 = vlaneseq
    %v2227 = vshrl.u32 %v2226, 7
    %v2228 = vsub.s32 1, %v2227
    %v2229 = vrot.slane %v2220, %v2228
    %v2232 = vadd.f32 %v2156, %v2225
    %v2233 = vadd.f32 %v2157, %v2229
    %v2234 = vadd.f32 %v2158, %v2225
    %v2235 = vadd.f32 %v2159, %v2229
    %v2236 = vadd.f32 %v2160, %v2225
    %v2237 = vadd.f32 %v2161, %v2229
    %v2238 = vadd.f32 %v2162, %v2225
    %v2239 = vadd.f32 %v2163, %v2229
    %v2240 = vadd.f32 %v2164, %v2225
    %v2241 = vadd.f32 %v2165, %v2229
    %v2242 = vadd.f32 %v2166, %v2225
    %v2243 = vadd.f32 %v2167, %v2229
    %v2244 = vadd.f32 %v2168, %v2225
    %v2245 = vadd.f32 %v2169, %v2229
    %v2246 = vadd.f32 %v2170, %v2225
    %v2247 = vadd.f32 %v2171, %v2229
    %v2248 = vadd.f32 %v2172, %v2225
    %v2249 = vadd.f32 %v2173, %v2229
    %v2250 = vadd.f32 %v2174, %v2225
    %v2251 = vadd.f32 %v2175, %v2229
    %v2252 = vadd.f32 %v2176, %v2225
    %v2253 = vadd.f32 %v2177, %v2229
    %v2254 = vadd.f32 %v2178, %v2225
    %v2255 = vadd.f32 %v2179, %v2229
    %v2256 = vadd.f32 %v2180, %v2225
    %v2257 = vadd.f32 %v2181, %v2229
    %v2258 = vadd.f32 %v2182, %v2225
    %v2259 = vadd.f32 %v2183, %v2229
    %v2260 = vadd.f32 %v2184, %v2225
    %v2261 = vadd.f32 %v2185, %v2229
    %v2262 = vadd.f32 %v2186, %v2225
    %v2263 = vadd.f32 %v2187, %v2229
    %v2264 = vadd.f32 %v2188, %v2225
    %v2265 = vadd.f32 %v2189, %v2229
    %v2266 = vadd.f32 %v2190, %v2225
    %v2267 = vadd.f32 %v2191, %v2229
    %v2268 = vadd.f32 %v2192, %v2225
    %v2269 = vadd.f32 %v2193, %v2229
    %v2270 = vadd.f32 %v2194, %v2225
    %v2271 = vadd.f32 %v2195, %v2229
    %v2272 = vadd.f32 %v2196, %v2225
    %v2273 = vadd.f32 %v2197, %v2229
    %v2274 = vadd.f32 %v2198, %v2225
    %v2275 = vadd.f32 %v2199, %v2229
    %v2276 = vadd.f32 %v2200, %v2225
    %v2277 = vadd.f32 %v2201, %v2229
    %v2278 = vadd.f32 %v2202, %v2225
    %v2279 = vadd.f32 %v2203, %v2229
    %v2280 = vadd.f32 %v2204, %v2225
    %v2281 = vadd.f32 %v2205, %v2229
    %v2282 = vadd.f32 %v2206, %v2225
    %v2283 = vadd.f32 %v2207, %v2229
    %v2284 = vadd.f32 %v2208, %v2225
    %v2285 = vadd.f32 %v2209, %v2229
    %v2286 = vadd.f32 %v2210, %v2225
    %v2287 = vadd.f32 %v2211, %v2229
    %v2288 = vadd.f32 %v2212, %v2225
    %v2289 = vadd.f32 %v2213, %v2229
    %v2290 = vadd.f32 %v2214, %v2225
    %v2291 = vadd.f32 %v2215, %v2229
    %v2292 = vadd.f32 %v2216, %v2225
    %v2293 = vadd.f32 %v2217, %v2229
    %v2294 = vadd.f32 %v2218, %v2225
    %v2295 = vadd.f32 %v2219, %v2229
    %v2296 = vmax.f32 %v2232, 0.0
    %v2297 = vmax.f32 %v2233, 0.0
    %v2298 = vmax.f32 %v2234, 0.0
    %v2299 = vmax.f32 %v2235, 0.0
    %v2300 = vmax.f32 %v2236, 0.0
    %v2301 = vmax.f32 %v2237, 0.0
    %v2302 = vmax.f32 %v2238, 0.0
    %v2303 = vmax.f32 %v2239, 0.0
    %v2304 = vmax.f32 %v2240, 0.0
    %v2305 = vmax.f32 %v2241, 0.0
    %v2306 = vmax.f32 %v2242, 0.0
    %v2307 = vmax.f32 %v2243, 0.0
    %v2308 = vmax.f32 %v2244, 0.0
    %v2309 = vmax.f32 %v2245, 0.0
    %v2310 = vmax.f32 %v2246, 0.0
    %v2311 = vmax.f32 %v2247, 0.0
    %v2312 = vmax.f32 %v2248, 0.0
    %v2313 = vmax.f32 %v2249, 0.0
    %v2314 = vmax.f32 %v2250, 0.0
    %v2315 = vmax.f32 %v2251, 0.0
    %v2316 = vmax.f32 %v2252, 0.0
    %v2317 = vmax.f32 %v2253, 0.0
    %v2318 = vmax.f32 %v2254, 0.0
    %v2319 = vmax.f32 %v2255, 0.0
    %v2320 = vmax.f32 %v2256, 0.0
    %v2321 = vmax.f32 %v2257, 0.0
    %v2322 = vmax.f32 %v2258, 0.0
    %v2323 = vmax.f32 %v2259, 0.0
    %v2324 = vmax.f32 %v2260, 0.0
    %v2325 = vmax.f32 %v2261, 0.0
    %v2326 = vmax.f32 %v2262, 0.0
    %v2327 = vmax.f32 %v2263, 0.0
    %v2328 = vmax.f32 %v2264, 0.0
    %v2329 = vmax.f32 %v2265, 0.0
    %v2330 = vmax.f32 %v2266, 0.0
    %v2331 = vmax.f32 %v2267, 0.0
    %v2332 = vmax.f32 %v2268, 0.0
    %v2333 = vmax.f32 %v2269, 0.0
    %v2334 = vmax.f32 %v2270, 0.0
    %v2335 = vmax.f32 %v2271, 0.0
    %v2336 = vmax.f32 %v2272, 0.0
    %v2337 = vmax.f32 %v2273, 0.0
    %v2338 = vmax.f32 %v2274, 0.0
    %v2339 = vmax.f32 %v2275, 0.0
    %v2340 = vmax.f32 %v2276, 0.0
    %v2341 = vmax.f32 %v2277, 0.0
    %v2342 = vmax.f32 %v2278, 0.0
    %v2343 = vmax.f32 %v2279, 0.0
    %v2344 = vmax.f32 %v2280, 0.0
    %v2345 = vmax.f32 %v2281, 0.0
    %v2346 = vmax.f32 %v2282, 0.0
    %v2347 = vmax.f32 %v2283, 0.0
    %v2348 = vmax.f32 %v2284, 0.0
    %v2349 = vmax.f32 %v2285, 0.0
    %v2350 = vmax.f32 %v2286, 0.0
    %v2351 = vmax.f32 %v2287, 0.0
    %v2352 = vmax.f32 %v2288, 0.0
    %v2353 = vmax.f32 %v2289, 0.0
    %v2354 = vmax.f32 %v2290, 0.0
    %v2355 = vmax.f32 %v2291, 0.0
    %v2356 = vmax.f32 %v2292, 0.0
    %v2357 = vmax.f32 %v2293, 0.0
    %v2358 = vmax.f32 %v2294, 0.0
    %v2359 = vmax.f32 %v2295, 0.0
    %v2424 = vrot.slane %v2296, 1
    %v2425 = vrot.slane %v2298, 1
    %v2426 = vsel %vm114, %v2424, %v2425
    %v2427 = vrot.slane %v2297, 1
    %v2428 = vrot.slane %v2299, 1
    %v2429 = vsel %vm114, %v2427, %v2428
    %v2430 = vrot.slane %v2300, 1
    %v2431 = vsel %vm114, %v2425, %v2430
    %v2432 = vrot.slane %v2301, 1
    %v2433 = vsel %vm114, %v2428, %v2432
    %v2434 = vrot.slane %v2302, 1
    %v2435 = vsel %vm114, %v2430, %v2434
    %v2436 = vrot.slane %v2303, 1
    %v2437 = vsel %vm114, %v2432, %v2436
    %v2438 = vrot.slane %v2304, 1
    %v2439 = vsel %vm114, %v2434, %v2438
    %v2440 = vrot.slane %v2305, 1
    %v2441 = vsel %vm114, %v2436, %v2440
    %v2442 = vrot.slane %v2306, 1
    %v2443 = vsel %vm114, %v2438, %v2442
    %v2444 = vrot.slane %v2307, 1
    %v2445 = vsel %vm114, %v2440, %v2444
    %v2446 = vrot.slane %v2308, 1
    %v2447 = vsel %vm114, %v2442, %v2446
    %v2448 = vrot.slane %v2309, 1
    %v2449 = vsel %vm114, %v2444, %v2448
    %v2450 = vrot.slane %v2310, 1
    %v2451 = vsel %vm114, %v2446, %v2450
    %v2452 = vrot.slane %v2311, 1
    %v2453 = vsel %vm114, %v2448, %v2452
    %v2454 = vrot.slane %v2312, 1
    %v2455 = vsel %vm114, %v2450, %v2454
    %v2456 = vrot.slane %v2313, 1
    %v2457 = vsel %vm114, %v2452, %v2456
    %v2458 = vrot.slane %v2314, 1
    %v2459 = vsel %vm114, %v2454, %v2458
    %v2460 = vrot.slane %v2315, 1
    %v2461 = vsel %vm114, %v2456, %v2460
    %v2462 = vrot.slane %v2316, 1
    %v2463 = vsel %vm114, %v2458, %v2462
    %v2464 = vrot.slane %v2317, 1
    %v2465 = vsel %vm114, %v2460, %v2464
    %v2466 = vrot.slane %v2318, 1
    %v2467 = vsel %vm114, %v2462, %v2466
    %v2468 = vrot.slane %v2319, 1
    %v2469 = vsel %vm114, %v2464, %v2468
    %v2470 = vrot.slane %v2320, 1
    %v2471 = vsel %vm114, %v2466, %v2470
    %v2472 = vrot.slane %v2321, 1
    %v2473 = vsel %vm114, %v2468, %v2472
    %v2474 = vrot.slane %v2322, 1
    %v2475 = vsel %vm114, %v2470, %v2474
    %v2476 = vrot.slane %v2323, 1
    %v2477 = vsel %vm114, %v2472, %v2476
    %v2478 = vrot.slane %v2324, 1
    %v2479 = vsel %vm114, %v2474, %v2478
    %v2480 = vrot.slane %v2325, 1
    %v2481 = vsel %vm114, %v2476, %v2480
    %v2482 = vrot.slane %v2326, 1
    %v2483 = vsel %vm114, %v2478, %v2482
    %v2484 = vrot.slane %v2327, 1
    %v2485 = vsel %vm114, %v2480, %v2484
    %v2486 = vrot.slane %v2328, 1
    %v2487 = vsel %vm114, %v2482, %v2486
    %v2488 = vrot.slane %v2329, 1
    %v2489 = vsel %vm114, %v2484, %v2488
    %v2490 = vrot.slane %v2330, 1
    %v2491 = vsel %vm114, %v2486, %v2490
    %v2492 = vrot.slane %v2331, 1
    %v2493 = vsel %vm114, %v2488, %v2492
    %v2494 = vrot.slane %v2332, 1
    %v2495 = vsel %vm114, %v2490, %v2494
    %v2496 = vrot.slane %v2333, 1
    %v2497 = vsel %vm114, %v2492, %v2496
    %v2498 = vrot.slane %v2334, 1
    %v2499 = vsel %vm114, %v2494, %v2498
    %v2500 = vrot.slane %v2335, 1
    %v2501 = vsel %vm114, %v2496, %v2500
    %v2502 = vrot.slane %v2336, 1
    %v2503 = vsel %vm114, %v2498, %v2502
    %v2504 = vrot.slane %v2337, 1
    %v2505 = vsel %vm114, %v2500, %v2504
    %v2506 = vrot.slane %v2338, 1
    %v2507 = vsel %vm114, %v2502, %v2506
    %v2508 = vrot.slane %v2339, 1
    %v2509 = vsel %vm114, %v2504, %v2508
    %v2510 = vrot.slane %v2340, 1
    %v2511 = vsel %vm114, %v2506, %v2510
    %v2512 = vrot.slane %v2341, 1
    %v2513 = vsel %vm114, %v2508, %v2512
    %v2514 = vrot.slane %v2342, 1
    %v2515 = vsel %vm114, %v2510, %v2514
    %v2516 = vrot.slane %v2343, 1
    %v2517 = vsel %vm114, %v2512, %v2516
    %v2518 = vrot.slane %v2344, 1
    %v2519 = vsel %vm114, %v2514, %v2518
    %v2520 = vrot.slane %v2345, 1
    %v2521 = vsel %vm114, %v2516, %v2520
    %v2522 = vrot.slane %v2346, 1
    %v2523 = vsel %vm114, %v2518, %v2522
    %v2524 = vrot.slane %v2347, 1
    %v2525 = vsel %vm114, %v2520, %v2524
    %v2526 = vrot.slane %v2348, 1
    %v2527 = vsel %vm114, %v2522, %v2526
    %v2528 = vrot.slane %v2349, 1
    %v2529 = vsel %vm114, %v2524, %v2528
    %v2530 = vrot.slane %v2350, 1
    %v2531 = vsel %vm114, %v2526, %v2530
    %v2532 = vrot.slane %v2351, 1
    %v2533 = vsel %vm114, %v2528, %v2532
    %v2534 = vrot.slane %v2352, 1
    %v2535 = vsel %vm114, %v2530, %v2534
    %v2536 = vrot.slane %v2353, 1
    %v2537 = vsel %vm114, %v2532, %v2536
    %v2538 = vrot.slane %v2354, 1
    %v2539 = vsel %vm114, %v2534, %v2538
    %v2540 = vrot.slane %v2355, 1
    %v2541 = vsel %vm114, %v2536, %v2540
    %v2542 = vrot.slane %v2356, 1
    %v2543 = vsel %vm114, %v2538, %v2542
    %v2544 = vrot.slane %v2357, 1
    %v2545 = vsel %vm114, %v2540, %v2544
    %v2546 = vrot.slane %v2358, 1
    %v2547 = vsel %vm114, %v2542, %v2546
    %v2548 = vrot.slane %v2359, 1
    %v2549 = vsel %vm114, %v2544, %v2548
    %v2616 = vsel %vm114, %v2546, %v2424
    %v2617 = vsel %vm114, %v2548, %v2427
    %v2618 = vmax.f32 %v2296, %v2426
    %v2619 = vmax.f32 %v2297, %v2429
    %v2620 = vmax.f32 %v2298, %v2431
    %v2621 = vmax.f32 %v2299, %v2433
    %v2622 = vmax.f32 %v2300, %v2435
    %v2623 = vmax.f32 %v2301, %v2437
    %v2624 = vmax.f32 %v2302, %v2439
    %v2625 = vmax.f32 %v2303, %v2441
    %v2626 = vmax.f32 %v2304, %v2443
    %v2627 = vmax.f32 %v2305, %v2445
    %v2628 = vmax.f32 %v2306, %v2447
    %v2629 = vmax.f32 %v2307, %v2449
    %v2630 = vmax.f32 %v2308, %v2451
    %v2631 = vmax.f32 %v2309, %v2453
    %v2632 = vmax.f32 %v2310, %v2455
    %v2633 = vmax.f32 %v2311, %v2457
    %v2634 = vmax.f32 %v2312, %v2459
    %v2635 = vmax.f32 %v2313, %v2461
    %v2636 = vmax.f32 %v2314, %v2463
    %v2637 = vmax.f32 %v2315, %v2465
    %v2638 = vmax.f32 %v2316, %v2467
    %v2639 = vmax.f32 %v2317, %v2469
    %v2640 = vmax.f32 %v2318, %v2471
    %v2641 = vmax.f32 %v2319, %v2473
    %v2642 = vmax.f32 %v2320, %v2475
    %v2643 = vmax.f32 %v2321, %v2477
    %v2644 = vmax.f32 %v2322, %v2479
    %v2645 = vmax.f32 %v2323, %v2481
    %v2646 = vmax.f32 %v2324, %v2483
    %v2647 = vmax.f32 %v2325, %v2485
    %v2648 = vmax.f32 %v2326, %v2487
    %v2649 = vmax.f32 %v2327, %v2489
    %v2650 = vmax.f32 %v2328, %v2491
    %v2651 = vmax.f32 %v2329, %v2493
    %v2652 = vmax.f32 %v2330, %v2495
    %v2653 = vmax.f32 %v2331, %v2497
    %v2654 = vmax.f32 %v2332, %v2499
    %v2655 = vmax.f32 %v2333, %v2501
    %v2656 = vmax.f32 %v2334, %v2503
    %v2657 = vmax.f32 %v2335, %v2505
    %v2658 = vmax.f32 %v2336, %v2507
    %v2659 = vmax.f32 %v2337, %v2509
    %v2660 = vmax.f32 %v2338, %v2511
    %v2661 = vmax.f32 %v2339, %v2513
    %v2662 = vmax.f32 %v2340, %v2515
    %v2663 = vmax.f32 %v2341, %v2517
    %v2664 = vmax.f32 %v2342, %v2519
    %v2665 = vmax.f32 %v2343, %v2521
    %v2666 = vmax.f32 %v2344, %v2523
    %v2667 = vmax.f32 %v2345, %v2525
    %v2668 = vmax.f32 %v2346, %v2527
    %v2669 = vmax.f32 %v2347, %v2529
    %v2670 = vmax.f32 %v2348, %v2531
    %v2671 = vmax.f32 %v2349, %v2533
    %v2672 = vmax.f32 %v2350, %v2535
    %v2673 = vmax.f32 %v2351, %v2537
    %v2674 = vmax.f32 %v2352, %v2539
    %v2675 = vmax.f32 %v2353, %v2541
    %v2676 = vmax.f32 %v2354, %v2543
    %v2677 = vmax.f32 %v2355, %v2545
    %v2678 = vmax.f32 %v2356, %v2547
    %v2679 = vmax.f32 %v2357, %v2549
    %v2680 = vmax.f32 %v2358, %v2616
    %v2681 = vmax.f32 %v2359, %v2617
    %2746 = vrot.lane.b32.xlu0 %v2618, 122
    %v2747 = vpop.permute.xlu0 %2746
    %2748 = vrot.lane.b32.xlu0 %v2619, 122
    %v2749 = vpop.permute.xlu0 %2748
    %2750 = vrot.lane.b32.xlu0 %v2620, 122
    %v2751 = vpop.permute.xlu0 %2750
    %2752 = vrot.lane.b32.xlu0 %v2621, 122
    %v2753 = vpop.permute.xlu0 %2752
    %2754 = vrot.lane.b32.xlu0 %v2622, 122
    %v2755 = vpop.permute.xlu0 %2754
    %2756 = vrot.lane.b32.xlu0 %v2623, 122
    %v2757 = vpop.permute.xlu0 %2756
    %2758 = vrot.lane.b32.xlu0 %v2624, 122
    %v2759 = vpop.permute.xlu0 %2758
    %2760 = vrot.lane.b32.xlu0 %v2625, 122
    %v2761 = vpop.permute.xlu0 %2760
    %2762 = vrot.lane.b32.xlu0 %v2626, 122
    %v2763 = vpop.permute.xlu0 %2762
    %2764 = vrot.lane.b32.xlu0 %v2627, 122
    %v2765 = vpop.permute.xlu0 %2764
    %2766 = vrot.lane.b32.xlu0 %v2628, 122
    %v2767 = vpop.permute.xlu0 %2766
    %2768 = vrot.lane.b32.xlu0 %v2629, 122
    %v2769 = vpop.permute.xlu0 %2768
    %2770 = vrot.lane.b32.xlu0 %v2630, 122
    %v2771 = vpop.permute.xlu0 %2770
    %2772 = vrot.lane.b32.xlu0 %v2631, 122
    %v2773 = vpop.permute.xlu0 %2772
    %2774 = vrot.lane.b32.xlu0 %v2632, 122
    %v2775 = vpop.permute.xlu0 %2774
    %2776 = vrot.lane.b32.xlu0 %v2633, 122
    %v2777 = vpop.permute.xlu0 %2776
    %2778 = vrot.lane.b32.xlu0 %v2634, 122
    %v2779 = vpop.permute.xlu0 %2778
    %2780 = vrot.lane.b32.xlu0 %v2635, 122
    %v2781 = vpop.permute.xlu0 %2780
    %2782 = vrot.lane.b32.xlu0 %v2636, 122
    %v2783 = vpop.permute.xlu0 %2782
    %2784 = vrot.lane.b32.xlu0 %v2637, 122
    %v2785 = vpop.permute.xlu0 %2784
    %2786 = vrot.lane.b32.xlu0 %v2638, 122
    %v2787 = vpop.permute.xlu0 %2786
    %2788 = vrot.lane.b32.xlu0 %v2639, 122
    %v2789 = vpop.permute.xlu0 %2788
    %2790 = vrot.lane.b32.xlu0 %v2640, 122
    %v2791 = vpop.permute.xlu0 %2790
    %2792 = vrot.lane.b32.xlu0 %v2641, 122
    %v2793 = vpop.permute.xlu0 %2792
    %2794 = vrot.lane.b32.xlu0 %v2642, 122
    %v2795 = vpop.permute.xlu0 %2794
    %2796 = vrot.lane.b32.xlu0 %v2643, 122
    %v2797 = vpop.permute.xlu0 %2796
    %2798 = vrot.lane.b32.xlu0 %v2644, 122
    %v2799 = vpop.permute.xlu0 %2798
    %2800 = vrot.lane.b32.xlu0 %v2645, 122
    %v2801 = vpop.permute.xlu0 %2800
    %2802 = vrot.lane.b32.xlu0 %v2646, 122
    %v2803 = vpop.permute.xlu0 %2802
    %2804 = vrot.lane.b32.xlu0 %v2647, 122
    %v2805 = vpop.permute.xlu0 %2804
    %2806 = vrot.lane.b32.xlu0 %v2648, 122
    %v2807 = vpop.permute.xlu0 %2806
    %2808 = vrot.lane.b32.xlu0 %v2649, 122
    %v2809 = vpop.permute.xlu0 %2808
    %2810 = vrot.lane.b32.xlu0 %v2650, 122
    %v2811 = vpop.permute.xlu0 %2810
    %2812 = vrot.lane.b32.xlu0 %v2651, 122
    %v2813 = vpop.permute.xlu0 %2812
    %2814 = vrot.lane.b32.xlu0 %v2652, 122
    %v2815 = vpop.permute.xlu0 %2814
    %2816 = vrot.lane.b32.xlu0 %v2653, 122
    %v2817 = vpop.permute.xlu0 %2816
    %2818 = vrot.lane.b32.xlu0 %v2654, 122
    %v2819 = vpop.permute.xlu0 %2818
    %2820 = vrot.lane.b32.xlu0 %v2655, 122
    %v2821 = vpop.permute.xlu0 %2820
    %2822 = vrot.lane.b32.xlu0 %v2656, 122
    %v2823 = vpop.permute.xlu0 %2822
    %2824 = vrot.lane.b32.xlu0 %v2657, 122
    %v2825 = vpop.permute.xlu0 %2824
    %2826 = vrot.lane.b32.xlu0 %v2658, 122
    %v2827 = vpop.permute.xlu0 %2826
    %2828 = vrot.lane.b32.xlu0 %v2659, 122
    %v2829 = vpop.permute.xlu0 %2828
    %2830 = vrot.lane.b32.xlu0 %v2660, 122
    %v2831 = vpop.permute.xlu0 %2830
    %2832 = vrot.lane.b32.xlu0 %v2661, 122
    %v2833 = vpop.permute.xlu0 %2832
    %2834 = vrot.lane.b32.xlu0 %v2662, 122
    %v2835 = vpop.permute.xlu0 %2834
    %2836 = vrot.lane.b32.xlu0 %v2663, 122
    %v2837 = vpop.permute.xlu0 %2836
    %2838 = vrot.lane.b32.xlu0 %v2664, 122
    %v2839 = vpop.permute.xlu0 %2838
    %2840 = vrot.lane.b32.xlu0 %v2665, 122
    %v2841 = vpop.permute.xlu0 %2840
    %2842 = vrot.lane.b32.xlu0 %v2666, 122
    %v2843 = vpop.permute.xlu0 %2842
    %2844 = vrot.lane.b32.xlu0 %v2667, 122
    %v2845 = vpop.permute.xlu0 %2844
    %2846 = vrot.lane.b32.xlu0 %v2668, 122
    %v2847 = vpop.permute.xlu0 %2846
    %2848 = vrot.lane.b32.xlu0 %v2669, 122
    %v2849 = vpop.permute.xlu0 %2848
    %2850 = vrot.lane.b32.xlu0 %v2670, 122
    %v2851 = vpop.permute.xlu0 %2850
    %2852 = vrot.lane.b32.xlu0 %v2671, 122
    %v2853 = vpop.permute.xlu0 %2852
    %2854 = vrot.lane.b32.xlu0 %v2672, 122
    %v2855 = vpop.permute.xlu0 %2854
    %2856 = vrot.lane.b32.xlu0 %v2673, 122
    %v2857 = vpop.permute.xlu0 %2856
    %2858 = vrot.lane.b32.xlu0 %v2674, 122
    %v2859 = vpop.permute.xlu0 %2858
    %2860 = vrot.lane.b32.xlu0 %v2675, 122
    %v2861 = vpop.permute.xlu0 %2860
    %2862 = vrot.lane.b32.xlu0 %v2676, 122
    %v2863 = vpop.permute.xlu0 %2862
    %2864 = vrot.lane.b32.xlu0 %v2677, 122
    %v2865 = vpop.permute.xlu0 %2864
    %2866 = vrot.lane.b32.xlu0 %v2678, 122
    %v2867 = vpop.permute.xlu0 %2866
    %2868 = vrot.lane.b32.xlu0 %v2679, 122
    %v2869 = vpop.permute.xlu0 %2868
    %2870 = vrot.lane.b32.xlu0 %v2680, 122
    %v2871 = vpop.permute.xlu0 %2870
    %2872 = vrot.lane.b32.xlu0 %v2681, 122
    %v2873 = vpop.permute.xlu0 %2872
    %vm2874 = vcmask 998400
    %v2875 = vsel %vm2874, %v2747, %v2749
    %v2876 = vsel %vm2874, %v2751, %v2753
    %v2877 = vsel %vm2874, %v2755, %v2757
    %v2878 = vsel %vm2874, %v2759, %v2761
    %v2879 = vsel %vm2874, %v2763, %v2765
    %v2880 = vsel %vm2874, %v2767, %v2769
    %v2881 = vsel %vm2874, %v2771, %v2773
    %v2882 = vsel %vm2874, %v2775, %v2777
    %v2883 = vsel %vm2874, %v2779, %v2781
    %v2884 = vsel %vm2874, %v2783, %v2785
    %v2885 = vsel %vm2874, %v2787, %v2789
    %v2886 = vsel %vm2874, %v2791, %v2793
    %v2887 = vsel %vm2874, %v2795, %v2797
    %v2888 = vsel %vm2874, %v2799, %v2801
    %v2889 = vsel %vm2874, %v2803, %v2805
    %v2890 = vsel %vm2874, %v2807, %v2809
    %v2891 = vsel %vm2874, %v2811, %v2813
    %v2892 = vsel %vm2874, %v2815, %v2817
    %v2893 = vsel %vm2874, %v2819, %v2821
    %v2894 = vsel %vm2874, %v2823, %v2825
    %v2895 = vsel %vm2874, %v2827, %v2829
    %v2896 = vsel %vm2874, %v2831, %v2833
    %v2897 = vsel %vm2874, %v2835, %v2837
    %v2898 = vsel %vm2874, %v2839, %v2841
    %v2899 = vsel %vm2874, %v2843, %v2845
    %v2900 = vsel %vm2874, %v2847, %v2849
    %v2901 = vsel %vm2874, %v2851, %v2853
    %v2902 = vsel %vm2874, %v2855, %v2857
    %v2903 = vsel %vm2874, %v2859, %v2861
    %v2904 = vsel %vm2874, %v2863, %v2865
    %v2905 = vsel %vm2874, %v2867, %v2869
    %v2906 = vsel %vm2874, %v2871, %v2873
    %v2971 = vmax.f32 %v2618, %v2875
    %v2972 = vmax.f32 %v2619, %v2749
    %v2973 = vmax.f32 %v2620, %v2876
    %v2974 = vmax.f32 %v2621, %v2753
    %v2975 = vmax.f32 %v2622, %v2877
    %v2976 = vmax.f32 %v2623, %v2757
    %v2977 = vmax.f32 %v2624, %v2878
    %v2978 = vmax.f32 %v2625, %v2761
    %v2979 = vmax.f32 %v2626, %v2879
    %v2980 = vmax.f32 %v2627, %v2765
    %v2981 = vmax.f32 %v2628, %v2880
    %v2982 = vmax.f32 %v2629, %v2769
    %v2983 = vmax.f32 %v2630, %v2881
    %v2984 = vmax.f32 %v2631, %v2773
    %v2985 = vmax.f32 %v2632, %v2882
    %v2986 = vmax.f32 %v2633, %v2777
    %v2987 = vmax.f32 %v2634, %v2883
    %v2988 = vmax.f32 %v2635, %v2781
    %v2989 = vmax.f32 %v2636, %v2884
    %v2990 = vmax.f32 %v2637, %v2785
    %v2991 = vmax.f32 %v2638, %v2885
    %v2992 = vmax.f32 %v2639, %v2789
    %v2993 = vmax.f32 %v2640, %v2886
    %v2994 = vmax.f32 %v2641, %v2793
    %v2995 = vmax.f32 %v2642, %v2887
    %v2996 = vmax.f32 %v2643, %v2797
    %v2997 = vmax.f32 %v2644, %v2888
    %v2998 = vmax.f32 %v2645, %v2801
    %v2999 = vmax.f32 %v2646, %v2889
    %v3000 = vmax.f32 %v2647, %v2805
    %v3001 = vmax.f32 %v2648, %v2890
    %v3002 = vmax.f32 %v2649, %v2809
    %v3003 = vmax.f32 %v2650, %v2891
    %v3004 = vmax.f32 %v2651, %v2813
    %v3005 = vmax.f32 %v2652, %v2892
    %v3006 = vmax.f32 %v2653, %v2817
    %v3007 = vmax.f32 %v2654, %v2893
    %v3008 = vmax.f32 %v2655, %v2821
    %v3009 = vmax.f32 %v2656, %v2894
    %v3010 = vmax.f32 %v2657, %v2825
    %v3011 = vmax.f32 %v2658, %v2895
    %v3012 = vmax.f32 %v2659, %v2829
    %v3013 = vmax.f32 %v2660, %v2896
    %v3014 = vmax.f32 %v2661, %v2833
    %v3015 = vmax.f32 %v2662, %v2897
    %v3016 = vmax.f32 %v2663, %v2837
    %v3017 = vmax.f32 %v2664, %v2898
    %v3018 = vmax.f32 %v2665, %v2841
    %v3019 = vmax.f32 %v2666, %v2899
    %v3020 = vmax.f32 %v2667, %v2845
    %v3021 = vmax.f32 %v2668, %v2900
    %v3022 = vmax.f32 %v2669, %v2849
    %v3023 = vmax.f32 %v2670, %v2901
    %v3024 = vmax.f32 %v2671, %v2853
    %v3025 = vmax.f32 %v2672, %v2902
    %v3026 = vmax.f32 %v2673, %v2857
    %v3027 = vmax.f32 %v2674, %v2903
    %v3028 = vmax.f32 %v2675, %v2861
    %v3029 = vmax.f32 %v2676, %v2904
    %v3030 = vmax.f32 %v2677, %v2865
    %v3031 = vmax.f32 %v2678, %v2905
    %v3032 = vmax.f32 %v2679, %v2869
    %v3033 = vmax.f32 %v2680, %v2906
    %v3034 = vmax.f32 %v2681, %v2873
    %v3035 = vld [vmem:[%s3] sm:$0xff]
    %v3036 = vld [vmem:[%s3 + $0x8] sm:$0xff]
    %v3037 = vld [vmem:[%s3 + $0x10] sm:$0xff]
    %v3038 = vld [vmem:[%s3 + $0x18] sm:$0xff]
    %v3039 = vld [vmem:[%s3 + $0x20] sm:$0xff]
    %v3040 = vld [vmem:[%s3 + $0x28] sm:$0xff]
    %v3041 = vld [vmem:[%s3 + $0x30] sm:$0xff]
    %v3042 = vld [vmem:[%s3 + $0x38] sm:$0xff]
    %v3043 = vld [vmem:[%s3 + $0x40] sm:$0xff]
    %v3044 = vld [vmem:[%s3 + $0x48] sm:$0xff]
    %v3045 = vld [vmem:[%s3 + $0x50] sm:$0xff]
    %v3046 = vld [vmem:[%s3 + $0x58] sm:$0xff]
    %v3047 = vld [vmem:[%s3 + $0x60] sm:$0xff]
    %v3048 = vld [vmem:[%s3 + $0x68] sm:$0xff]
    %v3049 = vld [vmem:[%s3 + $0x70] sm:$0xff]
    %v3050 = vld [vmem:[%s3 + $0x78] sm:$0xff]
    %v3051 = vld [vmem:[%s3 + $0x80] sm:$0xff]
    %v3052 = vld [vmem:[%s3 + $0x88] sm:$0xff]
    %v3053 = vld [vmem:[%s3 + $0x90] sm:$0xff]
    %v3054 = vld [vmem:[%s3 + $0x98] sm:$0xff]
    %v3055 = vld [vmem:[%s3 + $0xa0] sm:$0xff]
    %v3056 = vld [vmem:[%s3 + $0xa8] sm:$0xff]
    %v3057 = vld [vmem:[%s3 + $0xb0] sm:$0xff]
    %v3058 = vld [vmem:[%s3 + $0xb8] sm:$0xff]
    %v3059 = vld [vmem:[%s3 + $0xc0] sm:$0xff]
    %v3060 = vld [vmem:[%s3 + $0xc8] sm:$0xff]
    %v3061 = vld [vmem:[%s3 + $0xd0] sm:$0xff]
    %v3062 = vld [vmem:[%s3 + $0xd8] sm:$0xff]
    %v3063 = vld [vmem:[%s3 + $0xe0] sm:$0xff]
    %v3064 = vld [vmem:[%s3 + $0xe8] sm:$0xff]
    %v3065 = vld [vmem:[%s3 + $0xf0] sm:$0xff]
    %v3066 = vld [vmem:[%s3 + $0xf8] sm:$0xff]
    %v3067 = vld [vmem:[%s3 + $0x100] sm:$0xff]
    %v3068 = vld [vmem:[%s3 + $0x108] sm:$0xff]
    %v3069 = vld [vmem:[%s3 + $0x110] sm:$0xff]
    %v3070 = vld [vmem:[%s3 + $0x118] sm:$0xff]
    %v3071 = vld [vmem:[%s3 + $0x120] sm:$0xff]
    %v3072 = vld [vmem:[%s3 + $0x128] sm:$0xff]
    %v3073 = vld [vmem:[%s3 + $0x130] sm:$0xff]
    %v3074 = vld [vmem:[%s3 + $0x138] sm:$0xff]
    %v3075 = vld [vmem:[%s3 + $0x140] sm:$0x3]
    %v3076 = vld [vmem:[%s3 + $0x148] sm:$0x3]
    %v3141 = vrot.slane %v2971, 2
    %v3142 = vrot.slane %v2973, 2
    %v3143 = vsel %vm834, %v3141, %v3142
    %v3144 = vrot.slane %v2972, 2
    %v3145 = vrot.slane %v2974, 2
    %v3146 = vsel %vm834, %v3144, %v3145
    %v3147 = vrot.slane %v2975, 2
    %v3148 = vsel %vm834, %v3142, %v3147
    %v3149 = vrot.slane %v2976, 2
    %v3150 = vsel %vm834, %v3145, %v3149
    %v3151 = vrot.slane %v2977, 2
    %v3152 = vsel %vm834, %v3147, %v3151
    %v3153 = vrot.slane %v2978, 2
    %v3154 = vsel %vm834, %v3149, %v3153
    %v3155 = vrot.slane %v2979, 2
    %v3156 = vsel %vm834, %v3151, %v3155
    %v3157 = vrot.slane %v2980, 2
    %v3158 = vsel %vm834, %v3153, %v3157
    %v3159 = vrot.slane %v2981, 2
    %v3160 = vsel %vm834, %v3155, %v3159
    %v3161 = vrot.slane %v2982, 2
    %v3162 = vsel %vm834, %v3157, %v3161
    %v3163 = vrot.slane %v2983, 2
    %v3164 = vsel %vm834, %v3159, %v3163
    %v3165 = vrot.slane %v2984, 2
    %v3166 = vsel %vm834, %v3161, %v3165
    %v3167 = vrot.slane %v2985, 2
    %v3168 = vsel %vm834, %v3163, %v3167
    %v3169 = vrot.slane %v2986, 2
    %v3170 = vsel %vm834, %v3165, %v3169
    %v3171 = vrot.slane %v2987, 2
    %v3172 = vsel %vm834, %v3167, %v3171
    %v3173 = vrot.slane %v2988, 2
    %v3174 = vsel %vm834, %v3169, %v3173
    %v3175 = vrot.slane %v2989, 2
    %v3176 = vsel %vm834, %v3171, %v3175
    %v3177 = vrot.slane %v2990, 2
    %v3178 = vsel %vm834, %v3173, %v3177
    %v3179 = vrot.slane %v2991, 2
    %v3180 = vsel %vm834, %v3175, %v3179
    %v3181 = vrot.slane %v2992, 2
    %v3182 = vsel %vm834, %v3177, %v3181
    %v3183 = vrot.slane %v2993, 2
    %v3184 = vsel %vm834, %v3179, %v3183
    %v3185 = vrot.slane %v2994, 2
    %v3186 = vsel %vm834, %v3181, %v3185
    %v3187 = vrot.slane %v2995, 2
    %v3188 = vsel %vm834, %v3183, %v3187
    %v3189 = vrot.slane %v2996, 2
    %v3190 = vsel %vm834, %v3185, %v3189
    %v3191 = vrot.slane %v2997, 2
    %v3192 = vsel %vm834, %v3187, %v3191
    %v3193 = vrot.slane %v2998, 2
    %v3194 = vsel %vm834, %v3189, %v3193
    %v3195 = vrot.slane %v2999, 2
    %v3196 = vsel %vm834, %v3191, %v3195
    %v3197 = vrot.slane %v3000, 2
    %v3198 = vsel %vm834, %v3193, %v3197
    %v3199 = vrot.slane %v3001, 2
    %v3200 = vsel %vm834, %v3195, %v3199
    %v3201 = vrot.slane %v3002, 2
    %v3202 = vsel %vm834, %v3197, %v3201
    %v3203 = vrot.slane %v3003, 2
    %v3204 = vsel %vm834, %v3199, %v3203
    %v3205 = vrot.slane %v3004, 2
    %v3206 = vsel %vm834, %v3201, %v3205
    %v3207 = vrot.slane %v3005, 2
    %v3208 = vsel %vm834, %v3203, %v3207
    %v3209 = vrot.slane %v3006, 2
    %v3210 = vsel %vm834, %v3205, %v3209
    %v3211 = vrot.slane %v3007, 2
    %v3212 = vsel %vm834, %v3207, %v3211
    %v3213 = vrot.slane %v3008, 2
    %v3214 = vsel %vm834, %v3209, %v3213
    %v3215 = vrot.slane %v3009, 2
    %v3216 = vsel %vm834, %v3211, %v3215
    %v3217 = vrot.slane %v3010, 2
    %v3218 = vsel %vm834, %v3213, %v3217
    %v3219 = vrot.slane %v3011, 2
    %v3220 = vsel %vm834, %v3215, %v3219
    %v3221 = vrot.slane %v3012, 2
    %v3222 = vsel %vm834, %v3217, %v3221
    %v3223 = vrot.slane %v3013, 2
    %v3224 = vsel %vm834, %v3219, %v3223
    %v3225 = vrot.slane %v3014, 2
    %v3226 = vsel %vm834, %v3221, %v3225
    %v3227 = vrot.slane %v3015, 2
    %v3228 = vsel %vm834, %v3223, %v3227
    %v3229 = vrot.slane %v3016, 2
    %v3230 = vsel %vm834, %v3225, %v3229
    %v3231 = vrot.slane %v3017, 2
    %v3232 = vsel %vm834, %v3227, %v3231
    %v3233 = vrot.slane %v3018, 2
    %v3234 = vsel %vm834, %v3229, %v3233
    %v3235 = vrot.slane %v3019, 2
    %v3236 = vsel %vm834, %v3231, %v3235
    %v3237 = vrot.slane %v3020, 2
    %v3238 = vsel %vm834, %v3233, %v3237
    %v3239 = vrot.slane %v3021, 2
    %v3240 = vsel %vm834, %v3235, %v3239
    %v3241 = vrot.slane %v3022, 2
    %v3242 = vsel %vm834, %v3237, %v3241
    %v3243 = vrot.slane %v3023, 2
    %v3244 = vsel %vm834, %v3239, %v3243
    %v3245 = vrot.slane %v3024, 2
    %v3246 = vsel %vm834, %v3241, %v3245
    %v3247 = vrot.slane %v3025, 2
    %v3248 = vsel %vm834, %v3243, %v3247
    %v3249 = vrot.slane %v3026, 2
    %v3250 = vsel %vm834, %v3245, %v3249
    %v3251 = vrot.slane %v3027, 2
    %v3252 = vsel %vm834, %v3247, %v3251
    %v3253 = vrot.slane %v3028, 2
    %v3254 = vsel %vm834, %v3249, %v3253
    %v3255 = vrot.slane %v3029, 2
    %v3256 = vsel %vm834, %v3251, %v3255
    %v3257 = vrot.slane %v3030, 2
    %v3258 = vsel %vm834, %v3253, %v3257
    %v3259 = vrot.slane %v3031, 2
    %v3260 = vsel %vm834, %v3255, %v3259
    %v3261 = vrot.slane %v3032, 2
    %v3262 = vsel %vm834, %v3257, %v3261
    %v3263 = vrot.slane %v3033, 2
    %v3264 = vsel %vm834, %v3259, %v3263
    %v3265 = vrot.slane %v3034, 2
    %v3266 = vsel %vm834, %v3261, %v3265
    %v3302 = vsel %vm834, %v3263, %v3141
    %v3303 = vsel %vm834, %v3265, %v3144
    %s3304 = scalar_lea.vmem %s3, 336
    %v3305 = vld [vmem:[%s3304] sm:$0xff]
    %v3306 = vld [vmem:[%s3304 + $0x8] sm:$0xff]
    %v3307 = vld [vmem:[%s3304 + $0x10] sm:$0xff]
    %v3308 = vld [vmem:[%s3304 + $0x18] sm:$0xff]
    %v3309 = vld [vmem:[%s3304 + $0x20] sm:$0xff]
    %v3310 = vld [vmem:[%s3304 + $0x28] sm:$0xff]
    %v3311 = vld [vmem:[%s3304 + $0x30] sm:$0xff]
    %v3312 = vld [vmem:[%s3304 + $0x38] sm:$0xff]
    %v3313 = vld [vmem:[%s3304 + $0x40] sm:$0xff]
    %v3314 = vld [vmem:[%s3304 + $0x48] sm:$0xff]
    %v3315 = vld [vmem:[%s3304 + $0x50] sm:$0xff]
    %v3316 = vld [vmem:[%s3304 + $0x58] sm:$0xff]
    %v3317 = vld [vmem:[%s3304 + $0x60] sm:$0xff]
    %v3318 = vld [vmem:[%s3304 + $0x68] sm:$0xff]
    %v3319 = vld [vmem:[%s3304 + $0x70] sm:$0xff]
    %v3320 = vld [vmem:[%s3304 + $0x78] sm:$0xff]
    %v3321 = vld [vmem:[%s3304 + $0x80] sm:$0xff]
    %v3322 = vld [vmem:[%s3304 + $0x88] sm:$0xff]
    %v3323 = vld [vmem:[%s3304 + $0x90] sm:$0xff]
    %v3324 = vld [vmem:[%s3304 + $0x98] sm:$0xff]
    %v3325 = vld [vmem:[%s3304 + $0xa0] sm:$0xff]
    %v3326 = vld [vmem:[%s3304 + $0xa8] sm:$0xff]
    %v3327 = vld [vmem:[%s3304 + $0xb0] sm:$0xff]
    %v3328 = vld [vmem:[%s3304 + $0xb8] sm:$0xff]
    %v3329 = vld [vmem:[%s3304 + $0xc0] sm:$0xff]
    %v3330 = vld [vmem:[%s3304 + $0xc8] sm:$0xff]
    %v3331 = vld [vmem:[%s3304 + $0xd0] sm:$0xff]
    %v3332 = vld [vmem:[%s3304 + $0xd8] sm:$0xff]
    %v3333 = vld [vmem:[%s3304 + $0xe0] sm:$0xff]
    %v3334 = vld [vmem:[%s3304 + $0xe8] sm:$0xff]
    %v3335 = vld [vmem:[%s3304 + $0xf0] sm:$0xff]
    %v3336 = vld [vmem:[%s3304 + $0xf8] sm:$0xff]
    %v3337 = vld [vmem:[%s3304 + $0x100] sm:$0xff]
    %v3338 = vld [vmem:[%s3304 + $0x108] sm:$0xff]
    %v3339 = vld [vmem:[%s3304 + $0x110] sm:$0xff]
    %v3340 = vld [vmem:[%s3304 + $0x118] sm:$0xff]
    %v3341 = vld [vmem:[%s3304 + $0x120] sm:$0xff]
    %v3342 = vld [vmem:[%s3304 + $0x128] sm:$0xff]
    %v3343 = vld [vmem:[%s3304 + $0x130] sm:$0xff]
    %v3344 = vld [vmem:[%s3304 + $0x138] sm:$0xff]
    %v3345 = vld [vmem:[%s3304 + $0x140] sm:$0x3]
    %v3346 = vld [vmem:[%s3304 + $0x148] sm:$0x3]
    %vm3347 = vcmask 277504
    %v3348 = vsel %vm3347, %v3146, 0
    %v3350 = vsel %vm3347, %v3150, 0
    %v3352 = vsel %vm3347, %v3154, 0
    %v3354 = vsel %vm3347, %v3158, 0
    %v3356 = vsel %vm3347, %v3162, 0
    %v3358 = vsel %vm3347, %v3166, 0
    %v3360 = vsel %vm3347, %v3170, 0
    %v3362 = vsel %vm3347, %v3174, 0
    %v3364 = vsel %vm3347, %v3178, 0
    %v3366 = vsel %vm3347, %v3182, 0
    %v3368 = vsel %vm3347, %v3186, 0
    %v3370 = vsel %vm3347, %v3190, 0
    %v3372 = vsel %vm3347, %v3194, 0
    %v3374 = vsel %vm3347, %v3198, 0
    %v3376 = vsel %vm3347, %v3202, 0
    %v3378 = vsel %vm3347, %v3206, 0
    %v3380 = vsel %vm3347, %v3210, 0
    %v3382 = vsel %vm3347, %v3214, 0
    %v3384 = vsel %vm3347, %v3218, 0
    %v3386 = vsel %vm3347, %v3222, 0
    %v3388 = vsel %vm3347, %v3226, 0
    %v3390 = vsel %vm3347, %v3230, 0
    %v3392 = vsel %vm3347, %v3234, 0
    %v3394 = vsel %vm3347, %v3238, 0
    %v3396 = vsel %vm3347, %v3242, 0
    %v3398 = vsel %vm3347, %v3246, 0
    %v3400 = vsel %vm3347, %v3250, 0
    %v3402 = vsel %vm3347, %v3254, 0
    %v3404 = vsel %vm3347, %v3258, 0
    %v3406 = vsel %vm3347, %v3262, 0
    %v3408 = vsel %vm3347, %v3266, 0
    %v3411 = vsel %vm3347, %v3303, 0
    %vm3413 = vcmask 1041408
    %v3415 = vsel %vm3413, %v3345, 0
    %v3418 = vsel %vm3413, %v3346, 0
    %3420 = vmatprep.subr.mxu0 %v3336
    %3421 = vmatpush1.msra.mxu0 %v3335
    %3422 = vmatprep.subr.mxu0 %v3334
    %3423 = vmatpush1.msra.mxu0 %v3333
    %3424 = vmatprep.subr.mxu0 %v3332
    %3425 = vmatpush1.msra.mxu0 %v3331
    %3426 = vmatprep.subr.mxu0 %v3330
    %3427 = vmatpush1.msra.mxu0 %v3329
    %3428 = vmatprep.subr.mxu0 %v3328
    %3429 = vmatpush1.msra.mxu0 %v3327
    %3430 = vmatprep.subr.mxu0 %v3326
    %3431 = vmatpush1.msra.mxu0 %v3325
    %3432 = vmatprep.subr.mxu0 %v3324
    %3433 = vmatpush1.msra.mxu0 %v3323
    %3434 = vmatprep.subr.mxu0 %v3322
    %3435 = vmatpush1.msra.mxu0 %v3321
    %3436 = vmatprep.subr.mxu0 %v3320
    %3437 = vmatpush1.msra.mxu0 %v3319
    %3438 = vmatprep.subr.mxu0 %v3318
    %3439 = vmatpush1.msra.mxu0 %v3317
    %3440 = vmatprep.subr.mxu0 %v3316
    %3441 = vmatpush1.msra.mxu0 %v3315
    %3442 = vmatprep.subr.mxu0 %v3314
    %3443 = vmatpush1.msra.mxu0 %v3313
    %3444 = vmatprep.subr.mxu0 %v3312
    %3445 = vmatpush1.msra.mxu0 %v3311
    %3446 = vmatprep.subr.mxu0 %v3310
    %3447 = vmatpush1.msra.mxu0 %v3309
    %3448 = vmatprep.subr.mxu0 %v3308
    %3449 = vmatpush1.msra.mxu0 %v3307
    %3450 = vmatprep.subr.mxu0 %v3306
    %3451 = vmatpush1.msra.mxu0 %v3305
    %3452 = vmatprep.subr.mxu0 0.0
    %3453 = vmatpush2.msra.mxu0 0.0
    %3454 = vmatprep.subr.mxu0 0.0
    %3455 = vmatpush2.msra.mxu0 0.0
    %3456 = vmatprep.subr.mxu0 0.0
    %3457 = vmatpush2.msra.mxu0 0.0
    %3458 = vmatprep.subr.mxu0 0.0
    %3459 = vmatpush2.msra.mxu0 0.0
    %3460 = vmatprep.subr.mxu0 0.0
    %3461 = vmatpush2.msra.mxu0 0.0
    %3462 = vmatprep.subr.mxu0 0.0
    %3463 = vmatpush2.msra.mxu0 0.0
    %3464 = vmatprep.subr.mxu0 0.0
    %3465 = vmatpush2.msra.mxu0 0.0
    %3466 = vmatprep.subr.mxu0 0.0
    %3467 = vmatpush2.msra.mxu0 0.0
    %3468 = vmatprep.subr.mxu0 0.0
    %3469 = vmatpush2.msra.mxu0 0.0
    %3470 = vmatprep.subr.mxu0 0.0
    %3471 = vmatpush2.msra.mxu0 0.0
    %3472 = vmatprep.subr.mxu0 0.0
    %3473 = vmatpush2.msra.mxu0 0.0
    %3474 = vmatprep.subr.mxu0 %v3418
    %3475 = vmatpush2.msra.mxu0 %v3415
    %3476 = vmatprep.subr.mxu0 %v3344
    %3477 = vmatpush2.msra.mxu0 %v3343
    %3478 = vmatprep.subr.mxu0 %v3342
    %3479 = vmatpush2.msra.mxu0 %v3341
    %3480 = vmatprep.subr.mxu0 %v3340
    %3481 = vmatpush2.msra.mxu0 %v3339
    %3482 = vmatprep.subr.mxu0 %v3338
    %3483 = vmatpush2.msra.mxu0 %v3337
    %3484 = vmatprep.mubr.f32.mxu0 %v3348
    %3485 = vmatmul.mubr.f32.gmra.mxu0 %v3143
    %v3486 = vpop.f32.mrf.mxu0
    %v3487 = vadd.f32 0.0, %v3486
    %v3488 = vpop.f32.mrf.mxu0
    %v3489 = vadd.f32 0.0, %v3488
    %3490 = vmatprep.mubr.f32.mxu0 %v3350
    %3491 = vmatmul.mubr.f32.gmra.mxu0 %v3148
    %v3492 = vpop.f32.mrf.mxu0
    %v3493 = vadd.f32 0.0, %v3492
    %v3494 = vpop.f32.mrf.mxu0
    %v3495 = vadd.f32 0.0, %v3494
    %3496 = vmatprep.mubr.f32.mxu0 %v3352
    %3497 = vmatmul.mubr.f32.gmra.mxu0 %v3152
    %v3498 = vpop.f32.mrf.mxu0
    %v3499 = vadd.f32 0.0, %v3498
    %v3500 = vpop.f32.mrf.mxu0
    %v3501 = vadd.f32 0.0, %v3500
    %3502 = vmatprep.mubr.f32.mxu0 %v3354
    %3503 = vmatmul.mubr.f32.gmra.mxu0 %v3156
    %v3504 = vpop.f32.mrf.mxu0
    %v3505 = vadd.f32 0.0, %v3504
    %v3506 = vpop.f32.mrf.mxu0
    %v3507 = vadd.f32 0.0, %v3506
    %3508 = vmatprep.mubr.f32.mxu0 %v3356
    %3509 = vmatmul.mubr.f32.gmra.mxu0 %v3160
    %v3510 = vpop.f32.mrf.mxu0
    %v3511 = vadd.f32 0.0, %v3510
    %v3512 = vpop.f32.mrf.mxu0
    %v3513 = vadd.f32 0.0, %v3512
    %3514 = vmatprep.mubr.f32.mxu0 %v3358
    %3515 = vmatmul.mubr.f32.gmra.mxu0 %v3164
    %v3516 = vpop.f32.mrf.mxu0
    %v3517 = vadd.f32 0.0, %v3516
    %v3518 = vpop.f32.mrf.mxu0
    %v3519 = vadd.f32 0.0, %v3518
    %3520 = vmatprep.mubr.f32.mxu0 %v3360
    %3521 = vmatmul.mubr.f32.gmra.mxu0 %v3168
    %v3522 = vpop.f32.mrf.mxu0
    %v3523 = vadd.f32 0.0, %v3522
    %v3524 = vpop.f32.mrf.mxu0
    %v3525 = vadd.f32 0.0, %v3524
    %3526 = vmatprep.mubr.f32.mxu0 %v3362
    %3527 = vmatmul.mubr.f32.gmra.mxu0 %v3172
    %v3528 = vpop.f32.mrf.mxu0
    %v3529 = vadd.f32 0.0, %v3528
    %v3530 = vpop.f32.mrf.mxu0
    %v3531 = vadd.f32 0.0, %v3530
    %3532 = vmatprep.mubr.f32.mxu0 %v3364
    %3533 = vmatmul.mubr.f32.gmra.mxu0 %v3176
    %v3534 = vpop.f32.mrf.mxu0
    %v3535 = vadd.f32 0.0, %v3534
    %v3536 = vpop.f32.mrf.mxu0
    %v3537 = vadd.f32 0.0, %v3536
    %3538 = vmatprep.mubr.f32.mxu0 %v3366
    %3539 = vmatmul.mubr.f32.gmra.mxu0 %v3180
    %v3540 = vpop.f32.mrf.mxu0
    %v3541 = vadd.f32 0.0, %v3540
    %v3542 = vpop.f32.mrf.mxu0
    %v3543 = vadd.f32 0.0, %v3542
    %3544 = vmatprep.mubr.f32.mxu0 %v3368
    %3545 = vmatmul.mubr.f32.gmra.mxu0 %v3184
    %v3546 = vpop.f32.mrf.mxu0
    %v3547 = vadd.f32 0.0, %v3546
    %v3548 = vpop.f32.mrf.mxu0
    %v3549 = vadd.f32 0.0, %v3548
    %3550 = vmatprep.mubr.f32.mxu0 %v3370
    %3551 = vmatmul.mubr.f32.gmra.mxu0 %v3188
    %v3552 = vpop.f32.mrf.mxu0
    %v3553 = vadd.f32 0.0, %v3552
    %v3554 = vpop.f32.mrf.mxu0
    %v3555 = vadd.f32 0.0, %v3554
    %3556 = vmatprep.mubr.f32.mxu0 %v3372
    %3557 = vmatmul.mubr.f32.gmra.mxu0 %v3192
    %v3558 = vpop.f32.mrf.mxu0
    %v3559 = vadd.f32 0.0, %v3558
    %v3560 = vpop.f32.mrf.mxu0
    %v3561 = vadd.f32 0.0, %v3560
    %3562 = vmatprep.mubr.f32.mxu0 %v3374
    %3563 = vmatmul.mubr.f32.gmra.mxu0 %v3196
    %v3564 = vpop.f32.mrf.mxu0
    %v3565 = vadd.f32 0.0, %v3564
    %v3566 = vpop.f32.mrf.mxu0
    %v3567 = vadd.f32 0.0, %v3566
    %3568 = vmatprep.mubr.f32.mxu0 %v3376
    %3569 = vmatmul.mubr.f32.gmra.mxu0 %v3200
    %v3570 = vpop.f32.mrf.mxu0
    %v3571 = vadd.f32 0.0, %v3570
    %v3572 = vpop.f32.mrf.mxu0
    %v3573 = vadd.f32 0.0, %v3572
    %3574 = vmatprep.mubr.f32.mxu0 %v3378
    %3575 = vmatmul.mubr.f32.gmra.mxu0 %v3204
    %v3576 = vpop.f32.mrf.mxu0
    %v3577 = vadd.f32 0.0, %v3576
    %v3578 = vpop.f32.mrf.mxu0
    %v3579 = vadd.f32 0.0, %v3578
    %3580 = vmatprep.mubr.f32.mxu0 %v3380
    %3581 = vmatmul.mubr.f32.gmra.mxu0 %v3208
    %v3582 = vpop.f32.mrf.mxu0
    %v3583 = vadd.f32 0.0, %v3582
    %v3584 = vpop.f32.mrf.mxu0
    %v3585 = vadd.f32 0.0, %v3584
    %3586 = vmatprep.mubr.f32.mxu0 %v3382
    %3587 = vmatmul.mubr.f32.gmra.mxu0 %v3212
    %v3588 = vpop.f32.mrf.mxu0
    %v3589 = vadd.f32 0.0, %v3588
    %v3590 = vpop.f32.mrf.mxu0
    %v3591 = vadd.f32 0.0, %v3590
    %3592 = vmatprep.mubr.f32.mxu0 %v3384
    %3593 = vmatmul.mubr.f32.gmra.mxu0 %v3216
    %v3594 = vpop.f32.mrf.mxu0
    %v3595 = vadd.f32 0.0, %v3594
    %v3596 = vpop.f32.mrf.mxu0
    %v3597 = vadd.f32 0.0, %v3596
    %3598 = vmatprep.mubr.f32.mxu0 %v3386
    %3599 = vmatmul.mubr.f32.gmra.mxu0 %v3220
    %v3600 = vpop.f32.mrf.mxu0
    %v3601 = vadd.f32 0.0, %v3600
    %v3602 = vpop.f32.mrf.mxu0
    %v3603 = vadd.f32 0.0, %v3602
    %3604 = vmatprep.mubr.f32.mxu0 %v3388
    %3605 = vmatmul.mubr.f32.gmra.mxu0 %v3224
    %v3606 = vpop.f32.mrf.mxu0
    %v3607 = vadd.f32 0.0, %v3606
    %v3608 = vpop.f32.mrf.mxu0
    %v3609 = vadd.f32 0.0, %v3608
    %3610 = vmatprep.mubr.f32.mxu0 %v3390
    %3611 = vmatmul.mubr.f32.gmra.mxu0 %v3228
    %v3612 = vpop.f32.mrf.mxu0
    %v3613 = vadd.f32 0.0, %v3612
    %v3614 = vpop.f32.mrf.mxu0
    %v3615 = vadd.f32 0.0, %v3614
    %3616 = vmatprep.mubr.f32.mxu0 %v3392
    %3617 = vmatmul.mubr.f32.gmra.mxu0 %v3232
    %v3618 = vpop.f32.mrf.mxu0
    %v3619 = vadd.f32 0.0, %v3618
    %v3620 = vpop.f32.mrf.mxu0
    %v3621 = vadd.f32 0.0, %v3620
    %3622 = vmatprep.mubr.f32.mxu0 %v3394
    %3623 = vmatmul.mubr.f32.gmra.mxu0 %v3236
    %v3624 = vpop.f32.mrf.mxu0
    %v3625 = vadd.f32 0.0, %v3624
    %v3626 = vpop.f32.mrf.mxu0
    %v3627 = vadd.f32 0.0, %v3626
    %3628 = vmatprep.mubr.f32.mxu0 %v3396
    %3629 = vmatmul.mubr.f32.gmra.mxu0 %v3240
    %v3630 = vpop.f32.mrf.mxu0
    %v3631 = vadd.f32 0.0, %v3630
    %v3632 = vpop.f32.mrf.mxu0
    %v3633 = vadd.f32 0.0, %v3632
    %3634 = vmatprep.mubr.f32.mxu0 %v3398
    %3635 = vmatmul.mubr.f32.gmra.mxu0 %v3244
    %v3636 = vpop.f32.mrf.mxu0
    %v3637 = vadd.f32 0.0, %v3636
    %v3638 = vpop.f32.mrf.mxu0
    %v3639 = vadd.f32 0.0, %v3638
    %3640 = vmatprep.mubr.f32.mxu0 %v3400
    %3641 = vmatmul.mubr.f32.gmra.mxu0 %v3248
    %v3642 = vpop.f32.mrf.mxu0
    %v3643 = vadd.f32 0.0, %v3642
    %v3644 = vpop.f32.mrf.mxu0
    %v3645 = vadd.f32 0.0, %v3644
    %3646 = vmatprep.mubr.f32.mxu0 %v3402
    %3647 = vmatmul.mubr.f32.gmra.mxu0 %v3252
    %v3648 = vpop.f32.mrf.mxu0
    %v3649 = vadd.f32 0.0, %v3648
    %v3650 = vpop.f32.mrf.mxu0
    %v3651 = vadd.f32 0.0, %v3650
    %3652 = vmatprep.mubr.f32.mxu0 %v3404
    %3653 = vmatmul.mubr.f32.gmra.mxu0 %v3256
    %v3654 = vpop.f32.mrf.mxu0
    %v3655 = vadd.f32 0.0, %v3654
    %v3656 = vpop.f32.mrf.mxu0
    %v3657 = vadd.f32 0.0, %v3656
    %3658 = vmatprep.mubr.f32.mxu0 %v3406
    %3659 = vmatmul.mubr.f32.gmra.mxu0 %v3260
    %v3660 = vpop.f32.mrf.mxu0
    %v3661 = vadd.f32 0.0, %v3660
    %v3662 = vpop.f32.mrf.mxu0
    %v3663 = vadd.f32 0.0, %v3662
    %3664 = vmatprep.mubr.f32.mxu0 %v3408
    %3665 = vmatmul.mubr.f32.gmra.mxu0 %v3264
    %v3666 = vpop.f32.mrf.mxu0
    %v3667 = vadd.f32 0.0, %v3666
    %v3668 = vpop.f32.mrf.mxu0
    %v3669 = vadd.f32 0.0, %v3668
    %3670 = vmatprep.mubr.f32.mxu0 %v3411
    %3671 = vmatmul.mubr.f32.gmra.mxu0 %v3302
    %v3672 = vpop.f32.mrf.mxu0
    %v3673 = vadd.f32 0.0, %v3672
    %v3674 = vpop.f32.mrf.mxu0
    %v3675 = vadd.f32 0.0, %v3674
    %3676 = vdwg.mxu0
    %v3677 = vsel %vm3347, %v2972, 0
    %v3679 = vsel %vm3347, %v2974, 0
    %v3681 = vsel %vm3347, %v2976, 0
    %v3683 = vsel %vm3347, %v2978, 0
    %v3685 = vsel %vm3347, %v2980, 0
    %v3687 = vsel %vm3347, %v2982, 0
    %v3689 = vsel %vm3347, %v2984, 0
    %v3691 = vsel %vm3347, %v2986, 0
    %v3693 = vsel %vm3347, %v2988, 0
    %v3695 = vsel %vm3347, %v2990, 0
    %v3697 = vsel %vm3347, %v2992, 0
    %v3699 = vsel %vm3347, %v2994, 0
    %v3701 = vsel %vm3347, %v2996, 0
    %v3703 = vsel %vm3347, %v2998, 0
    %v3705 = vsel %vm3347, %v3000, 0
    %v3707 = vsel %vm3347, %v3002, 0
    %v3709 = vsel %vm3347, %v3004, 0
    %v3711 = vsel %vm3347, %v3006, 0
    %v3713 = vsel %vm3347, %v3008, 0
    %v3715 = vsel %vm3347, %v3010, 0
    %v3717 = vsel %vm3347, %v3012, 0
    %v3719 = vsel %vm3347, %v3014, 0
    %v3721 = vsel %vm3347, %v3016, 0
    %v3723 = vsel %vm3347, %v3018, 0
    %v3725 = vsel %vm3347, %v3020, 0
    %v3727 = vsel %vm3347, %v3022, 0
    %v3729 = vsel %vm3347, %v3024, 0
    %v3731 = vsel %vm3347, %v3026, 0
    %v3733 = vsel %vm3347, %v3028, 0
    %v3735 = vsel %vm3347, %v3030, 0
    %v3737 = vsel %vm3347, %v3032, 0
    %v3739 = vsel %vm3347, %v3034, 0
    %v3742 = vsel %vm3413, %v3075, 0
    %v3745 = vsel %vm3413, %v3076, 0
    %3747 = vmatprep.subr.mxu0 %v3066
    %3748 = vmatpush1.msra.mxu0 %v3065
    %3749 = vmatprep.subr.mxu0 %v3064
    %3750 = vmatpush1.msra.mxu0 %v3063
    %3751 = vmatprep.subr.mxu0 %v3062
    %3752 = vmatpush1.msra.mxu0 %v3061
    %3753 = vmatprep.subr.mxu0 %v3060
    %3754 = vmatpush1.msra.mxu0 %v3059
    %3755 = vmatprep.subr.mxu0 %v3058
    %3756 = vmatpush1.msra.mxu0 %v3057
    %3757 = vmatprep.subr.mxu0 %v3056
    %3758 = vmatpush1.msra.mxu0 %v3055
    %3759 = vmatprep.subr.mxu0 %v3054
    %3760 = vmatpush1.msra.mxu0 %v3053
    %3761 = vmatprep.subr.mxu0 %v3052
    %3762 = vmatpush1.msra.mxu0 %v3051
    %3763 = vmatprep.subr.mxu0 %v3050
    %3764 = vmatpush1.msra.mxu0 %v3049
    %3765 = vmatprep.subr.mxu0 %v3048
    %3766 = vmatpush1.msra.mxu0 %v3047
    %3767 = vmatprep.subr.mxu0 %v3046
    %3768 = vmatpush1.msra.mxu0 %v3045
    %3769 = vmatprep.subr.mxu0 %v3044
    %3770 = vmatpush1.msra.mxu0 %v3043
    %3771 = vmatprep.subr.mxu0 %v3042
    %3772 = vmatpush1.msra.mxu0 %v3041
    %3773 = vmatprep.subr.mxu0 %v3040
    %3774 = vmatpush1.msra.mxu0 %v3039
    %3775 = vmatprep.subr.mxu0 %v3038
    %3776 = vmatpush1.msra.mxu0 %v3037
    %3777 = vmatprep.subr.mxu0 %v3036
    %3778 = vmatpush1.msra.mxu0 %v3035
    %3779 = vmatprep.subr.mxu0 0.0
    %3780 = vmatpush2.msra.mxu0 0.0
    %3781 = vmatprep.subr.mxu0 0.0
    %3782 = vmatpush2.msra.mxu0 0.0
    %3783 = vmatprep.subr.mxu0 0.0
    %3784 = vmatpush2.msra.mxu0 0.0
    %3785 = vmatprep.subr.mxu0 0.0
    %3786 = vmatpush2.msra.mxu0 0.0
    %3787 = vmatprep.subr.mxu0 0.0
    %3788 = vmatpush2.msra.mxu0 0.0
    %3789 = vmatprep.subr.mxu0 0.0
    %3790 = vmatpush2.msra.mxu0 0.0
    %3791 = vmatprep.subr.mxu0 0.0
    %3792 = vmatpush2.msra.mxu0 0.0
    %3793 = vmatprep.subr.mxu0 0.0
    %3794 = vmatpush2.msra.mxu0 0.0
    %3795 = vmatprep.subr.mxu0 0.0
    %3796 = vmatpush2.msra.mxu0 0.0
    %3797 = vmatprep.subr.mxu0 0.0
    %3798 = vmatpush2.msra.mxu0 0.0
    %3799 = vmatprep.subr.mxu0 0.0
    %3800 = vmatpush2.msra.mxu0 0.0
    %3801 = vmatprep.subr.mxu0 %v3745
    %3802 = vmatpush2.msra.mxu0 %v3742
    %3803 = vmatprep.subr.mxu0 %v3074
    %3804 = vmatpush2.msra.mxu0 %v3073
    %3805 = vmatprep.subr.mxu0 %v3072
    %3806 = vmatpush2.msra.mxu0 %v3071
    %3807 = vmatprep.subr.mxu0 %v3070
    %3808 = vmatpush2.msra.mxu0 %v3069
    %3809 = vmatprep.subr.mxu0 %v3068
    %3810 = vmatpush2.msra.mxu0 %v3067
    %3811 = vmatprep.mubr.f32.mxu0 %v3677
    %3812 = vmatmul.mubr.f32.gmra.mxu0 %v2971
    %v3813 = vpop.f32.mrf.mxu0
    %v3814 = vadd.f32 %v3487, %v3813
    %v3815 = vpop.f32.mrf.mxu0
    %v3816 = vadd.f32 %v3489, %v3815
    %3817 = vmatprep.mubr.f32.mxu0 %v3679
    %3818 = vmatmul.mubr.f32.gmra.mxu0 %v2973
    %v3819 = vpop.f32.mrf.mxu0
    %v3820 = vadd.f32 %v3493, %v3819
    %v3821 = vpop.f32.mrf.mxu0
    %v3822 = vadd.f32 %v3495, %v3821
    %3823 = vmatprep.mubr.f32.mxu0 %v3681
    %3824 = vmatmul.mubr.f32.gmra.mxu0 %v2975
    %v3825 = vpop.f32.mrf.mxu0
    %v3826 = vadd.f32 %v3499, %v3825
    %v3827 = vpop.f32.mrf.mxu0
    %v3828 = vadd.f32 %v3501, %v3827
    %3829 = vmatprep.mubr.f32.mxu0 %v3683
    %3830 = vmatmul.mubr.f32.gmra.mxu0 %v2977
    %v3831 = vpop.f32.mrf.mxu0
    %v3832 = vadd.f32 %v3505, %v3831
    %v3833 = vpop.f32.mrf.mxu0
    %v3834 = vadd.f32 %v3507, %v3833
    %3835 = vmatprep.mubr.f32.mxu0 %v3685
    %3836 = vmatmul.mubr.f32.gmra.mxu0 %v2979
    %v3837 = vpop.f32.mrf.mxu0
    %v3838 = vadd.f32 %v3511, %v3837
    %v3839 = vpop.f32.mrf.mxu0
    %v3840 = vadd.f32 %v3513, %v3839
    %3841 = vmatprep.mubr.f32.mxu0 %v3687
    %3842 = vmatmul.mubr.f32.gmra.mxu0 %v2981
    %v3843 = vpop.f32.mrf.mxu0
    %v3844 = vadd.f32 %v3517, %v3843
    %v3845 = vpop.f32.mrf.mxu0
    %v3846 = vadd.f32 %v3519, %v3845
    %3847 = vmatprep.mubr.f32.mxu0 %v3689
    %3848 = vmatmul.mubr.f32.gmra.mxu0 %v2983
    %v3849 = vpop.f32.mrf.mxu0
    %v3850 = vadd.f32 %v3523, %v3849
    %v3851 = vpop.f32.mrf.mxu0
    %v3852 = vadd.f32 %v3525, %v3851
    %3853 = vmatprep.mubr.f32.mxu0 %v3691
    %3854 = vmatmul.mubr.f32.gmra.mxu0 %v2985
    %v3855 = vpop.f32.mrf.mxu0
    %v3856 = vadd.f32 %v3529, %v3855
    %v3857 = vpop.f32.mrf.mxu0
    %v3858 = vadd.f32 %v3531, %v3857
    %3859 = vmatprep.mubr.f32.mxu0 %v3693
    %3860 = vmatmul.mubr.f32.gmra.mxu0 %v2987
    %v3861 = vpop.f32.mrf.mxu0
    %v3862 = vadd.f32 %v3535, %v3861
    %v3863 = vpop.f32.mrf.mxu0
    %v3864 = vadd.f32 %v3537, %v3863
    %3865 = vmatprep.mubr.f32.mxu0 %v3695
    %3866 = vmatmul.mubr.f32.gmra.mxu0 %v2989
    %v3867 = vpop.f32.mrf.mxu0
    %v3868 = vadd.f32 %v3541, %v3867
    %v3869 = vpop.f32.mrf.mxu0
    %v3870 = vadd.f32 %v3543, %v3869
    %3871 = vmatprep.mubr.f32.mxu0 %v3697
    %3872 = vmatmul.mubr.f32.gmra.mxu0 %v2991
    %v3873 = vpop.f32.mrf.mxu0
    %v3874 = vadd.f32 %v3547, %v3873
    %v3875 = vpop.f32.mrf.mxu0
    %v3876 = vadd.f32 %v3549, %v3875
    %3877 = vmatprep.mubr.f32.mxu0 %v3699
    %3878 = vmatmul.mubr.f32.gmra.mxu0 %v2993
    %v3879 = vpop.f32.mrf.mxu0
    %v3880 = vadd.f32 %v3553, %v3879
    %v3881 = vpop.f32.mrf.mxu0
    %v3882 = vadd.f32 %v3555, %v3881
    %3883 = vmatprep.mubr.f32.mxu0 %v3701
    %3884 = vmatmul.mubr.f32.gmra.mxu0 %v2995
    %v3885 = vpop.f32.mrf.mxu0
    %v3886 = vadd.f32 %v3559, %v3885
    %v3887 = vpop.f32.mrf.mxu0
    %v3888 = vadd.f32 %v3561, %v3887
    %3889 = vmatprep.mubr.f32.mxu0 %v3703
    %3890 = vmatmul.mubr.f32.gmra.mxu0 %v2997
    %v3891 = vpop.f32.mrf.mxu0
    %v3892 = vadd.f32 %v3565, %v3891
    %v3893 = vpop.f32.mrf.mxu0
    %v3894 = vadd.f32 %v3567, %v3893
    %3895 = vmatprep.mubr.f32.mxu0 %v3705
    %3896 = vmatmul.mubr.f32.gmra.mxu0 %v2999
    %v3897 = vpop.f32.mrf.mxu0
    %v3898 = vadd.f32 %v3571, %v3897
    %v3899 = vpop.f32.mrf.mxu0
    %v3900 = vadd.f32 %v3573, %v3899
    %3901 = vmatprep.mubr.f32.mxu0 %v3707
    %3902 = vmatmul.mubr.f32.gmra.mxu0 %v3001
    %v3903 = vpop.f32.mrf.mxu0
    %v3904 = vadd.f32 %v3577, %v3903
    %v3905 = vpop.f32.mrf.mxu0
    %v3906 = vadd.f32 %v3579, %v3905
    %3907 = vmatprep.mubr.f32.mxu0 %v3709
    %3908 = vmatmul.mubr.f32.gmra.mxu0 %v3003
    %v3909 = vpop.f32.mrf.mxu0
    %v3910 = vadd.f32 %v3583, %v3909
    %v3911 = vpop.f32.mrf.mxu0
    %v3912 = vadd.f32 %v3585, %v3911
    %3913 = vmatprep.mubr.f32.mxu0 %v3711
    %3914 = vmatmul.mubr.f32.gmra.mxu0 %v3005
    %v3915 = vpop.f32.mrf.mxu0
    %v3916 = vadd.f32 %v3589, %v3915
    %v3917 = vpop.f32.mrf.mxu0
    %v3918 = vadd.f32 %v3591, %v3917
    %3919 = vmatprep.mubr.f32.mxu0 %v3713
    %3920 = vmatmul.mubr.f32.gmra.mxu0 %v3007
    %v3921 = vpop.f32.mrf.mxu0
    %v3922 = vadd.f32 %v3595, %v3921
    %v3923 = vpop.f32.mrf.mxu0
    %v3924 = vadd.f32 %v3597, %v3923
    %3925 = vmatprep.mubr.f32.mxu0 %v3715
    %3926 = vmatmul.mubr.f32.gmra.mxu0 %v3009
    %v3927 = vpop.f32.mrf.mxu0
    %v3928 = vadd.f32 %v3601, %v3927
    %v3929 = vpop.f32.mrf.mxu0
    %v3930 = vadd.f32 %v3603, %v3929
    %3931 = vmatprep.mubr.f32.mxu0 %v3717
    %3932 = vmatmul.mubr.f32.gmra.mxu0 %v3011
    %v3933 = vpop.f32.mrf.mxu0
    %v3934 = vadd.f32 %v3607, %v3933
    %v3935 = vpop.f32.mrf.mxu0
    %v3936 = vadd.f32 %v3609, %v3935
    %3937 = vmatprep.mubr.f32.mxu0 %v3719
    %3938 = vmatmul.mubr.f32.gmra.mxu0 %v3013
    %v3939 = vpop.f32.mrf.mxu0
    %v3940 = vadd.f32 %v3613, %v3939
    %v3941 = vpop.f32.mrf.mxu0
    %v3942 = vadd.f32 %v3615, %v3941
    %3943 = vmatprep.mubr.f32.mxu0 %v3721
    %3944 = vmatmul.mubr.f32.gmra.mxu0 %v3015
    %v3945 = vpop.f32.mrf.mxu0
    %v3946 = vadd.f32 %v3619, %v3945
    %v3947 = vpop.f32.mrf.mxu0
    %v3948 = vadd.f32 %v3621, %v3947
    %3949 = vmatprep.mubr.f32.mxu0 %v3723
    %3950 = vmatmul.mubr.f32.gmra.mxu0 %v3017
    %v3951 = vpop.f32.mrf.mxu0
    %v3952 = vadd.f32 %v3625, %v3951
    %v3953 = vpop.f32.mrf.mxu0
    %v3954 = vadd.f32 %v3627, %v3953
    %3955 = vmatprep.mubr.f32.mxu0 %v3725
    %3956 = vmatmul.mubr.f32.gmra.mxu0 %v3019
    %v3957 = vpop.f32.mrf.mxu0
    %v3958 = vadd.f32 %v3631, %v3957
    %v3959 = vpop.f32.mrf.mxu0
    %v3960 = vadd.f32 %v3633, %v3959
    %3961 = vmatprep.mubr.f32.mxu0 %v3727
    %3962 = vmatmul.mubr.f32.gmra.mxu0 %v3021
    %v3963 = vpop.f32.mrf.mxu0
    %v3964 = vadd.f32 %v3637, %v3963
    %v3965 = vpop.f32.mrf.mxu0
    %v3966 = vadd.f32 %v3639, %v3965
    %3967 = vmatprep.mubr.f32.mxu0 %v3729
    %3968 = vmatmul.mubr.f32.gmra.mxu0 %v3023
    %v3969 = vpop.f32.mrf.mxu0
    %v3970 = vadd.f32 %v3643, %v3969
    %v3971 = vpop.f32.mrf.mxu0
    %v3972 = vadd.f32 %v3645, %v3971
    %3973 = vmatprep.mubr.f32.mxu0 %v3731
    %3974 = vmatmul.mubr.f32.gmra.mxu0 %v3025
    %v3975 = vpop.f32.mrf.mxu0
    %v3976 = vadd.f32 %v3649, %v3975
    %v3977 = vpop.f32.mrf.mxu0
    %v3978 = vadd.f32 %v3651, %v3977
    %3979 = vmatprep.mubr.f32.mxu0 %v3733
    %3980 = vmatmul.mubr.f32.gmra.mxu0 %v3027
    %v3981 = vpop.f32.mrf.mxu0
    %v3982 = vadd.f32 %v3655, %v3981
    %v3983 = vpop.f32.mrf.mxu0
    %v3984 = vadd.f32 %v3657, %v3983
    %3985 = vmatprep.mubr.f32.mxu0 %v3735
    %3986 = vmatmul.mubr.f32.gmra.mxu0 %v3029
    %v3987 = vpop.f32.mrf.mxu0
    %v3988 = vadd.f32 %v3661, %v3987
    %v3989 = vpop.f32.mrf.mxu0
    %v3990 = vadd.f32 %v3663, %v3989
    %3991 = vmatprep.mubr.f32.mxu0 %v3737
    %3992 = vmatmul.mubr.f32.gmra.mxu0 %v3031
    %v3993 = vpop.f32.mrf.mxu0
    %v3994 = vadd.f32 %v3667, %v3993
    %v3995 = vpop.f32.mrf.mxu0
    %v3996 = vadd.f32 %v3669, %v3995
    %3997 = vmatprep.mubr.f32.mxu0 %v3739
    %3998 = vmatmul.mubr.f32.gmra.mxu0 %v3033
    %v3999 = vpop.f32.mrf.mxu0
    %v4000 = vadd.f32 %v3673, %v3999
    %v4001 = vpop.f32.mrf.mxu0
    %v4002 = vadd.f32 %v3675, %v4001
    %4003 = vdwg.mxu0
    %v4004 = vrot.slane %v2971, 4
    %v4005 = vrot.slane %v2973, 4
    %v4006 = vsel %vm1758, %v4004, %v4005
    %v4007 = vrot.slane %v2972, 4
    %v4008 = vrot.slane %v2974, 4
    %v4009 = vsel %vm1758, %v4007, %v4008
    %v4010 = vrot.slane %v2975, 4
    %v4011 = vsel %vm1758, %v4005, %v4010
    %v4012 = vrot.slane %v2976, 4
    %v4013 = vsel %vm1758, %v4008, %v4012
    %v4014 = vrot.slane %v2977, 4
    %v4015 = vsel %vm1758, %v4010, %v4014
    %v4016 = vrot.slane %v2978, 4
    %v4017 = vsel %vm1758, %v4012, %v4016
    %v4018 = vrot.slane %v2979, 4
    %v4019 = vsel %vm1758, %v4014, %v4018
    %v4020 = vrot.slane %v2980, 4
    %v4021 = vsel %vm1758, %v4016, %v4020
    %v4022 = vrot.slane %v2981, 4
    %v4023 = vsel %vm1758, %v4018, %v4022
    %v4024 = vrot.slane %v2982, 4
    %v4025 = vsel %vm1758, %v4020, %v4024
    %v4026 = vrot.slane %v2983, 4
    %v4027 = vsel %vm1758, %v4022, %v4026
    %v4028 = vrot.slane %v2984, 4
    %v4029 = vsel %vm1758, %v4024, %v4028
    %v4030 = vrot.slane %v2985, 4
    %v4031 = vsel %vm1758, %v4026, %v4030
    %v4032 = vrot.slane %v2986, 4
    %v4033 = vsel %vm1758, %v4028, %v4032
    %v4034 = vrot.slane %v2987, 4
    %v4035 = vsel %vm1758, %v4030, %v4034
    %v4036 = vrot.slane %v2988, 4
    %v4037 = vsel %vm1758, %v4032, %v4036
    %v4038 = vrot.slane %v2989, 4
    %v4039 = vsel %vm1758, %v4034, %v4038
    %v4040 = vrot.slane %v2990, 4
    %v4041 = vsel %vm1758, %v4036, %v4040
    %v4042 = vrot.slane %v2991, 4
    %v4043 = vsel %vm1758, %v4038, %v4042
    %v4044 = vrot.slane %v2992, 4
    %v4045 = vsel %vm1758, %v4040, %v4044
    %v4046 = vrot.slane %v2993, 4
    %v4047 = vsel %vm1758, %v4042, %v4046
    %v4048 = vrot.slane %v2994, 4
    %v4049 = vsel %vm1758, %v4044, %v4048
    %v4050 = vrot.slane %v2995, 4
    %v4051 = vsel %vm1758, %v4046, %v4050
    %v4052 = vrot.slane %v2996, 4
    %v4053 = vsel %vm1758, %v4048, %v4052
    %v4054 = vrot.slane %v2997, 4
    %v4055 = vsel %vm1758, %v4050, %v4054
    %v4056 = vrot.slane %v2998, 4
    %v4057 = vsel %vm1758, %v4052, %v4056
    %v4058 = vrot.slane %v2999, 4
    %v4059 = vsel %vm1758, %v4054, %v4058
    %v4060 = vrot.slane %v3000, 4
    %v4061 = vsel %vm1758, %v4056, %v4060
    %v4062 = vrot.slane %v3001, 4
    %v4063 = vsel %vm1758, %v4058, %v4062
    %v4064 = vrot.slane %v3002, 4
    %v4065 = vsel %vm1758, %v4060, %v4064
    %v4066 = vrot.slane %v3003, 4
    %v4067 = vsel %vm1758, %v4062, %v4066
    %v4068 = vrot.slane %v3004, 4
    %v4069 = vsel %vm1758, %v4064, %v4068
    %v4070 = vrot.slane %v3005, 4
    %v4071 = vsel %vm1758, %v4066, %v4070
    %v4072 = vrot.slane %v3006, 4
    %v4073 = vsel %vm1758, %v4068, %v4072
    %v4074 = vrot.slane %v3007, 4
    %v4075 = vsel %vm1758, %v4070, %v4074
    %v4076 = vrot.slane %v3008, 4
    %v4077 = vsel %vm1758, %v4072, %v4076
    %v4078 = vrot.slane %v3009, 4
    %v4079 = vsel %vm1758, %v4074, %v4078
    %v4080 = vrot.slane %v3010, 4
    %v4081 = vsel %vm1758, %v4076, %v4080
    %v4082 = vrot.slane %v3011, 4
    %v4083 = vsel %vm1758, %v4078, %v4082
    %v4084 = vrot.slane %v3012, 4
    %v4085 = vsel %vm1758, %v4080, %v4084
    %v4086 = vrot.slane %v3013, 4
    %v4087 = vsel %vm1758, %v4082, %v4086
    %v4088 = vrot.slane %v3014, 4
    %v4089 = vsel %vm1758, %v4084, %v4088
    %v4090 = vrot.slane %v3015, 4
    %v4091 = vsel %vm1758, %v4086, %v4090
    %v4092 = vrot.slane %v3016, 4
    %v4093 = vsel %vm1758, %v4088, %v4092
    %v4094 = vrot.slane %v3017, 4
    %v4095 = vsel %vm1758, %v4090, %v4094
    %v4096 = vrot.slane %v3018, 4
    %v4097 = vsel %vm1758, %v4092, %v4096
    %v4098 = vrot.slane %v3019, 4
    %v4099 = vsel %vm1758, %v4094, %v4098
    %v4100 = vrot.slane %v3020, 4
    %v4101 = vsel %vm1758, %v4096, %v4100
    %v4102 = vrot.slane %v3021, 4
    %v4103 = vsel %vm1758, %v4098, %v4102
    %v4104 = vrot.slane %v3022, 4
    %v4105 = vsel %vm1758, %v4100, %v4104
    %v4106 = vrot.slane %v3023, 4
    %v4107 = vsel %vm1758, %v4102, %v4106
    %v4108 = vrot.slane %v3024, 4
    %v4109 = vsel %vm1758, %v4104, %v4108
    %v4110 = vrot.slane %v3025, 4
    %v4111 = vsel %vm1758, %v4106, %v4110
    %v4112 = vrot.slane %v3026, 4
    %v4113 = vsel %vm1758, %v4108, %v4112
    %v4114 = vrot.slane %v3027, 4
    %v4115 = vsel %vm1758, %v4110, %v4114
    %v4116 = vrot.slane %v3028, 4
    %v4117 = vsel %vm1758, %v4112, %v4116
    %v4118 = vrot.slane %v3029, 4
    %v4119 = vsel %vm1758, %v4114, %v4118
    %v4120 = vrot.slane %v3030, 4
    %v4121 = vsel %vm1758, %v4116, %v4120
    %v4122 = vrot.slane %v3031, 4
    %v4123 = vsel %vm1758, %v4118, %v4122
    %v4124 = vrot.slane %v3032, 4
    %v4125 = vsel %vm1758, %v4120, %v4124
    %v4126 = vrot.slane %v3033, 4
    %v4127 = vsel %vm1758, %v4122, %v4126
    %v4128 = vrot.slane %v3034, 4
    %v4129 = vsel %vm1758, %v4124, %v4128
    %v4165 = vsel %vm1758, %v4126, %v4004
    %v4166 = vsel %vm1758, %v4128, %v4007
    %s4167 = scalar_lea.vmem %s3, 672
    %v4168 = vld [vmem:[%s4167] sm:$0xff]
    %v4169 = vld [vmem:[%s4167 + $0x8] sm:$0xff]
    %v4170 = vld [vmem:[%s4167 + $0x10] sm:$0xff]
    %v4171 = vld [vmem:[%s4167 + $0x18] sm:$0xff]
    %v4172 = vld [vmem:[%s4167 + $0x20] sm:$0xff]
    %v4173 = vld [vmem:[%s4167 + $0x28] sm:$0xff]
    %v4174 = vld [vmem:[%s4167 + $0x30] sm:$0xff]
    %v4175 = vld [vmem:[%s4167 + $0x38] sm:$0xff]
    %v4176 = vld [vmem:[%s4167 + $0x40] sm:$0xff]
    %v4177 = vld [vmem:[%s4167 + $0x48] sm:$0xff]
    %v4178 = vld [vmem:[%s4167 + $0x50] sm:$0xff]
    %v4179 = vld [vmem:[%s4167 + $0x58] sm:$0xff]
    %v4180 = vld [vmem:[%s4167 + $0x60] sm:$0xff]
    %v4181 = vld [vmem:[%s4167 + $0x68] sm:$0xff]
    %v4182 = vld [vmem:[%s4167 + $0x70] sm:$0xff]
    %v4183 = vld [vmem:[%s4167 + $0x78] sm:$0xff]
    %v4184 = vld [vmem:[%s4167 + $0x80] sm:$0xff]
    %v4185 = vld [vmem:[%s4167 + $0x88] sm:$0xff]
    %v4186 = vld [vmem:[%s4167 + $0x90] sm:$0xff]
    %v4187 = vld [vmem:[%s4167 + $0x98] sm:$0xff]
    %v4188 = vld [vmem:[%s4167 + $0xa0] sm:$0xff]
    %v4189 = vld [vmem:[%s4167 + $0xa8] sm:$0xff]
    %v4190 = vld [vmem:[%s4167 + $0xb0] sm:$0xff]
    %v4191 = vld [vmem:[%s4167 + $0xb8] sm:$0xff]
    %v4192 = vld [vmem:[%s4167 + $0xc0] sm:$0xff]
    %v4193 = vld [vmem:[%s4167 + $0xc8] sm:$0xff]
    %v4194 = vld [vmem:[%s4167 + $0xd0] sm:$0xff]
    %v4195 = vld [vmem:[%s4167 + $0xd8] sm:$0xff]
    %v4196 = vld [vmem:[%s4167 + $0xe0] sm:$0xff]
    %v4197 = vld [vmem:[%s4167 + $0xe8] sm:$0xff]
    %v4198 = vld [vmem:[%s4167 + $0xf0] sm:$0xff]
    %v4199 = vld [vmem:[%s4167 + $0xf8] sm:$0xff]
    %v4200 = vld [vmem:[%s4167 + $0x100] sm:$0xff]
    %v4201 = vld [vmem:[%s4167 + $0x108] sm:$0xff]
    %v4202 = vld [vmem:[%s4167 + $0x110] sm:$0xff]
    %v4203 = vld [vmem:[%s4167 + $0x118] sm:$0xff]
    %v4204 = vld [vmem:[%s4167 + $0x120] sm:$0xff]
    %v4205 = vld [vmem:[%s4167 + $0x128] sm:$0xff]
    %v4206 = vld [vmem:[%s4167 + $0x130] sm:$0xff]
    %v4207 = vld [vmem:[%s4167 + $0x138] sm:$0xff]
    %v4208 = vld [vmem:[%s4167 + $0x140] sm:$0x3]
    %v4209 = vld [vmem:[%s4167 + $0x148] sm:$0x3]
    %v4210 = vsel %vm3347, %v4009, 0
    %v4212 = vsel %vm3347, %v4013, 0
    %v4214 = vsel %vm3347, %v4017, 0
    %v4216 = vsel %vm3347, %v4021, 0
    %v4218 = vsel %vm3347, %v4025, 0
    %v4220 = vsel %vm3347, %v4029, 0
    %v4222 = vsel %vm3347, %v4033, 0
    %v4224 = vsel %vm3347, %v4037, 0
    %v4226 = vsel %vm3347, %v4041, 0
    %v4228 = vsel %vm3347, %v4045, 0
    %v4230 = vsel %vm3347, %v4049, 0
    %v4232 = vsel %vm3347, %v4053, 0
    %v4234 = vsel %vm3347, %v4057, 0
    %v4236 = vsel %vm3347, %v4061, 0
    %v4238 = vsel %vm3347, %v4065, 0
    %v4240 = vsel %vm3347, %v4069, 0
    %v4242 = vsel %vm3347, %v4073, 0
    %v4244 = vsel %vm3347, %v4077, 0
    %v4246 = vsel %vm3347, %v4081, 0
    %v4248 = vsel %vm3347, %v4085, 0
    %v4250 = vsel %vm3347, %v4089, 0
    %v4252 = vsel %vm3347, %v4093, 0
    %v4254 = vsel %vm3347, %v4097, 0
    %v4256 = vsel %vm3347, %v4101, 0
    %v4258 = vsel %vm3347, %v4105, 0
    %v4260 = vsel %vm3347, %v4109, 0
    %v4262 = vsel %vm3347, %v4113, 0
    %v4264 = vsel %vm3347, %v4117, 0
    %v4266 = vsel %vm3347, %v4121, 0
    %v4268 = vsel %vm3347, %v4125, 0
    %v4270 = vsel %vm3347, %v4129, 0
    %v4273 = vsel %vm3347, %v4166, 0
    %v4276 = vsel %vm3413, %v4208, 0
    %v4279 = vsel %vm3413, %v4209, 0
    %4281 = vmatprep.subr.mxu0 %v4199
    %4282 = vmatpush1.msra.mxu0 %v4198
    %4283 = vmatprep.subr.mxu0 %v4197
    %4284 = vmatpush1.msra.mxu0 %v4196
    %4285 = vmatprep.subr.mxu0 %v4195
    %4286 = vmatpush1.msra.mxu0 %v4194
    %4287 = vmatprep.subr.mxu0 %v4193
    %4288 = vmatpush1.msra.mxu0 %v4192
    %4289 = vmatprep.subr.mxu0 %v4191
    %4290 = vmatpush1.msra.mxu0 %v4190
    %4291 = vmatprep.subr.mxu0 %v4189
    %4292 = vmatpush1.msra.mxu0 %v4188
    %4293 = vmatprep.subr.mxu0 %v4187
    %4294 = vmatpush1.msra.mxu0 %v4186
    %4295 = vmatprep.subr.mxu0 %v4185
    %4296 = vmatpush1.msra.mxu0 %v4184
    %4297 = vmatprep.subr.mxu0 %v4183
    %4298 = vmatpush1.msra.mxu0 %v4182
    %4299 = vmatprep.subr.mxu0 %v4181
    %4300 = vmatpush1.msra.mxu0 %v4180
    %4301 = vmatprep.subr.mxu0 %v4179
    %4302 = vmatpush1.msra.mxu0 %v4178
    %4303 = vmatprep.subr.mxu0 %v4177
    %4304 = vmatpush1.msra.mxu0 %v4176
    %4305 = vmatprep.subr.mxu0 %v4175
    %4306 = vmatpush1.msra.mxu0 %v4174
    %4307 = vmatprep.subr.mxu0 %v4173
    %4308 = vmatpush1.msra.mxu0 %v4172
    %4309 = vmatprep.subr.mxu0 %v4171
    %4310 = vmatpush1.msra.mxu0 %v4170
    %4311 = vmatprep.subr.mxu0 %v4169
    %4312 = vmatpush1.msra.mxu0 %v4168
    %4313 = vmatprep.subr.mxu0 0.0
    %4314 = vmatpush2.msra.mxu0 0.0
    %4315 = vmatprep.subr.mxu0 0.0
    %4316 = vmatpush2.msra.mxu0 0.0
    %4317 = vmatprep.subr.mxu0 0.0
    %4318 = vmatpush2.msra.mxu0 0.0
    %4319 = vmatprep.subr.mxu0 0.0
    %4320 = vmatpush2.msra.mxu0 0.0
    %4321 = vmatprep.subr.mxu0 0.0
    %4322 = vmatpush2.msra.mxu0 0.0
    %4323 = vmatprep.subr.mxu0 0.0
    %4324 = vmatpush2.msra.mxu0 0.0
    %4325 = vmatprep.subr.mxu0 0.0
    %4326 = vmatpush2.msra.mxu0 0.0
    %4327 = vmatprep.subr.mxu0 0.0
    %4328 = vmatpush2.msra.mxu0 0.0
    %4329 = vmatprep.subr.mxu0 0.0
    %4330 = vmatpush2.msra.mxu0 0.0
    %4331 = vmatprep.subr.mxu0 0.0
    %4332 = vmatpush2.msra.mxu0 0.0
    %4333 = vmatprep.subr.mxu0 0.0
    %4334 = vmatpush2.msra.mxu0 0.0
    %4335 = vmatprep.subr.mxu0 %v4279
    %4336 = vmatpush2.msra.mxu0 %v4276
    %4337 = vmatprep.subr.mxu0 %v4207
    %4338 = vmatpush2.msra.mxu0 %v4206
    %4339 = vmatprep.subr.mxu0 %v4205
    %4340 = vmatpush2.msra.mxu0 %v4204
    %4341 = vmatprep.subr.mxu0 %v4203
    %4342 = vmatpush2.msra.mxu0 %v4202
    %4343 = vmatprep.subr.mxu0 %v4201
    %4344 = vmatpush2.msra.mxu0 %v4200
    %4345 = vmatprep.mubr.f32.mxu0 %v4210
    %4346 = vmatmul.mubr.f32.gmra.mxu0 %v4006
    %v4347 = vpop.f32.mrf.mxu0
    %v4348 = vadd.f32 0.0, %v4347
    %v4349 = vpop.f32.mrf.mxu0
    %v4350 = vadd.f32 0.0, %v4349
    %4351 = vmatprep.mubr.f32.mxu0 %v4212
    %4352 = vmatmul.mubr.f32.gmra.mxu0 %v4011
    %v4353 = vpop.f32.mrf.mxu0
    %v4354 = vadd.f32 0.0, %v4353
    %v4355 = vpop.f32.mrf.mxu0
    %v4356 = vadd.f32 0.0, %v4355
    %4357 = vmatprep.mubr.f32.mxu0 %v4214
    %4358 = vmatmul.mubr.f32.gmra.mxu0 %v4015
    %v4359 = vpop.f32.mrf.mxu0
    %v4360 = vadd.f32 0.0, %v4359
    %v4361 = vpop.f32.mrf.mxu0
    %v4362 = vadd.f32 0.0, %v4361
    %4363 = vmatprep.mubr.f32.mxu0 %v4216
    %4364 = vmatmul.mubr.f32.gmra.mxu0 %v4019
    %v4365 = vpop.f32.mrf.mxu0
    %v4366 = vadd.f32 0.0, %v4365
    %v4367 = vpop.f32.mrf.mxu0
    %v4368 = vadd.f32 0.0, %v4367
    %4369 = vmatprep.mubr.f32.mxu0 %v4218
    %4370 = vmatmul.mubr.f32.gmra.mxu0 %v4023
    %v4371 = vpop.f32.mrf.mxu0
    %v4372 = vadd.f32 0.0, %v4371
    %v4373 = vpop.f32.mrf.mxu0
    %v4374 = vadd.f32 0.0, %v4373
    %4375 = vmatprep.mubr.f32.mxu0 %v4220
    %4376 = vmatmul.mubr.f32.gmra.mxu0 %v4027
    %v4377 = vpop.f32.mrf.mxu0
    %v4378 = vadd.f32 0.0, %v4377
    %v4379 = vpop.f32.mrf.mxu0
    %v4380 = vadd.f32 0.0, %v4379
    %4381 = vmatprep.mubr.f32.mxu0 %v4222
    %4382 = vmatmul.mubr.f32.gmra.mxu0 %v4031
    %v4383 = vpop.f32.mrf.mxu0
    %v4384 = vadd.f32 0.0, %v4383
    %v4385 = vpop.f32.mrf.mxu0
    %v4386 = vadd.f32 0.0, %v4385
    %4387 = vmatprep.mubr.f32.mxu0 %v4224
    %4388 = vmatmul.mubr.f32.gmra.mxu0 %v4035
    %v4389 = vpop.f32.mrf.mxu0
    %v4390 = vadd.f32 0.0, %v4389
    %v4391 = vpop.f32.mrf.mxu0
    %v4392 = vadd.f32 0.0, %v4391
    %4393 = vmatprep.mubr.f32.mxu0 %v4226
    %4394 = vmatmul.mubr.f32.gmra.mxu0 %v4039
    %v4395 = vpop.f32.mrf.mxu0
    %v4396 = vadd.f32 0.0, %v4395
    %v4397 = vpop.f32.mrf.mxu0
    %v4398 = vadd.f32 0.0, %v4397
    %4399 = vmatprep.mubr.f32.mxu0 %v4228
    %4400 = vmatmul.mubr.f32.gmra.mxu0 %v4043
    %v4401 = vpop.f32.mrf.mxu0
    %v4402 = vadd.f32 0.0, %v4401
    %v4403 = vpop.f32.mrf.mxu0
    %v4404 = vadd.f32 0.0, %v4403
    %4405 = vmatprep.mubr.f32.mxu0 %v4230
    %4406 = vmatmul.mubr.f32.gmra.mxu0 %v4047
    %v4407 = vpop.f32.mrf.mxu0
    %v4408 = vadd.f32 0.0, %v4407
    %v4409 = vpop.f32.mrf.mxu0
    %v4410 = vadd.f32 0.0, %v4409
    %4411 = vmatprep.mubr.f32.mxu0 %v4232
    %4412 = vmatmul.mubr.f32.gmra.mxu0 %v4051
    %v4413 = vpop.f32.mrf.mxu0
    %v4414 = vadd.f32 0.0, %v4413
    %v4415 = vpop.f32.mrf.mxu0
    %v4416 = vadd.f32 0.0, %v4415
    %4417 = vmatprep.mubr.f32.mxu0 %v4234
    %4418 = vmatmul.mubr.f32.gmra.mxu0 %v4055
    %v4419 = vpop.f32.mrf.mxu0
    %v4420 = vadd.f32 0.0, %v4419
    %v4421 = vpop.f32.mrf.mxu0
    %v4422 = vadd.f32 0.0, %v4421
    %4423 = vmatprep.mubr.f32.mxu0 %v4236
    %4424 = vmatmul.mubr.f32.gmra.mxu0 %v4059
    %v4425 = vpop.f32.mrf.mxu0
    %v4426 = vadd.f32 0.0, %v4425
    %v4427 = vpop.f32.mrf.mxu0
    %v4428 = vadd.f32 0.0, %v4427
    %4429 = vmatprep.mubr.f32.mxu0 %v4238
    %4430 = vmatmul.mubr.f32.gmra.mxu0 %v4063
    %v4431 = vpop.f32.mrf.mxu0
    %v4432 = vadd.f32 0.0, %v4431
    %v4433 = vpop.f32.mrf.mxu0
    %v4434 = vadd.f32 0.0, %v4433
    %4435 = vmatprep.mubr.f32.mxu0 %v4240
    %4436 = vmatmul.mubr.f32.gmra.mxu0 %v4067
    %v4437 = vpop.f32.mrf.mxu0
    %v4438 = vadd.f32 0.0, %v4437
    %v4439 = vpop.f32.mrf.mxu0
    %v4440 = vadd.f32 0.0, %v4439
    %4441 = vmatprep.mubr.f32.mxu0 %v4242
    %4442 = vmatmul.mubr.f32.gmra.mxu0 %v4071
    %v4443 = vpop.f32.mrf.mxu0
    %v4444 = vadd.f32 0.0, %v4443
    %v4445 = vpop.f32.mrf.mxu0
    %v4446 = vadd.f32 0.0, %v4445
    %4447 = vmatprep.mubr.f32.mxu0 %v4244
    %4448 = vmatmul.mubr.f32.gmra.mxu0 %v4075
    %v4449 = vpop.f32.mrf.mxu0
    %v4450 = vadd.f32 0.0, %v4449
    %v4451 = vpop.f32.mrf.mxu0
    %v4452 = vadd.f32 0.0, %v4451
    %4453 = vmatprep.mubr.f32.mxu0 %v4246
    %4454 = vmatmul.mubr.f32.gmra.mxu0 %v4079
    %v4455 = vpop.f32.mrf.mxu0
    %v4456 = vadd.f32 0.0, %v4455
    %v4457 = vpop.f32.mrf.mxu0
    %v4458 = vadd.f32 0.0, %v4457
    %4459 = vmatprep.mubr.f32.mxu0 %v4248
    %4460 = vmatmul.mubr.f32.gmra.mxu0 %v4083
    %v4461 = vpop.f32.mrf.mxu0
    %v4462 = vadd.f32 0.0, %v4461
    %v4463 = vpop.f32.mrf.mxu0
    %v4464 = vadd.f32 0.0, %v4463
    %4465 = vmatprep.mubr.f32.mxu0 %v4250
    %4466 = vmatmul.mubr.f32.gmra.mxu0 %v4087
    %v4467 = vpop.f32.mrf.mxu0
    %v4468 = vadd.f32 0.0, %v4467
    %v4469 = vpop.f32.mrf.mxu0
    %v4470 = vadd.f32 0.0, %v4469
    %4471 = vmatprep.mubr.f32.mxu0 %v4252
    %4472 = vmatmul.mubr.f32.gmra.mxu0 %v4091
    %v4473 = vpop.f32.mrf.mxu0
    %v4474 = vadd.f32 0.0, %v4473
    %v4475 = vpop.f32.mrf.mxu0
    %v4476 = vadd.f32 0.0, %v4475
    %4477 = vmatprep.mubr.f32.mxu0 %v4254
    %4478 = vmatmul.mubr.f32.gmra.mxu0 %v4095
    %v4479 = vpop.f32.mrf.mxu0
    %v4480 = vadd.f32 0.0, %v4479
    %v4481 = vpop.f32.mrf.mxu0
    %v4482 = vadd.f32 0.0, %v4481
    %4483 = vmatprep.mubr.f32.mxu0 %v4256
    %4484 = vmatmul.mubr.f32.gmra.mxu0 %v4099
    %v4485 = vpop.f32.mrf.mxu0
    %v4486 = vadd.f32 0.0, %v4485
    %v4487 = vpop.f32.mrf.mxu0
    %v4488 = vadd.f32 0.0, %v4487
    %4489 = vmatprep.mubr.f32.mxu0 %v4258
    %4490 = vmatmul.mubr.f32.gmra.mxu0 %v4103
    %v4491 = vpop.f32.mrf.mxu0
    %v4492 = vadd.f32 0.0, %v4491
    %v4493 = vpop.f32.mrf.mxu0
    %v4494 = vadd.f32 0.0, %v4493
    %4495 = vmatprep.mubr.f32.mxu0 %v4260
    %4496 = vmatmul.mubr.f32.gmra.mxu0 %v4107
    %v4497 = vpop.f32.mrf.mxu0
    %v4498 = vadd.f32 0.0, %v4497
    %v4499 = vpop.f32.mrf.mxu0
    %v4500 = vadd.f32 0.0, %v4499
    %4501 = vmatprep.mubr.f32.mxu0 %v4262
    %4502 = vmatmul.mubr.f32.gmra.mxu0 %v4111
    %v4503 = vpop.f32.mrf.mxu0
    %v4504 = vadd.f32 0.0, %v4503
    %v4505 = vpop.f32.mrf.mxu0
    %v4506 = vadd.f32 0.0, %v4505
    %4507 = vmatprep.mubr.f32.mxu0 %v4264
    %4508 = vmatmul.mubr.f32.gmra.mxu0 %v4115
    %v4509 = vpop.f32.mrf.mxu0
    %v4510 = vadd.f32 0.0, %v4509
    %v4511 = vpop.f32.mrf.mxu0
    %v4512 = vadd.f32 0.0, %v4511
    %4513 = vmatprep.mubr.f32.mxu0 %v4266
    %4514 = vmatmul.mubr.f32.gmra.mxu0 %v4119
    %v4515 = vpop.f32.mrf.mxu0
    %v4516 = vadd.f32 0.0, %v4515
    %v4517 = vpop.f32.mrf.mxu0
    %v4518 = vadd.f32 0.0, %v4517
    %4519 = vmatprep.mubr.f32.mxu0 %v4268
    %4520 = vmatmul.mubr.f32.gmra.mxu0 %v4123
    %v4521 = vpop.f32.mrf.mxu0
    %v4522 = vadd.f32 0.0, %v4521
    %v4523 = vpop.f32.mrf.mxu0
    %v4524 = vadd.f32 0.0, %v4523
    %4525 = vmatprep.mubr.f32.mxu0 %v4270
    %4526 = vmatmul.mubr.f32.gmra.mxu0 %v4127
    %v4527 = vpop.f32.mrf.mxu0
    %v4528 = vadd.f32 0.0, %v4527
    %v4529 = vpop.f32.mrf.mxu0
    %v4530 = vadd.f32 0.0, %v4529
    %4531 = vmatprep.mubr.f32.mxu0 %v4273
    %4532 = vmatmul.mubr.f32.gmra.mxu0 %v4165
    %v4533 = vpop.f32.mrf.mxu0
    %v4534 = vadd.f32 0.0, %v4533
    %v4535 = vpop.f32.mrf.mxu0
    %v4536 = vadd.f32 0.0, %v4535
    %4537 = vdwg.mxu0
    %v4538 = vadd.f32 %v3814, %v4348
    %v4539 = vadd.f32 %v3816, %v4350
    %v4540 = vadd.f32 %v3820, %v4354
    %v4541 = vadd.f32 %v3822, %v4356
    %v4542 = vadd.f32 %v3826, %v4360
    %v4543 = vadd.f32 %v3828, %v4362
    %v4544 = vadd.f32 %v3832, %v4366
    %v4545 = vadd.f32 %v3834, %v4368
    %v4546 = vadd.f32 %v3838, %v4372
    %v4547 = vadd.f32 %v3840, %v4374
    %v4548 = vadd.f32 %v3844, %v4378
    %v4549 = vadd.f32 %v3846, %v4380
    %v4550 = vadd.f32 %v3850, %v4384
    %v4551 = vadd.f32 %v3852, %v4386
    %v4552 = vadd.f32 %v3856, %v4390
    %v4553 = vadd.f32 %v3858, %v4392
    %v4554 = vadd.f32 %v3862, %v4396
    %v4555 = vadd.f32 %v3864, %v4398
    %v4556 = vadd.f32 %v3868, %v4402
    %v4557 = vadd.f32 %v3870, %v4404
    %v4558 = vadd.f32 %v3874, %v4408
    %v4559 = vadd.f32 %v3876, %v4410
    %v4560 = vadd.f32 %v3880, %v4414
    %v4561 = vadd.f32 %v3882, %v4416
    %v4562 = vadd.f32 %v3886, %v4420
    %v4563 = vadd.f32 %v3888, %v4422
    %v4564 = vadd.f32 %v3892, %v4426
    %v4565 = vadd.f32 %v3894, %v4428
    %v4566 = vadd.f32 %v3898, %v4432
    %v4567 = vadd.f32 %v3900, %v4434
    %v4568 = vadd.f32 %v3904, %v4438
    %v4569 = vadd.f32 %v3906, %v4440
    %v4570 = vadd.f32 %v3910, %v4444
    %v4571 = vadd.f32 %v3912, %v4446
    %v4572 = vadd.f32 %v3916, %v4450
    %v4573 = vadd.f32 %v3918, %v4452
    %v4574 = vadd.f32 %v3922, %v4456
    %v4575 = vadd.f32 %v3924, %v4458
    %v4576 = vadd.f32 %v3928, %v4462
    %v4577 = vadd.f32 %v3930, %v4464
    %v4578 = vadd.f32 %v3934, %v4468
    %v4579 = vadd.f32 %v3936, %v4470
    %v4580 = vadd.f32 %v3940, %v4474
    %v4581 = vadd.f32 %v3942, %v4476
    %v4582 = vadd.f32 %v3946, %v4480
    %v4583 = vadd.f32 %v3948, %v4482
    %v4584 = vadd.f32 %v3952, %v4486
    %v4585 = vadd.f32 %v3954, %v4488
    %v4586 = vadd.f32 %v3958, %v4492
    %v4587 = vadd.f32 %v3960, %v4494
    %v4588 = vadd.f32 %v3964, %v4498
    %v4589 = vadd.f32 %v3966, %v4500
    %v4590 = vadd.f32 %v3970, %v4504
    %v4591 = vadd.f32 %v3972, %v4506
    %v4592 = vadd.f32 %v3976, %v4510
    %v4593 = vadd.f32 %v3978, %v4512
    %v4594 = vadd.f32 %v3982, %v4516
    %v4595 = vadd.f32 %v3984, %v4518
    %v4596 = vadd.f32 %v3988, %v4522
    %v4597 = vadd.f32 %v3990, %v4524
    %v4598 = vadd.f32 %v3994, %v4528
    %v4599 = vadd.f32 %v3996, %v4530
    %v4600 = vadd.f32 %v4000, %v4534
    %v4601 = vadd.f32 %v4002, %v4536
    %v4602 = vrot.slane %v2971, 6
    %v4603 = vrot.slane %v2973, 6
    %v4604 = vsel %vm3413, %v4602, %v4603
    %v4605 = vrot.slane %v2972, 6
    %v4606 = vrot.slane %v2974, 6
    %v4607 = vsel %vm3413, %v4605, %v4606
    %v4608 = vrot.slane %v2975, 6
    %v4609 = vsel %vm3413, %v4603, %v4608
    %v4610 = vrot.slane %v2976, 6
    %v4611 = vsel %vm3413, %v4606, %v4610
    %v4612 = vrot.slane %v2977, 6
    %v4613 = vsel %vm3413, %v4608, %v4612
    %v4614 = vrot.slane %v2978, 6
    %v4615 = vsel %vm3413, %v4610, %v4614
    %v4616 = vrot.slane %v2979, 6
    %v4617 = vsel %vm3413, %v4612, %v4616
    %v4618 = vrot.slane %v2980, 6
    %v4619 = vsel %vm3413, %v4614, %v4618
    %v4620 = vrot.slane %v2981, 6
    %v4621 = vsel %vm3413, %v4616, %v4620
    %v4622 = vrot.slane %v2982, 6
    %v4623 = vsel %vm3413, %v4618, %v4622
    %v4624 = vrot.slane %v2983, 6
    %v4625 = vsel %vm3413, %v4620, %v4624
    %v4626 = vrot.slane %v2984, 6
    %v4627 = vsel %vm3413, %v4622, %v4626
    %v4628 = vrot.slane %v2985, 6
    %v4629 = vsel %vm3413, %v4624, %v4628
    %v4630 = vrot.slane %v2986, 6
    %v4631 = vsel %vm3413, %v4626, %v4630
    %v4632 = vrot.slane %v2987, 6
    %v4633 = vsel %vm3413, %v4628, %v4632
    %v4634 = vrot.slane %v2988, 6
    %v4635 = vsel %vm3413, %v4630, %v4634
    %v4636 = vrot.slane %v2989, 6
    %v4637 = vsel %vm3413, %v4632, %v4636
    %v4638 = vrot.slane %v2990, 6
    %v4639 = vsel %vm3413, %v4634, %v4638
    %v4640 = vrot.slane %v2991, 6
    %v4641 = vsel %vm3413, %v4636, %v4640
    %v4642 = vrot.slane %v2992, 6
    %v4643 = vsel %vm3413, %v4638, %v4642
    %v4644 = vrot.slane %v2993, 6
    %v4645 = vsel %vm3413, %v4640, %v4644
    %v4646 = vrot.slane %v2994, 6
    %v4647 = vsel %vm3413, %v4642, %v4646
    %v4648 = vrot.slane %v2995, 6
    %v4649 = vsel %vm3413, %v4644, %v4648
    %v4650 = vrot.slane %v2996, 6
    %v4651 = vsel %vm3413, %v4646, %v4650
    %v4652 = vrot.slane %v2997, 6
    %v4653 = vsel %vm3413, %v4648, %v4652
    %v4654 = vrot.slane %v2998, 6
    %v4655 = vsel %vm3413, %v4650, %v4654
    %v4656 = vrot.slane %v2999, 6
    %v4657 = vsel %vm3413, %v4652, %v4656
    %v4658 = vrot.slane %v3000, 6
    %v4659 = vsel %vm3413, %v4654, %v4658
    %v4660 = vrot.slane %v3001, 6
    %v4661 = vsel %vm3413, %v4656, %v4660
    %v4662 = vrot.slane %v3002, 6
    %v4663 = vsel %vm3413, %v4658, %v4662
    %v4664 = vrot.slane %v3003, 6
    %v4665 = vsel %vm3413, %v4660, %v4664
    %v4666 = vrot.slane %v3004, 6
    %v4667 = vsel %vm3413, %v4662, %v4666
    %v4668 = vrot.slane %v3005, 6
    %v4669 = vsel %vm3413, %v4664, %v4668
    %v4670 = vrot.slane %v3006, 6
    %v4671 = vsel %vm3413, %v4666, %v4670
    %v4672 = vrot.slane %v3007, 6
    %v4673 = vsel %vm3413, %v4668, %v4672
    %v4674 = vrot.slane %v3008, 6
    %v4675 = vsel %vm3413, %v4670, %v4674
    %v4676 = vrot.slane %v3009, 6
    %v4677 = vsel %vm3413, %v4672, %v4676
    %v4678 = vrot.slane %v3010, 6
    %v4679 = vsel %vm3413, %v4674, %v4678
    %v4680 = vrot.slane %v3011, 6
    %v4681 = vsel %vm3413, %v4676, %v4680
    %v4682 = vrot.slane %v3012, 6
    %v4683 = vsel %vm3413, %v4678, %v4682
    %v4684 = vrot.slane %v3013, 6
    %v4685 = vsel %vm3413, %v4680, %v4684
    %v4686 = vrot.slane %v3014, 6
    %v4687 = vsel %vm3413, %v4682, %v4686
    %v4688 = vrot.slane %v3015, 6
    %v4689 = vsel %vm3413, %v4684, %v4688
    %v4690 = vrot.slane %v3016, 6
    %v4691 = vsel %vm3413, %v4686, %v4690
    %v4692 = vrot.slane %v3017, 6
    %v4693 = vsel %vm3413, %v4688, %v4692
    %v4694 = vrot.slane %v3018, 6
    %v4695 = vsel %vm3413, %v4690, %v4694
    %v4696 = vrot.slane %v3019, 6
    %v4697 = vsel %vm3413, %v4692, %v4696
    %v4698 = vrot.slane %v3020, 6
    %v4699 = vsel %vm3413, %v4694, %v4698
    %v4700 = vrot.slane %v3021, 6
    %v4701 = vsel %vm3413, %v4696, %v4700
    %v4702 = vrot.slane %v3022, 6
    %v4703 = vsel %vm3413, %v4698, %v4702
    %v4704 = vrot.slane %v3023, 6
    %v4705 = vsel %vm3413, %v4700, %v4704
    %v4706 = vrot.slane %v3024, 6
    %v4707 = vsel %vm3413, %v4702, %v4706
    %v4708 = vrot.slane %v3025, 6
    %v4709 = vsel %vm3413, %v4704, %v4708
    %v4710 = vrot.slane %v3026, 6
    %v4711 = vsel %vm3413, %v4706, %v4710
    %v4712 = vrot.slane %v3027, 6
    %v4713 = vsel %vm3413, %v4708, %v4712
    %v4714 = vrot.slane %v3028, 6
    %v4715 = vsel %vm3413, %v4710, %v4714
    %v4716 = vrot.slane %v3029, 6
    %v4717 = vsel %vm3413, %v4712, %v4716
    %v4718 = vrot.slane %v3030, 6
    %v4719 = vsel %vm3413, %v4714, %v4718
    %v4720 = vrot.slane %v3031, 6
    %v4721 = vsel %vm3413, %v4716, %v4720
    %v4722 = vrot.slane %v3032, 6
    %v4723 = vsel %vm3413, %v4718, %v4722
    %v4724 = vrot.slane %v3033, 6
    %v4725 = vsel %vm3413, %v4720, %v4724
    %v4726 = vrot.slane %v3034, 6
    %v4727 = vsel %vm3413, %v4722, %v4726
    %v4763 = vsel %vm3413, %v4724, %v4602
    %v4764 = vsel %vm3413, %v4726, %v4605
    %s4765 = scalar_lea.vmem %s3, 1008
    %v4766 = vld [vmem:[%s4765] sm:$0xff]
    %v4767 = vld [vmem:[%s4765 + $0x8] sm:$0xff]
    %v4768 = vld [vmem:[%s4765 + $0x10] sm:$0xff]
    %v4769 = vld [vmem:[%s4765 + $0x18] sm:$0xff]
    %v4770 = vld [vmem:[%s4765 + $0x20] sm:$0xff]
    %v4771 = vld [vmem:[%s4765 + $0x28] sm:$0xff]
    %v4772 = vld [vmem:[%s4765 + $0x30] sm:$0xff]
    %v4773 = vld [vmem:[%s4765 + $0x38] sm:$0xff]
    %v4774 = vld [vmem:[%s4765 + $0x40] sm:$0xff]
    %v4775 = vld [vmem:[%s4765 + $0x48] sm:$0xff]
    %v4776 = vld [vmem:[%s4765 + $0x50] sm:$0xff]
    %v4777 = vld [vmem:[%s4765 + $0x58] sm:$0xff]
    %v4778 = vld [vmem:[%s4765 + $0x60] sm:$0xff]
    %v4779 = vld [vmem:[%s4765 + $0x68] sm:$0xff]
    %v4780 = vld [vmem:[%s4765 + $0x70] sm:$0xff]
    %v4781 = vld [vmem:[%s4765 + $0x78] sm:$0xff]
    %v4782 = vld [vmem:[%s4765 + $0x80] sm:$0xff]
    %v4783 = vld [vmem:[%s4765 + $0x88] sm:$0xff]
    %v4784 = vld [vmem:[%s4765 + $0x90] sm:$0xff]
    %v4785 = vld [vmem:[%s4765 + $0x98] sm:$0xff]
    %v4786 = vld [vmem:[%s4765 + $0xa0] sm:$0xff]
    %v4787 = vld [vmem:[%s4765 + $0xa8] sm:$0xff]
    %v4788 = vld [vmem:[%s4765 + $0xb0] sm:$0xff]
    %v4789 = vld [vmem:[%s4765 + $0xb8] sm:$0xff]
    %v4790 = vld [vmem:[%s4765 + $0xc0] sm:$0xff]
    %v4791 = vld [vmem:[%s4765 + $0xc8] sm:$0xff]
    %v4792 = vld [vmem:[%s4765 + $0xd0] sm:$0xff]
    %v4793 = vld [vmem:[%s4765 + $0xd8] sm:$0xff]
    %v4794 = vld [vmem:[%s4765 + $0xe0] sm:$0xff]
    %v4795 = vld [vmem:[%s4765 + $0xe8] sm:$0xff]
    %v4796 = vld [vmem:[%s4765 + $0xf0] sm:$0xff]
    %v4797 = vld [vmem:[%s4765 + $0xf8] sm:$0xff]
    %v4798 = vld [vmem:[%s4765 + $0x100] sm:$0xff]
    %v4799 = vld [vmem:[%s4765 + $0x108] sm:$0xff]
    %v4800 = vld [vmem:[%s4765 + $0x110] sm:$0xff]
    %v4801 = vld [vmem:[%s4765 + $0x118] sm:$0xff]
    %v4802 = vld [vmem:[%s4765 + $0x120] sm:$0xff]
    %v4803 = vld [vmem:[%s4765 + $0x128] sm:$0xff]
    %v4804 = vld [vmem:[%s4765 + $0x130] sm:$0xff]
    %v4805 = vld [vmem:[%s4765 + $0x138] sm:$0xff]
    %v4806 = vld [vmem:[%s4765 + $0x140] sm:$0x3]
    %v4807 = vld [vmem:[%s4765 + $0x148] sm:$0x3]
    %v4808 = vsel %vm3347, %v4607, 0
    %v4810 = vsel %vm3347, %v4611, 0
    %v4812 = vsel %vm3347, %v4615, 0
    %v4814 = vsel %vm3347, %v4619, 0
    %v4816 = vsel %vm3347, %v4623, 0
    %v4818 = vsel %vm3347, %v4627, 0
    %v4820 = vsel %vm3347, %v4631, 0
    %v4822 = vsel %vm3347, %v4635, 0
    %v4824 = vsel %vm3347, %v4639, 0
    %v4826 = vsel %vm3347, %v4643, 0
    %v4828 = vsel %vm3347, %v4647, 0
    %v4830 = vsel %vm3347, %v4651, 0
    %v4832 = vsel %vm3347, %v4655, 0
    %v4834 = vsel %vm3347, %v4659, 0
    %v4836 = vsel %vm3347, %v4663, 0
    %v4838 = vsel %vm3347, %v4667, 0
    %v4840 = vsel %vm3347, %v4671, 0
    %v4842 = vsel %vm3347, %v4675, 0
    %v4844 = vsel %vm3347, %v4679, 0
    %v4846 = vsel %vm3347, %v4683, 0
    %v4848 = vsel %vm3347, %v4687, 0
    %v4850 = vsel %vm3347, %v4691, 0
    %v4852 = vsel %vm3347, %v4695, 0
    %v4854 = vsel %vm3347, %v4699, 0
    %v4856 = vsel %vm3347, %v4703, 0
    %v4858 = vsel %vm3347, %v4707, 0
    %v4860 = vsel %vm3347, %v4711, 0
    %v4862 = vsel %vm3347, %v4715, 0
    %v4864 = vsel %vm3347, %v4719, 0
    %v4866 = vsel %vm3347, %v4723, 0
    %v4868 = vsel %vm3347, %v4727, 0
    %v4871 = vsel %vm3347, %v4764, 0
    %v4874 = vsel %vm3413, %v4806, 0
    %v4877 = vsel %vm3413, %v4807, 0
    %4879 = vmatprep.subr.mxu0 %v4797
    %4880 = vmatpush1.msra.mxu0 %v4796
    %4881 = vmatprep.subr.mxu0 %v4795
    %4882 = vmatpush1.msra.mxu0 %v4794
    %4883 = vmatprep.subr.mxu0 %v4793
    %4884 = vmatpush1.msra.mxu0 %v4792
    %4885 = vmatprep.subr.mxu0 %v4791
    %4886 = vmatpush1.msra.mxu0 %v4790
    %4887 = vmatprep.subr.mxu0 %v4789
    %4888 = vmatpush1.msra.mxu0 %v4788
    %4889 = vmatprep.subr.mxu0 %v4787
    %4890 = vmatpush1.msra.mxu0 %v4786
    %4891 = vmatprep.subr.mxu0 %v4785
    %4892 = vmatpush1.msra.mxu0 %v4784
    %4893 = vmatprep.subr.mxu0 %v4783
    %4894 = vmatpush1.msra.mxu0 %v4782
    %4895 = vmatprep.subr.mxu0 %v4781
    %4896 = vmatpush1.msra.mxu0 %v4780
    %4897 = vmatprep.subr.mxu0 %v4779
    %4898 = vmatpush1.msra.mxu0 %v4778
    %4899 = vmatprep.subr.mxu0 %v4777
    %4900 = vmatpush1.msra.mxu0 %v4776
    %4901 = vmatprep.subr.mxu0 %v4775
    %4902 = vmatpush1.msra.mxu0 %v4774
    %4903 = vmatprep.subr.mxu0 %v4773
    %4904 = vmatpush1.msra.mxu0 %v4772
    %4905 = vmatprep.subr.mxu0 %v4771
    %4906 = vmatpush1.msra.mxu0 %v4770
    %4907 = vmatprep.subr.mxu0 %v4769
    %4908 = vmatpush1.msra.mxu0 %v4768
    %4909 = vmatprep.subr.mxu0 %v4767
    %4910 = vmatpush1.msra.mxu0 %v4766
    %4911 = vmatprep.subr.mxu0 0.0
    %4912 = vmatpush2.msra.mxu0 0.0
    %4913 = vmatprep.subr.mxu0 0.0
    %4914 = vmatpush2.msra.mxu0 0.0
    %4915 = vmatprep.subr.mxu0 0.0
    %4916 = vmatpush2.msra.mxu0 0.0
    %4917 = vmatprep.subr.mxu0 0.0
    %4918 = vmatpush2.msra.mxu0 0.0
    %4919 = vmatprep.subr.mxu0 0.0
    %4920 = vmatpush2.msra.mxu0 0.0
    %4921 = vmatprep.subr.mxu0 0.0
    %4922 = vmatpush2.msra.mxu0 0.0
    %4923 = vmatprep.subr.mxu0 0.0
    %4924 = vmatpush2.msra.mxu0 0.0
    %4925 = vmatprep.subr.mxu0 0.0
    %4926 = vmatpush2.msra.mxu0 0.0
    %4927 = vmatprep.subr.mxu0 0.0
    %4928 = vmatpush2.msra.mxu0 0.0
    %4929 = vmatprep.subr.mxu0 0.0
    %4930 = vmatpush2.msra.mxu0 0.0
    %4931 = vmatprep.subr.mxu0 0.0
    %4932 = vmatpush2.msra.mxu0 0.0
    %4933 = vmatprep.subr.mxu0 %v4877
    %4934 = vmatpush2.msra.mxu0 %v4874
    %4935 = vmatprep.subr.mxu0 %v4805
    %4936 = vmatpush2.msra.mxu0 %v4804
    %4937 = vmatprep.subr.mxu0 %v4803
    %4938 = vmatpush2.msra.mxu0 %v4802
    %4939 = vmatprep.subr.mxu0 %v4801
    %4940 = vmatpush2.msra.mxu0 %v4800
    %4941 = vmatprep.subr.mxu0 %v4799
    %4942 = vmatpush2.msra.mxu0 %v4798
    %4943 = vmatprep.mubr.f32.mxu0 %v4808
    %4944 = vmatmul.mubr.f32.gmra.mxu0 %v4604
    %v4945 = vpop.f32.mrf.mxu0
    %v4946 = vadd.f32 0.0, %v4945
    %v4947 = vpop.f32.mrf.mxu0
    %v4948 = vadd.f32 0.0, %v4947
    %4949 = vmatprep.mubr.f32.mxu0 %v4810
    %4950 = vmatmul.mubr.f32.gmra.mxu0 %v4609
    %v4951 = vpop.f32.mrf.mxu0
    %v4952 = vadd.f32 0.0, %v4951
    %v4953 = vpop.f32.mrf.mxu0
    %v4954 = vadd.f32 0.0, %v4953
    %4955 = vmatprep.mubr.f32.mxu0 %v4812
    %4956 = vmatmul.mubr.f32.gmra.mxu0 %v4613
    %v4957 = vpop.f32.mrf.mxu0
    %v4958 = vadd.f32 0.0, %v4957
    %v4959 = vpop.f32.mrf.mxu0
    %v4960 = vadd.f32 0.0, %v4959
    %4961 = vmatprep.mubr.f32.mxu0 %v4814
    %4962 = vmatmul.mubr.f32.gmra.mxu0 %v4617
    %v4963 = vpop.f32.mrf.mxu0
    %v4964 = vadd.f32 0.0, %v4963
    %v4965 = vpop.f32.mrf.mxu0
    %v4966 = vadd.f32 0.0, %v4965
    %4967 = vmatprep.mubr.f32.mxu0 %v4816
    %4968 = vmatmul.mubr.f32.gmra.mxu0 %v4621
    %v4969 = vpop.f32.mrf.mxu0
    %v4970 = vadd.f32 0.0, %v4969
    %v4971 = vpop.f32.mrf.mxu0
    %v4972 = vadd.f32 0.0, %v4971
    %4973 = vmatprep.mubr.f32.mxu0 %v4818
    %4974 = vmatmul.mubr.f32.gmra.mxu0 %v4625
    %v4975 = vpop.f32.mrf.mxu0
    %v4976 = vadd.f32 0.0, %v4975
    %v4977 = vpop.f32.mrf.mxu0
    %v4978 = vadd.f32 0.0, %v4977
    %4979 = vmatprep.mubr.f32.mxu0 %v4820
    %4980 = vmatmul.mubr.f32.gmra.mxu0 %v4629
    %v4981 = vpop.f32.mrf.mxu0
    %v4982 = vadd.f32 0.0, %v4981
    %v4983 = vpop.f32.mrf.mxu0
    %v4984 = vadd.f32 0.0, %v4983
    %4985 = vmatprep.mubr.f32.mxu0 %v4822
    %4986 = vmatmul.mubr.f32.gmra.mxu0 %v4633
    %v4987 = vpop.f32.mrf.mxu0
    %v4988 = vadd.f32 0.0, %v4987
    %v4989 = vpop.f32.mrf.mxu0
    %v4990 = vadd.f32 0.0, %v4989
    %4991 = vmatprep.mubr.f32.mxu0 %v4824
    %4992 = vmatmul.mubr.f32.gmra.mxu0 %v4637
    %v4993 = vpop.f32.mrf.mxu0
    %v4994 = vadd.f32 0.0, %v4993
    %v4995 = vpop.f32.mrf.mxu0
    %v4996 = vadd.f32 0.0, %v4995
    %4997 = vmatprep.mubr.f32.mxu0 %v4826
    %4998 = vmatmul.mubr.f32.gmra.mxu0 %v4641
    %v4999 = vpop.f32.mrf.mxu0
    %v5000 = vadd.f32 0.0, %v4999
    %v5001 = vpop.f32.mrf.mxu0
    %v5002 = vadd.f32 0.0, %v5001
    %5003 = vmatprep.mubr.f32.mxu0 %v4828
    %5004 = vmatmul.mubr.f32.gmra.mxu0 %v4645
    %v5005 = vpop.f32.mrf.mxu0
    %v5006 = vadd.f32 0.0, %v5005
    %v5007 = vpop.f32.mrf.mxu0
    %v5008 = vadd.f32 0.0, %v5007
    %5009 = vmatprep.mubr.f32.mxu0 %v4830
    %5010 = vmatmul.mubr.f32.gmra.mxu0 %v4649
    %v5011 = vpop.f32.mrf.mxu0
    %v5012 = vadd.f32 0.0, %v5011
    %v5013 = vpop.f32.mrf.mxu0
    %v5014 = vadd.f32 0.0, %v5013
    %5015 = vmatprep.mubr.f32.mxu0 %v4832
    %5016 = vmatmul.mubr.f32.gmra.mxu0 %v4653
    %v5017 = vpop.f32.mrf.mxu0
    %v5018 = vadd.f32 0.0, %v5017
    %v5019 = vpop.f32.mrf.mxu0
    %v5020 = vadd.f32 0.0, %v5019
    %5021 = vmatprep.mubr.f32.mxu0 %v4834
    %5022 = vmatmul.mubr.f32.gmra.mxu0 %v4657
    %v5023 = vpop.f32.mrf.mxu0
    %v5024 = vadd.f32 0.0, %v5023
    %v5025 = vpop.f32.mrf.mxu0
    %v5026 = vadd.f32 0.0, %v5025
    %5027 = vmatprep.mubr.f32.mxu0 %v4836
    %5028 = vmatmul.mubr.f32.gmra.mxu0 %v4661
    %v5029 = vpop.f32.mrf.mxu0
    %v5030 = vadd.f32 0.0, %v5029
    %v5031 = vpop.f32.mrf.mxu0
    %v5032 = vadd.f32 0.0, %v5031
    %5033 = vmatprep.mubr.f32.mxu0 %v4838
    %5034 = vmatmul.mubr.f32.gmra.mxu0 %v4665
    %v5035 = vpop.f32.mrf.mxu0
    %v5036 = vadd.f32 0.0, %v5035
    %v5037 = vpop.f32.mrf.mxu0
    %v5038 = vadd.f32 0.0, %v5037
    %5039 = vmatprep.mubr.f32.mxu0 %v4840
    %5040 = vmatmul.mubr.f32.gmra.mxu0 %v4669
    %v5041 = vpop.f32.mrf.mxu0
    %v5042 = vadd.f32 0.0, %v5041
    %v5043 = vpop.f32.mrf.mxu0
    %v5044 = vadd.f32 0.0, %v5043
    %5045 = vmatprep.mubr.f32.mxu0 %v4842
    %5046 = vmatmul.mubr.f32.gmra.mxu0 %v4673
    %v5047 = vpop.f32.mrf.mxu0
    %v5048 = vadd.f32 0.0, %v5047
    %v5049 = vpop.f32.mrf.mxu0
    %v5050 = vadd.f32 0.0, %v5049
    %5051 = vmatprep.mubr.f32.mxu0 %v4844
    %5052 = vmatmul.mubr.f32.gmra.mxu0 %v4677
    %v5053 = vpop.f32.mrf.mxu0
    %v5054 = vadd.f32 0.0, %v5053
    %v5055 = vpop.f32.mrf.mxu0
    %v5056 = vadd.f32 0.0, %v5055
    %5057 = vmatprep.mubr.f32.mxu0 %v4846
    %5058 = vmatmul.mubr.f32.gmra.mxu0 %v4681
    %v5059 = vpop.f32.mrf.mxu0
    %v5060 = vadd.f32 0.0, %v5059
    %v5061 = vpop.f32.mrf.mxu0
    %v5062 = vadd.f32 0.0, %v5061
    %5063 = vmatprep.mubr.f32.mxu0 %v4848
    %5064 = vmatmul.mubr.f32.gmra.mxu0 %v4685
    %v5065 = vpop.f32.mrf.mxu0
    %v5066 = vadd.f32 0.0, %v5065
    %v5067 = vpop.f32.mrf.mxu0
    %v5068 = vadd.f32 0.0, %v5067
    %5069 = vmatprep.mubr.f32.mxu0 %v4850
    %5070 = vmatmul.mubr.f32.gmra.mxu0 %v4689
    %v5071 = vpop.f32.mrf.mxu0
    %v5072 = vadd.f32 0.0, %v5071
    %v5073 = vpop.f32.mrf.mxu0
    %v5074 = vadd.f32 0.0, %v5073
    %5075 = vmatprep.mubr.f32.mxu0 %v4852
    %5076 = vmatmul.mubr.f32.gmra.mxu0 %v4693
    %v5077 = vpop.f32.mrf.mxu0
    %v5078 = vadd.f32 0.0, %v5077
    %v5079 = vpop.f32.mrf.mxu0
    %v5080 = vadd.f32 0.0, %v5079
    %5081 = vmatprep.mubr.f32.mxu0 %v4854
    %5082 = vmatmul.mubr.f32.gmra.mxu0 %v4697
    %v5083 = vpop.f32.mrf.mxu0
    %v5084 = vadd.f32 0.0, %v5083
    %v5085 = vpop.f32.mrf.mxu0
    %v5086 = vadd.f32 0.0, %v5085
    %5087 = vmatprep.mubr.f32.mxu0 %v4856
    %5088 = vmatmul.mubr.f32.gmra.mxu0 %v4701
    %v5089 = vpop.f32.mrf.mxu0
    %v5090 = vadd.f32 0.0, %v5089
    %v5091 = vpop.f32.mrf.mxu0
    %v5092 = vadd.f32 0.0, %v5091
    %5093 = vmatprep.mubr.f32.mxu0 %v4858
    %5094 = vmatmul.mubr.f32.gmra.mxu0 %v4705
    %v5095 = vpop.f32.mrf.mxu0
    %v5096 = vadd.f32 0.0, %v5095
    %v5097 = vpop.f32.mrf.mxu0
    %v5098 = vadd.f32 0.0, %v5097
    %5099 = vmatprep.mubr.f32.mxu0 %v4860
    %5100 = vmatmul.mubr.f32.gmra.mxu0 %v4709
    %v5101 = vpop.f32.mrf.mxu0
    %v5102 = vadd.f32 0.0, %v5101
    %v5103 = vpop.f32.mrf.mxu0
    %v5104 = vadd.f32 0.0, %v5103
    %5105 = vmatprep.mubr.f32.mxu0 %v4862
    %5106 = vmatmul.mubr.f32.gmra.mxu0 %v4713
    %v5107 = vpop.f32.mrf.mxu0
    %v5108 = vadd.f32 0.0, %v5107
    %v5109 = vpop.f32.mrf.mxu0
    %v5110 = vadd.f32 0.0, %v5109
    %5111 = vmatprep.mubr.f32.mxu0 %v4864
    %5112 = vmatmul.mubr.f32.gmra.mxu0 %v4717
    %v5113 = vpop.f32.mrf.mxu0
    %v5114 = vadd.f32 0.0, %v5113
    %v5115 = vpop.f32.mrf.mxu0
    %v5116 = vadd.f32 0.0, %v5115
    %5117 = vmatprep.mubr.f32.mxu0 %v4866
    %5118 = vmatmul.mubr.f32.gmra.mxu0 %v4721
    %v5119 = vpop.f32.mrf.mxu0
    %v5120 = vadd.f32 0.0, %v5119
    %v5121 = vpop.f32.mrf.mxu0
    %v5122 = vadd.f32 0.0, %v5121
    %5123 = vmatprep.mubr.f32.mxu0 %v4868
    %5124 = vmatmul.mubr.f32.gmra.mxu0 %v4725
    %v5125 = vpop.f32.mrf.mxu0
    %v5126 = vadd.f32 0.0, %v5125
    %v5127 = vpop.f32.mrf.mxu0
    %v5128 = vadd.f32 0.0, %v5127
    %5129 = vmatprep.mubr.f32.mxu0 %v4871
    %5130 = vmatmul.mubr.f32.gmra.mxu0 %v4763
    %v5131 = vpop.f32.mrf.mxu0
    %v5132 = vadd.f32 0.0, %v5131
    %v5133 = vpop.f32.mrf.mxu0
    %v5134 = vadd.f32 0.0, %v5133
    %5135 = vdwg.mxu0
    %v5136 = vadd.f32 %v4538, %v4946
    %v5137 = vadd.f32 %v4539, %v4948
    %v5138 = vadd.f32 %v4540, %v4952
    %v5139 = vadd.f32 %v4541, %v4954
    %v5140 = vadd.f32 %v4542, %v4958
    %v5141 = vadd.f32 %v4543, %v4960
    %v5142 = vadd.f32 %v4544, %v4964
    %v5143 = vadd.f32 %v4545, %v4966
    %v5144 = vadd.f32 %v4546, %v4970
    %v5145 = vadd.f32 %v4547, %v4972
    %v5146 = vadd.f32 %v4548, %v4976
    %v5147 = vadd.f32 %v4549, %v4978
    %v5148 = vadd.f32 %v4550, %v4982
    %v5149 = vadd.f32 %v4551, %v4984
    %v5150 = vadd.f32 %v4552, %v4988
    %v5151 = vadd.f32 %v4553, %v4990
    %v5152 = vadd.f32 %v4554, %v4994
    %v5153 = vadd.f32 %v4555, %v4996
    %v5154 = vadd.f32 %v4556, %v5000
    %v5155 = vadd.f32 %v4557, %v5002
    %v5156 = vadd.f32 %v4558, %v5006
    %v5157 = vadd.f32 %v4559, %v5008
    %v5158 = vadd.f32 %v4560, %v5012
    %v5159 = vadd.f32 %v4561, %v5014
    %v5160 = vadd.f32 %v4562, %v5018
    %v5161 = vadd.f32 %v4563, %v5020
    %v5162 = vadd.f32 %v4564, %v5024
    %v5163 = vadd.f32 %v4565, %v5026
    %v5164 = vadd.f32 %v4566, %v5030
    %v5165 = vadd.f32 %v4567, %v5032
    %v5166 = vadd.f32 %v4568, %v5036
    %v5167 = vadd.f32 %v4569, %v5038
    %v5168 = vadd.f32 %v4570, %v5042
    %v5169 = vadd.f32 %v4571, %v5044
    %v5170 = vadd.f32 %v4572, %v5048
    %v5171 = vadd.f32 %v4573, %v5050
    %v5172 = vadd.f32 %v4574, %v5054
    %v5173 = vadd.f32 %v4575, %v5056
    %v5174 = vadd.f32 %v4576, %v5060
    %v5175 = vadd.f32 %v4577, %v5062
    %v5176 = vadd.f32 %v4578, %v5066
    %v5177 = vadd.f32 %v4579, %v5068
    %v5178 = vadd.f32 %v4580, %v5072
    %v5179 = vadd.f32 %v4581, %v5074
    %v5180 = vadd.f32 %v4582, %v5078
    %v5181 = vadd.f32 %v4583, %v5080
    %v5182 = vadd.f32 %v4584, %v5084
    %v5183 = vadd.f32 %v4585, %v5086
    %v5184 = vadd.f32 %v4586, %v5090
    %v5185 = vadd.f32 %v4587, %v5092
    %v5186 = vadd.f32 %v4588, %v5096
    %v5187 = vadd.f32 %v4589, %v5098
    %v5188 = vadd.f32 %v4590, %v5102
    %v5189 = vadd.f32 %v4591, %v5104
    %v5190 = vadd.f32 %v4592, %v5108
    %v5191 = vadd.f32 %v4593, %v5110
    %v5192 = vadd.f32 %v4594, %v5114
    %v5193 = vadd.f32 %v4595, %v5116
    %v5194 = vadd.f32 %v4596, %v5120
    %v5195 = vadd.f32 %v4597, %v5122
    %v5196 = vadd.f32 %v4598, %v5126
    %v5197 = vadd.f32 %v4599, %v5128
    %v5198 = vadd.f32 %v4600, %v5132
    %v5199 = vadd.f32 %v4601, %v5134
    %s5200 = scalar_lea.vmem %s3, 1344
    %v5201 = vld [vmem:[%s5200] sm:$0xff]
    %v5202 = vld [vmem:[%s5200 + $0x8] sm:$0xff]
    %v5203 = vld [vmem:[%s5200 + $0x10] sm:$0xff]
    %v5204 = vld [vmem:[%s5200 + $0x18] sm:$0xff]
    %v5205 = vld [vmem:[%s5200 + $0x20] sm:$0xff]
    %v5206 = vld [vmem:[%s5200 + $0x28] sm:$0xff]
    %v5207 = vld [vmem:[%s5200 + $0x30] sm:$0xff]
    %v5208 = vld [vmem:[%s5200 + $0x38] sm:$0xff]
    %v5209 = vld [vmem:[%s5200 + $0x40] sm:$0xff]
    %v5210 = vld [vmem:[%s5200 + $0x48] sm:$0xff]
    %v5211 = vld [vmem:[%s5200 + $0x50] sm:$0xff]
    %v5212 = vld [vmem:[%s5200 + $0x58] sm:$0xff]
    %v5213 = vld [vmem:[%s5200 + $0x60] sm:$0xff]
    %v5214 = vld [vmem:[%s5200 + $0x68] sm:$0xff]
    %v5215 = vld [vmem:[%s5200 + $0x70] sm:$0xff]
    %v5216 = vld [vmem:[%s5200 + $0x78] sm:$0xff]
    %v5217 = vld [vmem:[%s5200 + $0x80] sm:$0xff]
    %v5218 = vld [vmem:[%s5200 + $0x88] sm:$0xff]
    %v5219 = vld [vmem:[%s5200 + $0x90] sm:$0xff]
    %v5220 = vld [vmem:[%s5200 + $0x98] sm:$0xff]
    %v5221 = vld [vmem:[%s5200 + $0xa0] sm:$0xff]
    %v5222 = vld [vmem:[%s5200 + $0xa8] sm:$0xff]
    %v5223 = vld [vmem:[%s5200 + $0xb0] sm:$0xff]
    %v5224 = vld [vmem:[%s5200 + $0xb8] sm:$0xff]
    %v5225 = vld [vmem:[%s5200 + $0xc0] sm:$0xff]
    %v5226 = vld [vmem:[%s5200 + $0xc8] sm:$0xff]
    %v5227 = vld [vmem:[%s5200 + $0xd0] sm:$0xff]
    %v5228 = vld [vmem:[%s5200 + $0xd8] sm:$0xff]
    %v5229 = vld [vmem:[%s5200 + $0xe0] sm:$0xff]
    %v5230 = vld [vmem:[%s5200 + $0xe8] sm:$0xff]
    %v5231 = vld [vmem:[%s5200 + $0xf0] sm:$0xff]
    %v5232 = vld [vmem:[%s5200 + $0xf8] sm:$0xff]
    %v5233 = vld [vmem:[%s5200 + $0x100] sm:$0xff]
    %v5234 = vld [vmem:[%s5200 + $0x108] sm:$0xff]
    %v5235 = vld [vmem:[%s5200 + $0x110] sm:$0xff]
    %v5236 = vld [vmem:[%s5200 + $0x118] sm:$0xff]
    %v5237 = vld [vmem:[%s5200 + $0x120] sm:$0xff]
    %v5238 = vld [vmem:[%s5200 + $0x128] sm:$0xff]
    %v5239 = vld [vmem:[%s5200 + $0x130] sm:$0xff]
    %v5240 = vld [vmem:[%s5200 + $0x138] sm:$0xff]
    %v5241 = vld [vmem:[%s5200 + $0x140] sm:$0x3]
    %v5242 = vld [vmem:[%s5200 + $0x148] sm:$0x3]
    %v5244 = vsel %vm3413, %v5241, 0
    %v5247 = vsel %vm3413, %v5242, 0
    %5249 = vmatprep.subr.mxu0 %v5232
    %5250 = vmatpush1.msra.mxu0 %v5231
    %5251 = vmatprep.subr.mxu0 %v5230
    %5252 = vmatpush1.msra.mxu0 %v5229
    %5253 = vmatprep.subr.mxu0 %v5228
    %5254 = vmatpush1.msra.mxu0 %v5227
    %5255 = vmatprep.subr.mxu0 %v5226
    %5256 = vmatpush1.msra.mxu0 %v5225
    %5257 = vmatprep.subr.mxu0 %v5224
    %5258 = vmatpush1.msra.mxu0 %v5223
    %5259 = vmatprep.subr.mxu0 %v5222
    %5260 = vmatpush1.msra.mxu0 %v5221
    %5261 = vmatprep.subr.mxu0 %v5220
    %5262 = vmatpush1.msra.mxu0 %v5219
    %5263 = vmatprep.subr.mxu0 %v5218
    %5264 = vmatpush1.msra.mxu0 %v5217
    %5265 = vmatprep.subr.mxu0 %v5216
    %5266 = vmatpush1.msra.mxu0 %v5215
    %5267 = vmatprep.subr.mxu0 %v5214
    %5268 = vmatpush1.msra.mxu0 %v5213
    %5269 = vmatprep.subr.mxu0 %v5212
    %5270 = vmatpush1.msra.mxu0 %v5211
    %5271 = vmatprep.subr.mxu0 %v5210
    %5272 = vmatpush1.msra.mxu0 %v5209
    %5273 = vmatprep.subr.mxu0 %v5208
    %5274 = vmatpush1.msra.mxu0 %v5207
    %5275 = vmatprep.subr.mxu0 %v5206
    %5276 = vmatpush1.msra.mxu0 %v5205
    %5277 = vmatprep.subr.mxu0 %v5204
    %5278 = vmatpush1.msra.mxu0 %v5203
    %5279 = vmatprep.subr.mxu0 %v5202
    %5280 = vmatpush1.msra.mxu0 %v5201
    %5281 = vmatprep.subr.mxu0 0.0
    %5282 = vmatpush2.msra.mxu0 0.0
    %5283 = vmatprep.subr.mxu0 0.0
    %5284 = vmatpush2.msra.mxu0 0.0
    %5285 = vmatprep.subr.mxu0 0.0
    %5286 = vmatpush2.msra.mxu0 0.0
    %5287 = vmatprep.subr.mxu0 0.0
    %5288 = vmatpush2.msra.mxu0 0.0
    %5289 = vmatprep.subr.mxu0 0.0
    %5290 = vmatpush2.msra.mxu0 0.0
    %5291 = vmatprep.subr.mxu0 0.0
    %5292 = vmatpush2.msra.mxu0 0.0
    %5293 = vmatprep.subr.mxu0 0.0
    %5294 = vmatpush2.msra.mxu0 0.0
    %5295 = vmatprep.subr.mxu0 0.0
    %5296 = vmatpush2.msra.mxu0 0.0
    %5297 = vmatprep.subr.mxu0 0.0
    %5298 = vmatpush2.msra.mxu0 0.0
    %5299 = vmatprep.subr.mxu0 0.0
    %5300 = vmatpush2.msra.mxu0 0.0
    %5301 = vmatprep.subr.mxu0 0.0
    %5302 = vmatpush2.msra.mxu0 0.0
    %5303 = vmatprep.subr.mxu0 %v5247
    %5304 = vmatpush2.msra.mxu0 %v5244
    %5305 = vmatprep.subr.mxu0 %v5240
    %5306 = vmatpush2.msra.mxu0 %v5239
    %5307 = vmatprep.subr.mxu0 %v5238
    %5308 = vmatpush2.msra.mxu0 %v5237
    %5309 = vmatprep.subr.mxu0 %v5236
    %5310 = vmatpush2.msra.mxu0 %v5235
    %5311 = vmatprep.subr.mxu0 %v5234
    %5312 = vmatpush2.msra.mxu0 %v5233
    %5313 = vmatprep.mubr.f32.mxu0 %v3679
    %5314 = vmatmul.mubr.f32.gmra.mxu0 %v2973
    %v5315 = vpop.f32.mrf.mxu0
    %v5316 = vadd.f32 0.0, %v5315
    %v5317 = vpop.f32.mrf.mxu0
    %v5318 = vadd.f32 0.0, %v5317
    %5319 = vmatprep.mubr.f32.mxu0 %v3681
    %5320 = vmatmul.mubr.f32.gmra.mxu0 %v2975
    %v5321 = vpop.f32.mrf.mxu0
    %v5322 = vadd.f32 0.0, %v5321
    %v5323 = vpop.f32.mrf.mxu0
    %v5324 = vadd.f32 0.0, %v5323
    %5325 = vmatprep.mubr.f32.mxu0 %v3683
    %5326 = vmatmul.mubr.f32.gmra.mxu0 %v2977
    %v5327 = vpop.f32.mrf.mxu0
    %v5328 = vadd.f32 0.0, %v5327
    %v5329 = vpop.f32.mrf.mxu0
    %v5330 = vadd.f32 0.0, %v5329
    %5331 = vmatprep.mubr.f32.mxu0 %v3685
    %5332 = vmatmul.mubr.f32.gmra.mxu0 %v2979
    %v5333 = vpop.f32.mrf.mxu0
    %v5334 = vadd.f32 0.0, %v5333
    %v5335 = vpop.f32.mrf.mxu0
    %v5336 = vadd.f32 0.0, %v5335
    %5337 = vmatprep.mubr.f32.mxu0 %v3687
    %5338 = vmatmul.mubr.f32.gmra.mxu0 %v2981
    %v5339 = vpop.f32.mrf.mxu0
    %v5340 = vadd.f32 0.0, %v5339
    %v5341 = vpop.f32.mrf.mxu0
    %v5342 = vadd.f32 0.0, %v5341
    %5343 = vmatprep.mubr.f32.mxu0 %v3689
    %5344 = vmatmul.mubr.f32.gmra.mxu0 %v2983
    %v5345 = vpop.f32.mrf.mxu0
    %v5346 = vadd.f32 0.0, %v5345
    %v5347 = vpop.f32.mrf.mxu0
    %v5348 = vadd.f32 0.0, %v5347
    %5349 = vmatprep.mubr.f32.mxu0 %v3691
    %5350 = vmatmul.mubr.f32.gmra.mxu0 %v2985
    %v5351 = vpop.f32.mrf.mxu0
    %v5352 = vadd.f32 0.0, %v5351
    %v5353 = vpop.f32.mrf.mxu0
    %v5354 = vadd.f32 0.0, %v5353
    %5355 = vmatprep.mubr.f32.mxu0 %v3693
    %5356 = vmatmul.mubr.f32.gmra.mxu0 %v2987
    %v5357 = vpop.f32.mrf.mxu0
    %v5358 = vadd.f32 0.0, %v5357
    %v5359 = vpop.f32.mrf.mxu0
    %v5360 = vadd.f32 0.0, %v5359
    %5361 = vmatprep.mubr.f32.mxu0 %v3695
    %5362 = vmatmul.mubr.f32.gmra.mxu0 %v2989
    %v5363 = vpop.f32.mrf.mxu0
    %v5364 = vadd.f32 0.0, %v5363
    %v5365 = vpop.f32.mrf.mxu0
    %v5366 = vadd.f32 0.0, %v5365
    %5367 = vmatprep.mubr.f32.mxu0 %v3697
    %5368 = vmatmul.mubr.f32.gmra.mxu0 %v2991
    %v5369 = vpop.f32.mrf.mxu0
    %v5370 = vadd.f32 0.0, %v5369
    %v5371 = vpop.f32.mrf.mxu0
    %v5372 = vadd.f32 0.0, %v5371
    %5373 = vmatprep.mubr.f32.mxu0 %v3699
    %5374 = vmatmul.mubr.f32.gmra.mxu0 %v2993
    %v5375 = vpop.f32.mrf.mxu0
    %v5376 = vadd.f32 0.0, %v5375
    %v5377 = vpop.f32.mrf.mxu0
    %v5378 = vadd.f32 0.0, %v5377
    %5379 = vmatprep.mubr.f32.mxu0 %v3701
    %5380 = vmatmul.mubr.f32.gmra.mxu0 %v2995
    %v5381 = vpop.f32.mrf.mxu0
    %v5382 = vadd.f32 0.0, %v5381
    %v5383 = vpop.f32.mrf.mxu0
    %v5384 = vadd.f32 0.0, %v5383
    %5385 = vmatprep.mubr.f32.mxu0 %v3703
    %5386 = vmatmul.mubr.f32.gmra.mxu0 %v2997
    %v5387 = vpop.f32.mrf.mxu0
    %v5388 = vadd.f32 0.0, %v5387
    %v5389 = vpop.f32.mrf.mxu0
    %v5390 = vadd.f32 0.0, %v5389
    %5391 = vmatprep.mubr.f32.mxu0 %v3705
    %5392 = vmatmul.mubr.f32.gmra.mxu0 %v2999
    %v5393 = vpop.f32.mrf.mxu0
    %v5394 = vadd.f32 0.0, %v5393
    %v5395 = vpop.f32.mrf.mxu0
    %v5396 = vadd.f32 0.0, %v5395
    %5397 = vmatprep.mubr.f32.mxu0 %v3707
    %5398 = vmatmul.mubr.f32.gmra.mxu0 %v3001
    %v5399 = vpop.f32.mrf.mxu0
    %v5400 = vadd.f32 0.0, %v5399
    %v5401 = vpop.f32.mrf.mxu0
    %v5402 = vadd.f32 0.0, %v5401
    %5403 = vmatprep.mubr.f32.mxu0 %v3709
    %5404 = vmatmul.mubr.f32.gmra.mxu0 %v3003
    %v5405 = vpop.f32.mrf.mxu0
    %v5406 = vadd.f32 0.0, %v5405
    %v5407 = vpop.f32.mrf.mxu0
    %v5408 = vadd.f32 0.0, %v5407
    %5409 = vmatprep.mubr.f32.mxu0 %v3711
    %5410 = vmatmul.mubr.f32.gmra.mxu0 %v3005
    %v5411 = vpop.f32.mrf.mxu0
    %v5412 = vadd.f32 0.0, %v5411
    %v5413 = vpop.f32.mrf.mxu0
    %v5414 = vadd.f32 0.0, %v5413
    %5415 = vmatprep.mubr.f32.mxu0 %v3713
    %5416 = vmatmul.mubr.f32.gmra.mxu0 %v3007
    %v5417 = vpop.f32.mrf.mxu0
    %v5418 = vadd.f32 0.0, %v5417
    %v5419 = vpop.f32.mrf.mxu0
    %v5420 = vadd.f32 0.0, %v5419
    %5421 = vmatprep.mubr.f32.mxu0 %v3715
    %5422 = vmatmul.mubr.f32.gmra.mxu0 %v3009
    %v5423 = vpop.f32.mrf.mxu0
    %v5424 = vadd.f32 0.0, %v5423
    %v5425 = vpop.f32.mrf.mxu0
    %v5426 = vadd.f32 0.0, %v5425
    %5427 = vmatprep.mubr.f32.mxu0 %v3717
    %5428 = vmatmul.mubr.f32.gmra.mxu0 %v3011
    %v5429 = vpop.f32.mrf.mxu0
    %v5430 = vadd.f32 0.0, %v5429
    %v5431 = vpop.f32.mrf.mxu0
    %v5432 = vadd.f32 0.0, %v5431
    %5433 = vmatprep.mubr.f32.mxu0 %v3719
    %5434 = vmatmul.mubr.f32.gmra.mxu0 %v3013
    %v5435 = vpop.f32.mrf.mxu0
    %v5436 = vadd.f32 0.0, %v5435
    %v5437 = vpop.f32.mrf.mxu0
    %v5438 = vadd.f32 0.0, %v5437
    %5439 = vmatprep.mubr.f32.mxu0 %v3721
    %5440 = vmatmul.mubr.f32.gmra.mxu0 %v3015
    %v5441 = vpop.f32.mrf.mxu0
    %v5442 = vadd.f32 0.0, %v5441
    %v5443 = vpop.f32.mrf.mxu0
    %v5444 = vadd.f32 0.0, %v5443
    %5445 = vmatprep.mubr.f32.mxu0 %v3723
    %5446 = vmatmul.mubr.f32.gmra.mxu0 %v3017
    %v5447 = vpop.f32.mrf.mxu0
    %v5448 = vadd.f32 0.0, %v5447
    %v5449 = vpop.f32.mrf.mxu0
    %v5450 = vadd.f32 0.0, %v5449
    %5451 = vmatprep.mubr.f32.mxu0 %v3725
    %5452 = vmatmul.mubr.f32.gmra.mxu0 %v3019
    %v5453 = vpop.f32.mrf.mxu0
    %v5454 = vadd.f32 0.0, %v5453
    %v5455 = vpop.f32.mrf.mxu0
    %v5456 = vadd.f32 0.0, %v5455
    %5457 = vmatprep.mubr.f32.mxu0 %v3727
    %5458 = vmatmul.mubr.f32.gmra.mxu0 %v3021
    %v5459 = vpop.f32.mrf.mxu0
    %v5460 = vadd.f32 0.0, %v5459
    %v5461 = vpop.f32.mrf.mxu0
    %v5462 = vadd.f32 0.0, %v5461
    %5463 = vmatprep.mubr.f32.mxu0 %v3729
    %5464 = vmatmul.mubr.f32.gmra.mxu0 %v3023
    %v5465 = vpop.f32.mrf.mxu0
    %v5466 = vadd.f32 0.0, %v5465
    %v5467 = vpop.f32.mrf.mxu0
    %v5468 = vadd.f32 0.0, %v5467
    %5469 = vmatprep.mubr.f32.mxu0 %v3731
    %5470 = vmatmul.mubr.f32.gmra.mxu0 %v3025
    %v5471 = vpop.f32.mrf.mxu0
    %v5472 = vadd.f32 0.0, %v5471
    %v5473 = vpop.f32.mrf.mxu0
    %v5474 = vadd.f32 0.0, %v5473
    %5475 = vmatprep.mubr.f32.mxu0 %v3733
    %5476 = vmatmul.mubr.f32.gmra.mxu0 %v3027
    %v5477 = vpop.f32.mrf.mxu0
    %v5478 = vadd.f32 0.0, %v5477
    %v5479 = vpop.f32.mrf.mxu0
    %v5480 = vadd.f32 0.0, %v5479
    %5481 = vmatprep.mubr.f32.mxu0 %v3735
    %5482 = vmatmul.mubr.f32.gmra.mxu0 %v3029
    %v5483 = vpop.f32.mrf.mxu0
    %v5484 = vadd.f32 0.0, %v5483
    %v5485 = vpop.f32.mrf.mxu0
    %v5486 = vadd.f32 0.0, %v5485
    %5487 = vmatprep.mubr.f32.mxu0 %v3737
    %5488 = vmatmul.mubr.f32.gmra.mxu0 %v3031
    %v5489 = vpop.f32.mrf.mxu0
    %v5490 = vadd.f32 0.0, %v5489
    %v5491 = vpop.f32.mrf.mxu0
    %v5492 = vadd.f32 0.0, %v5491
    %5493 = vmatprep.mubr.f32.mxu0 %v3739
    %5494 = vmatmul.mubr.f32.gmra.mxu0 %v3033
    %v5495 = vpop.f32.mrf.mxu0
    %v5496 = vadd.f32 0.0, %v5495
    %v5497 = vpop.f32.mrf.mxu0
    %v5498 = vadd.f32 0.0, %v5497
    %5499 = vmatprep.mubr.f32.mxu0 %v3677
    %5500 = vmatmul.mubr.f32.gmra.mxu0 %v2971
    %v5501 = vpop.f32.mrf.mxu0
    %v5502 = vadd.f32 0.0, %v5501
    %v5503 = vpop.f32.mrf.mxu0
    %v5504 = vadd.f32 0.0, %v5503
    %5505 = vdwg.mxu0
    %v5506 = vadd.f32 %v5136, %v5316
    %v5507 = vadd.f32 %v5137, %v5318
    %v5508 = vadd.f32 %v5138, %v5322
    %v5509 = vadd.f32 %v5139, %v5324
    %v5510 = vadd.f32 %v5140, %v5328
    %v5511 = vadd.f32 %v5141, %v5330
    %v5512 = vadd.f32 %v5142, %v5334
    %v5513 = vadd.f32 %v5143, %v5336
    %v5514 = vadd.f32 %v5144, %v5340
    %v5515 = vadd.f32 %v5145, %v5342
    %v5516 = vadd.f32 %v5146, %v5346
    %v5517 = vadd.f32 %v5147, %v5348
    %v5518 = vadd.f32 %v5148, %v5352
    %v5519 = vadd.f32 %v5149, %v5354
    %v5520 = vadd.f32 %v5150, %v5358
    %v5521 = vadd.f32 %v5151, %v5360
    %v5522 = vadd.f32 %v5152, %v5364
    %v5523 = vadd.f32 %v5153, %v5366
    %v5524 = vadd.f32 %v5154, %v5370
    %v5525 = vadd.f32 %v5155, %v5372
    %v5526 = vadd.f32 %v5156, %v5376
    %v5527 = vadd.f32 %v5157, %v5378
    %v5528 = vadd.f32 %v5158, %v5382
    %v5529 = vadd.f32 %v5159, %v5384
    %v5530 = vadd.f32 %v5160, %v5388
    %v5531 = vadd.f32 %v5161, %v5390
    %v5532 = vadd.f32 %v5162, %v5394
    %v5533 = vadd.f32 %v5163, %v5396
    %v5534 = vadd.f32 %v5164, %v5400
    %v5535 = vadd.f32 %v5165, %v5402
    %v5536 = vadd.f32 %v5166, %v5406
    %v5537 = vadd.f32 %v5167, %v5408
    %v5538 = vadd.f32 %v5168, %v5412
    %v5539 = vadd.f32 %v5169, %v5414
    %v5540 = vadd.f32 %v5170, %v5418
    %v5541 = vadd.f32 %v5171, %v5420
    %v5542 = vadd.f32 %v5172, %v5424
    %v5543 = vadd.f32 %v5173, %v5426
    %v5544 = vadd.f32 %v5174, %v5430
    %v5545 = vadd.f32 %v5175, %v5432
    %v5546 = vadd.f32 %v5176, %v5436
    %v5547 = vadd.f32 %v5177, %v5438
    %v5548 = vadd.f32 %v5178, %v5442
    %v5549 = vadd.f32 %v5179, %v5444
    %v5550 = vadd.f32 %v5180, %v5448
    %v5551 = vadd.f32 %v5181, %v5450
    %v5552 = vadd.f32 %v5182, %v5454
    %v5553 = vadd.f32 %v5183, %v5456
    %v5554 = vadd.f32 %v5184, %v5460
    %v5555 = vadd.f32 %v5185, %v5462
    %v5556 = vadd.f32 %v5186, %v5466
    %v5557 = vadd.f32 %v5187, %v5468
    %v5558 = vadd.f32 %v5188, %v5472
    %v5559 = vadd.f32 %v5189, %v5474
    %v5560 = vadd.f32 %v5190, %v5478
    %v5561 = vadd.f32 %v5191, %v5480
    %v5562 = vadd.f32 %v5192, %v5484
    %v5563 = vadd.f32 %v5193, %v5486
    %v5564 = vadd.f32 %v5194, %v5490
    %v5565 = vadd.f32 %v5195, %v5492
    %v5566 = vadd.f32 %v5196, %v5496
    %v5567 = vadd.f32 %v5197, %v5498
    %v5568 = vadd.f32 %v5198, %v5502
    %v5569 = vadd.f32 %v5199, %v5504
    %v5570 = vld [vmem:[%s4] sm:$0x3]
    %v5572 = vlaneseq
    %v5573 = vshrl.u32 %v5572, 7
    %v5574 = vsub.s32 0, %v5573
    %v5575 = vrot.slane %v5570, %v5574
    %v5576 = vlaneseq
    %v5577 = vshrl.u32 %v5576, 7
    %v5578 = vsub.s32 1, %v5577
    %v5579 = vrot.slane %v5570, %v5578
    %v5582 = vadd.f32 %v5506, %v5575
    %v5583 = vadd.f32 %v5507, %v5579
    %v5584 = vadd.f32 %v5508, %v5575
    %v5585 = vadd.f32 %v5509, %v5579
    %v5586 = vadd.f32 %v5510, %v5575
    %v5587 = vadd.f32 %v5511, %v5579
    %v5588 = vadd.f32 %v5512, %v5575
    %v5589 = vadd.f32 %v5513, %v5579
    %v5590 = vadd.f32 %v5514, %v5575
    %v5591 = vadd.f32 %v5515, %v5579
    %v5592 = vadd.f32 %v5516, %v5575
    %v5593 = vadd.f32 %v5517, %v5579
    %v5594 = vadd.f32 %v5518, %v5575
    %v5595 = vadd.f32 %v5519, %v5579
    %v5596 = vadd.f32 %v5520, %v5575
    %v5597 = vadd.f32 %v5521, %v5579
    %v5598 = vadd.f32 %v5522, %v5575
    %v5599 = vadd.f32 %v5523, %v5579
    %v5600 = vadd.f32 %v5524, %v5575
    %v5601 = vadd.f32 %v5525, %v5579
    %v5602 = vadd.f32 %v5526, %v5575
    %v5603 = vadd.f32 %v5527, %v5579
    %v5604 = vadd.f32 %v5528, %v5575
    %v5605 = vadd.f32 %v5529, %v5579
    %v5606 = vadd.f32 %v5530, %v5575
    %v5607 = vadd.f32 %v5531, %v5579
    %v5608 = vadd.f32 %v5532, %v5575
    %v5609 = vadd.f32 %v5533, %v5579
    %v5610 = vadd.f32 %v5534, %v5575
    %v5611 = vadd.f32 %v5535, %v5579
    %v5612 = vadd.f32 %v5536, %v5575
    %v5613 = vadd.f32 %v5537, %v5579
    %v5614 = vadd.f32 %v5538, %v5575
    %v5615 = vadd.f32 %v5539, %v5579
    %v5616 = vadd.f32 %v5540, %v5575
    %v5617 = vadd.f32 %v5541, %v5579
    %v5618 = vadd.f32 %v5542, %v5575
    %v5619 = vadd.f32 %v5543, %v5579
    %v5620 = vadd.f32 %v5544, %v5575
    %v5621 = vadd.f32 %v5545, %v5579
    %v5622 = vadd.f32 %v5546, %v5575
    %v5623 = vadd.f32 %v5547, %v5579
    %v5624 = vadd.f32 %v5548, %v5575
    %v5625 = vadd.f32 %v5549, %v5579
    %v5626 = vadd.f32 %v5550, %v5575
    %v5627 = vadd.f32 %v5551, %v5579
    %v5628 = vadd.f32 %v5552, %v5575
    %v5629 = vadd.f32 %v5553, %v5579
    %v5630 = vadd.f32 %v5554, %v5575
    %v5631 = vadd.f32 %v5555, %v5579
    %v5632 = vadd.f32 %v5556, %v5575
    %v5633 = vadd.f32 %v5557, %v5579
    %v5634 = vadd.f32 %v5558, %v5575
    %v5635 = vadd.f32 %v5559, %v5579
    %v5636 = vadd.f32 %v5560, %v5575
    %v5637 = vadd.f32 %v5561, %v5579
    %v5638 = vadd.f32 %v5562, %v5575
    %v5639 = vadd.f32 %v5563, %v5579
    %v5640 = vadd.f32 %v5564, %v5575
    %v5641 = vadd.f32 %v5565, %v5579
    %v5642 = vadd.f32 %v5566, %v5575
    %v5643 = vadd.f32 %v5567, %v5579
    %v5644 = vadd.f32 %v5568, %v5575
    %v5645 = vadd.f32 %v5569, %v5579
    %v5646 = vmax.f32 %v5582, 0.0
    %v5647 = vmax.f32 %v5583, 0.0
    %v5648 = vmax.f32 %v5584, 0.0
    %v5649 = vmax.f32 %v5585, 0.0
    %v5650 = vmax.f32 %v5586, 0.0
    %v5651 = vmax.f32 %v5587, 0.0
    %v5652 = vmax.f32 %v5588, 0.0
    %v5653 = vmax.f32 %v5589, 0.0
    %v5654 = vmax.f32 %v5590, 0.0
    %v5655 = vmax.f32 %v5591, 0.0
    %v5656 = vmax.f32 %v5592, 0.0
    %v5657 = vmax.f32 %v5593, 0.0
    %v5658 = vmax.f32 %v5594, 0.0
    %v5659 = vmax.f32 %v5595, 0.0
    %v5660 = vmax.f32 %v5596, 0.0
    %v5661 = vmax.f32 %v5597, 0.0
    %v5662 = vmax.f32 %v5598, 0.0
    %v5663 = vmax.f32 %v5599, 0.0
    %v5664 = vmax.f32 %v5600, 0.0
    %v5665 = vmax.f32 %v5601, 0.0
    %v5666 = vmax.f32 %v5602, 0.0
    %v5667 = vmax.f32 %v5603, 0.0
    %v5668 = vmax.f32 %v5604, 0.0
    %v5669 = vmax.f32 %v5605, 0.0
    %v5670 = vmax.f32 %v5606, 0.0
    %v5671 = vmax.f32 %v5607, 0.0
    %v5672 = vmax.f32 %v5608, 0.0
    %v5673 = vmax.f32 %v5609, 0.0
    %v5674 = vmax.f32 %v5610, 0.0
    %v5675 = vmax.f32 %v5611, 0.0
    %v5676 = vmax.f32 %v5612, 0.0
    %v5677 = vmax.f32 %v5613, 0.0
    %v5678 = vmax.f32 %v5614, 0.0
    %v5679 = vmax.f32 %v5615, 0.0
    %v5680 = vmax.f32 %v5616, 0.0
    %v5681 = vmax.f32 %v5617, 0.0
    %v5682 = vmax.f32 %v5618, 0.0
    %v5683 = vmax.f32 %v5619, 0.0
    %v5684 = vmax.f32 %v5620, 0.0
    %v5685 = vmax.f32 %v5621, 0.0
    %v5686 = vmax.f32 %v5622, 0.0
    %v5687 = vmax.f32 %v5623, 0.0
    %v5688 = vmax.f32 %v5624, 0.0
    %v5689 = vmax.f32 %v5625, 0.0
    %v5690 = vmax.f32 %v5626, 0.0
    %v5691 = vmax.f32 %v5627, 0.0
    %v5692 = vmax.f32 %v5628, 0.0
    %v5693 = vmax.f32 %v5629, 0.0
    %v5694 = vmax.f32 %v5630, 0.0
    %v5695 = vmax.f32 %v5631, 0.0
    %v5696 = vmax.f32 %v5632, 0.0
    %v5697 = vmax.f32 %v5633, 0.0
    %v5698 = vmax.f32 %v5634, 0.0
    %v5699 = vmax.f32 %v5635, 0.0
    %v5700 = vmax.f32 %v5636, 0.0
    %v5701 = vmax.f32 %v5637, 0.0
    %v5702 = vmax.f32 %v5638, 0.0
    %v5703 = vmax.f32 %v5639, 0.0
    %v5704 = vmax.f32 %v5640, 0.0
    %v5705 = vmax.f32 %v5641, 0.0
    %v5706 = vmax.f32 %v5642, 0.0
    %v5707 = vmax.f32 %v5643, 0.0
    %v5708 = vmax.f32 %v5644, 0.0
    %v5709 = vmax.f32 %v5645, 0.0
    %v5774 = vrot.slane %v5646, 2
    %v5775 = vrot.slane %v5648, 2
    %v5776 = vsel %vm834, %v5774, %v5775
    %v5777 = vrot.slane %v5647, 2
    %v5778 = vrot.slane %v5649, 2
    %v5779 = vsel %vm834, %v5777, %v5778
    %v5780 = vrot.slane %v5650, 2
    %v5781 = vsel %vm834, %v5775, %v5780
    %v5782 = vrot.slane %v5651, 2
    %v5783 = vsel %vm834, %v5778, %v5782
    %v5784 = vrot.slane %v5652, 2
    %v5785 = vsel %vm834, %v5780, %v5784
    %v5786 = vrot.slane %v5653, 2
    %v5787 = vsel %vm834, %v5782, %v5786
    %v5788 = vrot.slane %v5654, 2
    %v5789 = vsel %vm834, %v5784, %v5788
    %v5790 = vrot.slane %v5655, 2
    %v5791 = vsel %vm834, %v5786, %v5790
    %v5792 = vrot.slane %v5656, 2
    %v5793 = vsel %vm834, %v5788, %v5792
    %v5794 = vrot.slane %v5657, 2
    %v5795 = vsel %vm834, %v5790, %v5794
    %v5796 = vrot.slane %v5658, 2
    %v5797 = vsel %vm834, %v5792, %v5796
    %v5798 = vrot.slane %v5659, 2
    %v5799 = vsel %vm834, %v5794, %v5798
    %v5800 = vrot.slane %v5660, 2
    %v5801 = vsel %vm834, %v5796, %v5800
    %v5802 = vrot.slane %v5661, 2
    %v5803 = vsel %vm834, %v5798, %v5802
    %v5804 = vrot.slane %v5662, 2
    %v5805 = vsel %vm834, %v5800, %v5804
    %v5806 = vrot.slane %v5663, 2
    %v5807 = vsel %vm834, %v5802, %v5806
    %v5808 = vrot.slane %v5664, 2
    %v5809 = vsel %vm834, %v5804, %v5808
    %v5810 = vrot.slane %v5665, 2
    %v5811 = vsel %vm834, %v5806, %v5810
    %v5812 = vrot.slane %v5666, 2
    %v5813 = vsel %vm834, %v5808, %v5812
    %v5814 = vrot.slane %v5667, 2
    %v5815 = vsel %vm834, %v5810, %v5814
    %v5816 = vrot.slane %v5668, 2
    %v5817 = vsel %vm834, %v5812, %v5816
    %v5818 = vrot.slane %v5669, 2
    %v5819 = vsel %vm834, %v5814, %v5818
    %v5820 = vrot.slane %v5670, 2
    %v5821 = vsel %vm834, %v5816, %v5820
    %v5822 = vrot.slane %v5671, 2
    %v5823 = vsel %vm834, %v5818, %v5822
    %v5824 = vrot.slane %v5672, 2
    %v5825 = vsel %vm834, %v5820, %v5824
    %v5826 = vrot.slane %v5673, 2
    %v5827 = vsel %vm834, %v5822, %v5826
    %v5828 = vrot.slane %v5674, 2
    %v5829 = vsel %vm834, %v5824, %v5828
    %v5830 = vrot.slane %v5675, 2
    %v5831 = vsel %vm834, %v5826, %v5830
    %v5832 = vrot.slane %v5676, 2
    %v5833 = vsel %vm834, %v5828, %v5832
    %v5834 = vrot.slane %v5677, 2
    %v5835 = vsel %vm834, %v5830, %v5834
    %v5836 = vrot.slane %v5678, 2
    %v5837 = vsel %vm834, %v5832, %v5836
    %v5838 = vrot.slane %v5679, 2
    %v5839 = vsel %vm834, %v5834, %v5838
    %v5840 = vrot.slane %v5680, 2
    %v5841 = vsel %vm834, %v5836, %v5840
    %v5842 = vrot.slane %v5681, 2
    %v5843 = vsel %vm834, %v5838, %v5842
    %v5844 = vrot.slane %v5682, 2
    %v5845 = vsel %vm834, %v5840, %v5844
    %v5846 = vrot.slane %v5683, 2
    %v5847 = vsel %vm834, %v5842, %v5846
    %v5848 = vrot.slane %v5684, 2
    %v5849 = vsel %vm834, %v5844, %v5848
    %v5850 = vrot.slane %v5685, 2
    %v5851 = vsel %vm834, %v5846, %v5850
    %v5852 = vrot.slane %v5686, 2
    %v5853 = vsel %vm834, %v5848, %v5852
    %v5854 = vrot.slane %v5687, 2
    %v5855 = vsel %vm834, %v5850, %v5854
    %v5856 = vrot.slane %v5688, 2
    %v5857 = vsel %vm834, %v5852, %v5856
    %v5858 = vrot.slane %v5689, 2
    %v5859 = vsel %vm834, %v5854, %v5858
    %v5860 = vrot.slane %v5690, 2
    %v5861 = vsel %vm834, %v5856, %v5860
    %v5862 = vrot.slane %v5691, 2
    %v5863 = vsel %vm834, %v5858, %v5862
    %v5864 = vrot.slane %v5692, 2
    %v5865 = vsel %vm834, %v5860, %v5864
    %v5866 = vrot.slane %v5693, 2
    %v5867 = vsel %vm834, %v5862, %v5866
    %v5868 = vrot.slane %v5694, 2
    %v5869 = vsel %vm834, %v5864, %v5868
    %v5870 = vrot.slane %v5695, 2
    %v5871 = vsel %vm834, %v5866, %v5870
    %v5872 = vrot.slane %v5696, 2
    %v5873 = vsel %vm834, %v5868, %v5872
    %v5874 = vrot.slane %v5697, 2
    %v5875 = vsel %vm834, %v5870, %v5874
    %v5876 = vrot.slane %v5698, 2
    %v5877 = vsel %vm834, %v5872, %v5876
    %v5878 = vrot.slane %v5699, 2
    %v5879 = vsel %vm834, %v5874, %v5878
    %v5880 = vrot.slane %v5700, 2
    %v5881 = vsel %vm834, %v5876, %v5880
    %v5882 = vrot.slane %v5701, 2
    %v5883 = vsel %vm834, %v5878, %v5882
    %v5884 = vrot.slane %v5702, 2
    %v5885 = vsel %vm834, %v5880, %v5884
    %v5886 = vrot.slane %v5703, 2
    %v5887 = vsel %vm834, %v5882, %v5886
    %v5888 = vrot.slane %v5704, 2
    %v5889 = vsel %vm834, %v5884, %v5888
    %v5890 = vrot.slane %v5705, 2
    %v5891 = vsel %vm834, %v5886, %v5890
    %v5892 = vrot.slane %v5706, 2
    %v5893 = vsel %vm834, %v5888, %v5892
    %v5894 = vrot.slane %v5707, 2
    %v5895 = vsel %vm834, %v5890, %v5894
    %v5896 = vrot.slane %v5708, 2
    %v5897 = vsel %vm834, %v5892, %v5896
    %v5898 = vrot.slane %v5709, 2
    %v5899 = vsel %vm834, %v5894, %v5898
    %v5966 = vsel %vm834, %v5896, %v5774
    %v5967 = vsel %vm834, %v5898, %v5777
    %v5968 = vmax.f32 %v5646, %v5776
    %v5969 = vmax.f32 %v5647, %v5779
    %v5970 = vmax.f32 %v5648, %v5781
    %v5971 = vmax.f32 %v5649, %v5783
    %v5972 = vmax.f32 %v5650, %v5785
    %v5973 = vmax.f32 %v5651, %v5787
    %v5974 = vmax.f32 %v5652, %v5789
    %v5975 = vmax.f32 %v5653, %v5791
    %v5976 = vmax.f32 %v5654, %v5793
    %v5977 = vmax.f32 %v5655, %v5795
    %v5978 = vmax.f32 %v5656, %v5797
    %v5979 = vmax.f32 %v5657, %v5799
    %v5980 = vmax.f32 %v5658, %v5801
    %v5981 = vmax.f32 %v5659, %v5803
    %v5982 = vmax.f32 %v5660, %v5805
    %v5983 = vmax.f32 %v5661, %v5807
    %v5984 = vmax.f32 %v5662, %v5809
    %v5985 = vmax.f32 %v5663, %v5811
    %v5986 = vmax.f32 %v5664, %v5813
    %v5987 = vmax.f32 %v5665, %v5815
    %v5988 = vmax.f32 %v5666, %v5817
    %v5989 = vmax.f32 %v5667, %v5819
    %v5990 = vmax.f32 %v5668, %v5821
    %v5991 = vmax.f32 %v5669, %v5823
    %v5992 = vmax.f32 %v5670, %v5825
    %v5993 = vmax.f32 %v5671, %v5827
    %v5994 = vmax.f32 %v5672, %v5829
    %v5995 = vmax.f32 %v5673, %v5831
    %v5996 = vmax.f32 %v5674, %v5833
    %v5997 = vmax.f32 %v5675, %v5835
    %v5998 = vmax.f32 %v5676, %v5837
    %v5999 = vmax.f32 %v5677, %v5839
    %v6000 = vmax.f32 %v5678, %v5841
    %v6001 = vmax.f32 %v5679, %v5843
    %v6002 = vmax.f32 %v5680, %v5845
    %v6003 = vmax.f32 %v5681, %v5847
    %v6004 = vmax.f32 %v5682, %v5849
    %v6005 = vmax.f32 %v5683, %v5851
    %v6006 = vmax.f32 %v5684, %v5853
    %v6007 = vmax.f32 %v5685, %v5855
    %v6008 = vmax.f32 %v5686, %v5857
    %v6009 = vmax.f32 %v5687, %v5859
    %v6010 = vmax.f32 %v5688, %v5861
    %v6011 = vmax.f32 %v5689, %v5863
    %v6012 = vmax.f32 %v5690, %v5865
    %v6013 = vmax.f32 %v5691, %v5867
    %v6014 = vmax.f32 %v5692, %v5869
    %v6015 = vmax.f32 %v5693, %v5871
    %v6016 = vmax.f32 %v5694, %v5873
    %v6017 = vmax.f32 %v5695, %v5875
    %v6018 = vmax.f32 %v5696, %v5877
    %v6019 = vmax.f32 %v5697, %v5879
    %v6020 = vmax.f32 %v5698, %v5881
    %v6021 = vmax.f32 %v5699, %v5883
    %v6022 = vmax.f32 %v5700, %v5885
    %v6023 = vmax.f32 %v5701, %v5887
    %v6024 = vmax.f32 %v5702, %v5889
    %v6025 = vmax.f32 %v5703, %v5891
    %v6026 = vmax.f32 %v5704, %v5893
    %v6027 = vmax.f32 %v5705, %v5895
    %v6028 = vmax.f32 %v5706, %v5897
    %v6029 = vmax.f32 %v5707, %v5899
    %v6030 = vmax.f32 %v5708, %v5966
    %v6031 = vmax.f32 %v5709, %v5967
    %6096 = vrot.lane.b32.xlu0 %v5968, 112
    %v6097 = vpop.permute.xlu0 %6096
    %6098 = vrot.lane.b32.xlu0 %v5969, 112
    %v6099 = vpop.permute.xlu0 %6098
    %6100 = vrot.lane.b32.xlu0 %v5970, 112
    %v6101 = vpop.permute.xlu0 %6100
    %6102 = vrot.lane.b32.xlu0 %v5971, 112
    %v6103 = vpop.permute.xlu0 %6102
    %6104 = vrot.lane.b32.xlu0 %v5972, 112
    %v6105 = vpop.permute.xlu0 %6104
    %6106 = vrot.lane.b32.xlu0 %v5973, 112
    %v6107 = vpop.permute.xlu0 %6106
    %6108 = vrot.lane.b32.xlu0 %v5974, 112
    %v6109 = vpop.permute.xlu0 %6108
    %6110 = vrot.lane.b32.xlu0 %v5975, 112
    %v6111 = vpop.permute.xlu0 %6110
    %6112 = vrot.lane.b32.xlu0 %v5976, 112
    %v6113 = vpop.permute.xlu0 %6112
    %6114 = vrot.lane.b32.xlu0 %v5977, 112
    %v6115 = vpop.permute.xlu0 %6114
    %6116 = vrot.lane.b32.xlu0 %v5978, 112
    %v6117 = vpop.permute.xlu0 %6116
    %6118 = vrot.lane.b32.xlu0 %v5979, 112
    %v6119 = vpop.permute.xlu0 %6118
    %6120 = vrot.lane.b32.xlu0 %v5980, 112
    %v6121 = vpop.permute.xlu0 %6120
    %6122 = vrot.lane.b32.xlu0 %v5981, 112
    %v6123 = vpop.permute.xlu0 %6122
    %6124 = vrot.lane.b32.xlu0 %v5982, 112
    %v6125 = vpop.permute.xlu0 %6124
    %6126 = vrot.lane.b32.xlu0 %v5983, 112
    %v6127 = vpop.permute.xlu0 %6126
    %6128 = vrot.lane.b32.xlu0 %v5984, 112
    %v6129 = vpop.permute.xlu0 %6128
    %6130 = vrot.lane.b32.xlu0 %v5985, 112
    %v6131 = vpop.permute.xlu0 %6130
    %6132 = vrot.lane.b32.xlu0 %v5986, 112
    %v6133 = vpop.permute.xlu0 %6132
    %6134 = vrot.lane.b32.xlu0 %v5987, 112
    %v6135 = vpop.permute.xlu0 %6134
    %6136 = vrot.lane.b32.xlu0 %v5988, 112
    %v6137 = vpop.permute.xlu0 %6136
    %6138 = vrot.lane.b32.xlu0 %v5989, 112
    %v6139 = vpop.permute.xlu0 %6138
    %6140 = vrot.lane.b32.xlu0 %v5990, 112
    %v6141 = vpop.permute.xlu0 %6140
    %6142 = vrot.lane.b32.xlu0 %v5991, 112
    %v6143 = vpop.permute.xlu0 %6142
    %6144 = vrot.lane.b32.xlu0 %v5992, 112
    %v6145 = vpop.permute.xlu0 %6144
    %6146 = vrot.lane.b32.xlu0 %v5993, 112
    %v6147 = vpop.permute.xlu0 %6146
    %6148 = vrot.lane.b32.xlu0 %v5994, 112
    %v6149 = vpop.permute.xlu0 %6148
    %6150 = vrot.lane.b32.xlu0 %v5995, 112
    %v6151 = vpop.permute.xlu0 %6150
    %6152 = vrot.lane.b32.xlu0 %v5996, 112
    %v6153 = vpop.permute.xlu0 %6152
    %6154 = vrot.lane.b32.xlu0 %v5997, 112
    %v6155 = vpop.permute.xlu0 %6154
    %6156 = vrot.lane.b32.xlu0 %v5998, 112
    %v6157 = vpop.permute.xlu0 %6156
    %6158 = vrot.lane.b32.xlu0 %v5999, 112
    %v6159 = vpop.permute.xlu0 %6158
    %6160 = vrot.lane.b32.xlu0 %v6000, 112
    %v6161 = vpop.permute.xlu0 %6160
    %6162 = vrot.lane.b32.xlu0 %v6001, 112
    %v6163 = vpop.permute.xlu0 %6162
    %6164 = vrot.lane.b32.xlu0 %v6002, 112
    %v6165 = vpop.permute.xlu0 %6164
    %6166 = vrot.lane.b32.xlu0 %v6003, 112
    %v6167 = vpop.permute.xlu0 %6166
    %6168 = vrot.lane.b32.xlu0 %v6004, 112
    %v6169 = vpop.permute.xlu0 %6168
    %6170 = vrot.lane.b32.xlu0 %v6005, 112
    %v6171 = vpop.permute.xlu0 %6170
    %6172 = vrot.lane.b32.xlu0 %v6006, 112
    %v6173 = vpop.permute.xlu0 %6172
    %6174 = vrot.lane.b32.xlu0 %v6007, 112
    %v6175 = vpop.permute.xlu0 %6174
    %6176 = vrot.lane.b32.xlu0 %v6008, 112
    %v6177 = vpop.permute.xlu0 %6176
    %6178 = vrot.lane.b32.xlu0 %v6009, 112
    %v6179 = vpop.permute.xlu0 %6178
    %6180 = vrot.lane.b32.xlu0 %v6010, 112
    %v6181 = vpop.permute.xlu0 %6180
    %6182 = vrot.lane.b32.xlu0 %v6011, 112
    %v6183 = vpop.permute.xlu0 %6182
    %6184 = vrot.lane.b32.xlu0 %v6012, 112
    %v6185 = vpop.permute.xlu0 %6184
    %6186 = vrot.lane.b32.xlu0 %v6013, 112
    %v6187 = vpop.permute.xlu0 %6186
    %6188 = vrot.lane.b32.xlu0 %v6014, 112
    %v6189 = vpop.permute.xlu0 %6188
    %6190 = vrot.lane.b32.xlu0 %v6015, 112
    %v6191 = vpop.permute.xlu0 %6190
    %6192 = vrot.lane.b32.xlu0 %v6016, 112
    %v6193 = vpop.permute.xlu0 %6192
    %6194 = vrot.lane.b32.xlu0 %v6017, 112
    %v6195 = vpop.permute.xlu0 %6194
    %6196 = vrot.lane.b32.xlu0 %v6018, 112
    %v6197 = vpop.permute.xlu0 %6196
    %6198 = vrot.lane.b32.xlu0 %v6019, 112
    %v6199 = vpop.permute.xlu0 %6198
    %6200 = vrot.lane.b32.xlu0 %v6020, 112
    %v6201 = vpop.permute.xlu0 %6200
    %6202 = vrot.lane.b32.xlu0 %v6021, 112
    %v6203 = vpop.permute.xlu0 %6202
    %6204 = vrot.lane.b32.xlu0 %v6022, 112
    %v6205 = vpop.permute.xlu0 %6204
    %6206 = vrot.lane.b32.xlu0 %v6023, 112
    %v6207 = vpop.permute.xlu0 %6206
    %6208 = vrot.lane.b32.xlu0 %v6024, 112
    %v6209 = vpop.permute.xlu0 %6208
    %6210 = vrot.lane.b32.xlu0 %v6025, 112
    %v6211 = vpop.permute.xlu0 %6210
    %6212 = vrot.lane.b32.xlu0 %v6026, 112
    %v6213 = vpop.permute.xlu0 %6212
    %6214 = vrot.lane.b32.xlu0 %v6027, 112
    %v6215 = vpop.permute.xlu0 %6214
    %6216 = vrot.lane.b32.xlu0 %v6028, 112
    %v6217 = vpop.permute.xlu0 %6216
    %6218 = vrot.lane.b32.xlu0 %v6029, 112
    %v6219 = vpop.permute.xlu0 %6218
    %6220 = vrot.lane.b32.xlu0 %v6030, 112
    %v6221 = vpop.permute.xlu0 %6220
    %6222 = vrot.lane.b32.xlu0 %v6031, 112
    %v6223 = vpop.permute.xlu0 %6222
    %vm6224 = vcmask 916480
    %v6225 = vsel %vm6224, %v6097, %v6099
    %v6226 = vsel %vm6224, %v6101, %v6103
    %v6227 = vsel %vm6224, %v6105, %v6107
    %v6228 = vsel %vm6224, %v6109, %v6111
    %v6229 = vsel %vm6224, %v6113, %v6115
    %v6230 = vsel %vm6224, %v6117, %v6119
    %v6231 = vsel %vm6224, %v6121, %v6123
    %v6232 = vsel %vm6224, %v6125, %v6127
    %v6233 = vsel %vm6224, %v6129, %v6131
    %v6234 = vsel %vm6224, %v6133, %v6135
    %v6235 = vsel %vm6224, %v6137, %v6139
    %v6236 = vsel %vm6224, %v6141, %v6143
    %v6237 = vsel %vm6224, %v6145, %v6147
    %v6238 = vsel %vm6224, %v6149, %v6151
    %v6239 = vsel %vm6224, %v6153, %v6155
    %v6240 = vsel %vm6224, %v6157, %v6159
    %v6241 = vsel %vm6224, %v6161, %v6163
    %v6242 = vsel %vm6224, %v6165, %v6167
    %v6243 = vsel %vm6224, %v6169, %v6171
    %v6244 = vsel %vm6224, %v6173, %v6175
    %v6245 = vsel %vm6224, %v6177, %v6179
    %v6246 = vsel %vm6224, %v6181, %v6183
    %v6247 = vsel %vm6224, %v6185, %v6187
    %v6248 = vsel %vm6224, %v6189, %v6191
    %v6249 = vsel %vm6224, %v6193, %v6195
    %v6250 = vsel %vm6224, %v6197, %v6199
    %v6251 = vsel %vm6224, %v6201, %v6203
    %v6252 = vsel %vm6224, %v6205, %v6207
    %v6253 = vsel %vm6224, %v6209, %v6211
    %v6254 = vsel %vm6224, %v6213, %v6215
    %v6255 = vsel %vm6224, %v6217, %v6219
    %v6256 = vsel %vm6224, %v6221, %v6223
    %v6321 = vmax.f32 %v5968, %v6225
    %v6322 = vmax.f32 %v5969, %v6099
    %v6323 = vmax.f32 %v5970, %v6226
    %v6324 = vmax.f32 %v5971, %v6103
    %v6325 = vmax.f32 %v5972, %v6227
    %v6326 = vmax.f32 %v5973, %v6107
    %v6327 = vmax.f32 %v5974, %v6228
    %v6328 = vmax.f32 %v5975, %v6111
    %v6329 = vmax.f32 %v5976, %v6229
    %v6330 = vmax.f32 %v5977, %v6115
    %v6331 = vmax.f32 %v5978, %v6230
    %v6332 = vmax.f32 %v5979, %v6119
    %v6333 = vmax.f32 %v5980, %v6231
    %v6334 = vmax.f32 %v5981, %v6123
    %v6335 = vmax.f32 %v5982, %v6232
    %v6336 = vmax.f32 %v5983, %v6127
    %v6337 = vmax.f32 %v5984, %v6233
    %v6338 = vmax.f32 %v5985, %v6131
    %v6339 = vmax.f32 %v5986, %v6234
    %v6340 = vmax.f32 %v5987, %v6135
    %v6341 = vmax.f32 %v5988, %v6235
    %v6342 = vmax.f32 %v5989, %v6139
    %v6343 = vmax.f32 %v5990, %v6236
    %v6344 = vmax.f32 %v5991, %v6143
    %v6345 = vmax.f32 %v5992, %v6237
    %v6346 = vmax.f32 %v5993, %v6147
    %v6347 = vmax.f32 %v5994, %v6238
    %v6348 = vmax.f32 %v5995, %v6151
    %v6349 = vmax.f32 %v5996, %v6239
    %v6350 = vmax.f32 %v5997, %v6155
    %v6351 = vmax.f32 %v5998, %v6240
    %v6352 = vmax.f32 %v5999, %v6159
    %v6353 = vmax.f32 %v6000, %v6241
    %v6354 = vmax.f32 %v6001, %v6163
    %v6355 = vmax.f32 %v6002, %v6242
    %v6356 = vmax.f32 %v6003, %v6167
    %v6357 = vmax.f32 %v6004, %v6243
    %v6358 = vmax.f32 %v6005, %v6171
    %v6359 = vmax.f32 %v6006, %v6244
    %v6360 = vmax.f32 %v6007, %v6175
    %v6361 = vmax.f32 %v6008, %v6245
    %v6362 = vmax.f32 %v6009, %v6179
    %v6363 = vmax.f32 %v6010, %v6246
    %v6364 = vmax.f32 %v6011, %v6183
    %v6365 = vmax.f32 %v6012, %v6247
    %v6366 = vmax.f32 %v6013, %v6187
    %v6367 = vmax.f32 %v6014, %v6248
    %v6368 = vmax.f32 %v6015, %v6191
    %v6369 = vmax.f32 %v6016, %v6249
    %v6370 = vmax.f32 %v6017, %v6195
    %v6371 = vmax.f32 %v6018, %v6250
    %v6372 = vmax.f32 %v6019, %v6199
    %v6373 = vmax.f32 %v6020, %v6251
    %v6374 = vmax.f32 %v6021, %v6203
    %v6375 = vmax.f32 %v6022, %v6252
    %v6376 = vmax.f32 %v6023, %v6207
    %v6377 = vmax.f32 %v6024, %v6253
    %v6378 = vmax.f32 %v6025, %v6211
    %v6379 = vmax.f32 %v6026, %v6254
    %v6380 = vmax.f32 %v6027, %v6215
    %v6381 = vmax.f32 %v6028, %v6255
    %v6382 = vmax.f32 %v6029, %v6219
    %v6383 = vmax.f32 %v6030, %v6256
    %v6384 = vmax.f32 %v6031, %v6223
    %v6385 = vld [vmem:[%s5] sm:$0xff]
    %v6386 = vld [vmem:[%s5 + $0x8] sm:$0xff]
    %6387 = vmatprep.subr.mxu0 %v6352
    %6388 = vmatpush1.msra.mxu0 %v6351
    %6389 = vmatprep.subr.mxu0 %v6350
    %6390 = vmatpush1.msra.mxu0 %v6349
    %6391 = vmatprep.subr.mxu0 %v6348
    %6392 = vmatpush1.msra.mxu0 %v6347
    %6393 = vmatprep.subr.mxu0 %v6346
    %6394 = vmatpush1.msra.mxu0 %v6345
    %6395 = vmatprep.subr.mxu0 %v6344
    %6396 = vmatpush1.msra.mxu0 %v6343
    %6397 = vmatprep.subr.mxu0 %v6342
    %6398 = vmatpush1.msra.mxu0 %v6341
    %6399 = vmatprep.subr.mxu0 %v6340
    %6400 = vmatpush1.msra.mxu0 %v6339
    %6401 = vmatprep.subr.mxu0 %v6338
    %6402 = vmatpush1.msra.mxu0 %v6337
    %6403 = vmatprep.subr.mxu0 %v6336
    %6404 = vmatpush1.msra.mxu0 %v6335
    %6405 = vmatprep.subr.mxu0 %v6334
    %6406 = vmatpush1.msra.mxu0 %v6333
    %6407 = vmatprep.subr.mxu0 %v6332
    %6408 = vmatpush1.msra.mxu0 %v6331
    %6409 = vmatprep.subr.mxu0 %v6330
    %6410 = vmatpush1.msra.mxu0 %v6329
    %6411 = vmatprep.subr.mxu0 %v6328
    %6412 = vmatpush1.msra.mxu0 %v6327
    %6413 = vmatprep.subr.mxu0 %v6326
    %6414 = vmatpush1.msra.mxu0 %v6325
    %6415 = vmatprep.subr.mxu0 %v6324
    %6416 = vmatpush1.msra.mxu0 %v6323
    %6417 = vmatprep.subr.mxu0 %v6322
    %6418 = vmatpush1.msra.mxu0 %v6321
    %6419 = vmatprep.subr.mxu0 %v6384
    %6420 = vmatpush2.msra.mxu0 %v6383
    %6421 = vmatprep.subr.mxu0 %v6382
    %6422 = vmatpush2.msra.mxu0 %v6381
    %6423 = vmatprep.subr.mxu0 %v6380
    %6424 = vmatpush2.msra.mxu0 %v6379
    %6425 = vmatprep.subr.mxu0 %v6378
    %6426 = vmatpush2.msra.mxu0 %v6377
    %6427 = vmatprep.subr.mxu0 %v6376
    %6428 = vmatpush2.msra.mxu0 %v6375
    %6429 = vmatprep.subr.mxu0 %v6374
    %6430 = vmatpush2.msra.mxu0 %v6373
    %6431 = vmatprep.subr.mxu0 %v6372
    %6432 = vmatpush2.msra.mxu0 %v6371
    %6433 = vmatprep.subr.mxu0 %v6370
    %6434 = vmatpush2.msra.mxu0 %v6369
    %6435 = vmatprep.subr.mxu0 %v6368
    %6436 = vmatpush2.msra.mxu0 %v6367
    %6437 = vmatprep.subr.mxu0 %v6366
    %6438 = vmatpush2.msra.mxu0 %v6365
    %6439 = vmatprep.subr.mxu0 %v6364
    %6440 = vmatpush2.msra.mxu0 %v6363
    %6441 = vmatprep.subr.mxu0 %v6362
    %6442 = vmatpush2.msra.mxu0 %v6361
    %6443 = vmatprep.subr.mxu0 %v6360
    %6444 = vmatpush2.msra.mxu0 %v6359
    %6445 = vmatprep.subr.mxu0 %v6358
    %6446 = vmatpush2.msra.mxu0 %v6357
    %6447 = vmatprep.subr.mxu0 %v6356
    %6448 = vmatpush2.msra.mxu0 %v6355
    %6449 = vmatprep.subr.mxu0 %v6354
    %6450 = vmatpush2.msra.mxu0 %v6353
    %6451 = vmatprep.mubr.f32.mxu0 %v6386
    %6452 = vmatmul.mubr.f32.gmra.mxu0 %v6385
    %v6453 = vpop.f32.mrf.mxu0
    %v6454 = vadd.f32 0.0, %v6453
    %v6455 = vpop.f32.mrf.mxu0
    %v6456 = vadd.f32 0.0, %v6455
    %6457 = vdwg.mxu0
    %v6458 = vld [vmem:[%s6] sm:$0xff]
    %v6459 = vld [vmem:[%s6 + $0x8] sm:$0xff]
    %v6460 = vld [vmem:[%s6 + $0x10] sm:$0xff]
    %v6461 = vld [vmem:[%s6 + $0x18] sm:$0xff]
    %v6462 = vld [vmem:[%s6 + $0x20] sm:$0xff]
    %v6463 = vld [vmem:[%s6 + $0x28] sm:$0xff]
    %v6464 = vld [vmem:[%s6 + $0x30] sm:$0xff]
    %v6465 = vld [vmem:[%s6 + $0x38] sm:$0xff]
    %v6466 = vld [vmem:[%s6 + $0x40] sm:$0xff]
    %v6467 = vld [vmem:[%s6 + $0x48] sm:$0xff]
    %v6468 = vld [vmem:[%s6 + $0x50] sm:$0xff]
    %v6469 = vld [vmem:[%s6 + $0x58] sm:$0xff]
    %v6470 = vld [vmem:[%s6 + $0x60] sm:$0xff]
    %v6471 = vld [vmem:[%s6 + $0x68] sm:$0xff]
    %v6472 = vld [vmem:[%s6 + $0x70] sm:$0xff]
    %v6473 = vld [vmem:[%s6 + $0x78] sm:$0xff]
    %v6474 = vld [vmem:[%s6 + $0x80] sm:$0xff]
    %v6475 = vld [vmem:[%s6 + $0x88] sm:$0xff]
    %s6476 = scalar_lea.vmem %s5, 16
    %v6477 = vld [vmem:[%s6476] sm:$0xff]
    %v6478 = vld [vmem:[%s6476 + $0x8] sm:$0xff]
    %6479 = vmatprep.subr.mxu0 %v6352
    %6480 = vmatpush1.msra.mxu0 %v6351
    %6481 = vmatprep.subr.mxu0 %v6350
    %6482 = vmatpush1.msra.mxu0 %v6349
    %6483 = vmatprep.subr.mxu0 %v6348
    %6484 = vmatpush1.msra.mxu0 %v6347
    %6485 = vmatprep.subr.mxu0 %v6346
    %6486 = vmatpush1.msra.mxu0 %v6345
    %6487 = vmatprep.subr.mxu0 %v6344
    %6488 = vmatpush1.msra.mxu0 %v6343
    %6489 = vmatprep.subr.mxu0 %v6342
    %6490 = vmatpush1.msra.mxu0 %v6341
    %6491 = vmatprep.subr.mxu0 %v6340
    %6492 = vmatpush1.msra.mxu0 %v6339
    %6493 = vmatprep.subr.mxu0 %v6338
    %6494 = vmatpush1.msra.mxu0 %v6337
    %6495 = vmatprep.subr.mxu0 %v6336
    %6496 = vmatpush1.msra.mxu0 %v6335
    %6497 = vmatprep.subr.mxu0 %v6334
    %6498 = vmatpush1.msra.mxu0 %v6333
    %6499 = vmatprep.subr.mxu0 %v6332
    %6500 = vmatpush1.msra.mxu0 %v6331
    %6501 = vmatprep.subr.mxu0 %v6330
    %6502 = vmatpush1.msra.mxu0 %v6329
    %6503 = vmatprep.subr.mxu0 %v6328
    %6504 = vmatpush1.msra.mxu0 %v6327
    %6505 = vmatprep.subr.mxu0 %v6326
    %6506 = vmatpush1.msra.mxu0 %v6325
    %6507 = vmatprep.subr.mxu0 %v6324
    %6508 = vmatpush1.msra.mxu0 %v6323
    %6509 = vmatprep.subr.mxu0 %v6322
    %6510 = vmatpush1.msra.mxu0 %v6321
    %6511 = vmatprep.subr.mxu0 %v6384
    %6512 = vmatpush2.msra.mxu0 %v6383
    %6513 = vmatprep.subr.mxu0 %v6382
    %6514 = vmatpush2.msra.mxu0 %v6381
    %6515 = vmatprep.subr.mxu0 %v6380
    %6516 = vmatpush2.msra.mxu0 %v6379
    %6517 = vmatprep.subr.mxu0 %v6378
    %6518 = vmatpush2.msra.mxu0 %v6377
    %6519 = vmatprep.subr.mxu0 %v6376
    %6520 = vmatpush2.msra.mxu0 %v6375
    %6521 = vmatprep.subr.mxu0 %v6374
    %6522 = vmatpush2.msra.mxu0 %v6373
    %6523 = vmatprep.subr.mxu0 %v6372
    %6524 = vmatpush2.msra.mxu0 %v6371
    %6525 = vmatprep.subr.mxu0 %v6370
    %6526 = vmatpush2.msra.mxu0 %v6369
    %6527 = vmatprep.subr.mxu0 %v6368
    %6528 = vmatpush2.msra.mxu0 %v6367
    %6529 = vmatprep.subr.mxu0 %v6366
    %6530 = vmatpush2.msra.mxu0 %v6365
    %6531 = vmatprep.subr.mxu0 %v6364
    %6532 = vmatpush2.msra.mxu0 %v6363
    %6533 = vmatprep.subr.mxu0 %v6362
    %6534 = vmatpush2.msra.mxu0 %v6361
    %6535 = vmatprep.subr.mxu0 %v6360
    %6536 = vmatpush2.msra.mxu0 %v6359
    %6537 = vmatprep.subr.mxu0 %v6358
    %6538 = vmatpush2.msra.mxu0 %v6357
    %6539 = vmatprep.subr.mxu0 %v6356
    %6540 = vmatpush2.msra.mxu0 %v6355
    %6541 = vmatprep.subr.mxu0 %v6354
    %6542 = vmatpush2.msra.mxu0 %v6353
    %6543 = vmatprep.mubr.f32.mxu0 %v6478
    %6544 = vmatmul.mubr.f32.gmra.mxu0 %v6477
    %v6545 = vpop.f32.mrf.mxu0
    %v6546 = vadd.f32 0.0, %v6545
    %v6547 = vpop.f32.mrf.mxu0
    %v6548 = vadd.f32 0.0, %v6547
    %6549 = vdwg.mxu0
    %s6550 = scalar_lea.vmem %s6, 144
    %v6551 = vld [vmem:[%s6550] sm:$0xff]
    %v6552 = vld [vmem:[%s6550 + $0x8] sm:$0xff]
    %v6553 = vld [vmem:[%s6550 + $0x10] sm:$0xff]
    %v6554 = vld [vmem:[%s6550 + $0x18] sm:$0xff]
    %v6555 = vld [vmem:[%s6550 + $0x20] sm:$0xff]
    %v6556 = vld [vmem:[%s6550 + $0x28] sm:$0xff]
    %v6557 = vld [vmem:[%s6550 + $0x30] sm:$0xff]
    %v6558 = vld [vmem:[%s6550 + $0x38] sm:$0xff]
    %v6559 = vld [vmem:[%s6550 + $0x40] sm:$0xff]
    %v6560 = vld [vmem:[%s6550 + $0x48] sm:$0xff]
    %v6561 = vld [vmem:[%s6550 + $0x50] sm:$0xff]
    %v6562 = vld [vmem:[%s6550 + $0x58] sm:$0xff]
    %v6563 = vld [vmem:[%s6550 + $0x60] sm:$0xff]
    %v6564 = vld [vmem:[%s6550 + $0x68] sm:$0xff]
    %v6565 = vld [vmem:[%s6550 + $0x70] sm:$0xff]
    %v6566 = vld [vmem:[%s6550 + $0x78] sm:$0xff]
    %v6567 = vld [vmem:[%s6550 + $0x80] sm:$0xff]
    %v6568 = vld [vmem:[%s6550 + $0x88] sm:$0xff]
    %vm6569 = vcmask 130048
    %v6571 = vsel %vm6569, %v6548, 0
    %6573 = vmatprep.subr.mxu0 0.0
    %6574 = vmatpush1.msra.mxu0 %v6566
    %6575 = vmatprep.subr.mxu0 0.0
    %6576 = vmatpush1.msra.mxu0 %v6565
    %6577 = vmatprep.subr.mxu0 0.0
    %6578 = vmatpush1.msra.mxu0 %v6564
    %6579 = vmatprep.subr.mxu0 0.0
    %6580 = vmatpush1.msra.mxu0 %v6563
    %6581 = vmatprep.subr.mxu0 0.0
    %6582 = vmatpush1.msra.mxu0 %v6562
    %6583 = vmatprep.subr.mxu0 0.0
    %6584 = vmatpush1.msra.mxu0 %v6561
    %6585 = vmatprep.subr.mxu0 0.0
    %6586 = vmatpush1.msra.mxu0 %v6560
    %6587 = vmatprep.subr.mxu0 0.0
    %6588 = vmatpush1.msra.mxu0 %v6559
    %6589 = vmatprep.subr.mxu0 0.0
    %6590 = vmatpush1.msra.mxu0 %v6558
    %6591 = vmatprep.subr.mxu0 0.0
    %6592 = vmatpush1.msra.mxu0 %v6557
    %6593 = vmatprep.subr.mxu0 0.0
    %6594 = vmatpush1.msra.mxu0 %v6556
    %6595 = vmatprep.subr.mxu0 0.0
    %6596 = vmatpush1.msra.mxu0 %v6555
    %6597 = vmatprep.subr.mxu0 0.0
    %6598 = vmatpush1.msra.mxu0 %v6554
    %6599 = vmatprep.subr.mxu0 0.0
    %6600 = vmatpush1.msra.mxu0 %v6553
    %6601 = vmatprep.subr.mxu0 0.0
    %6602 = vmatpush1.msra.mxu0 %v6552
    %6603 = vmatprep.subr.mxu0 0.0
    %6604 = vmatpush1.msra.mxu0 %v6551
    %6605 = vmatprep.subr.mxu0 0.0
    %6606 = vmatpush2.msra.mxu0 0.0
    %6607 = vmatprep.subr.mxu0 0.0
    %6608 = vmatpush2.msra.mxu0 0.0
    %6609 = vmatprep.subr.mxu0 0.0
    %6610 = vmatpush2.msra.mxu0 0.0
    %6611 = vmatprep.subr.mxu0 0.0
    %6612 = vmatpush2.msra.mxu0 0.0
    %6613 = vmatprep.subr.mxu0 0.0
    %6614 = vmatpush2.msra.mxu0 0.0
    %6615 = vmatprep.subr.mxu0 0.0
    %6616 = vmatpush2.msra.mxu0 0.0
    %6617 = vmatprep.subr.mxu0 0.0
    %6618 = vmatpush2.msra.mxu0 0.0
    %6619 = vmatprep.subr.mxu0 0.0
    %6620 = vmatpush2.msra.mxu0 0.0
    %6621 = vmatprep.subr.mxu0 0.0
    %6622 = vmatpush2.msra.mxu0 0.0
    %6623 = vmatprep.subr.mxu0 0.0
    %6624 = vmatpush2.msra.mxu0 0.0
    %6625 = vmatprep.subr.mxu0 0.0
    %6626 = vmatpush2.msra.mxu0 0.0
    %6627 = vmatprep.subr.mxu0 0.0
    %6628 = vmatpush2.msra.mxu0 0.0
    %6629 = vmatprep.subr.mxu0 0.0
    %6630 = vmatpush2.msra.mxu0 0.0
    %6631 = vmatprep.subr.mxu0 0.0
    %6632 = vmatpush2.msra.mxu0 0.0
    %6633 = vmatprep.subr.mxu0 0.0
    %6634 = vmatpush2.msra.mxu0 %v6568
    %6635 = vmatprep.subr.mxu0 0.0
    %6636 = vmatpush2.msra.mxu0 %v6567
    %6637 = vmatprep.mubr.f32.mxu0 %v6571
    %6638 = vmatmul.mubr.f32.gmra.mxu0 %v6546
    %v6639 = vpop.f32.mrf.mxu0
    %v6640 = vadd.f32 0.0, %v6639
    %v6641 = vpop.f32.mrf.mxu0
    %6642 = vdwg.mxu0
    %v6644 = vsel %vm6569, %v6456, 0
    %6646 = vmatprep.subr.mxu0 0.0
    %6647 = vmatpush1.msra.mxu0 %v6473
    %6648 = vmatprep.subr.mxu0 0.0
    %6649 = vmatpush1.msra.mxu0 %v6472
    %6650 = vmatprep.subr.mxu0 0.0
    %6651 = vmatpush1.msra.mxu0 %v6471
    %6652 = vmatprep.subr.mxu0 0.0
    %6653 = vmatpush1.msra.mxu0 %v6470
    %6654 = vmatprep.subr.mxu0 0.0
    %6655 = vmatpush1.msra.mxu0 %v6469
    %6656 = vmatprep.subr.mxu0 0.0
    %6657 = vmatpush1.msra.mxu0 %v6468
    %6658 = vmatprep.subr.mxu0 0.0
    %6659 = vmatpush1.msra.mxu0 %v6467
    %6660 = vmatprep.subr.mxu0 0.0
    %6661 = vmatpush1.msra.mxu0 %v6466
    %6662 = vmatprep.subr.mxu0 0.0
    %6663 = vmatpush1.msra.mxu0 %v6465
    %6664 = vmatprep.subr.mxu0 0.0
    %6665 = vmatpush1.msra.mxu0 %v6464
    %6666 = vmatprep.subr.mxu0 0.0
    %6667 = vmatpush1.msra.mxu0 %v6463
    %6668 = vmatprep.subr.mxu0 0.0
    %6669 = vmatpush1.msra.mxu0 %v6462
    %6670 = vmatprep.subr.mxu0 0.0
    %6671 = vmatpush1.msra.mxu0 %v6461
    %6672 = vmatprep.subr.mxu0 0.0
    %6673 = vmatpush1.msra.mxu0 %v6460
    %6674 = vmatprep.subr.mxu0 0.0
    %6675 = vmatpush1.msra.mxu0 %v6459
    %6676 = vmatprep.subr.mxu0 0.0
    %6677 = vmatpush1.msra.mxu0 %v6458
    %6678 = vmatprep.subr.mxu0 0.0
    %6679 = vmatpush2.msra.mxu0 0.0
    %6680 = vmatprep.subr.mxu0 0.0
    %6681 = vmatpush2.msra.mxu0 0.0
    %6682 = vmatprep.subr.mxu0 0.0
    %6683 = vmatpush2.msra.mxu0 0.0
    %6684 = vmatprep.subr.mxu0 0.0
    %6685 = vmatpush2.msra.mxu0 0.0
    %6686 = vmatprep.subr.mxu0 0.0
    %6687 = vmatpush2.msra.mxu0 0.0
    %6688 = vmatprep.subr.mxu0 0.0
    %6689 = vmatpush2.msra.mxu0 0.0
    %6690 = vmatprep.subr.mxu0 0.0
    %6691 = vmatpush2.msra.mxu0 0.0
    %6692 = vmatprep.subr.mxu0 0.0
    %6693 = vmatpush2.msra.mxu0 0.0
    %6694 = vmatprep.subr.mxu0 0.0
    %6695 = vmatpush2.msra.mxu0 0.0
    %6696 = vmatprep.subr.mxu0 0.0
    %6697 = vmatpush2.msra.mxu0 0.0
    %6698 = vmatprep.subr.mxu0 0.0
    %6699 = vmatpush2.msra.mxu0 0.0
    %6700 = vmatprep.subr.mxu0 0.0
    %6701 = vmatpush2.msra.mxu0 0.0
    %6702 = vmatprep.subr.mxu0 0.0
    %6703 = vmatpush2.msra.mxu0 0.0
    %6704 = vmatprep.subr.mxu0 0.0
    %6705 = vmatpush2.msra.mxu0 0.0
    %6706 = vmatprep.subr.mxu0 0.0
    %6707 = vmatpush2.msra.mxu0 %v6475
    %6708 = vmatprep.subr.mxu0 0.0
    %6709 = vmatpush2.msra.mxu0 %v6474
    %6710 = vmatprep.mubr.f32.mxu0 %v6644
    %6711 = vmatmul.mubr.f32.gmra.mxu0 %v6454
    %v6712 = vpop.f32.mrf.mxu0
    %v6713 = vadd.f32 %v6640, %v6712
    %v6714 = vpop.f32.mrf.mxu0
    %6715 = vdwg.mxu0
    %s6716 = scalar_lea.vmem %s5, 32
    %v6717 = vld [vmem:[%s6716] sm:$0xff]
    %v6718 = vld [vmem:[%s6716 + $0x8] sm:$0xff]
    %6719 = vmatprep.subr.mxu0 %v6352
    %6720 = vmatpush1.msra.mxu0 %v6351
    %6721 = vmatprep.subr.mxu0 %v6350
    %6722 = vmatpush1.msra.mxu0 %v6349
    %6723 = vmatprep.subr.mxu0 %v6348
    %6724 = vmatpush1.msra.mxu0 %v6347
    %6725 = vmatprep.subr.mxu0 %v6346
    %6726 = vmatpush1.msra.mxu0 %v6345
    %6727 = vmatprep.subr.mxu0 %v6344
    %6728 = vmatpush1.msra.mxu0 %v6343
    %6729 = vmatprep.subr.mxu0 %v6342
    %6730 = vmatpush1.msra.mxu0 %v6341
    %6731 = vmatprep.subr.mxu0 %v6340
    %6732 = vmatpush1.msra.mxu0 %v6339
    %6733 = vmatprep.subr.mxu0 %v6338
    %6734 = vmatpush1.msra.mxu0 %v6337
    %6735 = vmatprep.subr.mxu0 %v6336
    %6736 = vmatpush1.msra.mxu0 %v6335
    %6737 = vmatprep.subr.mxu0 %v6334
    %6738 = vmatpush1.msra.mxu0 %v6333
    %6739 = vmatprep.subr.mxu0 %v6332
    %6740 = vmatpush1.msra.mxu0 %v6331
    %6741 = vmatprep.subr.mxu0 %v6330
    %6742 = vmatpush1.msra.mxu0 %v6329
    %6743 = vmatprep.subr.mxu0 %v6328
    %6744 = vmatpush1.msra.mxu0 %v6327
    %6745 = vmatprep.subr.mxu0 %v6326
    %6746 = vmatpush1.msra.mxu0 %v6325
    %6747 = vmatprep.subr.mxu0 %v6324
    %6748 = vmatpush1.msra.mxu0 %v6323
    %6749 = vmatprep.subr.mxu0 %v6322
    %6750 = vmatpush1.msra.mxu0 %v6321
    %6751 = vmatprep.subr.mxu0 %v6384
    %6752 = vmatpush2.msra.mxu0 %v6383
    %6753 = vmatprep.subr.mxu0 %v6382
    %6754 = vmatpush2.msra.mxu0 %v6381
    %6755 = vmatprep.subr.mxu0 %v6380
    %6756 = vmatpush2.msra.mxu0 %v6379
    %6757 = vmatprep.subr.mxu0 %v6378
    %6758 = vmatpush2.msra.mxu0 %v6377
    %6759 = vmatprep.subr.mxu0 %v6376
    %6760 = vmatpush2.msra.mxu0 %v6375
    %6761 = vmatprep.subr.mxu0 %v6374
    %6762 = vmatpush2.msra.mxu0 %v6373
    %6763 = vmatprep.subr.mxu0 %v6372
    %6764 = vmatpush2.msra.mxu0 %v6371
    %6765 = vmatprep.subr.mxu0 %v6370
    %6766 = vmatpush2.msra.mxu0 %v6369
    %6767 = vmatprep.subr.mxu0 %v6368
    %6768 = vmatpush2.msra.mxu0 %v6367
    %6769 = vmatprep.subr.mxu0 %v6366
    %6770 = vmatpush2.msra.mxu0 %v6365
    %6771 = vmatprep.subr.mxu0 %v6364
    %6772 = vmatpush2.msra.mxu0 %v6363
    %6773 = vmatprep.subr.mxu0 %v6362
    %6774 = vmatpush2.msra.mxu0 %v6361
    %6775 = vmatprep.subr.mxu0 %v6360
    %6776 = vmatpush2.msra.mxu0 %v6359
    %6777 = vmatprep.subr.mxu0 %v6358
    %6778 = vmatpush2.msra.mxu0 %v6357
    %6779 = vmatprep.subr.mxu0 %v6356
    %6780 = vmatpush2.msra.mxu0 %v6355
    %6781 = vmatprep.subr.mxu0 %v6354
    %6782 = vmatpush2.msra.mxu0 %v6353
    %6783 = vmatprep.mubr.f32.mxu0 %v6718
    %6784 = vmatmul.mubr.f32.gmra.mxu0 %v6717
    %v6785 = vpop.f32.mrf.mxu0
    %v6786 = vadd.f32 0.0, %v6785
    %v6787 = vpop.f32.mrf.mxu0
    %v6788 = vadd.f32 0.0, %v6787
    %6789 = vdwg.mxu0
    %s6790 = scalar_lea.vmem %s6, 288
    %v6791 = vld [vmem:[%s6790] sm:$0xff]
    %v6792 = vld [vmem:[%s6790 + $0x8] sm:$0xff]
    %v6793 = vld [vmem:[%s6790 + $0x10] sm:$0xff]
    %v6794 = vld [vmem:[%s6790 + $0x18] sm:$0xff]
    %v6795 = vld [vmem:[%s6790 + $0x20] sm:$0xff]
    %v6796 = vld [vmem:[%s6790 + $0x28] sm:$0xff]
    %v6797 = vld [vmem:[%s6790 + $0x30] sm:$0xff]
    %v6798 = vld [vmem:[%s6790 + $0x38] sm:$0xff]
    %v6799 = vld [vmem:[%s6790 + $0x40] sm:$0xff]
    %v6800 = vld [vmem:[%s6790 + $0x48] sm:$0xff]
    %v6801 = vld [vmem:[%s6790 + $0x50] sm:$0xff]
    %v6802 = vld [vmem:[%s6790 + $0x58] sm:$0xff]
    %v6803 = vld [vmem:[%s6790 + $0x60] sm:$0xff]
    %v6804 = vld [vmem:[%s6790 + $0x68] sm:$0xff]
    %v6805 = vld [vmem:[%s6790 + $0x70] sm:$0xff]
    %v6806 = vld [vmem:[%s6790 + $0x78] sm:$0xff]
    %v6807 = vld [vmem:[%s6790 + $0x80] sm:$0xff]
    %v6808 = vld [vmem:[%s6790 + $0x88] sm:$0xff]
    %v6810 = vsel %vm6569, %v6788, 0
    %6812 = vmatprep.subr.mxu0 0.0
    %6813 = vmatpush1.msra.mxu0 %v6806
    %6814 = vmatprep.subr.mxu0 0.0
    %6815 = vmatpush1.msra.mxu0 %v6805
    %6816 = vmatprep.subr.mxu0 0.0
    %6817 = vmatpush1.msra.mxu0 %v6804
    %6818 = vmatprep.subr.mxu0 0.0
    %6819 = vmatpush1.msra.mxu0 %v6803
    %6820 = vmatprep.subr.mxu0 0.0
    %6821 = vmatpush1.msra.mxu0 %v6802
    %6822 = vmatprep.subr.mxu0 0.0
    %6823 = vmatpush1.msra.mxu0 %v6801
    %6824 = vmatprep.subr.mxu0 0.0
    %6825 = vmatpush1.msra.mxu0 %v6800
    %6826 = vmatprep.subr.mxu0 0.0
    %6827 = vmatpush1.msra.mxu0 %v6799
    %6828 = vmatprep.subr.mxu0 0.0
    %6829 = vmatpush1.msra.mxu0 %v6798
    %6830 = vmatprep.subr.mxu0 0.0
    %6831 = vmatpush1.msra.mxu0 %v6797
    %6832 = vmatprep.subr.mxu0 0.0
    %6833 = vmatpush1.msra.mxu0 %v6796
    %6834 = vmatprep.subr.mxu0 0.0
    %6835 = vmatpush1.msra.mxu0 %v6795
    %6836 = vmatprep.subr.mxu0 0.0
    %6837 = vmatpush1.msra.mxu0 %v6794
    %6838 = vmatprep.subr.mxu0 0.0
    %6839 = vmatpush1.msra.mxu0 %v6793
    %6840 = vmatprep.subr.mxu0 0.0
    %6841 = vmatpush1.msra.mxu0 %v6792
    %6842 = vmatprep.subr.mxu0 0.0
    %6843 = vmatpush1.msra.mxu0 %v6791
    %6844 = vmatprep.subr.mxu0 0.0
    %6845 = vmatpush2.msra.mxu0 0.0
    %6846 = vmatprep.subr.mxu0 0.0
    %6847 = vmatpush2.msra.mxu0 0.0
    %6848 = vmatprep.subr.mxu0 0.0
    %6849 = vmatpush2.msra.mxu0 0.0
    %6850 = vmatprep.subr.mxu0 0.0
    %6851 = vmatpush2.msra.mxu0 0.0
    %6852 = vmatprep.subr.mxu0 0.0
    %6853 = vmatpush2.msra.mxu0 0.0
    %6854 = vmatprep.subr.mxu0 0.0
    %6855 = vmatpush2.msra.mxu0 0.0
    %6856 = vmatprep.subr.mxu0 0.0
    %6857 = vmatpush2.msra.mxu0 0.0
    %6858 = vmatprep.subr.mxu0 0.0
    %6859 = vmatpush2.msra.mxu0 0.0
    %6860 = vmatprep.subr.mxu0 0.0
    %6861 = vmatpush2.msra.mxu0 0.0
    %6862 = vmatprep.subr.mxu0 0.0
    %6863 = vmatpush2.msra.mxu0 0.0
    %6864 = vmatprep.subr.mxu0 0.0
    %6865 = vmatpush2.msra.mxu0 0.0
    %6866 = vmatprep.subr.mxu0 0.0
    %6867 = vmatpush2.msra.mxu0 0.0
    %6868 = vmatprep.subr.mxu0 0.0
    %6869 = vmatpush2.msra.mxu0 0.0
    %6870 = vmatprep.subr.mxu0 0.0
    %6871 = vmatpush2.msra.mxu0 0.0
    %6872 = vmatprep.subr.mxu0 0.0
    %6873 = vmatpush2.msra.mxu0 %v6808
    %6874 = vmatprep.subr.mxu0 0.0
    %6875 = vmatpush2.msra.mxu0 %v6807
    %6876 = vmatprep.mubr.f32.mxu0 %v6810
    %6877 = vmatmul.mubr.f32.gmra.mxu0 %v6786
    %v6878 = vpop.f32.mrf.mxu0
    %v6879 = vadd.f32 0.0, %v6878
    %v6880 = vpop.f32.mrf.mxu0
    %6881 = vdwg.mxu0
    %v6882 = vadd.f32 %v6713, %v6879
    %s6883 = scalar_lea.vmem %s5, 48
    %v6884 = vld [vmem:[%s6883] sm:$0xff]
    %v6885 = vld [vmem:[%s6883 + $0x8] sm:$0xff]
    %6886 = vmatprep.subr.mxu0 %v6352
    %6887 = vmatpush1.msra.mxu0 %v6351
    %6888 = vmatprep.subr.mxu0 %v6350
    %6889 = vmatpush1.msra.mxu0 %v6349
    %6890 = vmatprep.subr.mxu0 %v6348
    %6891 = vmatpush1.msra.mxu0 %v6347
    %6892 = vmatprep.subr.mxu0 %v6346
    %6893 = vmatpush1.msra.mxu0 %v6345
    %6894 = vmatprep.subr.mxu0 %v6344
    %6895 = vmatpush1.msra.mxu0 %v6343
    %6896 = vmatprep.subr.mxu0 %v6342
    %6897 = vmatpush1.msra.mxu0 %v6341
    %6898 = vmatprep.subr.mxu0 %v6340
    %6899 = vmatpush1.msra.mxu0 %v6339
    %6900 = vmatprep.subr.mxu0 %v6338
    %6901 = vmatpush1.msra.mxu0 %v6337
    %6902 = vmatprep.subr.mxu0 %v6336
    %6903 = vmatpush1.msra.mxu0 %v6335
    %6904 = vmatprep.subr.mxu0 %v6334
    %6905 = vmatpush1.msra.mxu0 %v6333
    %6906 = vmatprep.subr.mxu0 %v6332
    %6907 = vmatpush1.msra.mxu0 %v6331
    %6908 = vmatprep.subr.mxu0 %v6330
    %6909 = vmatpush1.msra.mxu0 %v6329
    %6910 = vmatprep.subr.mxu0 %v6328
    %6911 = vmatpush1.msra.mxu0 %v6327
    %6912 = vmatprep.subr.mxu0 %v6326
    %6913 = vmatpush1.msra.mxu0 %v6325
    %6914 = vmatprep.subr.mxu0 %v6324
    %6915 = vmatpush1.msra.mxu0 %v6323
    %6916 = vmatprep.subr.mxu0 %v6322
    %6917 = vmatpush1.msra.mxu0 %v6321
    %6918 = vmatprep.subr.mxu0 %v6384
    %6919 = vmatpush2.msra.mxu0 %v6383
    %6920 = vmatprep.subr.mxu0 %v6382
    %6921 = vmatpush2.msra.mxu0 %v6381
    %6922 = vmatprep.subr.mxu0 %v6380
    %6923 = vmatpush2.msra.mxu0 %v6379
    %6924 = vmatprep.subr.mxu0 %v6378
    %6925 = vmatpush2.msra.mxu0 %v6377
    %6926 = vmatprep.subr.mxu0 %v6376
    %6927 = vmatpush2.msra.mxu0 %v6375
    %6928 = vmatprep.subr.mxu0 %v6374
    %6929 = vmatpush2.msra.mxu0 %v6373
    %6930 = vmatprep.subr.mxu0 %v6372
    %6931 = vmatpush2.msra.mxu0 %v6371
    %6932 = vmatprep.subr.mxu0 %v6370
    %6933 = vmatpush2.msra.mxu0 %v6369
    %6934 = vmatprep.subr.mxu0 %v6368
    %6935 = vmatpush2.msra.mxu0 %v6367
    %6936 = vmatprep.subr.mxu0 %v6366
    %6937 = vmatpush2.msra.mxu0 %v6365
    %6938 = vmatprep.subr.mxu0 %v6364
    %6939 = vmatpush2.msra.mxu0 %v6363
    %6940 = vmatprep.subr.mxu0 %v6362
    %6941 = vmatpush2.msra.mxu0 %v6361
    %6942 = vmatprep.subr.mxu0 %v6360
    %6943 = vmatpush2.msra.mxu0 %v6359
    %6944 = vmatprep.subr.mxu0 %v6358
    %6945 = vmatpush2.msra.mxu0 %v6357
    %6946 = vmatprep.subr.mxu0 %v6356
    %6947 = vmatpush2.msra.mxu0 %v6355
    %6948 = vmatprep.subr.mxu0 %v6354
    %6949 = vmatpush2.msra.mxu0 %v6353
    %6950 = vmatprep.mubr.f32.mxu0 %v6885
    %6951 = vmatmul.mubr.f32.gmra.mxu0 %v6884
    %v6952 = vpop.f32.mrf.mxu0
    %v6953 = vadd.f32 0.0, %v6952
    %v6954 = vpop.f32.mrf.mxu0
    %v6955 = vadd.f32 0.0, %v6954
    %6956 = vdwg.mxu0
    %s6957 = scalar_lea.vmem %s6, 432
    %v6958 = vld [vmem:[%s6957] sm:$0xff]
    %v6959 = vld [vmem:[%s6957 + $0x8] sm:$0xff]
    %v6960 = vld [vmem:[%s6957 + $0x10] sm:$0xff]
    %v6961 = vld [vmem:[%s6957 + $0x18] sm:$0xff]
    %v6962 = vld [vmem:[%s6957 + $0x20] sm:$0xff]
    %v6963 = vld [vmem:[%s6957 + $0x28] sm:$0xff]
    %v6964 = vld [vmem:[%s6957 + $0x30] sm:$0xff]
    %v6965 = vld [vmem:[%s6957 + $0x38] sm:$0xff]
    %v6966 = vld [vmem:[%s6957 + $0x40] sm:$0xff]
    %v6967 = vld [vmem:[%s6957 + $0x48] sm:$0xff]
    %v6968 = vld [vmem:[%s6957 + $0x50] sm:$0xff]
    %v6969 = vld [vmem:[%s6957 + $0x58] sm:$0xff]
    %v6970 = vld [vmem:[%s6957 + $0x60] sm:$0xff]
    %v6971 = vld [vmem:[%s6957 + $0x68] sm:$0xff]
    %v6972 = vld [vmem:[%s6957 + $0x70] sm:$0xff]
    %v6973 = vld [vmem:[%s6957 + $0x78] sm:$0xff]
    %v6974 = vld [vmem:[%s6957 + $0x80] sm:$0xff]
    %v6975 = vld [vmem:[%s6957 + $0x88] sm:$0xff]
    %v6977 = vsel %vm6569, %v6955, 0
    %6979 = vmatprep.subr.mxu0 0.0
    %6980 = vmatpush1.msra.mxu0 %v6973
    %6981 = vmatprep.subr.mxu0 0.0
    %6982 = vmatpush1.msra.mxu0 %v6972
    %6983 = vmatprep.subr.mxu0 0.0
    %6984 = vmatpush1.msra.mxu0 %v6971
    %6985 = vmatprep.subr.mxu0 0.0
    %6986 = vmatpush1.msra.mxu0 %v6970
    %6987 = vmatprep.subr.mxu0 0.0
    %6988 = vmatpush1.msra.mxu0 %v6969
    %6989 = vmatprep.subr.mxu0 0.0
    %6990 = vmatpush1.msra.mxu0 %v6968
    %6991 = vmatprep.subr.mxu0 0.0
    %6992 = vmatpush1.msra.mxu0 %v6967
    %6993 = vmatprep.subr.mxu0 0.0
    %6994 = vmatpush1.msra.mxu0 %v6966
    %6995 = vmatprep.subr.mxu0 0.0
    %6996 = vmatpush1.msra.mxu0 %v6965
    %6997 = vmatprep.subr.mxu0 0.0
    %6998 = vmatpush1.msra.mxu0 %v6964
    %6999 = vmatprep.subr.mxu0 0.0
    %7000 = vmatpush1.msra.mxu0 %v6963
    %7001 = vmatprep.subr.mxu0 0.0
    %7002 = vmatpush1.msra.mxu0 %v6962
    %7003 = vmatprep.subr.mxu0 0.0
    %7004 = vmatpush1.msra.mxu0 %v6961
    %7005 = vmatprep.subr.mxu0 0.0
    %7006 = vmatpush1.msra.mxu0 %v6960
    %7007 = vmatprep.subr.mxu0 0.0
    %7008 = vmatpush1.msra.mxu0 %v6959
    %7009 = vmatprep.subr.mxu0 0.0
    %7010 = vmatpush1.msra.mxu0 %v6958
    %7011 = vmatprep.subr.mxu0 0.0
    %7012 = vmatpush2.msra.mxu0 0.0
    %7013 = vmatprep.subr.mxu0 0.0
    %7014 = vmatpush2.msra.mxu0 0.0
    %7015 = vmatprep.subr.mxu0 0.0
    %7016 = vmatpush2.msra.mxu0 0.0
    %7017 = vmatprep.subr.mxu0 0.0
    %7018 = vmatpush2.msra.mxu0 0.0
    %7019 = vmatprep.subr.mxu0 0.0
    %7020 = vmatpush2.msra.mxu0 0.0
    %7021 = vmatprep.subr.mxu0 0.0
    %7022 = vmatpush2.msra.mxu0 0.0
    %7023 = vmatprep.subr.mxu0 0.0
    %7024 = vmatpush2.msra.mxu0 0.0
    %7025 = vmatprep.subr.mxu0 0.0
    %7026 = vmatpush2.msra.mxu0 0.0
    %7027 = vmatprep.subr.mxu0 0.0
    %7028 = vmatpush2.msra.mxu0 0.0
    %7029 = vmatprep.subr.mxu0 0.0
    %7030 = vmatpush2.msra.mxu0 0.0
    %7031 = vmatprep.subr.mxu0 0.0
    %7032 = vmatpush2.msra.mxu0 0.0
    %7033 = vmatprep.subr.mxu0 0.0
    %7034 = vmatpush2.msra.mxu0 0.0
    %7035 = vmatprep.subr.mxu0 0.0
    %7036 = vmatpush2.msra.mxu0 0.0
    %7037 = vmatprep.subr.mxu0 0.0
    %7038 = vmatpush2.msra.mxu0 0.0
    %7039 = vmatprep.subr.mxu0 0.0
    %7040 = vmatpush2.msra.mxu0 %v6975
    %7041 = vmatprep.subr.mxu0 0.0
    %7042 = vmatpush2.msra.mxu0 %v6974
    %7043 = vmatprep.mubr.f32.mxu0 %v6977
    %7044 = vmatmul.mubr.f32.gmra.mxu0 %v6953
    %v7045 = vpop.f32.mrf.mxu0
    %v7046 = vadd.f32 0.0, %v7045
    %v7047 = vpop.f32.mrf.mxu0
    %7048 = vdwg.mxu0
    %v7049 = vadd.f32 %v6882, %v7046
    %s7050 = scalar_lea.vmem %s5, 64
    %v7051 = vld [vmem:[%s7050] sm:$0xff]
    %v7052 = vld [vmem:[%s7050 + $0x8] sm:$0xff]
    %7053 = vmatprep.subr.mxu0 %v6352
    %7054 = vmatpush1.msra.mxu0 %v6351
    %7055 = vmatprep.subr.mxu0 %v6350
    %7056 = vmatpush1.msra.mxu0 %v6349
    %7057 = vmatprep.subr.mxu0 %v6348
    %7058 = vmatpush1.msra.mxu0 %v6347
    %7059 = vmatprep.subr.mxu0 %v6346
    %7060 = vmatpush1.msra.mxu0 %v6345
    %7061 = vmatprep.subr.mxu0 %v6344
    %7062 = vmatpush1.msra.mxu0 %v6343
    %7063 = vmatprep.subr.mxu0 %v6342
    %7064 = vmatpush1.msra.mxu0 %v6341
    %7065 = vmatprep.subr.mxu0 %v6340
    %7066 = vmatpush1.msra.mxu0 %v6339
    %7067 = vmatprep.subr.mxu0 %v6338
    %7068 = vmatpush1.msra.mxu0 %v6337
    %7069 = vmatprep.subr.mxu0 %v6336
    %7070 = vmatpush1.msra.mxu0 %v6335
    %7071 = vmatprep.subr.mxu0 %v6334
    %7072 = vmatpush1.msra.mxu0 %v6333
    %7073 = vmatprep.subr.mxu0 %v6332
    %7074 = vmatpush1.msra.mxu0 %v6331
    %7075 = vmatprep.subr.mxu0 %v6330
    %7076 = vmatpush1.msra.mxu0 %v6329
    %7077 = vmatprep.subr.mxu0 %v6328
    %7078 = vmatpush1.msra.mxu0 %v6327
    %7079 = vmatprep.subr.mxu0 %v6326
    %7080 = vmatpush1.msra.mxu0 %v6325
    %7081 = vmatprep.subr.mxu0 %v6324
    %7082 = vmatpush1.msra.mxu0 %v6323
    %7083 = vmatprep.subr.mxu0 %v6322
    %7084 = vmatpush1.msra.mxu0 %v6321
    %7085 = vmatprep.subr.mxu0 %v6384
    %7086 = vmatpush2.msra.mxu0 %v6383
    %7087 = vmatprep.subr.mxu0 %v6382
    %7088 = vmatpush2.msra.mxu0 %v6381
    %7089 = vmatprep.subr.mxu0 %v6380
    %7090 = vmatpush2.msra.mxu0 %v6379
    %7091 = vmatprep.subr.mxu0 %v6378
    %7092 = vmatpush2.msra.mxu0 %v6377
    %7093 = vmatprep.subr.mxu0 %v6376
    %7094 = vmatpush2.msra.mxu0 %v6375
    %7095 = vmatprep.subr.mxu0 %v6374
    %7096 = vmatpush2.msra.mxu0 %v6373
    %7097 = vmatprep.subr.mxu0 %v6372
    %7098 = vmatpush2.msra.mxu0 %v6371
    %7099 = vmatprep.subr.mxu0 %v6370
    %7100 = vmatpush2.msra.mxu0 %v6369
    %7101 = vmatprep.subr.mxu0 %v6368
    %7102 = vmatpush2.msra.mxu0 %v6367
    %7103 = vmatprep.subr.mxu0 %v6366
    %7104 = vmatpush2.msra.mxu0 %v6365
    %7105 = vmatprep.subr.mxu0 %v6364
    %7106 = vmatpush2.msra.mxu0 %v6363
    %7107 = vmatprep.subr.mxu0 %v6362
    %7108 = vmatpush2.msra.mxu0 %v6361
    %7109 = vmatprep.subr.mxu0 %v6360
    %7110 = vmatpush2.msra.mxu0 %v6359
    %7111 = vmatprep.subr.mxu0 %v6358
    %7112 = vmatpush2.msra.mxu0 %v6357
    %7113 = vmatprep.subr.mxu0 %v6356
    %7114 = vmatpush2.msra.mxu0 %v6355
    %7115 = vmatprep.subr.mxu0 %v6354
    %7116 = vmatpush2.msra.mxu0 %v6353
    %7117 = vmatprep.mubr.f32.mxu0 %v7052
    %7118 = vmatmul.mubr.f32.gmra.mxu0 %v7051
    %v7119 = vpop.f32.mrf.mxu0
    %v7120 = vadd.f32 0.0, %v7119
    %v7121 = vpop.f32.mrf.mxu0
    %v7122 = vadd.f32 0.0, %v7121
    %7123 = vdwg.mxu0
    %s7124 = scalar_lea.vmem %s6, 576
    %v7125 = vld [vmem:[%s7124] sm:$0xff]
    %v7126 = vld [vmem:[%s7124 + $0x8] sm:$0xff]
    %v7127 = vld [vmem:[%s7124 + $0x10] sm:$0xff]
    %v7128 = vld [vmem:[%s7124 + $0x18] sm:$0xff]
    %v7129 = vld [vmem:[%s7124 + $0x20] sm:$0xff]
    %v7130 = vld [vmem:[%s7124 + $0x28] sm:$0xff]
    %v7131 = vld [vmem:[%s7124 + $0x30] sm:$0xff]
    %v7132 = vld [vmem:[%s7124 + $0x38] sm:$0xff]
    %v7133 = vld [vmem:[%s7124 + $0x40] sm:$0xff]
    %v7134 = vld [vmem:[%s7124 + $0x48] sm:$0xff]
    %v7135 = vld [vmem:[%s7124 + $0x50] sm:$0xff]
    %v7136 = vld [vmem:[%s7124 + $0x58] sm:$0xff]
    %v7137 = vld [vmem:[%s7124 + $0x60] sm:$0xff]
    %v7138 = vld [vmem:[%s7124 + $0x68] sm:$0xff]
    %v7139 = vld [vmem:[%s7124 + $0x70] sm:$0xff]
    %v7140 = vld [vmem:[%s7124 + $0x78] sm:$0xff]
    %v7141 = vld [vmem:[%s7124 + $0x80] sm:$0xff]
    %v7142 = vld [vmem:[%s7124 + $0x88] sm:$0xff]
    %v7144 = vsel %vm6569, %v7122, 0
    %7146 = vmatprep.subr.mxu0 0.0
    %7147 = vmatpush1.msra.mxu0 %v7140
    %7148 = vmatprep.subr.mxu0 0.0
    %7149 = vmatpush1.msra.mxu0 %v7139
    %7150 = vmatprep.subr.mxu0 0.0
    %7151 = vmatpush1.msra.mxu0 %v7138
    %7152 = vmatprep.subr.mxu0 0.0
    %7153 = vmatpush1.msra.mxu0 %v7137
    %7154 = vmatprep.subr.mxu0 0.0
    %7155 = vmatpush1.msra.mxu0 %v7136
    %7156 = vmatprep.subr.mxu0 0.0
    %7157 = vmatpush1.msra.mxu0 %v7135
    %7158 = vmatprep.subr.mxu0 0.0
    %7159 = vmatpush1.msra.mxu0 %v7134
    %7160 = vmatprep.subr.mxu0 0.0
    %7161 = vmatpush1.msra.mxu0 %v7133
    %7162 = vmatprep.subr.mxu0 0.0
    %7163 = vmatpush1.msra.mxu0 %v7132
    %7164 = vmatprep.subr.mxu0 0.0
    %7165 = vmatpush1.msra.mxu0 %v7131
    %7166 = vmatprep.subr.mxu0 0.0
    %7167 = vmatpush1.msra.mxu0 %v7130
    %7168 = vmatprep.subr.mxu0 0.0
    %7169 = vmatpush1.msra.mxu0 %v7129
    %7170 = vmatprep.subr.mxu0 0.0
    %7171 = vmatpush1.msra.mxu0 %v7128
    %7172 = vmatprep.subr.mxu0 0.0
    %7173 = vmatpush1.msra.mxu0 %v7127
    %7174 = vmatprep.subr.mxu0 0.0
    %7175 = vmatpush1.msra.mxu0 %v7126
    %7176 = vmatprep.subr.mxu0 0.0
    %7177 = vmatpush1.msra.mxu0 %v7125
    %7178 = vmatprep.subr.mxu0 0.0
    %7179 = vmatpush2.msra.mxu0 0.0
    %7180 = vmatprep.subr.mxu0 0.0
    %7181 = vmatpush2.msra.mxu0 0.0
    %7182 = vmatprep.subr.mxu0 0.0
    %7183 = vmatpush2.msra.mxu0 0.0
    %7184 = vmatprep.subr.mxu0 0.0
    %7185 = vmatpush2.msra.mxu0 0.0
    %7186 = vmatprep.subr.mxu0 0.0
    %7187 = vmatpush2.msra.mxu0 0.0
    %7188 = vmatprep.subr.mxu0 0.0
    %7189 = vmatpush2.msra.mxu0 0.0
    %7190 = vmatprep.subr.mxu0 0.0
    %7191 = vmatpush2.msra.mxu0 0.0
    %7192 = vmatprep.subr.mxu0 0.0
    %7193 = vmatpush2.msra.mxu0 0.0
    %7194 = vmatprep.subr.mxu0 0.0
    %7195 = vmatpush2.msra.mxu0 0.0
    %7196 = vmatprep.subr.mxu0 0.0
    %7197 = vmatpush2.msra.mxu0 0.0
    %7198 = vmatprep.subr.mxu0 0.0
    %7199 = vmatpush2.msra.mxu0 0.0
    %7200 = vmatprep.subr.mxu0 0.0
    %7201 = vmatpush2.msra.mxu0 0.0
    %7202 = vmatprep.subr.mxu0 0.0
    %7203 = vmatpush2.msra.mxu0 0.0
    %7204 = vmatprep.subr.mxu0 0.0
    %7205 = vmatpush2.msra.mxu0 0.0
    %7206 = vmatprep.subr.mxu0 0.0
    %7207 = vmatpush2.msra.mxu0 %v7142
    %7208 = vmatprep.subr.mxu0 0.0
    %7209 = vmatpush2.msra.mxu0 %v7141
    %7210 = vmatprep.mubr.f32.mxu0 %v7144
    %7211 = vmatmul.mubr.f32.gmra.mxu0 %v7120
    %v7212 = vpop.f32.mrf.mxu0
    %v7213 = vadd.f32 0.0, %v7212
    %v7214 = vpop.f32.mrf.mxu0
    %7215 = vdwg.mxu0
    %v7216 = vadd.f32 %v7049, %v7213
    %v7217 = vld [vmem:[%s7] sm:$0x1]
    %v7219 = vlaneseq
    %v7220 = vshrl.u32 %v7219, 7
    %v7221 = vsub.s32 0, %v7220
    %v7222 = vrot.slane %v7217, %v7221
    %v7224 = vadd.f32 %v7216, %v7222
    %v7225 = vld [vmem:[%s8] sm:$0xff]
    %v7226 = vld [vmem:[%s8 + $0x8] sm:$0xff]
    %v7227 = vld [vmem:[%s8 + $0x10] sm:$0xff]
    %v7228 = vld [vmem:[%s8 + $0x18] sm:$0xff]
    %v7229 = vld [vmem:[%s8 + $0x20] sm:$0xff]
    %v7230 = vld [vmem:[%s8 + $0x28] sm:$0xff]
    %v7231 = vld [vmem:[%s8 + $0x30] sm:$0xff]
    %v7232 = vld [vmem:[%s8 + $0x38] sm:$0xff]
    %v7233 = vld [vmem:[%s8 + $0x40] sm:$0xff]
    %v7234 = vld [vmem:[%s8 + $0x48] sm:$0xff]
    %v7235 = vld [vmem:[%s8 + $0x50] sm:$0xff]
    %v7236 = vld [vmem:[%s8 + $0x58] sm:$0xff]
    %v7237 = vld [vmem:[%s8 + $0x60] sm:$0xff]
    %v7238 = vld [vmem:[%s8 + $0x68] sm:$0xff]
    %v7239 = vld [vmem:[%s8 + $0x70] sm:$0xff]
    %v7240 = vld [vmem:[%s8 + $0x78] sm:$0xff]
    %v7241 = vld [vmem:[%s9] sm:$0x1]
    %v7243 = vlaneseq
    %v7244 = vshrl.u32 %v7243, 7
    %v7245 = vsub.s32 0, %v7244
    %v7246 = vrot.slane %v7241, %v7245
    %7248 = vmatprep.subr.mxu0 0.0
    %7249 = vmatpush1.msra.mxu0 %v7240
    %7250 = vmatprep.subr.mxu0 0.0
    %7251 = vmatpush1.msra.mxu0 %v7239
    %7252 = vmatprep.subr.mxu0 0.0
    %7253 = vmatpush1.msra.mxu0 %v7238
    %7254 = vmatprep.subr.mxu0 0.0
    %7255 = vmatpush1.msra.mxu0 %v7237
    %7256 = vmatprep.subr.mxu0 0.0
    %7257 = vmatpush1.msra.mxu0 %v7236
    %7258 = vmatprep.subr.mxu0 0.0
    %7259 = vmatpush1.msra.mxu0 %v7235
    %7260 = vmatprep.subr.mxu0 0.0
    %7261 = vmatpush1.msra.mxu0 %v7234
    %7262 = vmatprep.subr.mxu0 0.0
    %7263 = vmatpush1.msra.mxu0 %v7233
    %7264 = vmatprep.subr.mxu0 0.0
    %7265 = vmatpush1.msra.mxu0 %v7232
    %7266 = vmatprep.subr.mxu0 0.0
    %7267 = vmatpush1.msra.mxu0 %v7231
    %7268 = vmatprep.subr.mxu0 0.0
    %7269 = vmatpush1.msra.mxu0 %v7230
    %7270 = vmatprep.subr.mxu0 0.0
    %7271 = vmatpush1.msra.mxu0 %v7229
    %7272 = vmatprep.subr.mxu0 0.0
    %7273 = vmatpush1.msra.mxu0 %v7228
    %7274 = vmatprep.subr.mxu0 0.0
    %7275 = vmatpush1.msra.mxu0 %v7227
    %7276 = vmatprep.subr.mxu0 0.0
    %7277 = vmatpush1.msra.mxu0 %v7226
    %7278 = vmatprep.subr.mxu0 0.0
    %7279 = vmatpush1.msra.mxu0 %v7225
    %7280 = vmatprep.subr.mxu0 0.0
    %7281 = vmatpush2.msra.mxu0 0.0
    %7282 = vmatprep.subr.mxu0 0.0
    %7283 = vmatpush2.msra.mxu0 0.0
    %7284 = vmatprep.subr.mxu0 0.0
    %7285 = vmatpush2.msra.mxu0 0.0
    %7286 = vmatprep.subr.mxu0 0.0
    %7287 = vmatpush2.msra.mxu0 0.0
    %7288 = vmatprep.subr.mxu0 0.0
    %7289 = vmatpush2.msra.mxu0 0.0
    %7290 = vmatprep.subr.mxu0 0.0
    %7291 = vmatpush2.msra.mxu0 0.0
    %7292 = vmatprep.subr.mxu0 0.0
    %7293 = vmatpush2.msra.mxu0 0.0
    %7294 = vmatprep.subr.mxu0 0.0
    %7295 = vmatpush2.msra.mxu0 0.0
    %7296 = vmatprep.subr.mxu0 0.0
    %7297 = vmatpush2.msra.mxu0 0.0
    %7298 = vmatprep.subr.mxu0 0.0
    %7299 = vmatpush2.msra.mxu0 0.0
    %7300 = vmatprep.subr.mxu0 0.0
    %7301 = vmatpush2.msra.mxu0 0.0
    %7302 = vmatprep.subr.mxu0 0.0
    %7303 = vmatpush2.msra.mxu0 0.0
    %7304 = vmatprep.subr.mxu0 0.0
    %7305 = vmatpush2.msra.mxu0 0.0
    %7306 = vmatprep.subr.mxu0 0.0
    %7307 = vmatpush2.msra.mxu0 0.0
    %7308 = vmatprep.subr.mxu0 0.0
    %7309 = vmatpush2.msra.mxu0 0.0
    %7310 = vmatprep.subr.mxu0 0.0
    %7311 = vmatpush2.msra.mxu0 0.0
    %7312 = vmatprep.mubr.f32.mxu0 0.0
    %7313 = vmatmul.mubr.f32.gmra.mxu0 %v7224
    %v7314 = vpop.f32.mrf.mxu0
    %v7315 = vadd.f32 %v7246, %v7314
    %v7316 = vpop.f32.mrf.mxu0
    %7317 = vdwg.mxu0
    %v7318 = vld [vmem:[%s10] sm:$0xff]
    %v7319 = vld [vmem:[%s10 + $0x8] sm:$0xff]
    %v7320 = vld [vmem:[%s10 + $0x10] sm:$0xff]
    %v7321 = vld [vmem:[%s10 + $0x18] sm:$0xff]
    %v7322 = vld [vmem:[%s10 + $0x20] sm:$0xff]
    %v7323 = vld [vmem:[%s10 + $0x28] sm:$0xff]
    %v7324 = vld [vmem:[%s10 + $0x30] sm:$0xff]
    %v7325 = vld [vmem:[%s10 + $0x38] sm:$0xff]
    %v7326 = vld [vmem:[%s10 + $0x40] sm:$0xff]
    %v7327 = vld [vmem:[%s10 + $0x48] sm:$0xff]
    %v7328 = vld [vmem:[%s10 + $0x50] sm:$0xff]
    %v7329 = vld [vmem:[%s10 + $0x58] sm:$0xff]
    %v7330 = vld [vmem:[%s10 + $0x60] sm:$0xff]
    %v7331 = vld [vmem:[%s10 + $0x68] sm:$0xff]
    %v7332 = vld [vmem:[%s10 + $0x70] sm:$0xff]
    %v7333 = vld [vmem:[%s10 + $0x78] sm:$0xff]
    %v7334 = vld [vmem:[%s11] sm:$0x1]
    %v7336 = vlaneseq
    %v7337 = vshrl.u32 %v7336, 7
    %v7338 = vsub.s32 0, %v7337
    %v7339 = vrot.slane %v7334, %v7338
    %7341 = vmatprep.subr.mxu0 0.0
    %7342 = vmatpush1.msra.mxu0 %v7333
    %7343 = vmatprep.subr.mxu0 0.0
    %7344 = vmatpush1.msra.mxu0 %v7332
    %7345 = vmatprep.subr.mxu0 0.0
    %7346 = vmatpush1.msra.mxu0 %v7331
    %7347 = vmatprep.subr.mxu0 0.0
    %7348 = vmatpush1.msra.mxu0 %v7330
    %7349 = vmatprep.subr.mxu0 0.0
    %7350 = vmatpush1.msra.mxu0 %v7329
    %7351 = vmatprep.subr.mxu0 0.0
    %7352 = vmatpush1.msra.mxu0 %v7328
    %7353 = vmatprep.subr.mxu0 0.0
    %7354 = vmatpush1.msra.mxu0 %v7327
    %7355 = vmatprep.subr.mxu0 0.0
    %7356 = vmatpush1.msra.mxu0 %v7326
    %7357 = vmatprep.subr.mxu0 0.0
    %7358 = vmatpush1.msra.mxu0 %v7325
    %7359 = vmatprep.subr.mxu0 0.0
    %7360 = vmatpush1.msra.mxu0 %v7324
    %7361 = vmatprep.subr.mxu0 0.0
    %7362 = vmatpush1.msra.mxu0 %v7323
    %7363 = vmatprep.subr.mxu0 0.0
    %7364 = vmatpush1.msra.mxu0 %v7322
    %7365 = vmatprep.subr.mxu0 0.0
    %7366 = vmatpush1.msra.mxu0 %v7321
    %7367 = vmatprep.subr.mxu0 0.0
    %7368 = vmatpush1.msra.mxu0 %v7320
    %7369 = vmatprep.subr.mxu0 0.0
    %7370 = vmatpush1.msra.mxu0 %v7319
    %7371 = vmatprep.subr.mxu0 0.0
    %7372 = vmatpush1.msra.mxu0 %v7318
    %7373 = vmatprep.subr.mxu0 0.0
    %7374 = vmatpush2.msra.mxu0 0.0
    %7375 = vmatprep.subr.mxu0 0.0
    %7376 = vmatpush2.msra.mxu0 0.0
    %7377 = vmatprep.subr.mxu0 0.0
    %7378 = vmatpush2.msra.mxu0 0.0
    %7379 = vmatprep.subr.mxu0 0.0
    %7380 = vmatpush2.msra.mxu0 0.0
    %7381 = vmatprep.subr.mxu0 0.0
    %7382 = vmatpush2.msra.mxu0 0.0
    %7383 = vmatprep.subr.mxu0 0.0
    %7384 = vmatpush2.msra.mxu0 0.0
    %7385 = vmatprep.subr.mxu0 0.0
    %7386 = vmatpush2.msra.mxu0 0.0
    %7387 = vmatprep.subr.mxu0 0.0
    %7388 = vmatpush2.msra.mxu0 0.0
    %7389 = vmatprep.subr.mxu0 0.0
    %7390 = vmatpush2.msra.mxu0 0.0
    %7391 = vmatprep.subr.mxu0 0.0
    %7392 = vmatpush2.msra.mxu0 0.0
    %7393 = vmatprep.subr.mxu0 0.0
    %7394 = vmatpush2.msra.mxu0 0.0
    %7395 = vmatprep.subr.mxu0 0.0
    %7396 = vmatpush2.msra.mxu0 0.0
    %7397 = vmatprep.subr.mxu0 0.0
    %7398 = vmatpush2.msra.mxu0 0.0
    %7399 = vmatprep.subr.mxu0 0.0
    %7400 = vmatpush2.msra.mxu0 0.0
    %7401 = vmatprep.subr.mxu0 0.0
    %7402 = vmatpush2.msra.mxu0 0.0
    %7403 = vmatprep.subr.mxu0 0.0
    %7404 = vmatpush2.msra.mxu0 0.0
    %7405 = vmatprep.mubr.f32.mxu0 0.0
    %7406 = vmatmul.mubr.f32.gmra.mxu0 %v7315
    %v7407 = vpop.f32.mrf.mxu0
    %v7408 = vadd.f32 %v7339, %v7407
    %v7409 = vpop.f32.mrf.mxu0
    %7410 = vdwg.mxu0
    %7411 = vst [vmem:[#allocation2] sm:$0xff] %v7408
    // Predicated region
    $region50: #{tpu_custom_call.1} parent=1 // pred_check
      _
    $region51: #{tpu_custom_call.1} parent=1 // pred_check_branch
      %7413 = sbr.rel (0) target = $region53
    $region52: #{tpu_custom_call.1} parent=1 // pred_region
      %s7415 = ssub.s32 128, 128
      %7416 = vsyncadd [#allocation3], %s7415
      %s7418 = sshll.u32 [#allocation2], 4
      %s7419 = int_to_ptr.vmem [resolvable:$true] %s7418
      %7421 = dma.vmem_to_hbm [thread:$0]  %s7419, 128, %s12, [#allocation3]
    $region53: #{tpu_custom_call.1} parent=1 // pred_fallthru
      _
    // Predicated region
    $region54: #{tpu_custom_call.1} parent=1 // pred_check
      _
    $region55: #{tpu_custom_call.1} parent=1 // pred_check_branch
      %7423 = sbr.rel (0) target = $region57
    $region56: #{tpu_custom_call.1} parent=1 // pred_region
      %7424 = dma.done [#allocation3], 128
    $region57: #{tpu_custom_call.1} parent=1 // pred_fallthru
      _
    %7425 = vsyncpa [#allocation3], 1

</llo_original>
